<compile_context>
chip_gen: v5e
topology: v5e:2x2
jax: 0.10.0
libtpu: 0.0.40
codegen_flags: <defaults>
</compile_context>

<pallas_src>
import jax
import jax.numpy as jnp
import numpy as np
from jax import lax
from jax.experimental import pallas as pl
from jax.experimental.pallas import tpu as pltpu

_TB = 128  # batch tile = lane width; all activations are (features, _TB)
_W_ORDER = ("t1", "b1", "t2", "b2", "fc1w", "fc1b", "fc2w", "fc2b", "fc3w", "fc3b")


# ----------------------------------------------------------------------------
# Fused kernel: whole forward pass for one 128-sample batch tile.
#   x_ref   : (896, TB)   input, row index = h*32 + w (W padded 28->32), batch in lanes
#   t1_ref  : (384, 192)  conv1 block-Toeplitz, rows = r*192 + dx*96 + wp*8 + c
#   t2_ref  : (256, 576)  conv2 block-Toeplitz, rows = r*128 + dx*64 + wp*16 + co
#   fc*_ref : row/col padded dense weights; all biases pre-broadcast to (rows, TB)
# ----------------------------------------------------------------------------
def _lenet_kernel(x_ref, t1_ref, b1_ref, t2_ref, b2_ref,
                  fc1w_ref, fc1b_ref, fc2w_ref, fc2b_ref, fc3w_ref, fc3b_ref,
                  out_ref, p1_ref, feats_ref):
    f32 = jnp.float32

    # conv1 + bias + ReLU + 2x2 maxpool: one MXU matmul per pooled output row.
    for hp in range(12):
        rhs = x_ref[64 * hp:64 * hp + 192, :]                        # input rows 2hp..2hp+5
        y = jnp.dot(t1_ref[...], rhs, preferred_element_type=f32)    # (384, TB)
        y = jnp.maximum(y[0:192, :], y[192:384, :])                  # pool over conv rows
        y = jnp.maximum(y[0:96, :], y[96:192, :])                    # pool over conv cols
        p1_ref[96 * hp:96 * hp + 96, :] = jnp.maximum(y + b1_ref[...], 0.0)

    # conv2 + bias + ReLU + 2x2 maxpool: one MXU matmul per pooled output row.
    for yp in range(4):
        rhs = p1_ref[192 * yp:192 * yp + 576, :]                     # p1 rows 2yp..2yp+5
        y = jnp.dot(t2_ref[...], rhs, preferred_element_type=f32)    # (256, TB)
        y = jnp.maximum(y[0:128, :], y[128:256, :])                  # pool over conv rows
        y = jnp.maximum(y[0:64, :], y[64:128, :])                    # pool over conv cols
        feats_ref[64 * yp:64 * yp + 64, :] = jnp.maximum(y + b2_ref[...], 0.0)

    # fc1 -> ReLU -> fc2 -> ReLU -> fc3, all (out_rows, K) @ (K, TB) on the MXU.
    feats = feats_ref[...]                                           # (256, TB)
    h1 = jnp.maximum(
        jnp.dot(fc1w_ref[...], feats, preferred_element_type=f32) + fc1b_ref[...], 0.0)
    h2 = jnp.maximum(
        jnp.dot(fc2w_ref[...], h1, preferred_element_type=f32) + fc2b_ref[...], 0.0)
    out_ref[...] = jnp.dot(fc3w_ref[...], h2, preferred_element_type=f32) + fc3b_ref[...]


# ----------------------------------------------------------------------------
# Parameter init (PyTorch-shaped).
# ----------------------------------------------------------------------------
def init_params(key):
    ks = jax.random.split(key, 10)

    def u(k, shape, fan_in):
        bound = 1.0 / jnp.sqrt(float(fan_in))
        return jax.random.uniform(k, shape, jnp.float32, -bound, bound)

    return {
        "conv1_w": u(ks[0], (6, 1, 5, 5), 1 * 5 * 5),
        "conv1_b": u(ks[1], (6,), 1 * 5 * 5),
        "conv2_w": u(ks[2], (16, 6, 5, 5), 6 * 5 * 5),
        "conv2_b": u(ks[3], (16,), 6 * 5 * 5),
        "fc1_w": u(ks[4], (120, 16 * 4 * 4), 16 * 4 * 4),
        "fc1_b": u(ks[5], (120,), 16 * 4 * 4),
        "fc2_w": u(ks[6], (84, 120), 120),
        "fc2_b": u(ks[7], (84,), 120),
        "fc3_w": u(ks[8], (10, 84), 84),
        "fc3_b": u(ks[9], (10,), 84),
    }


# ----------------------------------------------------------------------------
# One-time (host-side) repack of PyTorch weights into kernel-native layouts.
# ----------------------------------------------------------------------------
def _conv1_toeplitz(k1, b1):
    # rows m = r*192 + dx*96 + wp*8 + c ; cols k = a*32 + win  (a = input row in window)
    t = np.zeros((384, 192), np.float32)
    ii = np.arange(5)
    for r in range(2):
        for dx in range(2):
            for wp in range(12):
                xc = 2 * wp + dx                                   # conv1 output column
                cols = (r + ii)[:, None] * 32 + (xc + ii)[None, :]
                for c in range(6):
                    t[r * 192 + dx * 96 + wp * 8 + c, cols] = k1[c, 0]
    bias = np.zeros((96,), np.float32)
    for wp in range(12):
        bias[wp * 8:wp * 8 + 6] = b1
    return t, bias


def _conv2_toeplitz(k2, b2):
    # rows m = r*128 + dx*64 + wp*16 + co ; cols k = a*96 + wj*8 + ci
    t = np.zeros((256, 576), np.float32)
    ii = np.arange(5)
    for r in range(2):
        for dx in range(2):
            for wp in range(4):
                xc = 2 * wp + dx                                   # conv2 output column
                for co in range(16):
                    m = r * 128 + dx * 64 + wp * 16 + co
                    for ci in range(6):
                        cols = (r + ii)[:, None] * 96 + (xc + ii)[None, :] * 8 + ci
                        t[m, cols] = k2[co, ci]
    bias = np.tile(np.asarray(b2, np.float32), 4)                  # (64,)
    return t, bias


def prepare_params(params):
    k1 = np.asarray(params["conv1_w"], np.float32)
    b1 = np.asarray(params["conv1_b"], np.float32)
    k2 = np.asarray(params["conv2_w"], np.float32)
    b2 = np.asarray(params["conv2_b"], np.float32)

    t1, b1p = _conv1_toeplitz(k1, b1)
    t2, b2p = _conv2_toeplitz(k2, b2)

    # fc1: permute columns from PyTorch (c, h, w) flatten order to kernel
    # (h, w, c) order (h*64 + w*16 + c), pad 120 -> 128 output rows.
    fc1 = np.asarray(params["fc1_w"], np.float32).reshape(120, 16, 4, 4)
    fc1 = fc1.transpose(0, 2, 3, 1).reshape(120, 256)
    fc1w = np.zeros((128, 256), np.float32); fc1w[:120] = fc1
    fc1b = np.zeros((128,), np.float32); fc1b[:120] = np.asarray(params["fc1_b"], np.float32)

    fc2w = np.zeros((128, 128), np.float32)
    fc2w[:84, :120] = np.asarray(params["fc2_w"], np.float32)
    fc2b = np.zeros((128,), np.float32); fc2b[:84] = np.asarray(params["fc2_b"], np.float32)

    fc3w = np.zeros((16, 128), np.float32)
    fc3w[:10, :84] = np.asarray(params["fc3_w"], np.float32)
    fc3b = np.zeros((16,), np.float32); fc3b[:10] = np.asarray(params["fc3_b"], np.float32)

    def lanes(v):  # pre-broadcast biases across the 128 batch lanes
        return np.tile(np.asarray(v, np.float32)[:, None], (1, _TB))

    prep = dict(t1=t1, b1=lanes(b1p), t2=t2, b2=lanes(b2p),
                fc1w=fc1w, fc1b=lanes(fc1b), fc2w=fc2w, fc2b=lanes(fc2b),
                fc3w=fc3w, fc3b=lanes(fc3b))
    return {k: jnp.asarray(v) for k, v in prep.items()}


# ----------------------------------------------------------------------------
# Forward pass: one fused pallas_call, grid over 128-sample batch tiles.
# ----------------------------------------------------------------------------
def net_forward(x_nchw, prep):
    B = x_nchw.shape[0]
    b_pad = ((B + _TB - 1) // _TB) * _TB
    n_tiles = b_pad // _TB

    # (B,1,28,28) -> pad W 28->32 and batch -> flatten (h,w) -> batch into lanes.
    x = x_nchw.astype(jnp.float32).reshape(B, 28, 28)
    x = jnp.pad(x, ((0, b_pad - B), (0, 0), (0, 4)))
    x = x.reshape(b_pad, 28 * 32).T                                  # (896, b_pad)

    weight_elems = sum(int(v.size) for v in prep.values())
    mk_sum = 12 * 384 * 192 + 4 * 256 * 576 + 128 * 256 + 128 * 128 + 16 * 128
    cost = pl.CostEstimate(flops=2 * mk_sum * b_pad, transcendentals=0,
                           bytes_accessed=4 * ((896 + 16) * b_pad + weight_elems))

    weight_specs = [pl.BlockSpec(prep[k].shape, lambda i: (0, 0)) for k in _W_ORDER]

    out = pl.pallas_call(
        _lenet_kernel,
        out_shape=jax.ShapeDtypeStruct((16, b_pad), jnp.float32),
        grid=(n_tiles,),
        in_specs=[pl.BlockSpec((28 * 32, _TB), lambda i: (0, i))] + weight_specs,
        out_specs=pl.BlockSpec((16, _TB), lambda i: (0, i)),
        scratch_shapes=[
            pltpu.VMEM((12 * 96, _TB), jnp.float32),   # pooled conv1 map (1152, TB)
            pltpu.VMEM((256, _TB), jnp.float32),       # pooled conv2 map / fc1 input
        ],
        compiler_params=pltpu.CompilerParams(
            dimension_semantics=("parallel",),
            vmem_limit_bytes=32 * 1024 * 1024,
        ),
        cost_estimate=cost,
    )(x, *[prep[k] for k in _W_ORDER])

    return out[:10, :B].T                                            # (B, 10)


# ----------------------------------------------------------------------------
# Pure-JAX reference (PyTorch semantics) for the correctness check.
# ----------------------------------------------------------------------------
def reference_forward(x_nchw, params):
    hp = lax.Precision.HIGHEST
    x = x_nchw.astype(jnp.float32)
    y = lax.conv_general_dilated(x, params["conv1_w"].astype(jnp.float32), (1, 1), "VALID",
                                 dimension_numbers=("NCHW", "OIHW", "NCHW"), precision=hp)
    y = jnp.maximum(y + params["conv1_b"].reshape(1, 6, 1, 1), 0.0)
    y = lax.reduce_window(y, -jnp.inf, lax.max, (1, 1, 2, 2), (1, 1, 2, 2), "VALID")
    y = lax.conv_general_dilated(y, params["conv2_w"].astype(jnp.float32), (1, 1), "VALID",
                                 dimension_numbers=("NCHW", "OIHW", "NCHW"), precision=hp)
    y = jnp.maximum(y + params["conv2_b"].reshape(1, 16, 1, 1), 0.0)
    y = lax.reduce_window(y, -jnp.inf, lax.max, (1, 1, 2, 2), (1, 1, 2, 2), "VALID")
    y = y.reshape(y.shape[0], 16 * 4 * 4)
    y = jnp.maximum(jnp.dot(y, params["fc1_w"].T, precision=hp) + params["fc1_b"], 0.0)
    y = jnp.maximum(jnp.dot(y, params["fc2_w"].T, precision=hp) + params["fc2_b"], 0.0)
    return jnp.dot(y, params["fc3_w"].T, precision=hp) + params["fc3_b"]


if __name__ == "__main__":
    key = jax.random.PRNGKey(0)
    k_x, k_p = jax.random.split(key)

    # 28x28 mono images so the 16*4*4 flatten of fc1 holds (LeNet/MNIST sizing).
    x = jax.random.normal(k_x, (2, 1, 28, 28), dtype=jnp.float32)
    params = init_params(k_p)
    prep = prepare_params(params)

    fwd = jax.jit(net_forward)
    out = jax.block_until_ready(fwd(x, prep))
    assert out.shape == (2, 10), out.shape

    ref = jax.block_until_ready(reference_forward(x, params))
    max_err = float(jnp.max(jnp.abs(out - ref)))
    assert max_err < 5e-3, f"mismatch vs reference: max abs err = {max_err}"

    print("KERNEL_OK")
</pallas_src>

<mosaic_0001>
module attributes {stable_mosaic.version = 11 : i64} {
  func.func @_lenet_kernel(%arg0: i32, %arg1: memref<896x128xf32, #tpu.memory_space<vmem>>, %arg2: memref<384x192xf32, #tpu.memory_space<vmem>>, %arg3: memref<96x128xf32, #tpu.memory_space<vmem>>, %arg4: memref<256x576xf32, #tpu.memory_space<vmem>>, %arg5: memref<64x128xf32, #tpu.memory_space<vmem>>, %arg6: memref<128x256xf32, #tpu.memory_space<vmem>>, %arg7: memref<128x128xf32, #tpu.memory_space<vmem>>, %arg8: memref<128x128xf32, #tpu.memory_space<vmem>>, %arg9: memref<128x128xf32, #tpu.memory_space<vmem>>, %arg10: memref<16x128xf32, #tpu.memory_space<vmem>>, %arg11: memref<16x128xf32, #tpu.memory_space<vmem>>, %arg12: memref<16x128xf32, #tpu.memory_space<vmem>>, %arg13: memref<1152x128xf32, #tpu.memory_space<vmem>>, %arg14: memref<256x128xf32, #tpu.memory_space<vmem>>) attributes {dimension_semantics = [#tpu.dimension_semantics<parallel>], iteration_bounds = array<i64: 1>, scalar_prefetch = 0 : i64, scratch_operands = 2 : i64, tpu.core_type = #tpu.core_type<tc>, window_params = [{transform_indices = @transform_0, window_bounds = array<i64: 896, 128>}, {pipeline_mode = #tpu.pipeline_mode<synchronous>, transform_indices = @transform_1, window_bounds = array<i64: 384, 192>}, {pipeline_mode = #tpu.pipeline_mode<synchronous>, transform_indices = @transform_2, window_bounds = array<i64: 96, 128>}, {pipeline_mode = #tpu.pipeline_mode<synchronous>, transform_indices = @transform_3, window_bounds = array<i64: 256, 576>}, {pipeline_mode = #tpu.pipeline_mode<synchronous>, transform_indices = @transform_4, window_bounds = array<i64: 64, 128>}, {pipeline_mode = #tpu.pipeline_mode<synchronous>, transform_indices = @transform_5, window_bounds = array<i64: 128, 256>}, {pipeline_mode = #tpu.pipeline_mode<synchronous>, transform_indices = @transform_6, window_bounds = array<i64: 128, 128>}, {pipeline_mode = #tpu.pipeline_mode<synchronous>, transform_indices = @transform_7, window_bounds = array<i64: 128, 128>}, {pipeline_mode = #tpu.pipeline_mode<synchronous>, transform_indices = @transform_8, window_bounds = array<i64: 128, 128>}, {pipeline_mode = #tpu.pipeline_mode<synchronous>, transform_indices = @transform_9, window_bounds = array<i64: 16, 128>}, {pipeline_mode = #tpu.pipeline_mode<synchronous>, transform_indices = @transform_10, window_bounds = array<i64: 16, 128>}, {transform_indices = @transform_11, window_bounds = array<i64: 16, 128>}]} {
    %c0 = arith.constant 0 : index
    %c0_0 = arith.constant 0 : index
    %0 = vector.load %arg1[%c0, %c0_0] : memref<896x128xf32, #tpu.memory_space<vmem>>, vector<192x128xf32>
    %c0_1 = arith.constant 0 : index
    %c0_2 = arith.constant 0 : index
    %1 = vector.load %arg2[%c0_1, %c0_2] : memref<384x192xf32, #tpu.memory_space<vmem>>, vector<384x192xf32>
    %cst = arith.constant dense<0.000000e+00> : vector<384x128xf32>
    %2 = tpu.matmul %1, %0, %cst {dimension_numbers = #tpu.dot_dimension_numbers<[1], [0], [0], [1], [0, 0, 1, 1], [], []>} : vector<384x192xf32>, vector<192x128xf32>, vector<384x128xf32> -> vector<384x128xf32>
    %3 = vector.extract_strided_slice %2 {offsets = [0, 0], sizes = [192, 128], strides = [1, 1]} : vector<384x128xf32> to vector<192x128xf32>
    %4 = vector.extract_strided_slice %2 {offsets = [192, 0], sizes = [192, 128], strides = [1, 1]} : vector<384x128xf32> to vector<192x128xf32>
    %5 = arith.maximumf %3, %4 : vector<192x128xf32>
    %6 = vector.extract_strided_slice %5 {offsets = [0, 0], sizes = [96, 128], strides = [1, 1]} : vector<192x128xf32> to vector<96x128xf32>
    %7 = vector.extract_strided_slice %5 {offsets = [96, 0], sizes = [96, 128], strides = [1, 1]} : vector<192x128xf32> to vector<96x128xf32>
    %8 = arith.maximumf %6, %7 : vector<96x128xf32>
    %c0_3 = arith.constant 0 : index
    %c0_4 = arith.constant 0 : index
    %9 = vector.load %arg3[%c0_3, %c0_4] : memref<96x128xf32, #tpu.memory_space<vmem>>, vector<96x128xf32>
    %10 = arith.addf %8, %9 : vector<96x128xf32>
    %cst_5 = arith.constant 0.000000e+00 : f32
    %11 = vector.broadcast %cst_5 : f32 to vector<96x128xf32>
    %12 = arith.maximumf %10, %11 : vector<96x128xf32>
    %c0_6 = arith.constant 0 : index
    %c0_7 = arith.constant 0 : index
    %13 = vector.load %arg13[%c0_6, %c0_7] : memref<1152x128xf32, #tpu.memory_space<vmem>>, vector<96x128xf32>
    tpu.vector_store %arg13[%c0_6, %c0_7], %12 {strides = array<i32>} : memref<1152x128xf32, #tpu.memory_space<vmem>>, vector<96x128xf32>,
    %c64 = arith.constant 64 : index
    %c0_8 = arith.constant 0 : index
    %14 = vector.load %arg1[%c64, %c0_8] : memref<896x128xf32, #tpu.memory_space<vmem>>, vector<192x128xf32>
    %c0_9 = arith.constant 0 : index
    %c0_10 = arith.constant 0 : index
    %15 = vector.load %arg2[%c0_9, %c0_10] : memref<384x192xf32, #tpu.memory_space<vmem>>, vector<384x192xf32>
    %cst_11 = arith.constant dense<0.000000e+00> : vector<384x128xf32>
    %16 = tpu.matmul %15, %14, %cst_11 {dimension_numbers = #tpu.dot_dimension_numbers<[1], [0], [0], [1], [0, 0, 1, 1], [], []>} : vector<384x192xf32>, vector<192x128xf32>, vector<384x128xf32> -> vector<384x128xf32>
    %17 = vector.extract_strided_slice %16 {offsets = [0, 0], sizes = [192, 128], strides = [1, 1]} : vector<384x128xf32> to vector<192x128xf32>
    %18 = vector.extract_strided_slice %16 {offsets = [192, 0], sizes = [192, 128], strides = [1, 1]} : vector<384x128xf32> to vector<192x128xf32>
    %19 = arith.maximumf %17, %18 : vector<192x128xf32>
    %20 = vector.extract_strided_slice %19 {offsets = [0, 0], sizes = [96, 128], strides = [1, 1]} : vector<192x128xf32> to vector<96x128xf32>
    %21 = vector.extract_strided_slice %19 {offsets = [96, 0], sizes = [96, 128], strides = [1, 1]} : vector<192x128xf32> to vector<96x128xf32>
    %22 = arith.maximumf %20, %21 : vector<96x128xf32>
    %c0_12 = arith.constant 0 : index
    %c0_13 = arith.constant 0 : index
    %23 = vector.load %arg3[%c0_12, %c0_13] : memref<96x128xf32, #tpu.memory_space<vmem>>, vector<96x128xf32>
    %24 = arith.addf %22, %23 : vector<96x128xf32>
    %cst_14 = arith.constant 0.000000e+00 : f32
    %25 = vector.broadcast %cst_14 : f32 to vector<96x128xf32>
    %26 = arith.maximumf %24, %25 : vector<96x128xf32>
    %c96 = arith.constant 96 : index
    %c0_15 = arith.constant 0 : index
    %27 = vector.load %arg13[%c96, %c0_15] : memref<1152x128xf32, #tpu.memory_space<vmem>>, vector<96x128xf32>
    tpu.vector_store %arg13[%c96, %c0_15], %26 {strides = array<i32>} : memref<1152x128xf32, #tpu.memory_space<vmem>>, vector<96x128xf32>,
    %c128 = arith.constant 128 : index
    %c0_16 = arith.constant 0 : index
    %28 = vector.load %arg1[%c128, %c0_16] : memref<896x128xf32, #tpu.memory_space<vmem>>, vector<192x128xf32>
    %c0_17 = arith.constant 0 : index
    %c0_18 = arith.constant 0 : index
    %29 = vector.load %arg2[%c0_17, %c0_18] : memref<384x192xf32, #tpu.memory_space<vmem>>, vector<384x192xf32>
    %cst_19 = arith.constant dense<0.000000e+00> : vector<384x128xf32>
    %30 = tpu.matmul %29, %28, %cst_19 {dimension_numbers = #tpu.dot_dimension_numbers<[1], [0], [0], [1], [0, 0, 1, 1], [], []>} : vector<384x192xf32>, vector<192x128xf32>, vector<384x128xf32> -> vector<384x128xf32>
    %31 = vector.extract_strided_slice %30 {offsets = [0, 0], sizes = [192, 128], strides = [1, 1]} : vector<384x128xf32> to vector<192x128xf32>
    %32 = vector.extract_strided_slice %30 {offsets = [192, 0], sizes = [192, 128], strides = [1, 1]} : vector<384x128xf32> to vector<192x128xf32>
    %33 = arith.maximumf %31, %32 : vector<192x128xf32>
    %34 = vector.extract_strided_slice %33 {offsets = [0, 0], sizes = [96, 128], strides = [1, 1]} : vector<192x128xf32> to vector<96x128xf32>
    %35 = vector.extract_strided_slice %33 {offsets = [96, 0], sizes = [96, 128], strides = [1, 1]} : vector<192x128xf32> to vector<96x128xf32>
    %36 = arith.maximumf %34, %35 : vector<96x128xf32>
    %c0_20 = arith.constant 0 : index
    %c0_21 = arith.constant 0 : index
    %37 = vector.load %arg3[%c0_20, %c0_21] : memref<96x128xf32, #tpu.memory_space<vmem>>, vector<96x128xf32>
    %38 = arith.addf %36, %37 : vector<96x128xf32>
    %cst_22 = arith.constant 0.000000e+00 : f32
    %39 = vector.broadcast %cst_22 : f32 to vector<96x128xf32>
    %40 = arith.maximumf %38, %39 : vector<96x128xf32>
    %c192 = arith.constant 192 : index
    %c0_23 = arith.constant 0 : index
    %41 = vector.load %arg13[%c192, %c0_23] : memref<1152x128xf32, #tpu.memory_space<vmem>>, vector<96x128xf32>
    tpu.vector_store %arg13[%c192, %c0_23], %40 {strides = array<i32>} : memref<1152x128xf32, #tpu.memory_space<vmem>>, vector<96x128xf32>,
    %c192_24 = arith.constant 192 : index
    %c0_25 = arith.constant 0 : index
    %42 = vector.load %arg1[%c192_24, %c0_25] : memref<896x128xf32, #tpu.memory_space<vmem>>, vector<192x128xf32>
    %c0_26 = arith.constant 0 : index
    %c0_27 = arith.constant 0 : index
    %43 = vector.load %arg2[%c0_26, %c0_27] : memref<384x192xf32, #tpu.memory_space<vmem>>, vector<384x192xf32>
    %cst_28 = arith.constant dense<0.000000e+00> : vector<384x128xf32>
    %44 = tpu.matmul %43, %42, %cst_28 {dimension_numbers = #tpu.dot_dimension_numbers<[1], [0], [0], [1], [0, 0, 1, 1], [], []>} : vector<384x192xf32>, vector<192x128xf32>, vector<384x128xf32> -> vector<384x128xf32>
    %45 = vector.extract_strided_slice %44 {offsets = [0, 0], sizes = [192, 128], strides = [1, 1]} : vector<384x128xf32> to vector<192x128xf32>
    %46 = vector.extract_strided_slice %44 {offsets = [192, 0], sizes = [192, 128], strides = [1, 1]} : vector<384x128xf32> to vector<192x128xf32>
    %47 = arith.maximumf %45, %46 : vector<192x128xf32>
    %48 = vector.extract_strided_slice %47 {offsets = [0, 0], sizes = [96, 128], strides = [1, 1]} : vector<192x128xf32> to vector<96x128xf32>
    %49 = vector.extract_strided_slice %47 {offsets = [96, 0], sizes = [96, 128], strides = [1, 1]} : vector<192x128xf32> to vector<96x128xf32>
    %50 = arith.maximumf %48, %49 : vector<96x128xf32>
    %c0_29 = arith.constant 0 : index
    %c0_30 = arith.constant 0 : index
    %51 = vector.load %arg3[%c0_29, %c0_30] : memref<96x128xf32, #tpu.memory_space<vmem>>, vector<96x128xf32>
    %52 = arith.addf %50, %51 : vector<96x128xf32>
    %cst_31 = arith.constant 0.000000e+00 : f32
    %53 = vector.broadcast %cst_31 : f32 to vector<96x128xf32>
    %54 = arith.maximumf %52, %53 : vector<96x128xf32>
    %c288 = arith.constant 288 : index
    %c0_32 = arith.constant 0 : index
    %55 = vector.load %arg13[%c288, %c0_32] : memref<1152x128xf32, #tpu.memory_space<vmem>>, vector<96x128xf32>
    tpu.vector_store %arg13[%c288, %c0_32], %54 {strides = array<i32>} : memref<1152x128xf32, #tpu.memory_space<vmem>>, vector<96x128xf32>,
    %c256 = arith.constant 256 : index
    %c0_33 = arith.constant 0 : index
    %56 = vector.load %arg1[%c256, %c0_33] : memref<896x128xf32, #tpu.memory_space<vmem>>, vector<192x128xf32>
    %c0_34 = arith.constant 0 : index
    %c0_35 = arith.constant 0 : index
    %57 = vector.load %arg2[%c0_34, %c0_35] : memref<384x192xf32, #tpu.memory_space<vmem>>, vector<384x192xf32>
    %cst_36 = arith.constant dense<0.000000e+00> : vector<384x128xf32>
    %58 = tpu.matmul %57, %56, %cst_36 {dimension_numbers = #tpu.dot_dimension_numbers<[1], [0], [0], [1], [0, 0, 1, 1], [], []>} : vector<384x192xf32>, vector<192x128xf32>, vector<384x128xf32> -> vector<384x128xf32>
    %59 = vector.extract_strided_slice %58 {offsets = [0, 0], sizes = [192, 128], strides = [1, 1]} : vector<384x128xf32> to vector<192x128xf32>
    %60 = vector.extract_strided_slice %58 {offsets = [192, 0], sizes = [192, 128], strides = [1, 1]} : vector<384x128xf32> to vector<192x128xf32>
    %61 = arith.maximumf %59, %60 : vector<192x128xf32>
    %62 = vector.extract_strided_slice %61 {offsets = [0, 0], sizes = [96, 128], strides = [1, 1]} : vector<192x128xf32> to vector<96x128xf32>
    %63 = vector.extract_strided_slice %61 {offsets = [96, 0], sizes = [96, 128], strides = [1, 1]} : vector<192x128xf32> to vector<96x128xf32>
    %64 = arith.maximumf %62, %63 : vector<96x128xf32>
    %c0_37 = arith.constant 0 : index
    %c0_38 = arith.constant 0 : index
    %65 = vector.load %arg3[%c0_37, %c0_38] : memref<96x128xf32, #tpu.memory_space<vmem>>, vector<96x128xf32>
    %66 = arith.addf %64, %65 : vector<96x128xf32>
    %cst_39 = arith.constant 0.000000e+00 : f32
    %67 = vector.broadcast %cst_39 : f32 to vector<96x128xf32>
    %68 = arith.maximumf %66, %67 : vector<96x128xf32>
    %c384 = arith.constant 384 : index
    %c0_40 = arith.constant 0 : index
    %69 = vector.load %arg13[%c384, %c0_40] : memref<1152x128xf32, #tpu.memory_space<vmem>>, vector<96x128xf32>
    tpu.vector_store %arg13[%c384, %c0_40], %68 {strides = array<i32>} : memref<1152x128xf32, #tpu.memory_space<vmem>>, vector<96x128xf32>,
    %c320 = arith.constant 320 : index
    %c0_41 = arith.constant 0 : index
    %70 = vector.load %arg1[%c320, %c0_41] : memref<896x128xf32, #tpu.memory_space<vmem>>, vector<192x128xf32>
    %c0_42 = arith.constant 0 : index
    %c0_43 = arith.constant 0 : index
    %71 = vector.load %arg2[%c0_42, %c0_43] : memref<384x192xf32, #tpu.memory_space<vmem>>, vector<384x192xf32>
    %cst_44 = arith.constant dense<0.000000e+00> : vector<384x128xf32>
    %72 = tpu.matmul %71, %70, %cst_44 {dimension_numbers = #tpu.dot_dimension_numbers<[1], [0], [0], [1], [0, 0, 1, 1], [], []>} : vector<384x192xf32>, vector<192x128xf32>, vector<384x128xf32> -> vector<384x128xf32>
    %73 = vector.extract_strided_slice %72 {offsets = [0, 0], sizes = [192, 128], strides = [1, 1]} : vector<384x128xf32> to vector<192x128xf32>
    %74 = vector.extract_strided_slice %72 {offsets = [192, 0], sizes = [192, 128], strides = [1, 1]} : vector<384x128xf32> to vector<192x128xf32>
    %75 = arith.maximumf %73, %74 : vector<192x128xf32>
    %76 = vector.extract_strided_slice %75 {offsets = [0, 0], sizes = [96, 128], strides = [1, 1]} : vector<192x128xf32> to vector<96x128xf32>
    %77 = vector.extract_strided_slice %75 {offsets = [96, 0], sizes = [96, 128], strides = [1, 1]} : vector<192x128xf32> to vector<96x128xf32>
    %78 = arith.maximumf %76, %77 : vector<96x128xf32>
    %c0_45 = arith.constant 0 : index
    %c0_46 = arith.constant 0 : index
    %79 = vector.load %arg3[%c0_45, %c0_46] : memref<96x128xf32, #tpu.memory_space<vmem>>, vector<96x128xf32>
    %80 = arith.addf %78, %79 : vector<96x128xf32>
    %cst_47 = arith.constant 0.000000e+00 : f32
    %81 = vector.broadcast %cst_47 : f32 to vector<96x128xf32>
    %82 = arith.maximumf %80, %81 : vector<96x128xf32>
    %c480 = arith.constant 480 : index
    %c0_48 = arith.constant 0 : index
    %83 = vector.load %arg13[%c480, %c0_48] : memref<1152x128xf32, #tpu.memory_space<vmem>>, vector<96x128xf32>
    tpu.vector_store %arg13[%c480, %c0_48], %82 {strides = array<i32>} : memref<1152x128xf32, #tpu.memory_space<vmem>>, vector<96x128xf32>,
    %c384_49 = arith.constant 384 : index
    %c0_50 = arith.constant 0 : index
    %84 = vector.load %arg1[%c384_49, %c0_50] : memref<896x128xf32, #tpu.memory_space<vmem>>, vector<192x128xf32>
    %c0_51 = arith.constant 0 : index
    %c0_52 = arith.constant 0 : index
    %85 = vector.load %arg2[%c0_51, %c0_52] : memref<384x192xf32, #tpu.memory_space<vmem>>, vector<384x192xf32>
    %cst_53 = arith.constant dense<0.000000e+00> : vector<384x128xf32>
    %86 = tpu.matmul %85, %84, %cst_53 {dimension_numbers = #tpu.dot_dimension_numbers<[1], [0], [0], [1], [0, 0, 1, 1], [], []>} : vector<384x192xf32>, vector<192x128xf32>, vector<384x128xf32> -> vector<384x128xf32>
    %87 = vector.extract_strided_slice %86 {offsets = [0, 0], sizes = [192, 128], strides = [1, 1]} : vector<384x128xf32> to vector<192x128xf32>
    %88 = vector.extract_strided_slice %86 {offsets = [192, 0], sizes = [192, 128], strides = [1, 1]} : vector<384x128xf32> to vector<192x128xf32>
    %89 = arith.maximumf %87, %88 : vector<192x128xf32>
    %90 = vector.extract_strided_slice %89 {offsets = [0, 0], sizes = [96, 128], strides = [1, 1]} : vector<192x128xf32> to vector<96x128xf32>
    %91 = vector.extract_strided_slice %89 {offsets = [96, 0], sizes = [96, 128], strides = [1, 1]} : vector<192x128xf32> to vector<96x128xf32>
    %92 = arith.maximumf %90, %91 : vector<96x128xf32>
    %c0_54 = arith.constant 0 : index
    %c0_55 = arith.constant 0 : index
    %93 = vector.load %arg3[%c0_54, %c0_55] : memref<96x128xf32, #tpu.memory_space<vmem>>, vector<96x128xf32>
    %94 = arith.addf %92, %93 : vector<96x128xf32>
    %cst_56 = arith.constant 0.000000e+00 : f32
    %95 = vector.broadcast %cst_56 : f32 to vector<96x128xf32>
    %96 = arith.maximumf %94, %95 : vector<96x128xf32>
    %c576 = arith.constant 576 : index
    %c0_57 = arith.constant 0 : index
    %97 = vector.load %arg13[%c576, %c0_57] : memref<1152x128xf32, #tpu.memory_space<vmem>>, vector<96x128xf32>
    tpu.vector_store %arg13[%c576, %c0_57], %96 {strides = array<i32>} : memref<1152x128xf32, #tpu.memory_space<vmem>>, vector<96x128xf32>,
    %c448 = arith.constant 448 : index
    %c0_58 = arith.constant 0 : index
    %98 = vector.load %arg1[%c448, %c0_58] : memref<896x128xf32, #tpu.memory_space<vmem>>, vector<192x128xf32>
    %c0_59 = arith.constant 0 : index
    %c0_60 = arith.constant 0 : index
    %99 = vector.load %arg2[%c0_59, %c0_60] : memref<384x192xf32, #tpu.memory_space<vmem>>, vector<384x192xf32>
    %cst_61 = arith.constant dense<0.000000e+00> : vector<384x128xf32>
    %100 = tpu.matmul %99, %98, %cst_61 {dimension_numbers = #tpu.dot_dimension_numbers<[1], [0], [0], [1], [0, 0, 1, 1], [], []>} : vector<384x192xf32>, vector<192x128xf32>, vector<384x128xf32> -> vector<384x128xf32>
    %101 = vector.extract_strided_slice %100 {offsets = [0, 0], sizes = [192, 128], strides = [1, 1]} : vector<384x128xf32> to vector<192x128xf32>
    %102 = vector.extract_strided_slice %100 {offsets = [192, 0], sizes = [192, 128], strides = [1, 1]} : vector<384x128xf32> to vector<192x128xf32>
    %103 = arith.maximumf %101, %102 : vector<192x128xf32>
    %104 = vector.extract_strided_slice %103 {offsets = [0, 0], sizes = [96, 128], strides = [1, 1]} : vector<192x128xf32> to vector<96x128xf32>
    %105 = vector.extract_strided_slice %103 {offsets = [96, 0], sizes = [96, 128], strides = [1, 1]} : vector<192x128xf32> to vector<96x128xf32>
    %106 = arith.maximumf %104, %105 : vector<96x128xf32>
    %c0_62 = arith.constant 0 : index
    %c0_63 = arith.constant 0 : index
    %107 = vector.load %arg3[%c0_62, %c0_63] : memref<96x128xf32, #tpu.memory_space<vmem>>, vector<96x128xf32>
    %108 = arith.addf %106, %107 : vector<96x128xf32>
    %cst_64 = arith.constant 0.000000e+00 : f32
    %109 = vector.broadcast %cst_64 : f32 to vector<96x128xf32>
    %110 = arith.maximumf %108, %109 : vector<96x128xf32>
    %c672 = arith.constant 672 : index
    %c0_65 = arith.constant 0 : index
    %111 = vector.load %arg13[%c672, %c0_65] : memref<1152x128xf32, #tpu.memory_space<vmem>>, vector<96x128xf32>
    tpu.vector_store %arg13[%c672, %c0_65], %110 {strides = array<i32>} : memref<1152x128xf32, #tpu.memory_space<vmem>>, vector<96x128xf32>,
    %c512 = arith.constant 512 : index
    %c0_66 = arith.constant 0 : index
    %112 = vector.load %arg1[%c512, %c0_66] : memref<896x128xf32, #tpu.memory_space<vmem>>, vector<192x128xf32>
    %c0_67 = arith.constant 0 : index
    %c0_68 = arith.constant 0 : index
    %113 = vector.load %arg2[%c0_67, %c0_68] : memref<384x192xf32, #tpu.memory_space<vmem>>, vector<384x192xf32>
    %cst_69 = arith.constant dense<0.000000e+00> : vector<384x128xf32>
    %114 = tpu.matmul %113, %112, %cst_69 {dimension_numbers = #tpu.dot_dimension_numbers<[1], [0], [0], [1], [0, 0, 1, 1], [], []>} : vector<384x192xf32>, vector<192x128xf32>, vector<384x128xf32> -> vector<384x128xf32>
    %115 = vector.extract_strided_slice %114 {offsets = [0, 0], sizes = [192, 128], strides = [1, 1]} : vector<384x128xf32> to vector<192x128xf32>
    %116 = vector.extract_strided_slice %114 {offsets = [192, 0], sizes = [192, 128], strides = [1, 1]} : vector<384x128xf32> to vector<192x128xf32>
    %117 = arith.maximumf %115, %116 : vector<192x128xf32>
    %118 = vector.extract_strided_slice %117 {offsets = [0, 0], sizes = [96, 128], strides = [1, 1]} : vector<192x128xf32> to vector<96x128xf32>
    %119 = vector.extract_strided_slice %117 {offsets = [96, 0], sizes = [96, 128], strides = [1, 1]} : vector<192x128xf32> to vector<96x128xf32>
    %120 = arith.maximumf %118, %119 : vector<96x128xf32>
    %c0_70 = arith.constant 0 : index
    %c0_71 = arith.constant 0 : index
    %121 = vector.load %arg3[%c0_70, %c0_71] : memref<96x128xf32, #tpu.memory_space<vmem>>, vector<96x128xf32>
    %122 = arith.addf %120, %121 : vector<96x128xf32>
    %cst_72 = arith.constant 0.000000e+00 : f32
    %123 = vector.broadcast %cst_72 : f32 to vector<96x128xf32>
    %124 = arith.maximumf %122, %123 : vector<96x128xf32>
    %c768 = arith.constant 768 : index
    %c0_73 = arith.constant 0 : index
    %125 = vector.load %arg13[%c768, %c0_73] : memref<1152x128xf32, #tpu.memory_space<vmem>>, vector<96x128xf32>
    tpu.vector_store %arg13[%c768, %c0_73], %124 {strides = array<i32>} : memref<1152x128xf32, #tpu.memory_space<vmem>>, vector<96x128xf32>,
    %c576_74 = arith.constant 576 : index
    %c0_75 = arith.constant 0 : index
    %126 = vector.load %arg1[%c576_74, %c0_75] : memref<896x128xf32, #tpu.memory_space<vmem>>, vector<192x128xf32>
    %c0_76 = arith.constant 0 : index
    %c0_77 = arith.constant 0 : index
    %127 = vector.load %arg2[%c0_76, %c0_77] : memref<384x192xf32, #tpu.memory_space<vmem>>, vector<384x192xf32>
    %cst_78 = arith.constant dense<0.000000e+00> : vector<384x128xf32>
    %128 = tpu.matmul %127, %126, %cst_78 {dimension_numbers = #tpu.dot_dimension_numbers<[1], [0], [0], [1], [0, 0, 1, 1], [], []>} : vector<384x192xf32>, vector<192x128xf32>, vector<384x128xf32> -> vector<384x128xf32>
    %129 = vector.extract_strided_slice %128 {offsets = [0, 0], sizes = [192, 128], strides = [1, 1]} : vector<384x128xf32> to vector<192x128xf32>
    %130 = vector.extract_strided_slice %128 {offsets = [192, 0], sizes = [192, 128], strides = [1, 1]} : vector<384x128xf32> to vector<192x128xf32>
    %131 = arith.maximumf %129, %130 : vector<192x128xf32>
    %132 = vector.extract_strided_slice %131 {offsets = [0, 0], sizes = [96, 128], strides = [1, 1]} : vector<192x128xf32> to vector<96x128xf32>
    %133 = vector.extract_strided_slice %131 {offsets = [96, 0], sizes = [96, 128], strides = [1, 1]} : vector<192x128xf32> to vector<96x128xf32>
    %134 = arith.maximumf %132, %133 : vector<96x128xf32>
    %c0_79 = arith.constant 0 : index
    %c0_80 = arith.constant 0 : index
    %135 = vector.load %arg3[%c0_79, %c0_80] : memref<96x128xf32, #tpu.memory_space<vmem>>, vector<96x128xf32>
    %136 = arith.addf %134, %135 : vector<96x128xf32>
    %cst_81 = arith.constant 0.000000e+00 : f32
    %137 = vector.broadcast %cst_81 : f32 to vector<96x128xf32>
    %138 = arith.maximumf %136, %137 : vector<96x128xf32>
    %c864 = arith.constant 864 : index
    %c0_82 = arith.constant 0 : index
    %139 = vector.load %arg13[%c864, %c0_82] : memref<1152x128xf32, #tpu.memory_space<vmem>>, vector<96x128xf32>
    tpu.vector_store %arg13[%c864, %c0_82], %138 {strides = array<i32>} : memref<1152x128xf32, #tpu.memory_space<vmem>>, vector<96x128xf32>,
    %c640 = arith.constant 640 : index
    %c0_83 = arith.constant 0 : index
    %140 = vector.load %arg1[%c640, %c0_83] : memref<896x128xf32, #tpu.memory_space<vmem>>, vector<192x128xf32>
    %c0_84 = arith.constant 0 : index
    %c0_85 = arith.constant 0 : index
    %141 = vector.load %arg2[%c0_84, %c0_85] : memref<384x192xf32, #tpu.memory_space<vmem>>, vector<384x192xf32>
    %cst_86 = arith.constant dense<0.000000e+00> : vector<384x128xf32>
    %142 = tpu.matmul %141, %140, %cst_86 {dimension_numbers = #tpu.dot_dimension_numbers<[1], [0], [0], [1], [0, 0, 1, 1], [], []>} : vector<384x192xf32>, vector<192x128xf32>, vector<384x128xf32> -> vector<384x128xf32>
    %143 = vector.extract_strided_slice %142 {offsets = [0, 0], sizes = [192, 128], strides = [1, 1]} : vector<384x128xf32> to vector<192x128xf32>
    %144 = vector.extract_strided_slice %142 {offsets = [192, 0], sizes = [192, 128], strides = [1, 1]} : vector<384x128xf32> to vector<192x128xf32>
    %145 = arith.maximumf %143, %144 : vector<192x128xf32>
    %146 = vector.extract_strided_slice %145 {offsets = [0, 0], sizes = [96, 128], strides = [1, 1]} : vector<192x128xf32> to vector<96x128xf32>
    %147 = vector.extract_strided_slice %145 {offsets = [96, 0], sizes = [96, 128], strides = [1, 1]} : vector<192x128xf32> to vector<96x128xf32>
    %148 = arith.maximumf %146, %147 : vector<96x128xf32>
    %c0_87 = arith.constant 0 : index
    %c0_88 = arith.constant 0 : index
    %149 = vector.load %arg3[%c0_87, %c0_88] : memref<96x128xf32, #tpu.memory_space<vmem>>, vector<96x128xf32>
    %150 = arith.addf %148, %149 : vector<96x128xf32>
    %cst_89 = arith.constant 0.000000e+00 : f32
    %151 = vector.broadcast %cst_89 : f32 to vector<96x128xf32>
    %152 = arith.maximumf %150, %151 : vector<96x128xf32>
    %c960 = arith.constant 960 : index
    %c0_90 = arith.constant 0 : index
    %153 = vector.load %arg13[%c960, %c0_90] : memref<1152x128xf32, #tpu.memory_space<vmem>>, vector<96x128xf32>
    tpu.vector_store %arg13[%c960, %c0_90], %152 {strides = array<i32>} : memref<1152x128xf32, #tpu.memory_space<vmem>>, vector<96x128xf32>,
    %c704 = arith.constant 704 : index
    %c0_91 = arith.constant 0 : index
    %154 = vector.load %arg1[%c704, %c0_91] : memref<896x128xf32, #tpu.memory_space<vmem>>, vector<192x128xf32>
    %c0_92 = arith.constant 0 : index
    %c0_93 = arith.constant 0 : index
    %155 = vector.load %arg2[%c0_92, %c0_93] : memref<384x192xf32, #tpu.memory_space<vmem>>, vector<384x192xf32>
    %cst_94 = arith.constant dense<0.000000e+00> : vector<384x128xf32>
    %156 = tpu.matmul %155, %154, %cst_94 {dimension_numbers = #tpu.dot_dimension_numbers<[1], [0], [0], [1], [0, 0, 1, 1], [], []>} : vector<384x192xf32>, vector<192x128xf32>, vector<384x128xf32> -> vector<384x128xf32>
    %157 = vector.extract_strided_slice %156 {offsets = [0, 0], sizes = [192, 128], strides = [1, 1]} : vector<384x128xf32> to vector<192x128xf32>
    %158 = vector.extract_strided_slice %156 {offsets = [192, 0], sizes = [192, 128], strides = [1, 1]} : vector<384x128xf32> to vector<192x128xf32>
    %159 = arith.maximumf %157, %158 : vector<192x128xf32>
    %160 = vector.extract_strided_slice %159 {offsets = [0, 0], sizes = [96, 128], strides = [1, 1]} : vector<192x128xf32> to vector<96x128xf32>
    %161 = vector.extract_strided_slice %159 {offsets = [96, 0], sizes = [96, 128], strides = [1, 1]} : vector<192x128xf32> to vector<96x128xf32>
    %162 = arith.maximumf %160, %161 : vector<96x128xf32>
    %c0_95 = arith.constant 0 : index
    %c0_96 = arith.constant 0 : index
    %163 = vector.load %arg3[%c0_95, %c0_96] : memref<96x128xf32, #tpu.memory_space<vmem>>, vector<96x128xf32>
    %164 = arith.addf %162, %163 : vector<96x128xf32>
    %cst_97 = arith.constant 0.000000e+00 : f32
    %165 = vector.broadcast %cst_97 : f32 to vector<96x128xf32>
    %166 = arith.maximumf %164, %165 : vector<96x128xf32>
    %c1056 = arith.constant 1056 : index
    %c0_98 = arith.constant 0 : index
    %167 = vector.load %arg13[%c1056, %c0_98] : memref<1152x128xf32, #tpu.memory_space<vmem>>, vector<96x128xf32>
    tpu.vector_store %arg13[%c1056, %c0_98], %166 {strides = array<i32>} : memref<1152x128xf32, #tpu.memory_space<vmem>>, vector<96x128xf32>,
    %c0_99 = arith.constant 0 : index
    %c0_100 = arith.constant 0 : index
    %168 = vector.load %arg13[%c0_99, %c0_100] : memref<1152x128xf32, #tpu.memory_space<vmem>>, vector<576x128xf32>
    %c0_101 = arith.constant 0 : index
    %c0_102 = arith.constant 0 : index
    %169 = vector.load %arg4[%c0_101, %c0_102] : memref<256x576xf32, #tpu.memory_space<vmem>>, vector<256x576xf32>
    %cst_103 = arith.constant dense<0.000000e+00> : vector<256x128xf32>
    %170 = tpu.matmul %169, %168, %cst_103 {dimension_numbers = #tpu.dot_dimension_numbers<[1], [0], [0], [1], [0, 0, 1, 1], [], []>} : vector<256x576xf32>, vector<576x128xf32>, vector<256x128xf32> -> vector<256x128xf32>
    %171 = vector.extract_strided_slice %170 {offsets = [0, 0], sizes = [128, 128], strides = [1, 1]} : vector<256x128xf32> to vector<128x128xf32>
    %172 = vector.extract_strided_slice %170 {offsets = [128, 0], sizes = [128, 128], strides = [1, 1]} : vector<256x128xf32> to vector<128x128xf32>
    %173 = arith.maximumf %171, %172 : vector<128x128xf32>
    %174 = vector.extract_strided_slice %173 {offsets = [0, 0], sizes = [64, 128], strides = [1, 1]} : vector<128x128xf32> to vector<64x128xf32>
    %175 = vector.extract_strided_slice %173 {offsets = [64, 0], sizes = [64, 128], strides = [1, 1]} : vector<128x128xf32> to vector<64x128xf32>
    %176 = arith.maximumf %174, %175 : vector<64x128xf32>
    %c0_104 = arith.constant 0 : index
    %c0_105 = arith.constant 0 : index
    %177 = vector.load %arg5[%c0_104, %c0_105] : memref<64x128xf32, #tpu.memory_space<vmem>>, vector<64x128xf32>
    %178 = arith.addf %176, %177 : vector<64x128xf32>
    %cst_106 = arith.constant 0.000000e+00 : f32
    %179 = vector.broadcast %cst_106 : f32 to vector<64x128xf32>
    %180 = arith.maximumf %178, %179 : vector<64x128xf32>
    %c0_107 = arith.constant 0 : index
    %c0_108 = arith.constant 0 : index
    %181 = vector.load %arg14[%c0_107, %c0_108] : memref<256x128xf32, #tpu.memory_space<vmem>>, vector<64x128xf32>
    tpu.vector_store %arg14[%c0_107, %c0_108], %180 {strides = array<i32>} : memref<256x128xf32, #tpu.memory_space<vmem>>, vector<64x128xf32>,
    %c192_109 = arith.constant 192 : index
    %c0_110 = arith.constant 0 : index
    %182 = vector.load %arg13[%c192_109, %c0_110] : memref<1152x128xf32, #tpu.memory_space<vmem>>, vector<576x128xf32>
    %c0_111 = arith.constant 0 : index
    %c0_112 = arith.constant 0 : index
    %183 = vector.load %arg4[%c0_111, %c0_112] : memref<256x576xf32, #tpu.memory_space<vmem>>, vector<256x576xf32>
    %cst_113 = arith.constant dense<0.000000e+00> : vector<256x128xf32>
    %184 = tpu.matmul %183, %182, %cst_113 {dimension_numbers = #tpu.dot_dimension_numbers<[1], [0], [0], [1], [0, 0, 1, 1], [], []>} : vector<256x576xf32>, vector<576x128xf32>, vector<256x128xf32> -> vector<256x128xf32>
    %185 = vector.extract_strided_slice %184 {offsets = [0, 0], sizes = [128, 128], strides = [1, 1]} : vector<256x128xf32> to vector<128x128xf32>
    %186 = vector.extract_strided_slice %184 {offsets = [128, 0], sizes = [128, 128], strides = [1, 1]} : vector<256x128xf32> to vector<128x128xf32>
    %187 = arith.maximumf %185, %186 : vector<128x128xf32>
    %188 = vector.extract_strided_slice %187 {offsets = [0, 0], sizes = [64, 128], strides = [1, 1]} : vector<128x128xf32> to vector<64x128xf32>
    %189 = vector.extract_strided_slice %187 {offsets = [64, 0], sizes = [64, 128], strides = [1, 1]} : vector<128x128xf32> to vector<64x128xf32>
    %190 = arith.maximumf %188, %189 : vector<64x128xf32>
    %c0_114 = arith.constant 0 : index
    %c0_115 = arith.constant 0 : index
    %191 = vector.load %arg5[%c0_114, %c0_115] : memref<64x128xf32, #tpu.memory_space<vmem>>, vector<64x128xf32>
    %192 = arith.addf %190, %191 : vector<64x128xf32>
    %cst_116 = arith.constant 0.000000e+00 : f32
    %193 = vector.broadcast %cst_116 : f32 to vector<64x128xf32>
    %194 = arith.maximumf %192, %193 : vector<64x128xf32>
    %c64_117 = arith.constant 64 : index
    %c0_118 = arith.constant 0 : index
    %195 = vector.load %arg14[%c64_117, %c0_118] : memref<256x128xf32, #tpu.memory_space<vmem>>, vector<64x128xf32>
    tpu.vector_store %arg14[%c64_117, %c0_118], %194 {strides = array<i32>} : memref<256x128xf32, #tpu.memory_space<vmem>>, vector<64x128xf32>,
    %c384_119 = arith.constant 384 : index
    %c0_120 = arith.constant 0 : index
    %196 = vector.load %arg13[%c384_119, %c0_120] : memref<1152x128xf32, #tpu.memory_space<vmem>>, vector<576x128xf32>
    %c0_121 = arith.constant 0 : index
    %c0_122 = arith.constant 0 : index
    %197 = vector.load %arg4[%c0_121, %c0_122] : memref<256x576xf32, #tpu.memory_space<vmem>>, vector<256x576xf32>
    %cst_123 = arith.constant dense<0.000000e+00> : vector<256x128xf32>
    %198 = tpu.matmul %197, %196, %cst_123 {dimension_numbers = #tpu.dot_dimension_numbers<[1], [0], [0], [1], [0, 0, 1, 1], [], []>} : vector<256x576xf32>, vector<576x128xf32>, vector<256x128xf32> -> vector<256x128xf32>
    %199 = vector.extract_strided_slice %198 {offsets = [0, 0], sizes = [128, 128], strides = [1, 1]} : vector<256x128xf32> to vector<128x128xf32>
    %200 = vector.extract_strided_slice %198 {offsets = [128, 0], sizes = [128, 128], strides = [1, 1]} : vector<256x128xf32> to vector<128x128xf32>
    %201 = arith.maximumf %199, %200 : vector<128x128xf32>
    %202 = vector.extract_strided_slice %201 {offsets = [0, 0], sizes = [64, 128], strides = [1, 1]} : vector<128x128xf32> to vector<64x128xf32>
    %203 = vector.extract_strided_slice %201 {offsets = [64, 0], sizes = [64, 128], strides = [1, 1]} : vector<128x128xf32> to vector<64x128xf32>
    %204 = arith.maximumf %202, %203 : vector<64x128xf32>
    %c0_124 = arith.constant 0 : index
    %c0_125 = arith.constant 0 : index
    %205 = vector.load %arg5[%c0_124, %c0_125] : memref<64x128xf32, #tpu.memory_space<vmem>>, vector<64x128xf32>
    %206 = arith.addf %204, %205 : vector<64x128xf32>
    %cst_126 = arith.constant 0.000000e+00 : f32
    %207 = vector.broadcast %cst_126 : f32 to vector<64x128xf32>
    %208 = arith.maximumf %206, %207 : vector<64x128xf32>
    %c128_127 = arith.constant 128 : index
    %c0_128 = arith.constant 0 : index
    %209 = vector.load %arg14[%c128_127, %c0_128] : memref<256x128xf32, #tpu.memory_space<vmem>>, vector<64x128xf32>
    tpu.vector_store %arg14[%c128_127, %c0_128], %208 {strides = array<i32>} : memref<256x128xf32, #tpu.memory_space<vmem>>, vector<64x128xf32>,
    %c576_129 = arith.constant 576 : index
    %c0_130 = arith.constant 0 : index
    %210 = vector.load %arg13[%c576_129, %c0_130] : memref<1152x128xf32, #tpu.memory_space<vmem>>, vector<576x128xf32>
    %c0_131 = arith.constant 0 : index
    %c0_132 = arith.constant 0 : index
    %211 = vector.load %arg4[%c0_131, %c0_132] : memref<256x576xf32, #tpu.memory_space<vmem>>, vector<256x576xf32>
    %cst_133 = arith.constant dense<0.000000e+00> : vector<256x128xf32>
    %212 = tpu.matmul %211, %210, %cst_133 {dimension_numbers = #tpu.dot_dimension_numbers<[1], [0], [0], [1], [0, 0, 1, 1], [], []>} : vector<256x576xf32>, vector<576x128xf32>, vector<256x128xf32> -> vector<256x128xf32>
    %213 = vector.extract_strided_slice %212 {offsets = [0, 0], sizes = [128, 128], strides = [1, 1]} : vector<256x128xf32> to vector<128x128xf32>
    %214 = vector.extract_strided_slice %212 {offsets = [128, 0], sizes = [128, 128], strides = [1, 1]} : vector<256x128xf32> to vector<128x128xf32>
    %215 = arith.maximumf %213, %214 : vector<128x128xf32>
    %216 = vector.extract_strided_slice %215 {offsets = [0, 0], sizes = [64, 128], strides = [1, 1]} : vector<128x128xf32> to vector<64x128xf32>
    %217 = vector.extract_strided_slice %215 {offsets = [64, 0], sizes = [64, 128], strides = [1, 1]} : vector<128x128xf32> to vector<64x128xf32>
    %218 = arith.maximumf %216, %217 : vector<64x128xf32>
    %c0_134 = arith.constant 0 : index
    %c0_135 = arith.constant 0 : index
    %219 = vector.load %arg5[%c0_134, %c0_135] : memref<64x128xf32, #tpu.memory_space<vmem>>, vector<64x128xf32>
    %220 = arith.addf %218, %219 : vector<64x128xf32>
    %cst_136 = arith.constant 0.000000e+00 : f32
    %221 = vector.broadcast %cst_136 : f32 to vector<64x128xf32>
    %222 = arith.maximumf %220, %221 : vector<64x128xf32>
    %c192_137 = arith.constant 192 : index
    %c0_138 = arith.constant 0 : index
    %223 = vector.load %arg14[%c192_137, %c0_138] : memref<256x128xf32, #tpu.memory_space<vmem>>, vector<64x128xf32>
    tpu.vector_store %arg14[%c192_137, %c0_138], %222 {strides = array<i32>} : memref<256x128xf32, #tpu.memory_space<vmem>>, vector<64x128xf32>,
    %c0_139 = arith.constant 0 : index
    %c0_140 = arith.constant 0 : index
    %224 = vector.load %arg14[%c0_139, %c0_140] : memref<256x128xf32, #tpu.memory_space<vmem>>, vector<256x128xf32>
    %c0_141 = arith.constant 0 : index
    %c0_142 = arith.constant 0 : index
    %225 = vector.load %arg6[%c0_141, %c0_142] : memref<128x256xf32, #tpu.memory_space<vmem>>, vector<128x256xf32>
    %cst_143 = arith.constant dense<0.000000e+00> : vector<128x128xf32>
    %226 = tpu.matmul %225, %224, %cst_143 {dimension_numbers = #tpu.dot_dimension_numbers<[1], [0], [0], [1], [0, 0, 1, 1], [], []>} : vector<128x256xf32>, vector<256x128xf32>, vector<128x128xf32> -> vector<128x128xf32>
    %c0_144 = arith.constant 0 : index
    %c0_145 = arith.constant 0 : index
    %227 = vector.load %arg7[%c0_144, %c0_145] : memref<128x128xf32, #tpu.memory_space<vmem>>, vector<128x128xf32>
    %228 = arith.addf %226, %227 : vector<128x128xf32>
    %cst_146 = arith.constant 0.000000e+00 : f32
    %229 = vector.broadcast %cst_146 : f32 to vector<128x128xf32>
    %230 = arith.maximumf %228, %229 : vector<128x128xf32>
    %c0_147 = arith.constant 0 : index
    %c0_148 = arith.constant 0 : index
    %231 = vector.load %arg8[%c0_147, %c0_148] : memref<128x128xf32, #tpu.memory_space<vmem>>, vector<128x128xf32>
    %cst_149 = arith.constant dense<0.000000e+00> : vector<128x128xf32>
    %232 = tpu.matmul %231, %230, %cst_149 {dimension_numbers = #tpu.dot_dimension_numbers<[1], [0], [0], [1], [0, 0, 1, 1], [], []>} : vector<128x128xf32>, vector<128x128xf32>, vector<128x128xf32> -> vector<128x128xf32>
    %c0_150 = arith.constant 0 : index
    %c0_151 = arith.constant 0 : index
    %233 = vector.load %arg9[%c0_150, %c0_151] : memref<128x128xf32, #tpu.memory_space<vmem>>, vector<128x128xf32>
    %234 = arith.addf %232, %233 : vector<128x128xf32>
    %cst_152 = arith.constant 0.000000e+00 : f32
    %235 = vector.broadcast %cst_152 : f32 to vector<128x128xf32>
    %236 = arith.maximumf %234, %235 : vector<128x128xf32>
    %c0_153 = arith.constant 0 : index
    %c0_154 = arith.constant 0 : index
    %237 = vector.load %arg10[%c0_153, %c0_154] : memref<16x128xf32, #tpu.memory_space<vmem>>, vector<16x128xf32>
    %cst_155 = arith.constant dense<0.000000e+00> : vector<16x128xf32>
    %238 = tpu.matmul %237, %236, %cst_155 {dimension_numbers = #tpu.dot_dimension_numbers<[1], [0], [0], [1], [0, 0, 1, 1], [], []>} : vector<16x128xf32>, vector<128x128xf32>, vector<16x128xf32> -> vector<16x128xf32>
    %c0_156 = arith.constant 0 : index
    %c0_157 = arith.constant 0 : index
    %239 = vector.load %arg11[%c0_156, %c0_157] : memref<16x128xf32, #tpu.memory_space<vmem>>, vector<16x128xf32>
    %240 = arith.addf %238, %239 : vector<16x128xf32>
    %c0_158 = arith.constant 0 : index
    %c0_159 = arith.constant 0 : index
    %241 = vector.load %arg12[%c0_158, %c0_159] : memref<16x128xf32, #tpu.memory_space<vmem>>, vector<16x128xf32>
    tpu.vector_store %arg12[%c0_158, %c0_159], %240 {strides = array<i32>} : memref<16x128xf32, #tpu.memory_space<vmem>>, vector<16x128xf32>,
    return
  }
  func.func @transform_0(%arg0: i32) -> (i32, i32) {
    %c0_i32 = arith.constant 0 : i32
    %c0_i32_0 = arith.constant 0 : i32
    return %c0_i32, %arg0 : i32, i32
  }
  func.func @transform_1(%arg0: i32) -> (i32, i32) {
    %c0_i32 = arith.constant 0 : i32
    %c0_i32_0 = arith.constant 0 : i32
    %c0_i32_1 = arith.constant 0 : i32
    return %c0_i32, %c0_i32_0 : i32, i32
  }
  func.func @transform_2(%arg0: i32) -> (i32, i32) {
    %c0_i32 = arith.constant 0 : i32
    %c0_i32_0 = arith.constant 0 : i32
    %c0_i32_1 = arith.constant 0 : i32
    return %c0_i32, %c0_i32_0 : i32, i32
  }
  func.func @transform_3(%arg0: i32) -> (i32, i32) {
    %c0_i32 = arith.constant 0 : i32
    %c0_i32_0 = arith.constant 0 : i32
    %c0_i32_1 = arith.constant 0 : i32
    return %c0_i32, %c0_i32_0 : i32, i32
  }
  func.func @transform_4(%arg0: i32) -> (i32, i32) {
    %c0_i32 = arith.constant 0 : i32
    %c0_i32_0 = arith.constant 0 : i32
    %c0_i32_1 = arith.constant 0 : i32
    return %c0_i32, %c0_i32_0 : i32, i32
  }
  func.func @transform_5(%arg0: i32) -> (i32, i32) {
    %c0_i32 = arith.constant 0 : i32
    %c0_i32_0 = arith.constant 0 : i32
    %c0_i32_1 = arith.constant 0 : i32
    return %c0_i32, %c0_i32_0 : i32, i32
  }
  func.func @transform_6(%arg0: i32) -> (i32, i32) {
    %c0_i32 = arith.constant 0 : i32
    %c0_i32_0 = arith.constant 0 : i32
    %c0_i32_1 = arith.constant 0 : i32
    return %c0_i32, %c0_i32_0 : i32, i32
  }
  func.func @transform_7(%arg0: i32) -> (i32, i32) {
    %c0_i32 = arith.constant 0 : i32
    %c0_i32_0 = arith.constant 0 : i32
    %c0_i32_1 = arith.constant 0 : i32
    return %c0_i32, %c0_i32_0 : i32, i32
  }
  func.func @transform_8(%arg0: i32) -> (i32, i32) {
    %c0_i32 = arith.constant 0 : i32
    %c0_i32_0 = arith.constant 0 : i32
    %c0_i32_1 = arith.constant 0 : i32
    return %c0_i32, %c0_i32_0 : i32, i32
  }
  func.func @transform_9(%arg0: i32) -> (i32, i32) {
    %c0_i32 = arith.constant 0 : i32
    %c0_i32_0 = arith.constant 0 : i32
    %c0_i32_1 = arith.constant 0 : i32
    return %c0_i32, %c0_i32_0 : i32, i32
  }
  func.func @transform_10(%arg0: i32) -> (i32, i32) {
    %c0_i32 = arith.constant 0 : i32
    %c0_i32_0 = arith.constant 0 : i32
    %c0_i32_1 = arith.constant 0 : i32
    return %c0_i32, %c0_i32_0 : i32, i32
  }
  func.func @transform_11(%arg0: i32) -> (i32, i32) {
    %c0_i32 = arith.constant 0 : i32
    %c0_i32_0 = arith.constant 0 : i32
    return %c0_i32, %arg0 : i32, i32
  }
}

</mosaic_0001>

<llo_original>
// kernel: net_forward.1
$region0: #{net_forward.1}
  #allocation0 [shape = 'u32[]', space=smem, size = 0x4, offset = 0x4, fixed_abs, tag = 'smem constant byte address 0x4 - core index']
  #allocation1 [shape = 'u32[72,128]{1,0:T(1,128)}', space=vmem, size = 0x9000, scoped, tag = 'internal scratch']
  #allocation2 [shape = 'f32[1152,128]{1,0:T(8,128)}', space=vmem, size = 0x90000, scoped, tag = 'scratch operand']
  #allocation3 [shape = 'f32[256,128]{1,0:T(8,128)}', space=vmem, size = 0x20000, scoped, tag = 'scratch operand']
  %s0 = inlined_call_operand.vmem [shape: f32[896,128], index: 0, kind: input, shape index: {}]
  %s1 = inlined_call_operand.vmem [shape: f32[384,192], index: 1, kind: input, shape index: {}]
  %s2 = inlined_call_operand.vmem [shape: f32[96,128], index: 2, kind: input, shape index: {}]
  %s3 = inlined_call_operand.vmem [shape: f32[256,576], index: 3, kind: input, shape index: {}]
  %s4 = inlined_call_operand.vmem [shape: f32[64,128], index: 4, kind: input, shape index: {}]
  %s5 = inlined_call_operand.vmem [shape: f32[128,256], index: 5, kind: input, shape index: {}]
  %s6 = inlined_call_operand.vmem [shape: f32[128,128], index: 6, kind: input, shape index: {}]
  %s7 = inlined_call_operand.vmem [shape: f32[128,128], index: 7, kind: input, shape index: {}]
  %s8 = inlined_call_operand.vmem [shape: f32[128,128], index: 8, kind: input, shape index: {}]
  %s9 = inlined_call_operand.vmem [shape: f32[16,128], index: 9, kind: input, shape index: {}]
  %s10 = inlined_call_operand.vmem [shape: f32[16,128], index: 10, kind: input, shape index: {}]
  %s11 = inlined_call_operand.vmem [shape: f32[16,128], index: 11, kind: output, shape index: {}]
  %s12 = sld [smem:[#allocation0]]
  $region54: #{net_forward.1} parent=0
    _
  %s14 = ssub.s32 1, %s12
  %s15 = scalar_select 0, %s14, %s12
  // Predicated region
  $region2: #{net_forward.1} parent=0 // pred_check
    _
  $region3: #{net_forward.1} parent=0 // pred_check_branch
    %17 = sbr.rel (0) target = $region5
  $region4: #{net_forward.1} parent=0 // pred_region
    _
  $region5: #{net_forward.1} parent=0 // pred_fallthru
    _
  // Predicated region
  $region6: #{net_forward.1} parent=0 // pred_check
    _
  $region7: #{net_forward.1} parent=0 // pred_check_branch
    %19 = sbr.rel (0) target = $region9
  $region8: #{net_forward.1} parent=0 // pred_region
    _
  $region9: #{net_forward.1} parent=0 // pred_fallthru
    _
  // Predicated region
  $region10: #{net_forward.1} parent=0 // pred_check
    _
  $region11: #{net_forward.1} parent=0 // pred_check_branch
    %21 = sbr.rel (0) target = $region13
  $region12: #{net_forward.1} parent=0 // pred_region
    _
  $region13: #{net_forward.1} parent=0 // pred_fallthru
    _
  // Predicated region
  $region14: #{net_forward.1} parent=0 // pred_check
    _
  $region15: #{net_forward.1} parent=0 // pred_check_branch
    %23 = sbr.rel (0) target = $region17
  $region16: #{net_forward.1} parent=0 // pred_region
    _
  $region17: #{net_forward.1} parent=0 // pred_fallthru
    _
  // Predicated region
  $region18: #{net_forward.1} parent=0 // pred_check
    _
  $region19: #{net_forward.1} parent=0 // pred_check_branch
    %25 = sbr.rel (0) target = $region21
  $region20: #{net_forward.1} parent=0 // pred_region
    _
  $region21: #{net_forward.1} parent=0 // pred_fallthru
    _
  // Predicated region
  $region22: #{net_forward.1} parent=0 // pred_check
    _
  $region23: #{net_forward.1} parent=0 // pred_check_branch
    %27 = sbr.rel (0) target = $region25
  $region24: #{net_forward.1} parent=0 // pred_region
    _
  $region25: #{net_forward.1} parent=0 // pred_fallthru
    _
  // Predicated region
  $region26: #{net_forward.1} parent=0 // pred_check
    _
  $region27: #{net_forward.1} parent=0 // pred_check_branch
    %29 = sbr.rel (0) target = $region29
  $region28: #{net_forward.1} parent=0 // pred_region
    _
  $region29: #{net_forward.1} parent=0 // pred_fallthru
    _
  // Predicated region
  $region30: #{net_forward.1} parent=0 // pred_check
    _
  $region31: #{net_forward.1} parent=0 // pred_check_branch
    %31 = sbr.rel (0) target = $region33
  $region32: #{net_forward.1} parent=0 // pred_region
    _
  $region33: #{net_forward.1} parent=0 // pred_fallthru
    _
  // Predicated region
  $region34: #{net_forward.1} parent=0 // pred_check
    _
  $region35: #{net_forward.1} parent=0 // pred_check_branch
    %33 = sbr.rel (0) target = $region37
  $region36: #{net_forward.1} parent=0 // pred_region
    _
  $region37: #{net_forward.1} parent=0 // pred_fallthru
    _
  // Predicated region
  $region38: #{net_forward.1} parent=0 // pred_check
    _
  $region39: #{net_forward.1} parent=0 // pred_check_branch
    %35 = sbr.rel (0) target = $region41
  $region40: #{net_forward.1} parent=0 // pred_region
    _
  $region41: #{net_forward.1} parent=0 // pred_fallthru
    _
  // Predicated region
  $region42: #{net_forward.1} parent=0 // pred_check
    _
  $region43: #{net_forward.1} parent=0 // pred_check_branch
    %37 = sbr.rel (0) target = $region45
  $region44: #{net_forward.1} parent=0 // pred_region
    _
  $region45: #{net_forward.1} parent=0 // pred_fallthru
    _
  %v38 = vld [vmem:[%s0] sm:$0xff]
  %v39 = vld [vmem:[%s0 + $0x8] sm:$0xff]
  %v40 = vld [vmem:[%s0 + $0x10] sm:$0xff]
  %v41 = vld [vmem:[%s0 + $0x18] sm:$0xff]
  %v42 = vld [vmem:[%s0 + $0x20] sm:$0xff]
  %v43 = vld [vmem:[%s0 + $0x28] sm:$0xff]
  %v44 = vld [vmem:[%s0 + $0x30] sm:$0xff]
  %v45 = vld [vmem:[%s0 + $0x38] sm:$0xff]
  %v46 = vld [vmem:[%s0 + $0x40] sm:$0xff]
  %v47 = vld [vmem:[%s0 + $0x48] sm:$0xff]
  %v48 = vld [vmem:[%s0 + $0x50] sm:$0xff]
  %v49 = vld [vmem:[%s0 + $0x58] sm:$0xff]
  %v50 = vld [vmem:[%s0 + $0x60] sm:$0xff]
  %v51 = vld [vmem:[%s0 + $0x68] sm:$0xff]
  %v52 = vld [vmem:[%s0 + $0x70] sm:$0xff]
  %v53 = vld [vmem:[%s0 + $0x78] sm:$0xff]
  %v54 = vld [vmem:[%s0 + $0x80] sm:$0xff]
  %v55 = vld [vmem:[%s0 + $0x88] sm:$0xff]
  %v56 = vld [vmem:[%s0 + $0x90] sm:$0xff]
  %v57 = vld [vmem:[%s0 + $0x98] sm:$0xff]
  %v58 = vld [vmem:[%s0 + $0xa0] sm:$0xff]
  %v59 = vld [vmem:[%s0 + $0xa8] sm:$0xff]
  %v60 = vld [vmem:[%s0 + $0xb0] sm:$0xff]
  %v61 = vld [vmem:[%s0 + $0xb8] sm:$0xff]
  %v62 = vld [vmem:[%s1] sm:$0xff]
  %v63 = vld [vmem:[%s1 + $0x8] sm:$0xff]
  %v64 = vld [vmem:[%s1 + $0x10] sm:$0xff]
  %v65 = vld [vmem:[%s1 + $0x18] sm:$0xff]
  %v66 = vld [vmem:[%s1 + $0x20] sm:$0xff]
  %v67 = vld [vmem:[%s1 + $0x28] sm:$0xff]
  %v68 = vld [vmem:[%s1 + $0x30] sm:$0xff]
  %v69 = vld [vmem:[%s1 + $0x38] sm:$0xff]
  %v70 = vld [vmem:[%s1 + $0x40] sm:$0xff]
  %v71 = vld [vmem:[%s1 + $0x48] sm:$0xff]
  %v72 = vld [vmem:[%s1 + $0x50] sm:$0xff]
  %v73 = vld [vmem:[%s1 + $0x58] sm:$0xff]
  %v74 = vld [vmem:[%s1 + $0x60] sm:$0xff]
  %v75 = vld [vmem:[%s1 + $0x68] sm:$0xff]
  %v76 = vld [vmem:[%s1 + $0x70] sm:$0xff]
  %v77 = vld [vmem:[%s1 + $0x78] sm:$0xff]
  %v78 = vld [vmem:[%s1 + $0x80] sm:$0xff]
  %v79 = vld [vmem:[%s1 + $0x88] sm:$0xff]
  %v80 = vld [vmem:[%s1 + $0x90] sm:$0xff]
  %v81 = vld [vmem:[%s1 + $0x98] sm:$0xff]
  %v82 = vld [vmem:[%s1 + $0xa0] sm:$0xff]
  %v83 = vld [vmem:[%s1 + $0xa8] sm:$0xff]
  %v84 = vld [vmem:[%s1 + $0xb0] sm:$0xff]
  %v85 = vld [vmem:[%s1 + $0xb8] sm:$0xff]
  %v86 = vld [vmem:[%s1 + $0xc0] sm:$0xff]
  %v87 = vld [vmem:[%s1 + $0xc8] sm:$0xff]
  %v88 = vld [vmem:[%s1 + $0xd0] sm:$0xff]
  %v89 = vld [vmem:[%s1 + $0xd8] sm:$0xff]
  %v90 = vld [vmem:[%s1 + $0xe0] sm:$0xff]
  %v91 = vld [vmem:[%s1 + $0xe8] sm:$0xff]
  %v92 = vld [vmem:[%s1 + $0xf0] sm:$0xff]
  %v93 = vld [vmem:[%s1 + $0xf8] sm:$0xff]
  %v94 = vld [vmem:[%s1 + $0x100] sm:$0xff]
  %v95 = vld [vmem:[%s1 + $0x108] sm:$0xff]
  %v96 = vld [vmem:[%s1 + $0x110] sm:$0xff]
  %v97 = vld [vmem:[%s1 + $0x118] sm:$0xff]
  %v98 = vld [vmem:[%s1 + $0x120] sm:$0xff]
  %v99 = vld [vmem:[%s1 + $0x128] sm:$0xff]
  %v100 = vld [vmem:[%s1 + $0x130] sm:$0xff]
  %v101 = vld [vmem:[%s1 + $0x138] sm:$0xff]
  %v102 = vld [vmem:[%s1 + $0x140] sm:$0xff]
  %v103 = vld [vmem:[%s1 + $0x148] sm:$0xff]
  %v104 = vld [vmem:[%s1 + $0x150] sm:$0xff]
  %v105 = vld [vmem:[%s1 + $0x158] sm:$0xff]
  %v106 = vld [vmem:[%s1 + $0x160] sm:$0xff]
  %v107 = vld [vmem:[%s1 + $0x168] sm:$0xff]
  %v108 = vld [vmem:[%s1 + $0x170] sm:$0xff]
  %v109 = vld [vmem:[%s1 + $0x178] sm:$0xff]
  %v110 = vld [vmem:[%s1 + $0x180] sm:$0xff]
  %v111 = vld [vmem:[%s1 + $0x188] sm:$0xff]
  %v112 = vld [vmem:[%s1 + $0x190] sm:$0xff]
  %v113 = vld [vmem:[%s1 + $0x198] sm:$0xff]
  %v114 = vld [vmem:[%s1 + $0x1a0] sm:$0xff]
  %v115 = vld [vmem:[%s1 + $0x1a8] sm:$0xff]
  %v116 = vld [vmem:[%s1 + $0x1b0] sm:$0xff]
  %v117 = vld [vmem:[%s1 + $0x1b8] sm:$0xff]
  %v118 = vld [vmem:[%s1 + $0x1c0] sm:$0xff]
  %v119 = vld [vmem:[%s1 + $0x1c8] sm:$0xff]
  %v120 = vld [vmem:[%s1 + $0x1d0] sm:$0xff]
  %v121 = vld [vmem:[%s1 + $0x1d8] sm:$0xff]
  %v122 = vld [vmem:[%s1 + $0x1e0] sm:$0xff]
  %v123 = vld [vmem:[%s1 + $0x1e8] sm:$0xff]
  %v124 = vld [vmem:[%s1 + $0x1f0] sm:$0xff]
  %v125 = vld [vmem:[%s1 + $0x1f8] sm:$0xff]
  %v126 = vld [vmem:[%s1 + $0x200] sm:$0xff]
  %v127 = vld [vmem:[%s1 + $0x208] sm:$0xff]
  %v128 = vld [vmem:[%s1 + $0x210] sm:$0xff]
  %v129 = vld [vmem:[%s1 + $0x218] sm:$0xff]
  %v130 = vld [vmem:[%s1 + $0x220] sm:$0xff]
  %v131 = vld [vmem:[%s1 + $0x228] sm:$0xff]
  %v132 = vld [vmem:[%s1 + $0x230] sm:$0xff]
  %v133 = vld [vmem:[%s1 + $0x238] sm:$0xff]
  %v134 = vld [vmem:[%s1 + $0x240] sm:$0xff]
  %v135 = vld [vmem:[%s1 + $0x248] sm:$0xff]
  %v136 = vld [vmem:[%s1 + $0x250] sm:$0xff]
  %v137 = vld [vmem:[%s1 + $0x258] sm:$0xff]
  %v138 = vld [vmem:[%s1 + $0x260] sm:$0xff]
  %v139 = vld [vmem:[%s1 + $0x268] sm:$0xff]
  %v140 = vld [vmem:[%s1 + $0x270] sm:$0xff]
  %v141 = vld [vmem:[%s1 + $0x278] sm:$0xff]
  %v142 = vld [vmem:[%s1 + $0x280] sm:$0xff]
  %v143 = vld [vmem:[%s1 + $0x288] sm:$0xff]
  %v144 = vld [vmem:[%s1 + $0x290] sm:$0xff]
  %v145 = vld [vmem:[%s1 + $0x298] sm:$0xff]
  %v146 = vld [vmem:[%s1 + $0x2a0] sm:$0xff]
  %v147 = vld [vmem:[%s1 + $0x2a8] sm:$0xff]
  %v148 = vld [vmem:[%s1 + $0x2b0] sm:$0xff]
  %v149 = vld [vmem:[%s1 + $0x2b8] sm:$0xff]
  %v150 = vld [vmem:[%s1 + $0x2c0] sm:$0xff]
  %v151 = vld [vmem:[%s1 + $0x2c8] sm:$0xff]
  %v152 = vld [vmem:[%s1 + $0x2d0] sm:$0xff]
  %v153 = vld [vmem:[%s1 + $0x2d8] sm:$0xff]
  %v154 = vld [vmem:[%s1 + $0x2e0] sm:$0xff]
  %v155 = vld [vmem:[%s1 + $0x2e8] sm:$0xff]
  %v156 = vld [vmem:[%s1 + $0x2f0] sm:$0xff]
  %v157 = vld [vmem:[%s1 + $0x2f8] sm:$0xff]
  %vm158 = vcmask 523264
  %v160 = vsel %vm158, %v63, 0
  %v163 = vsel %vm158, %v65, 0
  %v166 = vsel %vm158, %v67, 0
  %v169 = vsel %vm158, %v69, 0
  %v172 = vsel %vm158, %v71, 0
  %v175 = vsel %vm158, %v73, 0
  %v178 = vsel %vm158, %v75, 0
  %v181 = vsel %vm158, %v77, 0
  %v184 = vsel %vm158, %v79, 0
  %v187 = vsel %vm158, %v81, 0
  %v190 = vsel %vm158, %v83, 0
  %v193 = vsel %vm158, %v85, 0
  %v196 = vsel %vm158, %v87, 0
  %v199 = vsel %vm158, %v89, 0
  %v202 = vsel %vm158, %v91, 0
  %v205 = vsel %vm158, %v93, 0
  %v208 = vsel %vm158, %v95, 0
  %v211 = vsel %vm158, %v97, 0
  %v214 = vsel %vm158, %v99, 0
  %v217 = vsel %vm158, %v101, 0
  %v220 = vsel %vm158, %v103, 0
  %v223 = vsel %vm158, %v105, 0
  %v226 = vsel %vm158, %v107, 0
  %v229 = vsel %vm158, %v109, 0
  %v232 = vsel %vm158, %v111, 0
  %v235 = vsel %vm158, %v113, 0
  %v238 = vsel %vm158, %v115, 0
  %v241 = vsel %vm158, %v117, 0
  %v244 = vsel %vm158, %v119, 0
  %v247 = vsel %vm158, %v121, 0
  %v250 = vsel %vm158, %v123, 0
  %v253 = vsel %vm158, %v125, 0
  %v256 = vsel %vm158, %v127, 0
  %v259 = vsel %vm158, %v129, 0
  %v262 = vsel %vm158, %v131, 0
  %v265 = vsel %vm158, %v133, 0
  %v268 = vsel %vm158, %v135, 0
  %v271 = vsel %vm158, %v137, 0
  %v274 = vsel %vm158, %v139, 0
  %v277 = vsel %vm158, %v141, 0
  %v280 = vsel %vm158, %v143, 0
  %v283 = vsel %vm158, %v145, 0
  %v286 = vsel %vm158, %v147, 0
  %v289 = vsel %vm158, %v149, 0
  %v292 = vsel %vm158, %v151, 0
  %v295 = vsel %vm158, %v153, 0
  %v298 = vsel %vm158, %v155, 0
  %v301 = vsel %vm158, %v157, 0
  %303 = vmatpush.msra.mxu0 %v53
  %304 = vmatpush.msra.mxu0 %v52
  %305 = vmatpush.msra.mxu0 %v51
  %306 = vmatpush.msra.mxu0 %v50
  %307 = vmatpush.msra.mxu0 %v49
  %308 = vmatpush.msra.mxu0 %v48
  %309 = vmatpush.msra.mxu0 %v47
  %310 = vmatpush.msra.mxu0 %v46
  %311 = vmatpush.msra.mxu0 %v45
  %312 = vmatpush.msra.mxu0 %v44
  %313 = vmatpush.msra.mxu0 %v43
  %314 = vmatpush.msra.mxu0 %v42
  %315 = vmatpush.msra.mxu0 %v41
  %316 = vmatpush.msra.mxu0 %v40
  %317 = vmatpush.msra.mxu0 %v39
  %318 = vmatpush.msra.mxu0 %v38
  %319 = vmatmul.f32.gmra.mxu0 %v62
  %v320 = vpop.f32.mrf.mxu0
  %v321 = vadd.f32 0.0, %v320
  %322 = vmatmul.f32.gmra.mxu0 %v64
  %v323 = vpop.f32.mrf.mxu0
  %v324 = vadd.f32 0.0, %v323
  %325 = vmatmul.f32.gmra.mxu0 %v66
  %v326 = vpop.f32.mrf.mxu0
  %v327 = vadd.f32 0.0, %v326
  %328 = vmatmul.f32.gmra.mxu0 %v68
  %v329 = vpop.f32.mrf.mxu0
  %v330 = vadd.f32 0.0, %v329
  %331 = vmatmul.f32.gmra.mxu0 %v70
  %v332 = vpop.f32.mrf.mxu0
  %v333 = vadd.f32 0.0, %v332
  %334 = vmatmul.f32.gmra.mxu0 %v72
  %v335 = vpop.f32.mrf.mxu0
  %v336 = vadd.f32 0.0, %v335
  %337 = vmatmul.f32.gmra.mxu0 %v74
  %v338 = vpop.f32.mrf.mxu0
  %v339 = vadd.f32 0.0, %v338
  %340 = vmatmul.f32.gmra.mxu0 %v76
  %v341 = vpop.f32.mrf.mxu0
  %v342 = vadd.f32 0.0, %v341
  %343 = vmatmul.f32.gmra.mxu0 %v78
  %v344 = vpop.f32.mrf.mxu0
  %v345 = vadd.f32 0.0, %v344
  %346 = vmatmul.f32.gmra.mxu0 %v80
  %v347 = vpop.f32.mrf.mxu0
  %v348 = vadd.f32 0.0, %v347
  %349 = vmatmul.f32.gmra.mxu0 %v82
  %v350 = vpop.f32.mrf.mxu0
  %v351 = vadd.f32 0.0, %v350
  %352 = vmatmul.f32.gmra.mxu0 %v84
  %v353 = vpop.f32.mrf.mxu0
  %v354 = vadd.f32 0.0, %v353
  %355 = vmatmul.f32.gmra.mxu0 %v86
  %v356 = vpop.f32.mrf.mxu0
  %v357 = vadd.f32 0.0, %v356
  %358 = vmatmul.f32.gmra.mxu0 %v88
  %v359 = vpop.f32.mrf.mxu0
  %v360 = vadd.f32 0.0, %v359
  %361 = vmatmul.f32.gmra.mxu0 %v90
  %v362 = vpop.f32.mrf.mxu0
  %v363 = vadd.f32 0.0, %v362
  %364 = vmatmul.f32.gmra.mxu0 %v92
  %v365 = vpop.f32.mrf.mxu0
  %v366 = vadd.f32 0.0, %v365
  %367 = vmatmul.f32.gmra.mxu0 %v94
  %v368 = vpop.f32.mrf.mxu0
  %v369 = vadd.f32 0.0, %v368
  %370 = vmatmul.f32.gmra.mxu0 %v96
  %v371 = vpop.f32.mrf.mxu0
  %v372 = vadd.f32 0.0, %v371
  %373 = vmatmul.f32.gmra.mxu0 %v98
  %v374 = vpop.f32.mrf.mxu0
  %v375 = vadd.f32 0.0, %v374
  %376 = vmatmul.f32.gmra.mxu0 %v100
  %v377 = vpop.f32.mrf.mxu0
  %v378 = vadd.f32 0.0, %v377
  %379 = vmatmul.f32.gmra.mxu0 %v102
  %v380 = vpop.f32.mrf.mxu0
  %v381 = vadd.f32 0.0, %v380
  %382 = vmatmul.f32.gmra.mxu0 %v104
  %v383 = vpop.f32.mrf.mxu0
  %v384 = vadd.f32 0.0, %v383
  %385 = vmatmul.f32.gmra.mxu0 %v106
  %v386 = vpop.f32.mrf.mxu0
  %v387 = vadd.f32 0.0, %v386
  %388 = vmatmul.f32.gmra.mxu0 %v108
  %v389 = vpop.f32.mrf.mxu0
  %v390 = vadd.f32 0.0, %v389
  %391 = vmatmul.f32.gmra.mxu0 %v110
  %v392 = vpop.f32.mrf.mxu0
  %v393 = vadd.f32 0.0, %v392
  %394 = vmatmul.f32.gmra.mxu0 %v112
  %v395 = vpop.f32.mrf.mxu0
  %v396 = vadd.f32 0.0, %v395
  %397 = vmatmul.f32.gmra.mxu0 %v114
  %v398 = vpop.f32.mrf.mxu0
  %v399 = vadd.f32 0.0, %v398
  %400 = vmatmul.f32.gmra.mxu0 %v116
  %v401 = vpop.f32.mrf.mxu0
  %v402 = vadd.f32 0.0, %v401
  %403 = vmatmul.f32.gmra.mxu0 %v118
  %v404 = vpop.f32.mrf.mxu0
  %v405 = vadd.f32 0.0, %v404
  %406 = vmatmul.f32.gmra.mxu0 %v120
  %v407 = vpop.f32.mrf.mxu0
  %v408 = vadd.f32 0.0, %v407
  %409 = vmatmul.f32.gmra.mxu0 %v122
  %v410 = vpop.f32.mrf.mxu0
  %v411 = vadd.f32 0.0, %v410
  %412 = vmatmul.f32.gmra.mxu0 %v124
  %v413 = vpop.f32.mrf.mxu0
  %v414 = vadd.f32 0.0, %v413
  %415 = vmatmul.f32.gmra.mxu0 %v126
  %v416 = vpop.f32.mrf.mxu0
  %v417 = vadd.f32 0.0, %v416
  %418 = vmatmul.f32.gmra.mxu0 %v128
  %v419 = vpop.f32.mrf.mxu0
  %v420 = vadd.f32 0.0, %v419
  %421 = vmatmul.f32.gmra.mxu0 %v130
  %v422 = vpop.f32.mrf.mxu0
  %v423 = vadd.f32 0.0, %v422
  %424 = vmatmul.f32.gmra.mxu0 %v132
  %v425 = vpop.f32.mrf.mxu0
  %v426 = vadd.f32 0.0, %v425
  %427 = vmatmul.f32.gmra.mxu0 %v134
  %v428 = vpop.f32.mrf.mxu0
  %v429 = vadd.f32 0.0, %v428
  %430 = vmatmul.f32.gmra.mxu0 %v136
  %v431 = vpop.f32.mrf.mxu0
  %v432 = vadd.f32 0.0, %v431
  %433 = vmatmul.f32.gmra.mxu0 %v138
  %v434 = vpop.f32.mrf.mxu0
  %v435 = vadd.f32 0.0, %v434
  %436 = vmatmul.f32.gmra.mxu0 %v140
  %v437 = vpop.f32.mrf.mxu0
  %v438 = vadd.f32 0.0, %v437
  %439 = vmatmul.f32.gmra.mxu0 %v142
  %v440 = vpop.f32.mrf.mxu0
  %v441 = vadd.f32 0.0, %v440
  %442 = vmatmul.f32.gmra.mxu0 %v144
  %v443 = vpop.f32.mrf.mxu0
  %v444 = vadd.f32 0.0, %v443
  %445 = vmatmul.f32.gmra.mxu0 %v146
  %v446 = vpop.f32.mrf.mxu0
  %v447 = vadd.f32 0.0, %v446
  %448 = vmatmul.f32.gmra.mxu0 %v148
  %v449 = vpop.f32.mrf.mxu0
  %v450 = vadd.f32 0.0, %v449
  %451 = vmatmul.f32.gmra.mxu0 %v150
  %v452 = vpop.f32.mrf.mxu0
  %v453 = vadd.f32 0.0, %v452
  %454 = vmatmul.f32.gmra.mxu0 %v152
  %v455 = vpop.f32.mrf.mxu0
  %v456 = vadd.f32 0.0, %v455
  %457 = vmatmul.f32.gmra.mxu0 %v154
  %v458 = vpop.f32.mrf.mxu0
  %v459 = vadd.f32 0.0, %v458
  %460 = vmatmul.f32.gmra.mxu0 %v156
  %v461 = vpop.f32.mrf.mxu0
  %v462 = vadd.f32 0.0, %v461
  %463 = vdwg.mxu0
  %464 = vmatpush.msra.mxu0 0.0
  %465 = vmatpush.msra.mxu0 0.0
  %466 = vmatpush.msra.mxu0 0.0
  %467 = vmatpush.msra.mxu0 0.0
  %468 = vmatpush.msra.mxu0 0.0
  %469 = vmatpush.msra.mxu0 0.0
  %470 = vmatpush.msra.mxu0 0.0
  %471 = vmatpush.msra.mxu0 0.0
  %472 = vmatpush.msra.mxu0 %v61
  %473 = vmatpush.msra.mxu0 %v60
  %474 = vmatpush.msra.mxu0 %v59
  %475 = vmatpush.msra.mxu0 %v58
  %476 = vmatpush.msra.mxu0 %v57
  %477 = vmatpush.msra.mxu0 %v56
  %478 = vmatpush.msra.mxu0 %v55
  %479 = vmatpush.msra.mxu0 %v54
  %480 = vmatmul.f32.gmra.mxu0 %v160
  %v481 = vpop.f32.mrf.mxu0
  %v482 = vadd.f32 %v321, %v481
  %483 = vmatmul.f32.gmra.mxu0 %v163
  %v484 = vpop.f32.mrf.mxu0
  %v485 = vadd.f32 %v324, %v484
  %486 = vmatmul.f32.gmra.mxu0 %v166
  %v487 = vpop.f32.mrf.mxu0
  %v488 = vadd.f32 %v327, %v487
  %489 = vmatmul.f32.gmra.mxu0 %v169
  %v490 = vpop.f32.mrf.mxu0
  %v491 = vadd.f32 %v330, %v490
  %492 = vmatmul.f32.gmra.mxu0 %v172
  %v493 = vpop.f32.mrf.mxu0
  %v494 = vadd.f32 %v333, %v493
  %495 = vmatmul.f32.gmra.mxu0 %v175
  %v496 = vpop.f32.mrf.mxu0
  %v497 = vadd.f32 %v336, %v496
  %498 = vmatmul.f32.gmra.mxu0 %v178
  %v499 = vpop.f32.mrf.mxu0
  %v500 = vadd.f32 %v339, %v499
  %501 = vmatmul.f32.gmra.mxu0 %v181
  %v502 = vpop.f32.mrf.mxu0
  %v503 = vadd.f32 %v342, %v502
  %504 = vmatmul.f32.gmra.mxu0 %v184
  %v505 = vpop.f32.mrf.mxu0
  %v506 = vadd.f32 %v345, %v505
  %507 = vmatmul.f32.gmra.mxu0 %v187
  %v508 = vpop.f32.mrf.mxu0
  %v509 = vadd.f32 %v348, %v508
  %510 = vmatmul.f32.gmra.mxu0 %v190
  %v511 = vpop.f32.mrf.mxu0
  %v512 = vadd.f32 %v351, %v511
  %513 = vmatmul.f32.gmra.mxu0 %v193
  %v514 = vpop.f32.mrf.mxu0
  %v515 = vadd.f32 %v354, %v514
  %516 = vmatmul.f32.gmra.mxu0 %v196
  %v517 = vpop.f32.mrf.mxu0
  %v518 = vadd.f32 %v357, %v517
  %519 = vmatmul.f32.gmra.mxu0 %v199
  %v520 = vpop.f32.mrf.mxu0
  %v521 = vadd.f32 %v360, %v520
  %522 = vmatmul.f32.gmra.mxu0 %v202
  %v523 = vpop.f32.mrf.mxu0
  %v524 = vadd.f32 %v363, %v523
  %525 = vmatmul.f32.gmra.mxu0 %v205
  %v526 = vpop.f32.mrf.mxu0
  %v527 = vadd.f32 %v366, %v526
  %528 = vmatmul.f32.gmra.mxu0 %v208
  %v529 = vpop.f32.mrf.mxu0
  %v530 = vadd.f32 %v369, %v529
  %531 = vmatmul.f32.gmra.mxu0 %v211
  %v532 = vpop.f32.mrf.mxu0
  %v533 = vadd.f32 %v372, %v532
  %534 = vmatmul.f32.gmra.mxu0 %v214
  %v535 = vpop.f32.mrf.mxu0
  %v536 = vadd.f32 %v375, %v535
  %537 = vmatmul.f32.gmra.mxu0 %v217
  %v538 = vpop.f32.mrf.mxu0
  %v539 = vadd.f32 %v378, %v538
  %540 = vmatmul.f32.gmra.mxu0 %v220
  %v541 = vpop.f32.mrf.mxu0
  %v542 = vadd.f32 %v381, %v541
  %543 = vmatmul.f32.gmra.mxu0 %v223
  %v544 = vpop.f32.mrf.mxu0
  %v545 = vadd.f32 %v384, %v544
  %546 = vmatmul.f32.gmra.mxu0 %v226
  %v547 = vpop.f32.mrf.mxu0
  %v548 = vadd.f32 %v387, %v547
  %549 = vmatmul.f32.gmra.mxu0 %v229
  %v550 = vpop.f32.mrf.mxu0
  %v551 = vadd.f32 %v390, %v550
  %552 = vmatmul.f32.gmra.mxu0 %v232
  %v553 = vpop.f32.mrf.mxu0
  %v554 = vadd.f32 %v393, %v553
  %555 = vmatmul.f32.gmra.mxu0 %v235
  %v556 = vpop.f32.mrf.mxu0
  %v557 = vadd.f32 %v396, %v556
  %558 = vmatmul.f32.gmra.mxu0 %v238
  %v559 = vpop.f32.mrf.mxu0
  %v560 = vadd.f32 %v399, %v559
  %561 = vmatmul.f32.gmra.mxu0 %v241
  %v562 = vpop.f32.mrf.mxu0
  %v563 = vadd.f32 %v402, %v562
  %564 = vmatmul.f32.gmra.mxu0 %v244
  %v565 = vpop.f32.mrf.mxu0
  %v566 = vadd.f32 %v405, %v565
  %567 = vmatmul.f32.gmra.mxu0 %v247
  %v568 = vpop.f32.mrf.mxu0
  %v569 = vadd.f32 %v408, %v568
  %570 = vmatmul.f32.gmra.mxu0 %v250
  %v571 = vpop.f32.mrf.mxu0
  %v572 = vadd.f32 %v411, %v571
  %573 = vmatmul.f32.gmra.mxu0 %v253
  %v574 = vpop.f32.mrf.mxu0
  %v575 = vadd.f32 %v414, %v574
  %576 = vmatmul.f32.gmra.mxu0 %v256
  %v577 = vpop.f32.mrf.mxu0
  %v578 = vadd.f32 %v417, %v577
  %579 = vmatmul.f32.gmra.mxu0 %v259
  %v580 = vpop.f32.mrf.mxu0
  %v581 = vadd.f32 %v420, %v580
  %582 = vmatmul.f32.gmra.mxu0 %v262
  %v583 = vpop.f32.mrf.mxu0
  %v584 = vadd.f32 %v423, %v583
  %585 = vmatmul.f32.gmra.mxu0 %v265
  %v586 = vpop.f32.mrf.mxu0
  %v587 = vadd.f32 %v426, %v586
  %588 = vmatmul.f32.gmra.mxu0 %v268
  %v589 = vpop.f32.mrf.mxu0
  %v590 = vadd.f32 %v429, %v589
  %591 = vmatmul.f32.gmra.mxu0 %v271
  %v592 = vpop.f32.mrf.mxu0
  %v593 = vadd.f32 %v432, %v592
  %594 = vmatmul.f32.gmra.mxu0 %v274
  %v595 = vpop.f32.mrf.mxu0
  %v596 = vadd.f32 %v435, %v595
  %597 = vmatmul.f32.gmra.mxu0 %v277
  %v598 = vpop.f32.mrf.mxu0
  %v599 = vadd.f32 %v438, %v598
  %600 = vmatmul.f32.gmra.mxu0 %v280
  %v601 = vpop.f32.mrf.mxu0
  %v602 = vadd.f32 %v441, %v601
  %603 = vmatmul.f32.gmra.mxu0 %v283
  %v604 = vpop.f32.mrf.mxu0
  %v605 = vadd.f32 %v444, %v604
  %606 = vmatmul.f32.gmra.mxu0 %v286
  %v607 = vpop.f32.mrf.mxu0
  %v608 = vadd.f32 %v447, %v607
  %609 = vmatmul.f32.gmra.mxu0 %v289
  %v610 = vpop.f32.mrf.mxu0
  %v611 = vadd.f32 %v450, %v610
  %612 = vmatmul.f32.gmra.mxu0 %v292
  %v613 = vpop.f32.mrf.mxu0
  %v614 = vadd.f32 %v453, %v613
  %615 = vmatmul.f32.gmra.mxu0 %v295
  %v616 = vpop.f32.mrf.mxu0
  %v617 = vadd.f32 %v456, %v616
  %618 = vmatmul.f32.gmra.mxu0 %v298
  %v619 = vpop.f32.mrf.mxu0
  %v620 = vadd.f32 %v459, %v619
  %621 = vmatmul.f32.gmra.mxu0 %v301
  %v622 = vpop.f32.mrf.mxu0
  %v623 = vadd.f32 %v462, %v622
  %624 = vdwg.mxu0
  %v625 = vmax.f32 %v482, %v554
  %v626 = vmax.f32 %v485, %v557
  %v627 = vmax.f32 %v488, %v560
  %v628 = vmax.f32 %v491, %v563
  %v629 = vmax.f32 %v494, %v566
  %v630 = vmax.f32 %v497, %v569
  %v631 = vmax.f32 %v500, %v572
  %v632 = vmax.f32 %v503, %v575
  %v633 = vmax.f32 %v506, %v578
  %v634 = vmax.f32 %v509, %v581
  %v635 = vmax.f32 %v512, %v584
  %v636 = vmax.f32 %v515, %v587
  %v637 = vmax.f32 %v518, %v590
  %v638 = vmax.f32 %v521, %v593
  %v639 = vmax.f32 %v524, %v596
  %v640 = vmax.f32 %v527, %v599
  %v641 = vmax.f32 %v530, %v602
  %v642 = vmax.f32 %v533, %v605
  %v643 = vmax.f32 %v536, %v608
  %v644 = vmax.f32 %v539, %v611
  %v645 = vmax.f32 %v542, %v614
  %v646 = vmax.f32 %v545, %v617
  %v647 = vmax.f32 %v548, %v620
  %v648 = vmax.f32 %v551, %v623
  %v649 = vmax.f32 %v625, %v637
  %v650 = vmax.f32 %v626, %v638
  %v651 = vmax.f32 %v627, %v639
  %v652 = vmax.f32 %v628, %v640
  %v653 = vmax.f32 %v629, %v641
  %v654 = vmax.f32 %v630, %v642
  %v655 = vmax.f32 %v631, %v643
  %v656 = vmax.f32 %v632, %v644
  %v657 = vmax.f32 %v633, %v645
  %v658 = vmax.f32 %v634, %v646
  %v659 = vmax.f32 %v635, %v647
  %v660 = vmax.f32 %v636, %v648
  %v661 = vld [vmem:[%s2] sm:$0xff]
  %v662 = vld [vmem:[%s2 + $0x8] sm:$0xff]
  %v663 = vld [vmem:[%s2 + $0x10] sm:$0xff]
  %v664 = vld [vmem:[%s2 + $0x18] sm:$0xff]
  %v665 = vld [vmem:[%s2 + $0x20] sm:$0xff]
  %v666 = vld [vmem:[%s2 + $0x28] sm:$0xff]
  %v667 = vld [vmem:[%s2 + $0x30] sm:$0xff]
  %v668 = vld [vmem:[%s2 + $0x38] sm:$0xff]
  %v669 = vld [vmem:[%s2 + $0x40] sm:$0xff]
  %v670 = vld [vmem:[%s2 + $0x48] sm:$0xff]
  %v671 = vld [vmem:[%s2 + $0x50] sm:$0xff]
  %v672 = vld [vmem:[%s2 + $0x58] sm:$0xff]
  %v673 = vadd.f32 %v649, %v661
  %v674 = vadd.f32 %v650, %v662
  %v675 = vadd.f32 %v651, %v663
  %v676 = vadd.f32 %v652, %v664
  %v677 = vadd.f32 %v653, %v665
  %v678 = vadd.f32 %v654, %v666
  %v679 = vadd.f32 %v655, %v667
  %v680 = vadd.f32 %v656, %v668
  %v681 = vadd.f32 %v657, %v669
  %v682 = vadd.f32 %v658, %v670
  %v683 = vadd.f32 %v659, %v671
  %v684 = vadd.f32 %v660, %v672
  %v685 = vmax.f32 %v673, 0.0
  %v686 = vmax.f32 %v674, 0.0
  %v687 = vmax.f32 %v675, 0.0
  %v688 = vmax.f32 %v676, 0.0
  %v689 = vmax.f32 %v677, 0.0
  %v690 = vmax.f32 %v678, 0.0
  %v691 = vmax.f32 %v679, 0.0
  %v692 = vmax.f32 %v680, 0.0
  %v693 = vmax.f32 %v681, 0.0
  %v694 = vmax.f32 %v682, 0.0
  %v695 = vmax.f32 %v683, 0.0
  %v696 = vmax.f32 %v684, 0.0
  %697 = vst [vmem:[#allocation2] sm:$0xff] %v685
  %698 = vst [vmem:[#allocation2 + $0x8] sm:$0xff] %v686
  %699 = vst [vmem:[#allocation2 + $0x10] sm:$0xff] %v687
  %700 = vst [vmem:[#allocation2 + $0x18] sm:$0xff] %v688
  %701 = vst [vmem:[#allocation2 + $0x20] sm:$0xff] %v689
  %702 = vst [vmem:[#allocation2 + $0x28] sm:$0xff] %v690
  %703 = vst [vmem:[#allocation2 + $0x30] sm:$0xff] %v691
  %704 = vst [vmem:[#allocation2 + $0x38] sm:$0xff] %v692
  %705 = vst [vmem:[#allocation2 + $0x40] sm:$0xff] %v693
  %706 = vst [vmem:[#allocation2 + $0x48] sm:$0xff] %v694
  %707 = vst [vmem:[#allocation2 + $0x50] sm:$0xff] %v695
  %708 = vst [vmem:[#allocation2 + $0x58] sm:$0xff] %v696
  %v709 = vld [vmem:[%s0 + $0x40] sm:$0xff]
  %v710 = vld [vmem:[%s0 + $0x48] sm:$0xff]
  %v711 = vld [vmem:[%s0 + $0x50] sm:$0xff]
  %v712 = vld [vmem:[%s0 + $0x58] sm:$0xff]
  %v713 = vld [vmem:[%s0 + $0x60] sm:$0xff]
  %v714 = vld [vmem:[%s0 + $0x68] sm:$0xff]
  %v715 = vld [vmem:[%s0 + $0x70] sm:$0xff]
  %v716 = vld [vmem:[%s0 + $0x78] sm:$0xff]
  %v717 = vld [vmem:[%s0 + $0x80] sm:$0xff]
  %v718 = vld [vmem:[%s0 + $0x88] sm:$0xff]
  %v719 = vld [vmem:[%s0 + $0x90] sm:$0xff]
  %v720 = vld [vmem:[%s0 + $0x98] sm:$0xff]
  %v721 = vld [vmem:[%s0 + $0xa0] sm:$0xff]
  %v722 = vld [vmem:[%s0 + $0xa8] sm:$0xff]
  %v723 = vld [vmem:[%s0 + $0xb0] sm:$0xff]
  %v724 = vld [vmem:[%s0 + $0xb8] sm:$0xff]
  %v725 = vld [vmem:[%s0 + $0xc0] sm:$0xff]
  %v726 = vld [vmem:[%s0 + $0xc8] sm:$0xff]
  %v727 = vld [vmem:[%s0 + $0xd0] sm:$0xff]
  %v728 = vld [vmem:[%s0 + $0xd8] sm:$0xff]
  %v729 = vld [vmem:[%s0 + $0xe0] sm:$0xff]
  %v730 = vld [vmem:[%s0 + $0xe8] sm:$0xff]
  %v731 = vld [vmem:[%s0 + $0xf0] sm:$0xff]
  %v732 = vld [vmem:[%s0 + $0xf8] sm:$0xff]
  %v733 = vld [vmem:[%s1] sm:$0xff]
  %v734 = vld [vmem:[%s1 + $0x8] sm:$0xff]
  %v735 = vld [vmem:[%s1 + $0x10] sm:$0xff]
  %v736 = vld [vmem:[%s1 + $0x18] sm:$0xff]
  %v737 = vld [vmem:[%s1 + $0x20] sm:$0xff]
  %v738 = vld [vmem:[%s1 + $0x28] sm:$0xff]
  %v739 = vld [vmem:[%s1 + $0x30] sm:$0xff]
  %v740 = vld [vmem:[%s1 + $0x38] sm:$0xff]
  %v741 = vld [vmem:[%s1 + $0x40] sm:$0xff]
  %v742 = vld [vmem:[%s1 + $0x48] sm:$0xff]
  %v743 = vld [vmem:[%s1 + $0x50] sm:$0xff]
  %v744 = vld [vmem:[%s1 + $0x58] sm:$0xff]
  %v745 = vld [vmem:[%s1 + $0x60] sm:$0xff]
  %v746 = vld [vmem:[%s1 + $0x68] sm:$0xff]
  %v747 = vld [vmem:[%s1 + $0x70] sm:$0xff]
  %v748 = vld [vmem:[%s1 + $0x78] sm:$0xff]
  %v749 = vld [vmem:[%s1 + $0x80] sm:$0xff]
  %v750 = vld [vmem:[%s1 + $0x88] sm:$0xff]
  %v751 = vld [vmem:[%s1 + $0x90] sm:$0xff]
  %v752 = vld [vmem:[%s1 + $0x98] sm:$0xff]
  %v753 = vld [vmem:[%s1 + $0xa0] sm:$0xff]
  %v754 = vld [vmem:[%s1 + $0xa8] sm:$0xff]
  %v755 = vld [vmem:[%s1 + $0xb0] sm:$0xff]
  %v756 = vld [vmem:[%s1 + $0xb8] sm:$0xff]
  %v757 = vld [vmem:[%s1 + $0xc0] sm:$0xff]
  %v758 = vld [vmem:[%s1 + $0xc8] sm:$0xff]
  %v759 = vld [vmem:[%s1 + $0xd0] sm:$0xff]
  %v760 = vld [vmem:[%s1 + $0xd8] sm:$0xff]
  %v761 = vld [vmem:[%s1 + $0xe0] sm:$0xff]
  %v762 = vld [vmem:[%s1 + $0xe8] sm:$0xff]
  %v763 = vld [vmem:[%s1 + $0xf0] sm:$0xff]
  %v764 = vld [vmem:[%s1 + $0xf8] sm:$0xff]
  %v765 = vld [vmem:[%s1 + $0x100] sm:$0xff]
  %v766 = vld [vmem:[%s1 + $0x108] sm:$0xff]
  %v767 = vld [vmem:[%s1 + $0x110] sm:$0xff]
  %v768 = vld [vmem:[%s1 + $0x118] sm:$0xff]
  %v769 = vld [vmem:[%s1 + $0x120] sm:$0xff]
  %v770 = vld [vmem:[%s1 + $0x128] sm:$0xff]
  %v771 = vld [vmem:[%s1 + $0x130] sm:$0xff]
  %v772 = vld [vmem:[%s1 + $0x138] sm:$0xff]
  %v773 = vld [vmem:[%s1 + $0x140] sm:$0xff]
  %v774 = vld [vmem:[%s1 + $0x148] sm:$0xff]
  %v775 = vld [vmem:[%s1 + $0x150] sm:$0xff]
  %v776 = vld [vmem:[%s1 + $0x158] sm:$0xff]
  %v777 = vld [vmem:[%s1 + $0x160] sm:$0xff]
  %v778 = vld [vmem:[%s1 + $0x168] sm:$0xff]
  %v779 = vld [vmem:[%s1 + $0x170] sm:$0xff]
  %v780 = vld [vmem:[%s1 + $0x178] sm:$0xff]
  %v781 = vld [vmem:[%s1 + $0x180] sm:$0xff]
  %v782 = vld [vmem:[%s1 + $0x188] sm:$0xff]
  %v783 = vld [vmem:[%s1 + $0x190] sm:$0xff]
  %v784 = vld [vmem:[%s1 + $0x198] sm:$0xff]
  %v785 = vld [vmem:[%s1 + $0x1a0] sm:$0xff]
  %v786 = vld [vmem:[%s1 + $0x1a8] sm:$0xff]
  %v787 = vld [vmem:[%s1 + $0x1b0] sm:$0xff]
  %v788 = vld [vmem:[%s1 + $0x1b8] sm:$0xff]
  %v789 = vld [vmem:[%s1 + $0x1c0] sm:$0xff]
  %v790 = vld [vmem:[%s1 + $0x1c8] sm:$0xff]
  %v791 = vld [vmem:[%s1 + $0x1d0] sm:$0xff]
  %v792 = vld [vmem:[%s1 + $0x1d8] sm:$0xff]
  %v793 = vld [vmem:[%s1 + $0x1e0] sm:$0xff]
  %v794 = vld [vmem:[%s1 + $0x1e8] sm:$0xff]
  %v795 = vld [vmem:[%s1 + $0x1f0] sm:$0xff]
  %v796 = vld [vmem:[%s1 + $0x1f8] sm:$0xff]
  %v797 = vld [vmem:[%s1 + $0x200] sm:$0xff]
  %v798 = vld [vmem:[%s1 + $0x208] sm:$0xff]
  %v799 = vld [vmem:[%s1 + $0x210] sm:$0xff]
  %v800 = vld [vmem:[%s1 + $0x218] sm:$0xff]
  %v801 = vld [vmem:[%s1 + $0x220] sm:$0xff]
  %v802 = vld [vmem:[%s1 + $0x228] sm:$0xff]
  %v803 = vld [vmem:[%s1 + $0x230] sm:$0xff]
  %v804 = vld [vmem:[%s1 + $0x238] sm:$0xff]
  %v805 = vld [vmem:[%s1 + $0x240] sm:$0xff]
  %v806 = vld [vmem:[%s1 + $0x248] sm:$0xff]
  %v807 = vld [vmem:[%s1 + $0x250] sm:$0xff]
  %v808 = vld [vmem:[%s1 + $0x258] sm:$0xff]
  %v809 = vld [vmem:[%s1 + $0x260] sm:$0xff]
  %v810 = vld [vmem:[%s1 + $0x268] sm:$0xff]
  %v811 = vld [vmem:[%s1 + $0x270] sm:$0xff]
  %v812 = vld [vmem:[%s1 + $0x278] sm:$0xff]
  %v813 = vld [vmem:[%s1 + $0x280] sm:$0xff]
  %v814 = vld [vmem:[%s1 + $0x288] sm:$0xff]
  %v815 = vld [vmem:[%s1 + $0x290] sm:$0xff]
  %v816 = vld [vmem:[%s1 + $0x298] sm:$0xff]
  %v817 = vld [vmem:[%s1 + $0x2a0] sm:$0xff]
  %v818 = vld [vmem:[%s1 + $0x2a8] sm:$0xff]
  %v819 = vld [vmem:[%s1 + $0x2b0] sm:$0xff]
  %v820 = vld [vmem:[%s1 + $0x2b8] sm:$0xff]
  %v821 = vld [vmem:[%s1 + $0x2c0] sm:$0xff]
  %v822 = vld [vmem:[%s1 + $0x2c8] sm:$0xff]
  %v823 = vld [vmem:[%s1 + $0x2d0] sm:$0xff]
  %v824 = vld [vmem:[%s1 + $0x2d8] sm:$0xff]
  %v825 = vld [vmem:[%s1 + $0x2e0] sm:$0xff]
  %v826 = vld [vmem:[%s1 + $0x2e8] sm:$0xff]
  %v827 = vld [vmem:[%s1 + $0x2f0] sm:$0xff]
  %v828 = vld [vmem:[%s1 + $0x2f8] sm:$0xff]
  %v830 = vsel %vm158, %v734, 0
  %v833 = vsel %vm158, %v736, 0
  %v836 = vsel %vm158, %v738, 0
  %v839 = vsel %vm158, %v740, 0
  %v842 = vsel %vm158, %v742, 0
  %v845 = vsel %vm158, %v744, 0
  %v848 = vsel %vm158, %v746, 0
  %v851 = vsel %vm158, %v748, 0
  %v854 = vsel %vm158, %v750, 0
  %v857 = vsel %vm158, %v752, 0
  %v860 = vsel %vm158, %v754, 0
  %v863 = vsel %vm158, %v756, 0
  %v866 = vsel %vm158, %v758, 0
  %v869 = vsel %vm158, %v760, 0
  %v872 = vsel %vm158, %v762, 0
  %v875 = vsel %vm158, %v764, 0
  %v878 = vsel %vm158, %v766, 0
  %v881 = vsel %vm158, %v768, 0
  %v884 = vsel %vm158, %v770, 0
  %v887 = vsel %vm158, %v772, 0
  %v890 = vsel %vm158, %v774, 0
  %v893 = vsel %vm158, %v776, 0
  %v896 = vsel %vm158, %v778, 0
  %v899 = vsel %vm158, %v780, 0
  %v902 = vsel %vm158, %v782, 0
  %v905 = vsel %vm158, %v784, 0
  %v908 = vsel %vm158, %v786, 0
  %v911 = vsel %vm158, %v788, 0
  %v914 = vsel %vm158, %v790, 0
  %v917 = vsel %vm158, %v792, 0
  %v920 = vsel %vm158, %v794, 0
  %v923 = vsel %vm158, %v796, 0
  %v926 = vsel %vm158, %v798, 0
  %v929 = vsel %vm158, %v800, 0
  %v932 = vsel %vm158, %v802, 0
  %v935 = vsel %vm158, %v804, 0
  %v938 = vsel %vm158, %v806, 0
  %v941 = vsel %vm158, %v808, 0
  %v944 = vsel %vm158, %v810, 0
  %v947 = vsel %vm158, %v812, 0
  %v950 = vsel %vm158, %v814, 0
  %v953 = vsel %vm158, %v816, 0
  %v956 = vsel %vm158, %v818, 0
  %v959 = vsel %vm158, %v820, 0
  %v962 = vsel %vm158, %v822, 0
  %v965 = vsel %vm158, %v824, 0
  %v968 = vsel %vm158, %v826, 0
  %v971 = vsel %vm158, %v828, 0
  %973 = vmatpush.msra.mxu0 %v724
  %974 = vmatpush.msra.mxu0 %v723
  %975 = vmatpush.msra.mxu0 %v722
  %976 = vmatpush.msra.mxu0 %v721
  %977 = vmatpush.msra.mxu0 %v720
  %978 = vmatpush.msra.mxu0 %v719
  %979 = vmatpush.msra.mxu0 %v718
  %980 = vmatpush.msra.mxu0 %v717
  %981 = vmatpush.msra.mxu0 %v716
  %982 = vmatpush.msra.mxu0 %v715
  %983 = vmatpush.msra.mxu0 %v714
  %984 = vmatpush.msra.mxu0 %v713
  %985 = vmatpush.msra.mxu0 %v712
  %986 = vmatpush.msra.mxu0 %v711
  %987 = vmatpush.msra.mxu0 %v710
  %988 = vmatpush.msra.mxu0 %v709
  %989 = vmatmul.f32.gmra.mxu0 %v733
  %v990 = vpop.f32.mrf.mxu0
  %v991 = vadd.f32 0.0, %v990
  %992 = vmatmul.f32.gmra.mxu0 %v735
  %v993 = vpop.f32.mrf.mxu0
  %v994 = vadd.f32 0.0, %v993
  %995 = vmatmul.f32.gmra.mxu0 %v737
  %v996 = vpop.f32.mrf.mxu0
  %v997 = vadd.f32 0.0, %v996
  %998 = vmatmul.f32.gmra.mxu0 %v739
  %v999 = vpop.f32.mrf.mxu0
  %v1000 = vadd.f32 0.0, %v999
  %1001 = vmatmul.f32.gmra.mxu0 %v741
  %v1002 = vpop.f32.mrf.mxu0
  %v1003 = vadd.f32 0.0, %v1002
  %1004 = vmatmul.f32.gmra.mxu0 %v743
  %v1005 = vpop.f32.mrf.mxu0
  %v1006 = vadd.f32 0.0, %v1005
  %1007 = vmatmul.f32.gmra.mxu0 %v745
  %v1008 = vpop.f32.mrf.mxu0
  %v1009 = vadd.f32 0.0, %v1008
  %1010 = vmatmul.f32.gmra.mxu0 %v747
  %v1011 = vpop.f32.mrf.mxu0
  %v1012 = vadd.f32 0.0, %v1011
  %1013 = vmatmul.f32.gmra.mxu0 %v749
  %v1014 = vpop.f32.mrf.mxu0
  %v1015 = vadd.f32 0.0, %v1014
  %1016 = vmatmul.f32.gmra.mxu0 %v751
  %v1017 = vpop.f32.mrf.mxu0
  %v1018 = vadd.f32 0.0, %v1017
  %1019 = vmatmul.f32.gmra.mxu0 %v753
  %v1020 = vpop.f32.mrf.mxu0
  %v1021 = vadd.f32 0.0, %v1020
  %1022 = vmatmul.f32.gmra.mxu0 %v755
  %v1023 = vpop.f32.mrf.mxu0
  %v1024 = vadd.f32 0.0, %v1023
  %1025 = vmatmul.f32.gmra.mxu0 %v757
  %v1026 = vpop.f32.mrf.mxu0
  %v1027 = vadd.f32 0.0, %v1026
  %1028 = vmatmul.f32.gmra.mxu0 %v759
  %v1029 = vpop.f32.mrf.mxu0
  %v1030 = vadd.f32 0.0, %v1029
  %1031 = vmatmul.f32.gmra.mxu0 %v761
  %v1032 = vpop.f32.mrf.mxu0
  %v1033 = vadd.f32 0.0, %v1032
  %1034 = vmatmul.f32.gmra.mxu0 %v763
  %v1035 = vpop.f32.mrf.mxu0
  %v1036 = vadd.f32 0.0, %v1035
  %1037 = vmatmul.f32.gmra.mxu0 %v765
  %v1038 = vpop.f32.mrf.mxu0
  %v1039 = vadd.f32 0.0, %v1038
  %1040 = vmatmul.f32.gmra.mxu0 %v767
  %v1041 = vpop.f32.mrf.mxu0
  %v1042 = vadd.f32 0.0, %v1041
  %1043 = vmatmul.f32.gmra.mxu0 %v769
  %v1044 = vpop.f32.mrf.mxu0
  %v1045 = vadd.f32 0.0, %v1044
  %1046 = vmatmul.f32.gmra.mxu0 %v771
  %v1047 = vpop.f32.mrf.mxu0
  %v1048 = vadd.f32 0.0, %v1047
  %1049 = vmatmul.f32.gmra.mxu0 %v773
  %v1050 = vpop.f32.mrf.mxu0
  %v1051 = vadd.f32 0.0, %v1050
  %1052 = vmatmul.f32.gmra.mxu0 %v775
  %v1053 = vpop.f32.mrf.mxu0
  %v1054 = vadd.f32 0.0, %v1053
  %1055 = vmatmul.f32.gmra.mxu0 %v777
  %v1056 = vpop.f32.mrf.mxu0
  %v1057 = vadd.f32 0.0, %v1056
  %1058 = vmatmul.f32.gmra.mxu0 %v779
  %v1059 = vpop.f32.mrf.mxu0
  %v1060 = vadd.f32 0.0, %v1059
  %1061 = vmatmul.f32.gmra.mxu0 %v781
  %v1062 = vpop.f32.mrf.mxu0
  %v1063 = vadd.f32 0.0, %v1062
  %1064 = vmatmul.f32.gmra.mxu0 %v783
  %v1065 = vpop.f32.mrf.mxu0
  %v1066 = vadd.f32 0.0, %v1065
  %1067 = vmatmul.f32.gmra.mxu0 %v785
  %v1068 = vpop.f32.mrf.mxu0
  %v1069 = vadd.f32 0.0, %v1068
  %1070 = vmatmul.f32.gmra.mxu0 %v787
  %v1071 = vpop.f32.mrf.mxu0
  %v1072 = vadd.f32 0.0, %v1071
  %1073 = vmatmul.f32.gmra.mxu0 %v789
  %v1074 = vpop.f32.mrf.mxu0
  %v1075 = vadd.f32 0.0, %v1074
  %1076 = vmatmul.f32.gmra.mxu0 %v791
  %v1077 = vpop.f32.mrf.mxu0
  %v1078 = vadd.f32 0.0, %v1077
  %1079 = vmatmul.f32.gmra.mxu0 %v793
  %v1080 = vpop.f32.mrf.mxu0
  %v1081 = vadd.f32 0.0, %v1080
  %1082 = vmatmul.f32.gmra.mxu0 %v795
  %v1083 = vpop.f32.mrf.mxu0
  %v1084 = vadd.f32 0.0, %v1083
  %1085 = vmatmul.f32.gmra.mxu0 %v797
  %v1086 = vpop.f32.mrf.mxu0
  %v1087 = vadd.f32 0.0, %v1086
  %1088 = vmatmul.f32.gmra.mxu0 %v799
  %v1089 = vpop.f32.mrf.mxu0
  %v1090 = vadd.f32 0.0, %v1089
  %1091 = vmatmul.f32.gmra.mxu0 %v801
  %v1092 = vpop.f32.mrf.mxu0
  %v1093 = vadd.f32 0.0, %v1092
  %1094 = vmatmul.f32.gmra.mxu0 %v803
  %v1095 = vpop.f32.mrf.mxu0
  %v1096 = vadd.f32 0.0, %v1095
  %1097 = vmatmul.f32.gmra.mxu0 %v805
  %v1098 = vpop.f32.mrf.mxu0
  %v1099 = vadd.f32 0.0, %v1098
  %1100 = vmatmul.f32.gmra.mxu0 %v807
  %v1101 = vpop.f32.mrf.mxu0
  %v1102 = vadd.f32 0.0, %v1101
  %1103 = vmatmul.f32.gmra.mxu0 %v809
  %v1104 = vpop.f32.mrf.mxu0
  %v1105 = vadd.f32 0.0, %v1104
  %1106 = vmatmul.f32.gmra.mxu0 %v811
  %v1107 = vpop.f32.mrf.mxu0
  %v1108 = vadd.f32 0.0, %v1107
  %1109 = vmatmul.f32.gmra.mxu0 %v813
  %v1110 = vpop.f32.mrf.mxu0
  %v1111 = vadd.f32 0.0, %v1110
  %1112 = vmatmul.f32.gmra.mxu0 %v815
  %v1113 = vpop.f32.mrf.mxu0
  %v1114 = vadd.f32 0.0, %v1113
  %1115 = vmatmul.f32.gmra.mxu0 %v817
  %v1116 = vpop.f32.mrf.mxu0
  %v1117 = vadd.f32 0.0, %v1116
  %1118 = vmatmul.f32.gmra.mxu0 %v819
  %v1119 = vpop.f32.mrf.mxu0
  %v1120 = vadd.f32 0.0, %v1119
  %1121 = vmatmul.f32.gmra.mxu0 %v821
  %v1122 = vpop.f32.mrf.mxu0
  %v1123 = vadd.f32 0.0, %v1122
  %1124 = vmatmul.f32.gmra.mxu0 %v823
  %v1125 = vpop.f32.mrf.mxu0
  %v1126 = vadd.f32 0.0, %v1125
  %1127 = vmatmul.f32.gmra.mxu0 %v825
  %v1128 = vpop.f32.mrf.mxu0
  %v1129 = vadd.f32 0.0, %v1128
  %1130 = vmatmul.f32.gmra.mxu0 %v827
  %v1131 = vpop.f32.mrf.mxu0
  %v1132 = vadd.f32 0.0, %v1131
  %1133 = vdwg.mxu0
  %1134 = vmatpush.msra.mxu0 0.0
  %1135 = vmatpush.msra.mxu0 0.0
  %1136 = vmatpush.msra.mxu0 0.0
  %1137 = vmatpush.msra.mxu0 0.0
  %1138 = vmatpush.msra.mxu0 0.0
  %1139 = vmatpush.msra.mxu0 0.0
  %1140 = vmatpush.msra.mxu0 0.0
  %1141 = vmatpush.msra.mxu0 0.0
  %1142 = vmatpush.msra.mxu0 %v732
  %1143 = vmatpush.msra.mxu0 %v731
  %1144 = vmatpush.msra.mxu0 %v730
  %1145 = vmatpush.msra.mxu0 %v729
  %1146 = vmatpush.msra.mxu0 %v728
  %1147 = vmatpush.msra.mxu0 %v727
  %1148 = vmatpush.msra.mxu0 %v726
  %1149 = vmatpush.msra.mxu0 %v725
  %1150 = vmatmul.f32.gmra.mxu0 %v830
  %v1151 = vpop.f32.mrf.mxu0
  %v1152 = vadd.f32 %v991, %v1151
  %1153 = vmatmul.f32.gmra.mxu0 %v833
  %v1154 = vpop.f32.mrf.mxu0
  %v1155 = vadd.f32 %v994, %v1154
  %1156 = vmatmul.f32.gmra.mxu0 %v836
  %v1157 = vpop.f32.mrf.mxu0
  %v1158 = vadd.f32 %v997, %v1157
  %1159 = vmatmul.f32.gmra.mxu0 %v839
  %v1160 = vpop.f32.mrf.mxu0
  %v1161 = vadd.f32 %v1000, %v1160
  %1162 = vmatmul.f32.gmra.mxu0 %v842
  %v1163 = vpop.f32.mrf.mxu0
  %v1164 = vadd.f32 %v1003, %v1163
  %1165 = vmatmul.f32.gmra.mxu0 %v845
  %v1166 = vpop.f32.mrf.mxu0
  %v1167 = vadd.f32 %v1006, %v1166
  %1168 = vmatmul.f32.gmra.mxu0 %v848
  %v1169 = vpop.f32.mrf.mxu0
  %v1170 = vadd.f32 %v1009, %v1169
  %1171 = vmatmul.f32.gmra.mxu0 %v851
  %v1172 = vpop.f32.mrf.mxu0
  %v1173 = vadd.f32 %v1012, %v1172
  %1174 = vmatmul.f32.gmra.mxu0 %v854
  %v1175 = vpop.f32.mrf.mxu0
  %v1176 = vadd.f32 %v1015, %v1175
  %1177 = vmatmul.f32.gmra.mxu0 %v857
  %v1178 = vpop.f32.mrf.mxu0
  %v1179 = vadd.f32 %v1018, %v1178
  %1180 = vmatmul.f32.gmra.mxu0 %v860
  %v1181 = vpop.f32.mrf.mxu0
  %v1182 = vadd.f32 %v1021, %v1181
  %1183 = vmatmul.f32.gmra.mxu0 %v863
  %v1184 = vpop.f32.mrf.mxu0
  %v1185 = vadd.f32 %v1024, %v1184
  %1186 = vmatmul.f32.gmra.mxu0 %v866
  %v1187 = vpop.f32.mrf.mxu0
  %v1188 = vadd.f32 %v1027, %v1187
  %1189 = vmatmul.f32.gmra.mxu0 %v869
  %v1190 = vpop.f32.mrf.mxu0
  %v1191 = vadd.f32 %v1030, %v1190
  %1192 = vmatmul.f32.gmra.mxu0 %v872
  %v1193 = vpop.f32.mrf.mxu0
  %v1194 = vadd.f32 %v1033, %v1193
  %1195 = vmatmul.f32.gmra.mxu0 %v875
  %v1196 = vpop.f32.mrf.mxu0
  %v1197 = vadd.f32 %v1036, %v1196
  %1198 = vmatmul.f32.gmra.mxu0 %v878
  %v1199 = vpop.f32.mrf.mxu0
  %v1200 = vadd.f32 %v1039, %v1199
  %1201 = vmatmul.f32.gmra.mxu0 %v881
  %v1202 = vpop.f32.mrf.mxu0
  %v1203 = vadd.f32 %v1042, %v1202
  %1204 = vmatmul.f32.gmra.mxu0 %v884
  %v1205 = vpop.f32.mrf.mxu0
  %v1206 = vadd.f32 %v1045, %v1205
  %1207 = vmatmul.f32.gmra.mxu0 %v887
  %v1208 = vpop.f32.mrf.mxu0
  %v1209 = vadd.f32 %v1048, %v1208
  %1210 = vmatmul.f32.gmra.mxu0 %v890
  %v1211 = vpop.f32.mrf.mxu0
  %v1212 = vadd.f32 %v1051, %v1211
  %1213 = vmatmul.f32.gmra.mxu0 %v893
  %v1214 = vpop.f32.mrf.mxu0
  %v1215 = vadd.f32 %v1054, %v1214
  %1216 = vmatmul.f32.gmra.mxu0 %v896
  %v1217 = vpop.f32.mrf.mxu0
  %v1218 = vadd.f32 %v1057, %v1217
  %1219 = vmatmul.f32.gmra.mxu0 %v899
  %v1220 = vpop.f32.mrf.mxu0
  %v1221 = vadd.f32 %v1060, %v1220
  %1222 = vmatmul.f32.gmra.mxu0 %v902
  %v1223 = vpop.f32.mrf.mxu0
  %v1224 = vadd.f32 %v1063, %v1223
  %1225 = vmatmul.f32.gmra.mxu0 %v905
  %v1226 = vpop.f32.mrf.mxu0
  %v1227 = vadd.f32 %v1066, %v1226
  %1228 = vmatmul.f32.gmra.mxu0 %v908
  %v1229 = vpop.f32.mrf.mxu0
  %v1230 = vadd.f32 %v1069, %v1229
  %1231 = vmatmul.f32.gmra.mxu0 %v911
  %v1232 = vpop.f32.mrf.mxu0
  %v1233 = vadd.f32 %v1072, %v1232
  %1234 = vmatmul.f32.gmra.mxu0 %v914
  %v1235 = vpop.f32.mrf.mxu0
  %v1236 = vadd.f32 %v1075, %v1235
  %1237 = vmatmul.f32.gmra.mxu0 %v917
  %v1238 = vpop.f32.mrf.mxu0
  %v1239 = vadd.f32 %v1078, %v1238
  %1240 = vmatmul.f32.gmra.mxu0 %v920
  %v1241 = vpop.f32.mrf.mxu0
  %v1242 = vadd.f32 %v1081, %v1241
  %1243 = vmatmul.f32.gmra.mxu0 %v923
  %v1244 = vpop.f32.mrf.mxu0
  %v1245 = vadd.f32 %v1084, %v1244
  %1246 = vmatmul.f32.gmra.mxu0 %v926
  %v1247 = vpop.f32.mrf.mxu0
  %v1248 = vadd.f32 %v1087, %v1247
  %1249 = vmatmul.f32.gmra.mxu0 %v929
  %v1250 = vpop.f32.mrf.mxu0
  %v1251 = vadd.f32 %v1090, %v1250
  %1252 = vmatmul.f32.gmra.mxu0 %v932
  %v1253 = vpop.f32.mrf.mxu0
  %v1254 = vadd.f32 %v1093, %v1253
  %1255 = vmatmul.f32.gmra.mxu0 %v935
  %v1256 = vpop.f32.mrf.mxu0
  %v1257 = vadd.f32 %v1096, %v1256
  %1258 = vmatmul.f32.gmra.mxu0 %v938
  %v1259 = vpop.f32.mrf.mxu0
  %v1260 = vadd.f32 %v1099, %v1259
  %1261 = vmatmul.f32.gmra.mxu0 %v941
  %v1262 = vpop.f32.mrf.mxu0
  %v1263 = vadd.f32 %v1102, %v1262
  %1264 = vmatmul.f32.gmra.mxu0 %v944
  %v1265 = vpop.f32.mrf.mxu0
  %v1266 = vadd.f32 %v1105, %v1265
  %1267 = vmatmul.f32.gmra.mxu0 %v947
  %v1268 = vpop.f32.mrf.mxu0
  %v1269 = vadd.f32 %v1108, %v1268
  %1270 = vmatmul.f32.gmra.mxu0 %v950
  %v1271 = vpop.f32.mrf.mxu0
  %v1272 = vadd.f32 %v1111, %v1271
  %1273 = vmatmul.f32.gmra.mxu0 %v953
  %v1274 = vpop.f32.mrf.mxu0
  %v1275 = vadd.f32 %v1114, %v1274
  %1276 = vmatmul.f32.gmra.mxu0 %v956
  %v1277 = vpop.f32.mrf.mxu0
  %v1278 = vadd.f32 %v1117, %v1277
  %1279 = vmatmul.f32.gmra.mxu0 %v959
  %v1280 = vpop.f32.mrf.mxu0
  %v1281 = vadd.f32 %v1120, %v1280
  %1282 = vmatmul.f32.gmra.mxu0 %v962
  %v1283 = vpop.f32.mrf.mxu0
  %v1284 = vadd.f32 %v1123, %v1283
  %1285 = vmatmul.f32.gmra.mxu0 %v965
  %v1286 = vpop.f32.mrf.mxu0
  %v1287 = vadd.f32 %v1126, %v1286
  %1288 = vmatmul.f32.gmra.mxu0 %v968
  %v1289 = vpop.f32.mrf.mxu0
  %v1290 = vadd.f32 %v1129, %v1289
  %1291 = vmatmul.f32.gmra.mxu0 %v971
  %v1292 = vpop.f32.mrf.mxu0
  %v1293 = vadd.f32 %v1132, %v1292
  %1294 = vdwg.mxu0
  %v1295 = vmax.f32 %v1152, %v1224
  %v1296 = vmax.f32 %v1155, %v1227
  %v1297 = vmax.f32 %v1158, %v1230
  %v1298 = vmax.f32 %v1161, %v1233
  %v1299 = vmax.f32 %v1164, %v1236
  %v1300 = vmax.f32 %v1167, %v1239
  %v1301 = vmax.f32 %v1170, %v1242
  %v1302 = vmax.f32 %v1173, %v1245
  %v1303 = vmax.f32 %v1176, %v1248
  %v1304 = vmax.f32 %v1179, %v1251
  %v1305 = vmax.f32 %v1182, %v1254
  %v1306 = vmax.f32 %v1185, %v1257
  %v1307 = vmax.f32 %v1188, %v1260
  %v1308 = vmax.f32 %v1191, %v1263
  %v1309 = vmax.f32 %v1194, %v1266
  %v1310 = vmax.f32 %v1197, %v1269
  %v1311 = vmax.f32 %v1200, %v1272
  %v1312 = vmax.f32 %v1203, %v1275
  %v1313 = vmax.f32 %v1206, %v1278
  %v1314 = vmax.f32 %v1209, %v1281
  %v1315 = vmax.f32 %v1212, %v1284
  %v1316 = vmax.f32 %v1215, %v1287
  %v1317 = vmax.f32 %v1218, %v1290
  %v1318 = vmax.f32 %v1221, %v1293
  %v1319 = vmax.f32 %v1295, %v1307
  %v1320 = vmax.f32 %v1296, %v1308
  %v1321 = vmax.f32 %v1297, %v1309
  %v1322 = vmax.f32 %v1298, %v1310
  %v1323 = vmax.f32 %v1299, %v1311
  %v1324 = vmax.f32 %v1300, %v1312
  %v1325 = vmax.f32 %v1301, %v1313
  %v1326 = vmax.f32 %v1302, %v1314
  %v1327 = vmax.f32 %v1303, %v1315
  %v1328 = vmax.f32 %v1304, %v1316
  %v1329 = vmax.f32 %v1305, %v1317
  %v1330 = vmax.f32 %v1306, %v1318
  %v1331 = vld [vmem:[%s2] sm:$0xff]
  %v1332 = vld [vmem:[%s2 + $0x8] sm:$0xff]
  %v1333 = vld [vmem:[%s2 + $0x10] sm:$0xff]
  %v1334 = vld [vmem:[%s2 + $0x18] sm:$0xff]
  %v1335 = vld [vmem:[%s2 + $0x20] sm:$0xff]
  %v1336 = vld [vmem:[%s2 + $0x28] sm:$0xff]
  %v1337 = vld [vmem:[%s2 + $0x30] sm:$0xff]
  %v1338 = vld [vmem:[%s2 + $0x38] sm:$0xff]
  %v1339 = vld [vmem:[%s2 + $0x40] sm:$0xff]
  %v1340 = vld [vmem:[%s2 + $0x48] sm:$0xff]
  %v1341 = vld [vmem:[%s2 + $0x50] sm:$0xff]
  %v1342 = vld [vmem:[%s2 + $0x58] sm:$0xff]
  %v1343 = vadd.f32 %v1319, %v1331
  %v1344 = vadd.f32 %v1320, %v1332
  %v1345 = vadd.f32 %v1321, %v1333
  %v1346 = vadd.f32 %v1322, %v1334
  %v1347 = vadd.f32 %v1323, %v1335
  %v1348 = vadd.f32 %v1324, %v1336
  %v1349 = vadd.f32 %v1325, %v1337
  %v1350 = vadd.f32 %v1326, %v1338
  %v1351 = vadd.f32 %v1327, %v1339
  %v1352 = vadd.f32 %v1328, %v1340
  %v1353 = vadd.f32 %v1329, %v1341
  %v1354 = vadd.f32 %v1330, %v1342
  %v1355 = vmax.f32 %v1343, 0.0
  %v1356 = vmax.f32 %v1344, 0.0
  %v1357 = vmax.f32 %v1345, 0.0
  %v1358 = vmax.f32 %v1346, 0.0
  %v1359 = vmax.f32 %v1347, 0.0
  %v1360 = vmax.f32 %v1348, 0.0
  %v1361 = vmax.f32 %v1349, 0.0
  %v1362 = vmax.f32 %v1350, 0.0
  %v1363 = vmax.f32 %v1351, 0.0
  %v1364 = vmax.f32 %v1352, 0.0
  %v1365 = vmax.f32 %v1353, 0.0
  %v1366 = vmax.f32 %v1354, 0.0
  %1367 = vst [vmem:[#allocation2 + $0x60] sm:$0xff] %v1355
  %1368 = vst [vmem:[#allocation2 + $0x68] sm:$0xff] %v1356
  %1369 = vst [vmem:[#allocation2 + $0x70] sm:$0xff] %v1357
  %1370 = vst [vmem:[#allocation2 + $0x78] sm:$0xff] %v1358
  %1371 = vst [vmem:[#allocation2 + $0x80] sm:$0xff] %v1359
  %1372 = vst [vmem:[#allocation2 + $0x88] sm:$0xff] %v1360
  %1373 = vst [vmem:[#allocation2 + $0x90] sm:$0xff] %v1361
  %1374 = vst [vmem:[#allocation2 + $0x98] sm:$0xff] %v1362
  %1375 = vst [vmem:[#allocation2 + $0xa0] sm:$0xff] %v1363
  %1376 = vst [vmem:[#allocation2 + $0xa8] sm:$0xff] %v1364
  %1377 = vst [vmem:[#allocation2 + $0xb0] sm:$0xff] %v1365
  %1378 = vst [vmem:[#allocation2 + $0xb8] sm:$0xff] %v1366
  %v1379 = vld [vmem:[%s0 + $0x80] sm:$0xff]
  %v1380 = vld [vmem:[%s0 + $0x88] sm:$0xff]
  %v1381 = vld [vmem:[%s0 + $0x90] sm:$0xff]
  %v1382 = vld [vmem:[%s0 + $0x98] sm:$0xff]
  %v1383 = vld [vmem:[%s0 + $0xa0] sm:$0xff]
  %v1384 = vld [vmem:[%s0 + $0xa8] sm:$0xff]
  %v1385 = vld [vmem:[%s0 + $0xb0] sm:$0xff]
  %v1386 = vld [vmem:[%s0 + $0xb8] sm:$0xff]
  %v1387 = vld [vmem:[%s0 + $0xc0] sm:$0xff]
  %v1388 = vld [vmem:[%s0 + $0xc8] sm:$0xff]
  %v1389 = vld [vmem:[%s0 + $0xd0] sm:$0xff]
  %v1390 = vld [vmem:[%s0 + $0xd8] sm:$0xff]
  %v1391 = vld [vmem:[%s0 + $0xe0] sm:$0xff]
  %v1392 = vld [vmem:[%s0 + $0xe8] sm:$0xff]
  %v1393 = vld [vmem:[%s0 + $0xf0] sm:$0xff]
  %v1394 = vld [vmem:[%s0 + $0xf8] sm:$0xff]
  %v1395 = vld [vmem:[%s0 + $0x100] sm:$0xff]
  %v1396 = vld [vmem:[%s0 + $0x108] sm:$0xff]
  %v1397 = vld [vmem:[%s0 + $0x110] sm:$0xff]
  %v1398 = vld [vmem:[%s0 + $0x118] sm:$0xff]
  %v1399 = vld [vmem:[%s0 + $0x120] sm:$0xff]
  %v1400 = vld [vmem:[%s0 + $0x128] sm:$0xff]
  %v1401 = vld [vmem:[%s0 + $0x130] sm:$0xff]
  %v1402 = vld [vmem:[%s0 + $0x138] sm:$0xff]
  %v1403 = vld [vmem:[%s1] sm:$0xff]
  %v1404 = vld [vmem:[%s1 + $0x8] sm:$0xff]
  %v1405 = vld [vmem:[%s1 + $0x10] sm:$0xff]
  %v1406 = vld [vmem:[%s1 + $0x18] sm:$0xff]
  %v1407 = vld [vmem:[%s1 + $0x20] sm:$0xff]
  %v1408 = vld [vmem:[%s1 + $0x28] sm:$0xff]
  %v1409 = vld [vmem:[%s1 + $0x30] sm:$0xff]
  %v1410 = vld [vmem:[%s1 + $0x38] sm:$0xff]
  %v1411 = vld [vmem:[%s1 + $0x40] sm:$0xff]
  %v1412 = vld [vmem:[%s1 + $0x48] sm:$0xff]
  %v1413 = vld [vmem:[%s1 + $0x50] sm:$0xff]
  %v1414 = vld [vmem:[%s1 + $0x58] sm:$0xff]
  %v1415 = vld [vmem:[%s1 + $0x60] sm:$0xff]
  %v1416 = vld [vmem:[%s1 + $0x68] sm:$0xff]
  %v1417 = vld [vmem:[%s1 + $0x70] sm:$0xff]
  %v1418 = vld [vmem:[%s1 + $0x78] sm:$0xff]
  %v1419 = vld [vmem:[%s1 + $0x80] sm:$0xff]
  %v1420 = vld [vmem:[%s1 + $0x88] sm:$0xff]
  %v1421 = vld [vmem:[%s1 + $0x90] sm:$0xff]
  %v1422 = vld [vmem:[%s1 + $0x98] sm:$0xff]
  %v1423 = vld [vmem:[%s1 + $0xa0] sm:$0xff]
  %v1424 = vld [vmem:[%s1 + $0xa8] sm:$0xff]
  %v1425 = vld [vmem:[%s1 + $0xb0] sm:$0xff]
  %v1426 = vld [vmem:[%s1 + $0xb8] sm:$0xff]
  %v1427 = vld [vmem:[%s1 + $0xc0] sm:$0xff]
  %v1428 = vld [vmem:[%s1 + $0xc8] sm:$0xff]
  %v1429 = vld [vmem:[%s1 + $0xd0] sm:$0xff]
  %v1430 = vld [vmem:[%s1 + $0xd8] sm:$0xff]
  %v1431 = vld [vmem:[%s1 + $0xe0] sm:$0xff]
  %v1432 = vld [vmem:[%s1 + $0xe8] sm:$0xff]
  %v1433 = vld [vmem:[%s1 + $0xf0] sm:$0xff]
  %v1434 = vld [vmem:[%s1 + $0xf8] sm:$0xff]
  %v1435 = vld [vmem:[%s1 + $0x100] sm:$0xff]
  %v1436 = vld [vmem:[%s1 + $0x108] sm:$0xff]
  %v1437 = vld [vmem:[%s1 + $0x110] sm:$0xff]
  %v1438 = vld [vmem:[%s1 + $0x118] sm:$0xff]
  %v1439 = vld [vmem:[%s1 + $0x120] sm:$0xff]
  %v1440 = vld [vmem:[%s1 + $0x128] sm:$0xff]
  %v1441 = vld [vmem:[%s1 + $0x130] sm:$0xff]
  %v1442 = vld [vmem:[%s1 + $0x138] sm:$0xff]
  %v1443 = vld [vmem:[%s1 + $0x140] sm:$0xff]
  %v1444 = vld [vmem:[%s1 + $0x148] sm:$0xff]
  %v1445 = vld [vmem:[%s1 + $0x150] sm:$0xff]
  %v1446 = vld [vmem:[%s1 + $0x158] sm:$0xff]
  %v1447 = vld [vmem:[%s1 + $0x160] sm:$0xff]
  %v1448 = vld [vmem:[%s1 + $0x168] sm:$0xff]
  %v1449 = vld [vmem:[%s1 + $0x170] sm:$0xff]
  %v1450 = vld [vmem:[%s1 + $0x178] sm:$0xff]
  %v1451 = vld [vmem:[%s1 + $0x180] sm:$0xff]
  %v1452 = vld [vmem:[%s1 + $0x188] sm:$0xff]
  %v1453 = vld [vmem:[%s1 + $0x190] sm:$0xff]
  %v1454 = vld [vmem:[%s1 + $0x198] sm:$0xff]
  %v1455 = vld [vmem:[%s1 + $0x1a0] sm:$0xff]
  %v1456 = vld [vmem:[%s1 + $0x1a8] sm:$0xff]
  %v1457 = vld [vmem:[%s1 + $0x1b0] sm:$0xff]
  %v1458 = vld [vmem:[%s1 + $0x1b8] sm:$0xff]
  %v1459 = vld [vmem:[%s1 + $0x1c0] sm:$0xff]
  %v1460 = vld [vmem:[%s1 + $0x1c8] sm:$0xff]
  %v1461 = vld [vmem:[%s1 + $0x1d0] sm:$0xff]
  %v1462 = vld [vmem:[%s1 + $0x1d8] sm:$0xff]
  %v1463 = vld [vmem:[%s1 + $0x1e0] sm:$0xff]
  %v1464 = vld [vmem:[%s1 + $0x1e8] sm:$0xff]
  %v1465 = vld [vmem:[%s1 + $0x1f0] sm:$0xff]
  %v1466 = vld [vmem:[%s1 + $0x1f8] sm:$0xff]
  %v1467 = vld [vmem:[%s1 + $0x200] sm:$0xff]
  %v1468 = vld [vmem:[%s1 + $0x208] sm:$0xff]
  %v1469 = vld [vmem:[%s1 + $0x210] sm:$0xff]
  %v1470 = vld [vmem:[%s1 + $0x218] sm:$0xff]
  %v1471 = vld [vmem:[%s1 + $0x220] sm:$0xff]
  %v1472 = vld [vmem:[%s1 + $0x228] sm:$0xff]
  %v1473 = vld [vmem:[%s1 + $0x230] sm:$0xff]
  %v1474 = vld [vmem:[%s1 + $0x238] sm:$0xff]
  %v1475 = vld [vmem:[%s1 + $0x240] sm:$0xff]
  %v1476 = vld [vmem:[%s1 + $0x248] sm:$0xff]
  %v1477 = vld [vmem:[%s1 + $0x250] sm:$0xff]
  %v1478 = vld [vmem:[%s1 + $0x258] sm:$0xff]
  %v1479 = vld [vmem:[%s1 + $0x260] sm:$0xff]
  %v1480 = vld [vmem:[%s1 + $0x268] sm:$0xff]
  %v1481 = vld [vmem:[%s1 + $0x270] sm:$0xff]
  %v1482 = vld [vmem:[%s1 + $0x278] sm:$0xff]
  %v1483 = vld [vmem:[%s1 + $0x280] sm:$0xff]
  %v1484 = vld [vmem:[%s1 + $0x288] sm:$0xff]
  %v1485 = vld [vmem:[%s1 + $0x290] sm:$0xff]
  %v1486 = vld [vmem:[%s1 + $0x298] sm:$0xff]
  %v1487 = vld [vmem:[%s1 + $0x2a0] sm:$0xff]
  %v1488 = vld [vmem:[%s1 + $0x2a8] sm:$0xff]
  %v1489 = vld [vmem:[%s1 + $0x2b0] sm:$0xff]
  %v1490 = vld [vmem:[%s1 + $0x2b8] sm:$0xff]
  %v1491 = vld [vmem:[%s1 + $0x2c0] sm:$0xff]
  %v1492 = vld [vmem:[%s1 + $0x2c8] sm:$0xff]
  %v1493 = vld [vmem:[%s1 + $0x2d0] sm:$0xff]
  %v1494 = vld [vmem:[%s1 + $0x2d8] sm:$0xff]
  %v1495 = vld [vmem:[%s1 + $0x2e0] sm:$0xff]
  %v1496 = vld [vmem:[%s1 + $0x2e8] sm:$0xff]
  %v1497 = vld [vmem:[%s1 + $0x2f0] sm:$0xff]
  %v1498 = vld [vmem:[%s1 + $0x2f8] sm:$0xff]
  %v1500 = vsel %vm158, %v1404, 0
  %v1503 = vsel %vm158, %v1406, 0
  %v1506 = vsel %vm158, %v1408, 0
  %v1509 = vsel %vm158, %v1410, 0
  %v1512 = vsel %vm158, %v1412, 0
  %v1515 = vsel %vm158, %v1414, 0
  %v1518 = vsel %vm158, %v1416, 0
  %v1521 = vsel %vm158, %v1418, 0
  %v1524 = vsel %vm158, %v1420, 0
  %v1527 = vsel %vm158, %v1422, 0
  %v1530 = vsel %vm158, %v1424, 0
  %v1533 = vsel %vm158, %v1426, 0
  %v1536 = vsel %vm158, %v1428, 0
  %v1539 = vsel %vm158, %v1430, 0
  %v1542 = vsel %vm158, %v1432, 0
  %v1545 = vsel %vm158, %v1434, 0
  %v1548 = vsel %vm158, %v1436, 0
  %v1551 = vsel %vm158, %v1438, 0
  %v1554 = vsel %vm158, %v1440, 0
  %v1557 = vsel %vm158, %v1442, 0
  %v1560 = vsel %vm158, %v1444, 0
  %v1563 = vsel %vm158, %v1446, 0
  %v1566 = vsel %vm158, %v1448, 0
  %v1569 = vsel %vm158, %v1450, 0
  %v1572 = vsel %vm158, %v1452, 0
  %v1575 = vsel %vm158, %v1454, 0
  %v1578 = vsel %vm158, %v1456, 0
  %v1581 = vsel %vm158, %v1458, 0
  %v1584 = vsel %vm158, %v1460, 0
  %v1587 = vsel %vm158, %v1462, 0
  %v1590 = vsel %vm158, %v1464, 0
  %v1593 = vsel %vm158, %v1466, 0
  %v1596 = vsel %vm158, %v1468, 0
  %v1599 = vsel %vm158, %v1470, 0
  %v1602 = vsel %vm158, %v1472, 0
  %v1605 = vsel %vm158, %v1474, 0
  %v1608 = vsel %vm158, %v1476, 0
  %v1611 = vsel %vm158, %v1478, 0
  %v1614 = vsel %vm158, %v1480, 0
  %v1617 = vsel %vm158, %v1482, 0
  %v1620 = vsel %vm158, %v1484, 0
  %v1623 = vsel %vm158, %v1486, 0
  %v1626 = vsel %vm158, %v1488, 0
  %v1629 = vsel %vm158, %v1490, 0
  %v1632 = vsel %vm158, %v1492, 0
  %v1635 = vsel %vm158, %v1494, 0
  %v1638 = vsel %vm158, %v1496, 0
  %v1641 = vsel %vm158, %v1498, 0
  %1643 = vmatpush.msra.mxu0 %v1394
  %1644 = vmatpush.msra.mxu0 %v1393
  %1645 = vmatpush.msra.mxu0 %v1392
  %1646 = vmatpush.msra.mxu0 %v1391
  %1647 = vmatpush.msra.mxu0 %v1390
  %1648 = vmatpush.msra.mxu0 %v1389
  %1649 = vmatpush.msra.mxu0 %v1388
  %1650 = vmatpush.msra.mxu0 %v1387
  %1651 = vmatpush.msra.mxu0 %v1386
  %1652 = vmatpush.msra.mxu0 %v1385
  %1653 = vmatpush.msra.mxu0 %v1384
  %1654 = vmatpush.msra.mxu0 %v1383
  %1655 = vmatpush.msra.mxu0 %v1382
  %1656 = vmatpush.msra.mxu0 %v1381
  %1657 = vmatpush.msra.mxu0 %v1380
  %1658 = vmatpush.msra.mxu0 %v1379
  %1659 = vmatmul.f32.gmra.mxu0 %v1403
  %v1660 = vpop.f32.mrf.mxu0
  %v1661 = vadd.f32 0.0, %v1660
  %1662 = vmatmul.f32.gmra.mxu0 %v1405
  %v1663 = vpop.f32.mrf.mxu0
  %v1664 = vadd.f32 0.0, %v1663
  %1665 = vmatmul.f32.gmra.mxu0 %v1407
  %v1666 = vpop.f32.mrf.mxu0
  %v1667 = vadd.f32 0.0, %v1666
  %1668 = vmatmul.f32.gmra.mxu0 %v1409
  %v1669 = vpop.f32.mrf.mxu0
  %v1670 = vadd.f32 0.0, %v1669
  %1671 = vmatmul.f32.gmra.mxu0 %v1411
  %v1672 = vpop.f32.mrf.mxu0
  %v1673 = vadd.f32 0.0, %v1672
  %1674 = vmatmul.f32.gmra.mxu0 %v1413
  %v1675 = vpop.f32.mrf.mxu0
  %v1676 = vadd.f32 0.0, %v1675
  %1677 = vmatmul.f32.gmra.mxu0 %v1415
  %v1678 = vpop.f32.mrf.mxu0
  %v1679 = vadd.f32 0.0, %v1678
  %1680 = vmatmul.f32.gmra.mxu0 %v1417
  %v1681 = vpop.f32.mrf.mxu0
  %v1682 = vadd.f32 0.0, %v1681
  %1683 = vmatmul.f32.gmra.mxu0 %v1419
  %v1684 = vpop.f32.mrf.mxu0
  %v1685 = vadd.f32 0.0, %v1684
  %1686 = vmatmul.f32.gmra.mxu0 %v1421
  %v1687 = vpop.f32.mrf.mxu0
  %v1688 = vadd.f32 0.0, %v1687
  %1689 = vmatmul.f32.gmra.mxu0 %v1423
  %v1690 = vpop.f32.mrf.mxu0
  %v1691 = vadd.f32 0.0, %v1690
  %1692 = vmatmul.f32.gmra.mxu0 %v1425
  %v1693 = vpop.f32.mrf.mxu0
  %v1694 = vadd.f32 0.0, %v1693
  %1695 = vmatmul.f32.gmra.mxu0 %v1427
  %v1696 = vpop.f32.mrf.mxu0
  %v1697 = vadd.f32 0.0, %v1696
  %1698 = vmatmul.f32.gmra.mxu0 %v1429
  %v1699 = vpop.f32.mrf.mxu0
  %v1700 = vadd.f32 0.0, %v1699
  %1701 = vmatmul.f32.gmra.mxu0 %v1431
  %v1702 = vpop.f32.mrf.mxu0
  %v1703 = vadd.f32 0.0, %v1702
  %1704 = vmatmul.f32.gmra.mxu0 %v1433
  %v1705 = vpop.f32.mrf.mxu0
  %v1706 = vadd.f32 0.0, %v1705
  %1707 = vmatmul.f32.gmra.mxu0 %v1435
  %v1708 = vpop.f32.mrf.mxu0
  %v1709 = vadd.f32 0.0, %v1708
  %1710 = vmatmul.f32.gmra.mxu0 %v1437
  %v1711 = vpop.f32.mrf.mxu0
  %v1712 = vadd.f32 0.0, %v1711
  %1713 = vmatmul.f32.gmra.mxu0 %v1439
  %v1714 = vpop.f32.mrf.mxu0
  %v1715 = vadd.f32 0.0, %v1714
  %1716 = vmatmul.f32.gmra.mxu0 %v1441
  %v1717 = vpop.f32.mrf.mxu0
  %v1718 = vadd.f32 0.0, %v1717
  %1719 = vmatmul.f32.gmra.mxu0 %v1443
  %v1720 = vpop.f32.mrf.mxu0
  %v1721 = vadd.f32 0.0, %v1720
  %1722 = vmatmul.f32.gmra.mxu0 %v1445
  %v1723 = vpop.f32.mrf.mxu0
  %v1724 = vadd.f32 0.0, %v1723
  %1725 = vmatmul.f32.gmra.mxu0 %v1447
  %v1726 = vpop.f32.mrf.mxu0
  %v1727 = vadd.f32 0.0, %v1726
  %1728 = vmatmul.f32.gmra.mxu0 %v1449
  %v1729 = vpop.f32.mrf.mxu0
  %v1730 = vadd.f32 0.0, %v1729
  %1731 = vmatmul.f32.gmra.mxu0 %v1451
  %v1732 = vpop.f32.mrf.mxu0
  %v1733 = vadd.f32 0.0, %v1732
  %1734 = vmatmul.f32.gmra.mxu0 %v1453
  %v1735 = vpop.f32.mrf.mxu0
  %v1736 = vadd.f32 0.0, %v1735
  %1737 = vmatmul.f32.gmra.mxu0 %v1455
  %v1738 = vpop.f32.mrf.mxu0
  %v1739 = vadd.f32 0.0, %v1738
  %1740 = vmatmul.f32.gmra.mxu0 %v1457
  %v1741 = vpop.f32.mrf.mxu0
  %v1742 = vadd.f32 0.0, %v1741
  %1743 = vmatmul.f32.gmra.mxu0 %v1459
  %v1744 = vpop.f32.mrf.mxu0
  %v1745 = vadd.f32 0.0, %v1744
  %1746 = vmatmul.f32.gmra.mxu0 %v1461
  %v1747 = vpop.f32.mrf.mxu0
  %v1748 = vadd.f32 0.0, %v1747
  %1749 = vmatmul.f32.gmra.mxu0 %v1463
  %v1750 = vpop.f32.mrf.mxu0
  %v1751 = vadd.f32 0.0, %v1750
  %1752 = vmatmul.f32.gmra.mxu0 %v1465
  %v1753 = vpop.f32.mrf.mxu0
  %v1754 = vadd.f32 0.0, %v1753
  %1755 = vmatmul.f32.gmra.mxu0 %v1467
  %v1756 = vpop.f32.mrf.mxu0
  %v1757 = vadd.f32 0.0, %v1756
  %1758 = vmatmul.f32.gmra.mxu0 %v1469
  %v1759 = vpop.f32.mrf.mxu0
  %v1760 = vadd.f32 0.0, %v1759
  %1761 = vmatmul.f32.gmra.mxu0 %v1471
  %v1762 = vpop.f32.mrf.mxu0
  %v1763 = vadd.f32 0.0, %v1762
  %1764 = vmatmul.f32.gmra.mxu0 %v1473
  %v1765 = vpop.f32.mrf.mxu0
  %v1766 = vadd.f32 0.0, %v1765
  %1767 = vmatmul.f32.gmra.mxu0 %v1475
  %v1768 = vpop.f32.mrf.mxu0
  %v1769 = vadd.f32 0.0, %v1768
  %1770 = vmatmul.f32.gmra.mxu0 %v1477
  %v1771 = vpop.f32.mrf.mxu0
  %v1772 = vadd.f32 0.0, %v1771
  %1773 = vmatmul.f32.gmra.mxu0 %v1479
  %v1774 = vpop.f32.mrf.mxu0
  %v1775 = vadd.f32 0.0, %v1774
  %1776 = vmatmul.f32.gmra.mxu0 %v1481
  %v1777 = vpop.f32.mrf.mxu0
  %v1778 = vadd.f32 0.0, %v1777
  %1779 = vmatmul.f32.gmra.mxu0 %v1483
  %v1780 = vpop.f32.mrf.mxu0
  %v1781 = vadd.f32 0.0, %v1780
  %1782 = vmatmul.f32.gmra.mxu0 %v1485
  %v1783 = vpop.f32.mrf.mxu0
  %v1784 = vadd.f32 0.0, %v1783
  %1785 = vmatmul.f32.gmra.mxu0 %v1487
  %v1786 = vpop.f32.mrf.mxu0
  %v1787 = vadd.f32 0.0, %v1786
  %1788 = vmatmul.f32.gmra.mxu0 %v1489
  %v1789 = vpop.f32.mrf.mxu0
  %v1790 = vadd.f32 0.0, %v1789
  %1791 = vmatmul.f32.gmra.mxu0 %v1491
  %v1792 = vpop.f32.mrf.mxu0
  %v1793 = vadd.f32 0.0, %v1792
  %1794 = vmatmul.f32.gmra.mxu0 %v1493
  %v1795 = vpop.f32.mrf.mxu0
  %v1796 = vadd.f32 0.0, %v1795
  %1797 = vmatmul.f32.gmra.mxu0 %v1495
  %v1798 = vpop.f32.mrf.mxu0
  %v1799 = vadd.f32 0.0, %v1798
  %1800 = vmatmul.f32.gmra.mxu0 %v1497
  %v1801 = vpop.f32.mrf.mxu0
  %v1802 = vadd.f32 0.0, %v1801
  %1803 = vdwg.mxu0
  %1804 = vmatpush.msra.mxu0 0.0
  %1805 = vmatpush.msra.mxu0 0.0
  %1806 = vmatpush.msra.mxu0 0.0
  %1807 = vmatpush.msra.mxu0 0.0
  %1808 = vmatpush.msra.mxu0 0.0
  %1809 = vmatpush.msra.mxu0 0.0
  %1810 = vmatpush.msra.mxu0 0.0
  %1811 = vmatpush.msra.mxu0 0.0
  %1812 = vmatpush.msra.mxu0 %v1402
  %1813 = vmatpush.msra.mxu0 %v1401
  %1814 = vmatpush.msra.mxu0 %v1400
  %1815 = vmatpush.msra.mxu0 %v1399
  %1816 = vmatpush.msra.mxu0 %v1398
  %1817 = vmatpush.msra.mxu0 %v1397
  %1818 = vmatpush.msra.mxu0 %v1396
  %1819 = vmatpush.msra.mxu0 %v1395
  %1820 = vmatmul.f32.gmra.mxu0 %v1500
  %v1821 = vpop.f32.mrf.mxu0
  %v1822 = vadd.f32 %v1661, %v1821
  %1823 = vmatmul.f32.gmra.mxu0 %v1503
  %v1824 = vpop.f32.mrf.mxu0
  %v1825 = vadd.f32 %v1664, %v1824
  %1826 = vmatmul.f32.gmra.mxu0 %v1506
  %v1827 = vpop.f32.mrf.mxu0
  %v1828 = vadd.f32 %v1667, %v1827
  %1829 = vmatmul.f32.gmra.mxu0 %v1509
  %v1830 = vpop.f32.mrf.mxu0
  %v1831 = vadd.f32 %v1670, %v1830
  %1832 = vmatmul.f32.gmra.mxu0 %v1512
  %v1833 = vpop.f32.mrf.mxu0
  %v1834 = vadd.f32 %v1673, %v1833
  %1835 = vmatmul.f32.gmra.mxu0 %v1515
  %v1836 = vpop.f32.mrf.mxu0
  %v1837 = vadd.f32 %v1676, %v1836
  %1838 = vmatmul.f32.gmra.mxu0 %v1518
  %v1839 = vpop.f32.mrf.mxu0
  %v1840 = vadd.f32 %v1679, %v1839
  %1841 = vmatmul.f32.gmra.mxu0 %v1521
  %v1842 = vpop.f32.mrf.mxu0
  %v1843 = vadd.f32 %v1682, %v1842
  %1844 = vmatmul.f32.gmra.mxu0 %v1524
  %v1845 = vpop.f32.mrf.mxu0
  %v1846 = vadd.f32 %v1685, %v1845
  %1847 = vmatmul.f32.gmra.mxu0 %v1527
  %v1848 = vpop.f32.mrf.mxu0
  %v1849 = vadd.f32 %v1688, %v1848
  %1850 = vmatmul.f32.gmra.mxu0 %v1530
  %v1851 = vpop.f32.mrf.mxu0
  %v1852 = vadd.f32 %v1691, %v1851
  %1853 = vmatmul.f32.gmra.mxu0 %v1533
  %v1854 = vpop.f32.mrf.mxu0
  %v1855 = vadd.f32 %v1694, %v1854
  %1856 = vmatmul.f32.gmra.mxu0 %v1536
  %v1857 = vpop.f32.mrf.mxu0
  %v1858 = vadd.f32 %v1697, %v1857
  %1859 = vmatmul.f32.gmra.mxu0 %v1539
  %v1860 = vpop.f32.mrf.mxu0
  %v1861 = vadd.f32 %v1700, %v1860
  %1862 = vmatmul.f32.gmra.mxu0 %v1542
  %v1863 = vpop.f32.mrf.mxu0
  %v1864 = vadd.f32 %v1703, %v1863
  %1865 = vmatmul.f32.gmra.mxu0 %v1545
  %v1866 = vpop.f32.mrf.mxu0
  %v1867 = vadd.f32 %v1706, %v1866
  %1868 = vmatmul.f32.gmra.mxu0 %v1548
  %v1869 = vpop.f32.mrf.mxu0
  %v1870 = vadd.f32 %v1709, %v1869
  %1871 = vmatmul.f32.gmra.mxu0 %v1551
  %v1872 = vpop.f32.mrf.mxu0
  %v1873 = vadd.f32 %v1712, %v1872
  %1874 = vmatmul.f32.gmra.mxu0 %v1554
  %v1875 = vpop.f32.mrf.mxu0
  %v1876 = vadd.f32 %v1715, %v1875
  %1877 = vmatmul.f32.gmra.mxu0 %v1557
  %v1878 = vpop.f32.mrf.mxu0
  %v1879 = vadd.f32 %v1718, %v1878
  %1880 = vmatmul.f32.gmra.mxu0 %v1560
  %v1881 = vpop.f32.mrf.mxu0
  %v1882 = vadd.f32 %v1721, %v1881
  %1883 = vmatmul.f32.gmra.mxu0 %v1563
  %v1884 = vpop.f32.mrf.mxu0
  %v1885 = vadd.f32 %v1724, %v1884
  %1886 = vmatmul.f32.gmra.mxu0 %v1566
  %v1887 = vpop.f32.mrf.mxu0
  %v1888 = vadd.f32 %v1727, %v1887
  %1889 = vmatmul.f32.gmra.mxu0 %v1569
  %v1890 = vpop.f32.mrf.mxu0
  %v1891 = vadd.f32 %v1730, %v1890
  %1892 = vmatmul.f32.gmra.mxu0 %v1572
  %v1893 = vpop.f32.mrf.mxu0
  %v1894 = vadd.f32 %v1733, %v1893
  %1895 = vmatmul.f32.gmra.mxu0 %v1575
  %v1896 = vpop.f32.mrf.mxu0
  %v1897 = vadd.f32 %v1736, %v1896
  %1898 = vmatmul.f32.gmra.mxu0 %v1578
  %v1899 = vpop.f32.mrf.mxu0
  %v1900 = vadd.f32 %v1739, %v1899
  %1901 = vmatmul.f32.gmra.mxu0 %v1581
  %v1902 = vpop.f32.mrf.mxu0
  %v1903 = vadd.f32 %v1742, %v1902
  %1904 = vmatmul.f32.gmra.mxu0 %v1584
  %v1905 = vpop.f32.mrf.mxu0
  %v1906 = vadd.f32 %v1745, %v1905
  %1907 = vmatmul.f32.gmra.mxu0 %v1587
  %v1908 = vpop.f32.mrf.mxu0
  %v1909 = vadd.f32 %v1748, %v1908
  %1910 = vmatmul.f32.gmra.mxu0 %v1590
  %v1911 = vpop.f32.mrf.mxu0
  %v1912 = vadd.f32 %v1751, %v1911
  %1913 = vmatmul.f32.gmra.mxu0 %v1593
  %v1914 = vpop.f32.mrf.mxu0
  %v1915 = vadd.f32 %v1754, %v1914
  %1916 = vmatmul.f32.gmra.mxu0 %v1596
  %v1917 = vpop.f32.mrf.mxu0
  %v1918 = vadd.f32 %v1757, %v1917
  %1919 = vmatmul.f32.gmra.mxu0 %v1599
  %v1920 = vpop.f32.mrf.mxu0
  %v1921 = vadd.f32 %v1760, %v1920
  %1922 = vmatmul.f32.gmra.mxu0 %v1602
  %v1923 = vpop.f32.mrf.mxu0
  %v1924 = vadd.f32 %v1763, %v1923
  %1925 = vmatmul.f32.gmra.mxu0 %v1605
  %v1926 = vpop.f32.mrf.mxu0
  %v1927 = vadd.f32 %v1766, %v1926
  %1928 = vmatmul.f32.gmra.mxu0 %v1608
  %v1929 = vpop.f32.mrf.mxu0
  %v1930 = vadd.f32 %v1769, %v1929
  %1931 = vmatmul.f32.gmra.mxu0 %v1611
  %v1932 = vpop.f32.mrf.mxu0
  %v1933 = vadd.f32 %v1772, %v1932
  %1934 = vmatmul.f32.gmra.mxu0 %v1614
  %v1935 = vpop.f32.mrf.mxu0
  %v1936 = vadd.f32 %v1775, %v1935
  %1937 = vmatmul.f32.gmra.mxu0 %v1617
  %v1938 = vpop.f32.mrf.mxu0
  %v1939 = vadd.f32 %v1778, %v1938
  %1940 = vmatmul.f32.gmra.mxu0 %v1620
  %v1941 = vpop.f32.mrf.mxu0
  %v1942 = vadd.f32 %v1781, %v1941
  %1943 = vmatmul.f32.gmra.mxu0 %v1623
  %v1944 = vpop.f32.mrf.mxu0
  %v1945 = vadd.f32 %v1784, %v1944
  %1946 = vmatmul.f32.gmra.mxu0 %v1626
  %v1947 = vpop.f32.mrf.mxu0
  %v1948 = vadd.f32 %v1787, %v1947
  %1949 = vmatmul.f32.gmra.mxu0 %v1629
  %v1950 = vpop.f32.mrf.mxu0
  %v1951 = vadd.f32 %v1790, %v1950
  %1952 = vmatmul.f32.gmra.mxu0 %v1632
  %v1953 = vpop.f32.mrf.mxu0
  %v1954 = vadd.f32 %v1793, %v1953
  %1955 = vmatmul.f32.gmra.mxu0 %v1635
  %v1956 = vpop.f32.mrf.mxu0
  %v1957 = vadd.f32 %v1796, %v1956
  %1958 = vmatmul.f32.gmra.mxu0 %v1638
  %v1959 = vpop.f32.mrf.mxu0
  %v1960 = vadd.f32 %v1799, %v1959
  %1961 = vmatmul.f32.gmra.mxu0 %v1641
  %v1962 = vpop.f32.mrf.mxu0
  %v1963 = vadd.f32 %v1802, %v1962
  %1964 = vdwg.mxu0
  %v1965 = vmax.f32 %v1822, %v1894
  %v1966 = vmax.f32 %v1825, %v1897
  %v1967 = vmax.f32 %v1828, %v1900
  %v1968 = vmax.f32 %v1831, %v1903
  %v1969 = vmax.f32 %v1834, %v1906
  %v1970 = vmax.f32 %v1837, %v1909
  %v1971 = vmax.f32 %v1840, %v1912
  %v1972 = vmax.f32 %v1843, %v1915
  %v1973 = vmax.f32 %v1846, %v1918
  %v1974 = vmax.f32 %v1849, %v1921
  %v1975 = vmax.f32 %v1852, %v1924
  %v1976 = vmax.f32 %v1855, %v1927
  %v1977 = vmax.f32 %v1858, %v1930
  %v1978 = vmax.f32 %v1861, %v1933
  %v1979 = vmax.f32 %v1864, %v1936
  %v1980 = vmax.f32 %v1867, %v1939
  %v1981 = vmax.f32 %v1870, %v1942
  %v1982 = vmax.f32 %v1873, %v1945
  %v1983 = vmax.f32 %v1876, %v1948
  %v1984 = vmax.f32 %v1879, %v1951
  %v1985 = vmax.f32 %v1882, %v1954
  %v1986 = vmax.f32 %v1885, %v1957
  %v1987 = vmax.f32 %v1888, %v1960
  %v1988 = vmax.f32 %v1891, %v1963
  %v1989 = vmax.f32 %v1965, %v1977
  %v1990 = vmax.f32 %v1966, %v1978
  %v1991 = vmax.f32 %v1967, %v1979
  %v1992 = vmax.f32 %v1968, %v1980
  %v1993 = vmax.f32 %v1969, %v1981
  %v1994 = vmax.f32 %v1970, %v1982
  %v1995 = vmax.f32 %v1971, %v1983
  %v1996 = vmax.f32 %v1972, %v1984
  %v1997 = vmax.f32 %v1973, %v1985
  %v1998 = vmax.f32 %v1974, %v1986
  %v1999 = vmax.f32 %v1975, %v1987
  %v2000 = vmax.f32 %v1976, %v1988
  %v2001 = vld [vmem:[%s2] sm:$0xff]
  %v2002 = vld [vmem:[%s2 + $0x8] sm:$0xff]
  %v2003 = vld [vmem:[%s2 + $0x10] sm:$0xff]
  %v2004 = vld [vmem:[%s2 + $0x18] sm:$0xff]
  %v2005 = vld [vmem:[%s2 + $0x20] sm:$0xff]
  %v2006 = vld [vmem:[%s2 + $0x28] sm:$0xff]
  %v2007 = vld [vmem:[%s2 + $0x30] sm:$0xff]
  %v2008 = vld [vmem:[%s2 + $0x38] sm:$0xff]
  %v2009 = vld [vmem:[%s2 + $0x40] sm:$0xff]
  %v2010 = vld [vmem:[%s2 + $0x48] sm:$0xff]
  %v2011 = vld [vmem:[%s2 + $0x50] sm:$0xff]
  %v2012 = vld [vmem:[%s2 + $0x58] sm:$0xff]
  %v2013 = vadd.f32 %v1989, %v2001
  %v2014 = vadd.f32 %v1990, %v2002
  %v2015 = vadd.f32 %v1991, %v2003
  %v2016 = vadd.f32 %v1992, %v2004
  %v2017 = vadd.f32 %v1993, %v2005
  %v2018 = vadd.f32 %v1994, %v2006
  %v2019 = vadd.f32 %v1995, %v2007
  %v2020 = vadd.f32 %v1996, %v2008
  %v2021 = vadd.f32 %v1997, %v2009
  %v2022 = vadd.f32 %v1998, %v2010
  %v2023 = vadd.f32 %v1999, %v2011
  %v2024 = vadd.f32 %v2000, %v2012
  %v2025 = vmax.f32 %v2013, 0.0
  %v2026 = vmax.f32 %v2014, 0.0
  %v2027 = vmax.f32 %v2015, 0.0
  %v2028 = vmax.f32 %v2016, 0.0
  %v2029 = vmax.f32 %v2017, 0.0
  %v2030 = vmax.f32 %v2018, 0.0
  %v2031 = vmax.f32 %v2019, 0.0
  %v2032 = vmax.f32 %v2020, 0.0
  %v2033 = vmax.f32 %v2021, 0.0
  %v2034 = vmax.f32 %v2022, 0.0
  %v2035 = vmax.f32 %v2023, 0.0
  %v2036 = vmax.f32 %v2024, 0.0
  %2037 = vst [vmem:[#allocation2 + $0xc0] sm:$0xff] %v2025
  %2038 = vst [vmem:[#allocation2 + $0xc8] sm:$0xff] %v2026
  %2039 = vst [vmem:[#allocation2 + $0xd0] sm:$0xff] %v2027
  %2040 = vst [vmem:[#allocation2 + $0xd8] sm:$0xff] %v2028
  %2041 = vst [vmem:[#allocation2 + $0xe0] sm:$0xff] %v2029
  %2042 = vst [vmem:[#allocation2 + $0xe8] sm:$0xff] %v2030
  %2043 = vst [vmem:[#allocation2 + $0xf0] sm:$0xff] %v2031
  %2044 = vst [vmem:[#allocation2 + $0xf8] sm:$0xff] %v2032
  %2045 = vst [vmem:[#allocation2 + $0x100] sm:$0xff] %v2033
  %2046 = vst [vmem:[#allocation2 + $0x108] sm:$0xff] %v2034
  %2047 = vst [vmem:[#allocation2 + $0x110] sm:$0xff] %v2035
  %2048 = vst [vmem:[#allocation2 + $0x118] sm:$0xff] %v2036
  %v2049 = vld [vmem:[%s0 + $0xc0] sm:$0xff]
  %v2050 = vld [vmem:[%s0 + $0xc8] sm:$0xff]
  %v2051 = vld [vmem:[%s0 + $0xd0] sm:$0xff]
  %v2052 = vld [vmem:[%s0 + $0xd8] sm:$0xff]
  %v2053 = vld [vmem:[%s0 + $0xe0] sm:$0xff]
  %v2054 = vld [vmem:[%s0 + $0xe8] sm:$0xff]
  %v2055 = vld [vmem:[%s0 + $0xf0] sm:$0xff]
  %v2056 = vld [vmem:[%s0 + $0xf8] sm:$0xff]
  %v2057 = vld [vmem:[%s0 + $0x100] sm:$0xff]
  %v2058 = vld [vmem:[%s0 + $0x108] sm:$0xff]
  %v2059 = vld [vmem:[%s0 + $0x110] sm:$0xff]
  %v2060 = vld [vmem:[%s0 + $0x118] sm:$0xff]
  %v2061 = vld [vmem:[%s0 + $0x120] sm:$0xff]
  %v2062 = vld [vmem:[%s0 + $0x128] sm:$0xff]
  %v2063 = vld [vmem:[%s0 + $0x130] sm:$0xff]
  %v2064 = vld [vmem:[%s0 + $0x138] sm:$0xff]
  %v2065 = vld [vmem:[%s0 + $0x140] sm:$0xff]
  %v2066 = vld [vmem:[%s0 + $0x148] sm:$0xff]
  %v2067 = vld [vmem:[%s0 + $0x150] sm:$0xff]
  %v2068 = vld [vmem:[%s0 + $0x158] sm:$0xff]
  %v2069 = vld [vmem:[%s0 + $0x160] sm:$0xff]
  %v2070 = vld [vmem:[%s0 + $0x168] sm:$0xff]
  %v2071 = vld [vmem:[%s0 + $0x170] sm:$0xff]
  %v2072 = vld [vmem:[%s0 + $0x178] sm:$0xff]
  %v2073 = vld [vmem:[%s1] sm:$0xff]
  %v2074 = vld [vmem:[%s1 + $0x8] sm:$0xff]
  %v2075 = vld [vmem:[%s1 + $0x10] sm:$0xff]
  %v2076 = vld [vmem:[%s1 + $0x18] sm:$0xff]
  %v2077 = vld [vmem:[%s1 + $0x20] sm:$0xff]
  %v2078 = vld [vmem:[%s1 + $0x28] sm:$0xff]
  %v2079 = vld [vmem:[%s1 + $0x30] sm:$0xff]
  %v2080 = vld [vmem:[%s1 + $0x38] sm:$0xff]
  %v2081 = vld [vmem:[%s1 + $0x40] sm:$0xff]
  %v2082 = vld [vmem:[%s1 + $0x48] sm:$0xff]
  %v2083 = vld [vmem:[%s1 + $0x50] sm:$0xff]
  %v2084 = vld [vmem:[%s1 + $0x58] sm:$0xff]
  %v2085 = vld [vmem:[%s1 + $0x60] sm:$0xff]
  %v2086 = vld [vmem:[%s1 + $0x68] sm:$0xff]
  %v2087 = vld [vmem:[%s1 + $0x70] sm:$0xff]
  %v2088 = vld [vmem:[%s1 + $0x78] sm:$0xff]
  %v2089 = vld [vmem:[%s1 + $0x80] sm:$0xff]
  %v2090 = vld [vmem:[%s1 + $0x88] sm:$0xff]
  %v2091 = vld [vmem:[%s1 + $0x90] sm:$0xff]
  %v2092 = vld [vmem:[%s1 + $0x98] sm:$0xff]
  %v2093 = vld [vmem:[%s1 + $0xa0] sm:$0xff]
  %v2094 = vld [vmem:[%s1 + $0xa8] sm:$0xff]
  %v2095 = vld [vmem:[%s1 + $0xb0] sm:$0xff]
  %v2096 = vld [vmem:[%s1 + $0xb8] sm:$0xff]
  %v2097 = vld [vmem:[%s1 + $0xc0] sm:$0xff]
  %v2098 = vld [vmem:[%s1 + $0xc8] sm:$0xff]
  %v2099 = vld [vmem:[%s1 + $0xd0] sm:$0xff]
  %v2100 = vld [vmem:[%s1 + $0xd8] sm:$0xff]
  %v2101 = vld [vmem:[%s1 + $0xe0] sm:$0xff]
  %v2102 = vld [vmem:[%s1 + $0xe8] sm:$0xff]
  %v2103 = vld [vmem:[%s1 + $0xf0] sm:$0xff]
  %v2104 = vld [vmem:[%s1 + $0xf8] sm:$0xff]
  %v2105 = vld [vmem:[%s1 + $0x100] sm:$0xff]
  %v2106 = vld [vmem:[%s1 + $0x108] sm:$0xff]
  %v2107 = vld [vmem:[%s1 + $0x110] sm:$0xff]
  %v2108 = vld [vmem:[%s1 + $0x118] sm:$0xff]
  %v2109 = vld [vmem:[%s1 + $0x120] sm:$0xff]
  %v2110 = vld [vmem:[%s1 + $0x128] sm:$0xff]
  %v2111 = vld [vmem:[%s1 + $0x130] sm:$0xff]
  %v2112 = vld [vmem:[%s1 + $0x138] sm:$0xff]
  %v2113 = vld [vmem:[%s1 + $0x140] sm:$0xff]
  %v2114 = vld [vmem:[%s1 + $0x148] sm:$0xff]
  %v2115 = vld [vmem:[%s1 + $0x150] sm:$0xff]
  %v2116 = vld [vmem:[%s1 + $0x158] sm:$0xff]
  %v2117 = vld [vmem:[%s1 + $0x160] sm:$0xff]
  %v2118 = vld [vmem:[%s1 + $0x168] sm:$0xff]
  %v2119 = vld [vmem:[%s1 + $0x170] sm:$0xff]
  %v2120 = vld [vmem:[%s1 + $0x178] sm:$0xff]
  %v2121 = vld [vmem:[%s1 + $0x180] sm:$0xff]
  %v2122 = vld [vmem:[%s1 + $0x188] sm:$0xff]
  %v2123 = vld [vmem:[%s1 + $0x190] sm:$0xff]
  %v2124 = vld [vmem:[%s1 + $0x198] sm:$0xff]
  %v2125 = vld [vmem:[%s1 + $0x1a0] sm:$0xff]
  %v2126 = vld [vmem:[%s1 + $0x1a8] sm:$0xff]
  %v2127 = vld [vmem:[%s1 + $0x1b0] sm:$0xff]
  %v2128 = vld [vmem:[%s1 + $0x1b8] sm:$0xff]
  %v2129 = vld [vmem:[%s1 + $0x1c0] sm:$0xff]
  %v2130 = vld [vmem:[%s1 + $0x1c8] sm:$0xff]
  %v2131 = vld [vmem:[%s1 + $0x1d0] sm:$0xff]
  %v2132 = vld [vmem:[%s1 + $0x1d8] sm:$0xff]
  %v2133 = vld [vmem:[%s1 + $0x1e0] sm:$0xff]
  %v2134 = vld [vmem:[%s1 + $0x1e8] sm:$0xff]
  %v2135 = vld [vmem:[%s1 + $0x1f0] sm:$0xff]
  %v2136 = vld [vmem:[%s1 + $0x1f8] sm:$0xff]
  %v2137 = vld [vmem:[%s1 + $0x200] sm:$0xff]
  %v2138 = vld [vmem:[%s1 + $0x208] sm:$0xff]
  %v2139 = vld [vmem:[%s1 + $0x210] sm:$0xff]
  %v2140 = vld [vmem:[%s1 + $0x218] sm:$0xff]
  %v2141 = vld [vmem:[%s1 + $0x220] sm:$0xff]
  %v2142 = vld [vmem:[%s1 + $0x228] sm:$0xff]
  %v2143 = vld [vmem:[%s1 + $0x230] sm:$0xff]
  %v2144 = vld [vmem:[%s1 + $0x238] sm:$0xff]
  %v2145 = vld [vmem:[%s1 + $0x240] sm:$0xff]
  %v2146 = vld [vmem:[%s1 + $0x248] sm:$0xff]
  %v2147 = vld [vmem:[%s1 + $0x250] sm:$0xff]
  %v2148 = vld [vmem:[%s1 + $0x258] sm:$0xff]
  %v2149 = vld [vmem:[%s1 + $0x260] sm:$0xff]
  %v2150 = vld [vmem:[%s1 + $0x268] sm:$0xff]
  %v2151 = vld [vmem:[%s1 + $0x270] sm:$0xff]
  %v2152 = vld [vmem:[%s1 + $0x278] sm:$0xff]
  %v2153 = vld [vmem:[%s1 + $0x280] sm:$0xff]
  %v2154 = vld [vmem:[%s1 + $0x288] sm:$0xff]
  %v2155 = vld [vmem:[%s1 + $0x290] sm:$0xff]
  %v2156 = vld [vmem:[%s1 + $0x298] sm:$0xff]
  %v2157 = vld [vmem:[%s1 + $0x2a0] sm:$0xff]
  %v2158 = vld [vmem:[%s1 + $0x2a8] sm:$0xff]
  %v2159 = vld [vmem:[%s1 + $0x2b0] sm:$0xff]
  %v2160 = vld [vmem:[%s1 + $0x2b8] sm:$0xff]
  %v2161 = vld [vmem:[%s1 + $0x2c0] sm:$0xff]
  %v2162 = vld [vmem:[%s1 + $0x2c8] sm:$0xff]
  %v2163 = vld [vmem:[%s1 + $0x2d0] sm:$0xff]
  %v2164 = vld [vmem:[%s1 + $0x2d8] sm:$0xff]
  %v2165 = vld [vmem:[%s1 + $0x2e0] sm:$0xff]
  %v2166 = vld [vmem:[%s1 + $0x2e8] sm:$0xff]
  %v2167 = vld [vmem:[%s1 + $0x2f0] sm:$0xff]
  %v2168 = vld [vmem:[%s1 + $0x2f8] sm:$0xff]
  %v2170 = vsel %vm158, %v2074, 0
  %v2173 = vsel %vm158, %v2076, 0
  %v2176 = vsel %vm158, %v2078, 0
  %v2179 = vsel %vm158, %v2080, 0
  %v2182 = vsel %vm158, %v2082, 0
  %v2185 = vsel %vm158, %v2084, 0
  %v2188 = vsel %vm158, %v2086, 0
  %v2191 = vsel %vm158, %v2088, 0
  %v2194 = vsel %vm158, %v2090, 0
  %v2197 = vsel %vm158, %v2092, 0
  %v2200 = vsel %vm158, %v2094, 0
  %v2203 = vsel %vm158, %v2096, 0
  %v2206 = vsel %vm158, %v2098, 0
  %v2209 = vsel %vm158, %v2100, 0
  %v2212 = vsel %vm158, %v2102, 0
  %v2215 = vsel %vm158, %v2104, 0
  %v2218 = vsel %vm158, %v2106, 0
  %v2221 = vsel %vm158, %v2108, 0
  %v2224 = vsel %vm158, %v2110, 0
  %v2227 = vsel %vm158, %v2112, 0
  %v2230 = vsel %vm158, %v2114, 0
  %v2233 = vsel %vm158, %v2116, 0
  %v2236 = vsel %vm158, %v2118, 0
  %v2239 = vsel %vm158, %v2120, 0
  %v2242 = vsel %vm158, %v2122, 0
  %v2245 = vsel %vm158, %v2124, 0
  %v2248 = vsel %vm158, %v2126, 0
  %v2251 = vsel %vm158, %v2128, 0
  %v2254 = vsel %vm158, %v2130, 0
  %v2257 = vsel %vm158, %v2132, 0
  %v2260 = vsel %vm158, %v2134, 0
  %v2263 = vsel %vm158, %v2136, 0
  %v2266 = vsel %vm158, %v2138, 0
  %v2269 = vsel %vm158, %v2140, 0
  %v2272 = vsel %vm158, %v2142, 0
  %v2275 = vsel %vm158, %v2144, 0
  %v2278 = vsel %vm158, %v2146, 0
  %v2281 = vsel %vm158, %v2148, 0
  %v2284 = vsel %vm158, %v2150, 0
  %v2287 = vsel %vm158, %v2152, 0
  %v2290 = vsel %vm158, %v2154, 0
  %v2293 = vsel %vm158, %v2156, 0
  %v2296 = vsel %vm158, %v2158, 0
  %v2299 = vsel %vm158, %v2160, 0
  %v2302 = vsel %vm158, %v2162, 0
  %v2305 = vsel %vm158, %v2164, 0
  %v2308 = vsel %vm158, %v2166, 0
  %v2311 = vsel %vm158, %v2168, 0
  %2313 = vmatpush.msra.mxu0 %v2064
  %2314 = vmatpush.msra.mxu0 %v2063
  %2315 = vmatpush.msra.mxu0 %v2062
  %2316 = vmatpush.msra.mxu0 %v2061
  %2317 = vmatpush.msra.mxu0 %v2060
  %2318 = vmatpush.msra.mxu0 %v2059
  %2319 = vmatpush.msra.mxu0 %v2058
  %2320 = vmatpush.msra.mxu0 %v2057
  %2321 = vmatpush.msra.mxu0 %v2056
  %2322 = vmatpush.msra.mxu0 %v2055
  %2323 = vmatpush.msra.mxu0 %v2054
  %2324 = vmatpush.msra.mxu0 %v2053
  %2325 = vmatpush.msra.mxu0 %v2052
  %2326 = vmatpush.msra.mxu0 %v2051
  %2327 = vmatpush.msra.mxu0 %v2050
  %2328 = vmatpush.msra.mxu0 %v2049
  %2329 = vmatmul.f32.gmra.mxu0 %v2073
  %v2330 = vpop.f32.mrf.mxu0
  %v2331 = vadd.f32 0.0, %v2330
  %2332 = vmatmul.f32.gmra.mxu0 %v2075
  %v2333 = vpop.f32.mrf.mxu0
  %v2334 = vadd.f32 0.0, %v2333
  %2335 = vmatmul.f32.gmra.mxu0 %v2077
  %v2336 = vpop.f32.mrf.mxu0
  %v2337 = vadd.f32 0.0, %v2336
  %2338 = vmatmul.f32.gmra.mxu0 %v2079
  %v2339 = vpop.f32.mrf.mxu0
  %v2340 = vadd.f32 0.0, %v2339
  %2341 = vmatmul.f32.gmra.mxu0 %v2081
  %v2342 = vpop.f32.mrf.mxu0
  %v2343 = vadd.f32 0.0, %v2342
  %2344 = vmatmul.f32.gmra.mxu0 %v2083
  %v2345 = vpop.f32.mrf.mxu0
  %v2346 = vadd.f32 0.0, %v2345
  %2347 = vmatmul.f32.gmra.mxu0 %v2085
  %v2348 = vpop.f32.mrf.mxu0
  %v2349 = vadd.f32 0.0, %v2348
  %2350 = vmatmul.f32.gmra.mxu0 %v2087
  %v2351 = vpop.f32.mrf.mxu0
  %v2352 = vadd.f32 0.0, %v2351
  %2353 = vmatmul.f32.gmra.mxu0 %v2089
  %v2354 = vpop.f32.mrf.mxu0
  %v2355 = vadd.f32 0.0, %v2354
  %2356 = vmatmul.f32.gmra.mxu0 %v2091
  %v2357 = vpop.f32.mrf.mxu0
  %v2358 = vadd.f32 0.0, %v2357
  %2359 = vmatmul.f32.gmra.mxu0 %v2093
  %v2360 = vpop.f32.mrf.mxu0
  %v2361 = vadd.f32 0.0, %v2360
  %2362 = vmatmul.f32.gmra.mxu0 %v2095
  %v2363 = vpop.f32.mrf.mxu0
  %v2364 = vadd.f32 0.0, %v2363
  %2365 = vmatmul.f32.gmra.mxu0 %v2097
  %v2366 = vpop.f32.mrf.mxu0
  %v2367 = vadd.f32 0.0, %v2366
  %2368 = vmatmul.f32.gmra.mxu0 %v2099
  %v2369 = vpop.f32.mrf.mxu0
  %v2370 = vadd.f32 0.0, %v2369
  %2371 = vmatmul.f32.gmra.mxu0 %v2101
  %v2372 = vpop.f32.mrf.mxu0
  %v2373 = vadd.f32 0.0, %v2372
  %2374 = vmatmul.f32.gmra.mxu0 %v2103
  %v2375 = vpop.f32.mrf.mxu0
  %v2376 = vadd.f32 0.0, %v2375
  %2377 = vmatmul.f32.gmra.mxu0 %v2105
  %v2378 = vpop.f32.mrf.mxu0
  %v2379 = vadd.f32 0.0, %v2378
  %2380 = vmatmul.f32.gmra.mxu0 %v2107
  %v2381 = vpop.f32.mrf.mxu0
  %v2382 = vadd.f32 0.0, %v2381
  %2383 = vmatmul.f32.gmra.mxu0 %v2109
  %v2384 = vpop.f32.mrf.mxu0
  %v2385 = vadd.f32 0.0, %v2384
  %2386 = vmatmul.f32.gmra.mxu0 %v2111
  %v2387 = vpop.f32.mrf.mxu0
  %v2388 = vadd.f32 0.0, %v2387
  %2389 = vmatmul.f32.gmra.mxu0 %v2113
  %v2390 = vpop.f32.mrf.mxu0
  %v2391 = vadd.f32 0.0, %v2390
  %2392 = vmatmul.f32.gmra.mxu0 %v2115
  %v2393 = vpop.f32.mrf.mxu0
  %v2394 = vadd.f32 0.0, %v2393
  %2395 = vmatmul.f32.gmra.mxu0 %v2117
  %v2396 = vpop.f32.mrf.mxu0
  %v2397 = vadd.f32 0.0, %v2396
  %2398 = vmatmul.f32.gmra.mxu0 %v2119
  %v2399 = vpop.f32.mrf.mxu0
  %v2400 = vadd.f32 0.0, %v2399
  %2401 = vmatmul.f32.gmra.mxu0 %v2121
  %v2402 = vpop.f32.mrf.mxu0
  %v2403 = vadd.f32 0.0, %v2402
  %2404 = vmatmul.f32.gmra.mxu0 %v2123
  %v2405 = vpop.f32.mrf.mxu0
  %v2406 = vadd.f32 0.0, %v2405
  %2407 = vmatmul.f32.gmra.mxu0 %v2125
  %v2408 = vpop.f32.mrf.mxu0
  %v2409 = vadd.f32 0.0, %v2408
  %2410 = vmatmul.f32.gmra.mxu0 %v2127
  %v2411 = vpop.f32.mrf.mxu0
  %v2412 = vadd.f32 0.0, %v2411
  %2413 = vmatmul.f32.gmra.mxu0 %v2129
  %v2414 = vpop.f32.mrf.mxu0
  %v2415 = vadd.f32 0.0, %v2414
  %2416 = vmatmul.f32.gmra.mxu0 %v2131
  %v2417 = vpop.f32.mrf.mxu0
  %v2418 = vadd.f32 0.0, %v2417
  %2419 = vmatmul.f32.gmra.mxu0 %v2133
  %v2420 = vpop.f32.mrf.mxu0
  %v2421 = vadd.f32 0.0, %v2420
  %2422 = vmatmul.f32.gmra.mxu0 %v2135
  %v2423 = vpop.f32.mrf.mxu0
  %v2424 = vadd.f32 0.0, %v2423
  %2425 = vmatmul.f32.gmra.mxu0 %v2137
  %v2426 = vpop.f32.mrf.mxu0
  %v2427 = vadd.f32 0.0, %v2426
  %2428 = vmatmul.f32.gmra.mxu0 %v2139
  %v2429 = vpop.f32.mrf.mxu0
  %v2430 = vadd.f32 0.0, %v2429
  %2431 = vmatmul.f32.gmra.mxu0 %v2141
  %v2432 = vpop.f32.mrf.mxu0
  %v2433 = vadd.f32 0.0, %v2432
  %2434 = vmatmul.f32.gmra.mxu0 %v2143
  %v2435 = vpop.f32.mrf.mxu0
  %v2436 = vadd.f32 0.0, %v2435
  %2437 = vmatmul.f32.gmra.mxu0 %v2145
  %v2438 = vpop.f32.mrf.mxu0
  %v2439 = vadd.f32 0.0, %v2438
  %2440 = vmatmul.f32.gmra.mxu0 %v2147
  %v2441 = vpop.f32.mrf.mxu0
  %v2442 = vadd.f32 0.0, %v2441
  %2443 = vmatmul.f32.gmra.mxu0 %v2149
  %v2444 = vpop.f32.mrf.mxu0
  %v2445 = vadd.f32 0.0, %v2444
  %2446 = vmatmul.f32.gmra.mxu0 %v2151
  %v2447 = vpop.f32.mrf.mxu0
  %v2448 = vadd.f32 0.0, %v2447
  %2449 = vmatmul.f32.gmra.mxu0 %v2153
  %v2450 = vpop.f32.mrf.mxu0
  %v2451 = vadd.f32 0.0, %v2450
  %2452 = vmatmul.f32.gmra.mxu0 %v2155
  %v2453 = vpop.f32.mrf.mxu0
  %v2454 = vadd.f32 0.0, %v2453
  %2455 = vmatmul.f32.gmra.mxu0 %v2157
  %v2456 = vpop.f32.mrf.mxu0
  %v2457 = vadd.f32 0.0, %v2456
  %2458 = vmatmul.f32.gmra.mxu0 %v2159
  %v2459 = vpop.f32.mrf.mxu0
  %v2460 = vadd.f32 0.0, %v2459
  %2461 = vmatmul.f32.gmra.mxu0 %v2161
  %v2462 = vpop.f32.mrf.mxu0
  %v2463 = vadd.f32 0.0, %v2462
  %2464 = vmatmul.f32.gmra.mxu0 %v2163
  %v2465 = vpop.f32.mrf.mxu0
  %v2466 = vadd.f32 0.0, %v2465
  %2467 = vmatmul.f32.gmra.mxu0 %v2165
  %v2468 = vpop.f32.mrf.mxu0
  %v2469 = vadd.f32 0.0, %v2468
  %2470 = vmatmul.f32.gmra.mxu0 %v2167
  %v2471 = vpop.f32.mrf.mxu0
  %v2472 = vadd.f32 0.0, %v2471
  %2473 = vdwg.mxu0
  %2474 = vmatpush.msra.mxu0 0.0
  %2475 = vmatpush.msra.mxu0 0.0
  %2476 = vmatpush.msra.mxu0 0.0
  %2477 = vmatpush.msra.mxu0 0.0
  %2478 = vmatpush.msra.mxu0 0.0
  %2479 = vmatpush.msra.mxu0 0.0
  %2480 = vmatpush.msra.mxu0 0.0
  %2481 = vmatpush.msra.mxu0 0.0
  %2482 = vmatpush.msra.mxu0 %v2072
  %2483 = vmatpush.msra.mxu0 %v2071
  %2484 = vmatpush.msra.mxu0 %v2070
  %2485 = vmatpush.msra.mxu0 %v2069
  %2486 = vmatpush.msra.mxu0 %v2068
  %2487 = vmatpush.msra.mxu0 %v2067
  %2488 = vmatpush.msra.mxu0 %v2066
  %2489 = vmatpush.msra.mxu0 %v2065
  %2490 = vmatmul.f32.gmra.mxu0 %v2170
  %v2491 = vpop.f32.mrf.mxu0
  %v2492 = vadd.f32 %v2331, %v2491
  %2493 = vmatmul.f32.gmra.mxu0 %v2173
  %v2494 = vpop.f32.mrf.mxu0
  %v2495 = vadd.f32 %v2334, %v2494
  %2496 = vmatmul.f32.gmra.mxu0 %v2176
  %v2497 = vpop.f32.mrf.mxu0
  %v2498 = vadd.f32 %v2337, %v2497
  %2499 = vmatmul.f32.gmra.mxu0 %v2179
  %v2500 = vpop.f32.mrf.mxu0
  %v2501 = vadd.f32 %v2340, %v2500
  %2502 = vmatmul.f32.gmra.mxu0 %v2182
  %v2503 = vpop.f32.mrf.mxu0
  %v2504 = vadd.f32 %v2343, %v2503
  %2505 = vmatmul.f32.gmra.mxu0 %v2185
  %v2506 = vpop.f32.mrf.mxu0
  %v2507 = vadd.f32 %v2346, %v2506
  %2508 = vmatmul.f32.gmra.mxu0 %v2188
  %v2509 = vpop.f32.mrf.mxu0
  %v2510 = vadd.f32 %v2349, %v2509
  %2511 = vmatmul.f32.gmra.mxu0 %v2191
  %v2512 = vpop.f32.mrf.mxu0
  %v2513 = vadd.f32 %v2352, %v2512
  %2514 = vmatmul.f32.gmra.mxu0 %v2194
  %v2515 = vpop.f32.mrf.mxu0
  %v2516 = vadd.f32 %v2355, %v2515
  %2517 = vmatmul.f32.gmra.mxu0 %v2197
  %v2518 = vpop.f32.mrf.mxu0
  %v2519 = vadd.f32 %v2358, %v2518
  %2520 = vmatmul.f32.gmra.mxu0 %v2200
  %v2521 = vpop.f32.mrf.mxu0
  %v2522 = vadd.f32 %v2361, %v2521
  %2523 = vmatmul.f32.gmra.mxu0 %v2203
  %v2524 = vpop.f32.mrf.mxu0
  %v2525 = vadd.f32 %v2364, %v2524
  %2526 = vmatmul.f32.gmra.mxu0 %v2206
  %v2527 = vpop.f32.mrf.mxu0
  %v2528 = vadd.f32 %v2367, %v2527
  %2529 = vmatmul.f32.gmra.mxu0 %v2209
  %v2530 = vpop.f32.mrf.mxu0
  %v2531 = vadd.f32 %v2370, %v2530
  %2532 = vmatmul.f32.gmra.mxu0 %v2212
  %v2533 = vpop.f32.mrf.mxu0
  %v2534 = vadd.f32 %v2373, %v2533
  %2535 = vmatmul.f32.gmra.mxu0 %v2215
  %v2536 = vpop.f32.mrf.mxu0
  %v2537 = vadd.f32 %v2376, %v2536
  %2538 = vmatmul.f32.gmra.mxu0 %v2218
  %v2539 = vpop.f32.mrf.mxu0
  %v2540 = vadd.f32 %v2379, %v2539
  %2541 = vmatmul.f32.gmra.mxu0 %v2221
  %v2542 = vpop.f32.mrf.mxu0
  %v2543 = vadd.f32 %v2382, %v2542
  %2544 = vmatmul.f32.gmra.mxu0 %v2224
  %v2545 = vpop.f32.mrf.mxu0
  %v2546 = vadd.f32 %v2385, %v2545
  %2547 = vmatmul.f32.gmra.mxu0 %v2227
  %v2548 = vpop.f32.mrf.mxu0
  %v2549 = vadd.f32 %v2388, %v2548
  %2550 = vmatmul.f32.gmra.mxu0 %v2230
  %v2551 = vpop.f32.mrf.mxu0
  %v2552 = vadd.f32 %v2391, %v2551
  %2553 = vmatmul.f32.gmra.mxu0 %v2233
  %v2554 = vpop.f32.mrf.mxu0
  %v2555 = vadd.f32 %v2394, %v2554
  %2556 = vmatmul.f32.gmra.mxu0 %v2236
  %v2557 = vpop.f32.mrf.mxu0
  %v2558 = vadd.f32 %v2397, %v2557
  %2559 = vmatmul.f32.gmra.mxu0 %v2239
  %v2560 = vpop.f32.mrf.mxu0
  %v2561 = vadd.f32 %v2400, %v2560
  %2562 = vmatmul.f32.gmra.mxu0 %v2242
  %v2563 = vpop.f32.mrf.mxu0
  %v2564 = vadd.f32 %v2403, %v2563
  %2565 = vmatmul.f32.gmra.mxu0 %v2245
  %v2566 = vpop.f32.mrf.mxu0
  %v2567 = vadd.f32 %v2406, %v2566
  %2568 = vmatmul.f32.gmra.mxu0 %v2248
  %v2569 = vpop.f32.mrf.mxu0
  %v2570 = vadd.f32 %v2409, %v2569
  %2571 = vmatmul.f32.gmra.mxu0 %v2251
  %v2572 = vpop.f32.mrf.mxu0
  %v2573 = vadd.f32 %v2412, %v2572
  %2574 = vmatmul.f32.gmra.mxu0 %v2254
  %v2575 = vpop.f32.mrf.mxu0
  %v2576 = vadd.f32 %v2415, %v2575
  %2577 = vmatmul.f32.gmra.mxu0 %v2257
  %v2578 = vpop.f32.mrf.mxu0
  %v2579 = vadd.f32 %v2418, %v2578
  %2580 = vmatmul.f32.gmra.mxu0 %v2260
  %v2581 = vpop.f32.mrf.mxu0
  %v2582 = vadd.f32 %v2421, %v2581
  %2583 = vmatmul.f32.gmra.mxu0 %v2263
  %v2584 = vpop.f32.mrf.mxu0
  %v2585 = vadd.f32 %v2424, %v2584
  %2586 = vmatmul.f32.gmra.mxu0 %v2266
  %v2587 = vpop.f32.mrf.mxu0
  %v2588 = vadd.f32 %v2427, %v2587
  %2589 = vmatmul.f32.gmra.mxu0 %v2269
  %v2590 = vpop.f32.mrf.mxu0
  %v2591 = vadd.f32 %v2430, %v2590
  %2592 = vmatmul.f32.gmra.mxu0 %v2272
  %v2593 = vpop.f32.mrf.mxu0
  %v2594 = vadd.f32 %v2433, %v2593
  %2595 = vmatmul.f32.gmra.mxu0 %v2275
  %v2596 = vpop.f32.mrf.mxu0
  %v2597 = vadd.f32 %v2436, %v2596
  %2598 = vmatmul.f32.gmra.mxu0 %v2278
  %v2599 = vpop.f32.mrf.mxu0
  %v2600 = vadd.f32 %v2439, %v2599
  %2601 = vmatmul.f32.gmra.mxu0 %v2281
  %v2602 = vpop.f32.mrf.mxu0
  %v2603 = vadd.f32 %v2442, %v2602
  %2604 = vmatmul.f32.gmra.mxu0 %v2284
  %v2605 = vpop.f32.mrf.mxu0
  %v2606 = vadd.f32 %v2445, %v2605
  %2607 = vmatmul.f32.gmra.mxu0 %v2287
  %v2608 = vpop.f32.mrf.mxu0
  %v2609 = vadd.f32 %v2448, %v2608
  %2610 = vmatmul.f32.gmra.mxu0 %v2290
  %v2611 = vpop.f32.mrf.mxu0
  %v2612 = vadd.f32 %v2451, %v2611
  %2613 = vmatmul.f32.gmra.mxu0 %v2293
  %v2614 = vpop.f32.mrf.mxu0
  %v2615 = vadd.f32 %v2454, %v2614
  %2616 = vmatmul.f32.gmra.mxu0 %v2296
  %v2617 = vpop.f32.mrf.mxu0
  %v2618 = vadd.f32 %v2457, %v2617
  %2619 = vmatmul.f32.gmra.mxu0 %v2299
  %v2620 = vpop.f32.mrf.mxu0
  %v2621 = vadd.f32 %v2460, %v2620
  %2622 = vmatmul.f32.gmra.mxu0 %v2302
  %v2623 = vpop.f32.mrf.mxu0
  %v2624 = vadd.f32 %v2463, %v2623
  %2625 = vmatmul.f32.gmra.mxu0 %v2305
  %v2626 = vpop.f32.mrf.mxu0
  %v2627 = vadd.f32 %v2466, %v2626
  %2628 = vmatmul.f32.gmra.mxu0 %v2308
  %v2629 = vpop.f32.mrf.mxu0
  %v2630 = vadd.f32 %v2469, %v2629
  %2631 = vmatmul.f32.gmra.mxu0 %v2311
  %v2632 = vpop.f32.mrf.mxu0
  %v2633 = vadd.f32 %v2472, %v2632
  %2634 = vdwg.mxu0
  %v2635 = vmax.f32 %v2492, %v2564
  %v2636 = vmax.f32 %v2495, %v2567
  %v2637 = vmax.f32 %v2498, %v2570
  %v2638 = vmax.f32 %v2501, %v2573
  %v2639 = vmax.f32 %v2504, %v2576
  %v2640 = vmax.f32 %v2507, %v2579
  %v2641 = vmax.f32 %v2510, %v2582
  %v2642 = vmax.f32 %v2513, %v2585
  %v2643 = vmax.f32 %v2516, %v2588
  %v2644 = vmax.f32 %v2519, %v2591
  %v2645 = vmax.f32 %v2522, %v2594
  %v2646 = vmax.f32 %v2525, %v2597
  %v2647 = vmax.f32 %v2528, %v2600
  %v2648 = vmax.f32 %v2531, %v2603
  %v2649 = vmax.f32 %v2534, %v2606
  %v2650 = vmax.f32 %v2537, %v2609
  %v2651 = vmax.f32 %v2540, %v2612
  %v2652 = vmax.f32 %v2543, %v2615
  %v2653 = vmax.f32 %v2546, %v2618
  %v2654 = vmax.f32 %v2549, %v2621
  %v2655 = vmax.f32 %v2552, %v2624
  %v2656 = vmax.f32 %v2555, %v2627
  %v2657 = vmax.f32 %v2558, %v2630
  %v2658 = vmax.f32 %v2561, %v2633
  %v2659 = vmax.f32 %v2635, %v2647
  %v2660 = vmax.f32 %v2636, %v2648
  %v2661 = vmax.f32 %v2637, %v2649
  %v2662 = vmax.f32 %v2638, %v2650
  %v2663 = vmax.f32 %v2639, %v2651
  %v2664 = vmax.f32 %v2640, %v2652
  %v2665 = vmax.f32 %v2641, %v2653
  %v2666 = vmax.f32 %v2642, %v2654
  %v2667 = vmax.f32 %v2643, %v2655
  %v2668 = vmax.f32 %v2644, %v2656
  %v2669 = vmax.f32 %v2645, %v2657
  %v2670 = vmax.f32 %v2646, %v2658
  %v2671 = vld [vmem:[%s2] sm:$0xff]
  %v2672 = vld [vmem:[%s2 + $0x8] sm:$0xff]
  %v2673 = vld [vmem:[%s2 + $0x10] sm:$0xff]
  %v2674 = vld [vmem:[%s2 + $0x18] sm:$0xff]
  %v2675 = vld [vmem:[%s2 + $0x20] sm:$0xff]
  %v2676 = vld [vmem:[%s2 + $0x28] sm:$0xff]
  %v2677 = vld [vmem:[%s2 + $0x30] sm:$0xff]
  %v2678 = vld [vmem:[%s2 + $0x38] sm:$0xff]
  %v2679 = vld [vmem:[%s2 + $0x40] sm:$0xff]
  %v2680 = vld [vmem:[%s2 + $0x48] sm:$0xff]
  %v2681 = vld [vmem:[%s2 + $0x50] sm:$0xff]
  %v2682 = vld [vmem:[%s2 + $0x58] sm:$0xff]
  %v2683 = vadd.f32 %v2659, %v2671
  %v2684 = vadd.f32 %v2660, %v2672
  %v2685 = vadd.f32 %v2661, %v2673
  %v2686 = vadd.f32 %v2662, %v2674
  %v2687 = vadd.f32 %v2663, %v2675
  %v2688 = vadd.f32 %v2664, %v2676
  %v2689 = vadd.f32 %v2665, %v2677
  %v2690 = vadd.f32 %v2666, %v2678
  %v2691 = vadd.f32 %v2667, %v2679
  %v2692 = vadd.f32 %v2668, %v2680
  %v2693 = vadd.f32 %v2669, %v2681
  %v2694 = vadd.f32 %v2670, %v2682
  %v2695 = vmax.f32 %v2683, 0.0
  %v2696 = vmax.f32 %v2684, 0.0
  %v2697 = vmax.f32 %v2685, 0.0
  %v2698 = vmax.f32 %v2686, 0.0
  %v2699 = vmax.f32 %v2687, 0.0
  %v2700 = vmax.f32 %v2688, 0.0
  %v2701 = vmax.f32 %v2689, 0.0
  %v2702 = vmax.f32 %v2690, 0.0
  %v2703 = vmax.f32 %v2691, 0.0
  %v2704 = vmax.f32 %v2692, 0.0
  %v2705 = vmax.f32 %v2693, 0.0
  %v2706 = vmax.f32 %v2694, 0.0
  %2707 = vst [vmem:[#allocation2 + $0x120] sm:$0xff] %v2695
  %2708 = vst [vmem:[#allocation2 + $0x128] sm:$0xff] %v2696
  %2709 = vst [vmem:[#allocation2 + $0x130] sm:$0xff] %v2697
  %2710 = vst [vmem:[#allocation2 + $0x138] sm:$0xff] %v2698
  %2711 = vst [vmem:[#allocation2 + $0x140] sm:$0xff] %v2699
  %2712 = vst [vmem:[#allocation2 + $0x148] sm:$0xff] %v2700
  %2713 = vst [vmem:[#allocation2 + $0x150] sm:$0xff] %v2701
  %2714 = vst [vmem:[#allocation2 + $0x158] sm:$0xff] %v2702
  %2715 = vst [vmem:[#allocation2 + $0x160] sm:$0xff] %v2703
  %2716 = vst [vmem:[#allocation2 + $0x168] sm:$0xff] %v2704
  %2717 = vst [vmem:[#allocation2 + $0x170] sm:$0xff] %v2705
  %2718 = vst [vmem:[#allocation2 + $0x178] sm:$0xff] %v2706
  %v2719 = vld [vmem:[%s0 + $0x100] sm:$0xff]
  %v2720 = vld [vmem:[%s0 + $0x108] sm:$0xff]
  %v2721 = vld [vmem:[%s0 + $0x110] sm:$0xff]
  %v2722 = vld [vmem:[%s0 + $0x118] sm:$0xff]
  %v2723 = vld [vmem:[%s0 + $0x120] sm:$0xff]
  %v2724 = vld [vmem:[%s0 + $0x128] sm:$0xff]
  %v2725 = vld [vmem:[%s0 + $0x130] sm:$0xff]
  %v2726 = vld [vmem:[%s0 + $0x138] sm:$0xff]
  %v2727 = vld [vmem:[%s0 + $0x140] sm:$0xff]
  %v2728 = vld [vmem:[%s0 + $0x148] sm:$0xff]
  %v2729 = vld [vmem:[%s0 + $0x150] sm:$0xff]
  %v2730 = vld [vmem:[%s0 + $0x158] sm:$0xff]
  %v2731 = vld [vmem:[%s0 + $0x160] sm:$0xff]
  %v2732 = vld [vmem:[%s0 + $0x168] sm:$0xff]
  %v2733 = vld [vmem:[%s0 + $0x170] sm:$0xff]
  %v2734 = vld [vmem:[%s0 + $0x178] sm:$0xff]
  %v2735 = vld [vmem:[%s0 + $0x180] sm:$0xff]
  %v2736 = vld [vmem:[%s0 + $0x188] sm:$0xff]
  %v2737 = vld [vmem:[%s0 + $0x190] sm:$0xff]
  %v2738 = vld [vmem:[%s0 + $0x198] sm:$0xff]
  %v2739 = vld [vmem:[%s0 + $0x1a0] sm:$0xff]
  %v2740 = vld [vmem:[%s0 + $0x1a8] sm:$0xff]
  %v2741 = vld [vmem:[%s0 + $0x1b0] sm:$0xff]
  %v2742 = vld [vmem:[%s0 + $0x1b8] sm:$0xff]
  %v2743 = vld [vmem:[%s1] sm:$0xff]
  %v2744 = vld [vmem:[%s1 + $0x8] sm:$0xff]
  %v2745 = vld [vmem:[%s1 + $0x10] sm:$0xff]
  %v2746 = vld [vmem:[%s1 + $0x18] sm:$0xff]
  %v2747 = vld [vmem:[%s1 + $0x20] sm:$0xff]
  %v2748 = vld [vmem:[%s1 + $0x28] sm:$0xff]
  %v2749 = vld [vmem:[%s1 + $0x30] sm:$0xff]
  %v2750 = vld [vmem:[%s1 + $0x38] sm:$0xff]
  %v2751 = vld [vmem:[%s1 + $0x40] sm:$0xff]
  %v2752 = vld [vmem:[%s1 + $0x48] sm:$0xff]
  %v2753 = vld [vmem:[%s1 + $0x50] sm:$0xff]
  %v2754 = vld [vmem:[%s1 + $0x58] sm:$0xff]
  %v2755 = vld [vmem:[%s1 + $0x60] sm:$0xff]
  %v2756 = vld [vmem:[%s1 + $0x68] sm:$0xff]
  %v2757 = vld [vmem:[%s1 + $0x70] sm:$0xff]
  %v2758 = vld [vmem:[%s1 + $0x78] sm:$0xff]
  %v2759 = vld [vmem:[%s1 + $0x80] sm:$0xff]
  %v2760 = vld [vmem:[%s1 + $0x88] sm:$0xff]
  %v2761 = vld [vmem:[%s1 + $0x90] sm:$0xff]
  %v2762 = vld [vmem:[%s1 + $0x98] sm:$0xff]
  %v2763 = vld [vmem:[%s1 + $0xa0] sm:$0xff]
  %v2764 = vld [vmem:[%s1 + $0xa8] sm:$0xff]
  %v2765 = vld [vmem:[%s1 + $0xb0] sm:$0xff]
  %v2766 = vld [vmem:[%s1 + $0xb8] sm:$0xff]
  %v2767 = vld [vmem:[%s1 + $0xc0] sm:$0xff]
  %v2768 = vld [vmem:[%s1 + $0xc8] sm:$0xff]
  %v2769 = vld [vmem:[%s1 + $0xd0] sm:$0xff]
  %v2770 = vld [vmem:[%s1 + $0xd8] sm:$0xff]
  %v2771 = vld [vmem:[%s1 + $0xe0] sm:$0xff]
  %v2772 = vld [vmem:[%s1 + $0xe8] sm:$0xff]
  %v2773 = vld [vmem:[%s1 + $0xf0] sm:$0xff]
  %v2774 = vld [vmem:[%s1 + $0xf8] sm:$0xff]
  %v2775 = vld [vmem:[%s1 + $0x100] sm:$0xff]
  %v2776 = vld [vmem:[%s1 + $0x108] sm:$0xff]
  %v2777 = vld [vmem:[%s1 + $0x110] sm:$0xff]
  %v2778 = vld [vmem:[%s1 + $0x118] sm:$0xff]
  %v2779 = vld [vmem:[%s1 + $0x120] sm:$0xff]
  %v2780 = vld [vmem:[%s1 + $0x128] sm:$0xff]
  %v2781 = vld [vmem:[%s1 + $0x130] sm:$0xff]
  %v2782 = vld [vmem:[%s1 + $0x138] sm:$0xff]
  %v2783 = vld [vmem:[%s1 + $0x140] sm:$0xff]
  %v2784 = vld [vmem:[%s1 + $0x148] sm:$0xff]
  %v2785 = vld [vmem:[%s1 + $0x150] sm:$0xff]
  %v2786 = vld [vmem:[%s1 + $0x158] sm:$0xff]
  %v2787 = vld [vmem:[%s1 + $0x160] sm:$0xff]
  %v2788 = vld [vmem:[%s1 + $0x168] sm:$0xff]
  %v2789 = vld [vmem:[%s1 + $0x170] sm:$0xff]
  %v2790 = vld [vmem:[%s1 + $0x178] sm:$0xff]
  %v2791 = vld [vmem:[%s1 + $0x180] sm:$0xff]
  %v2792 = vld [vmem:[%s1 + $0x188] sm:$0xff]
  %v2793 = vld [vmem:[%s1 + $0x190] sm:$0xff]
  %v2794 = vld [vmem:[%s1 + $0x198] sm:$0xff]
  %v2795 = vld [vmem:[%s1 + $0x1a0] sm:$0xff]
  %v2796 = vld [vmem:[%s1 + $0x1a8] sm:$0xff]
  %v2797 = vld [vmem:[%s1 + $0x1b0] sm:$0xff]
  %v2798 = vld [vmem:[%s1 + $0x1b8] sm:$0xff]
  %v2799 = vld [vmem:[%s1 + $0x1c0] sm:$0xff]
  %v2800 = vld [vmem:[%s1 + $0x1c8] sm:$0xff]
  %v2801 = vld [vmem:[%s1 + $0x1d0] sm:$0xff]
  %v2802 = vld [vmem:[%s1 + $0x1d8] sm:$0xff]
  %v2803 = vld [vmem:[%s1 + $0x1e0] sm:$0xff]
  %v2804 = vld [vmem:[%s1 + $0x1e8] sm:$0xff]
  %v2805 = vld [vmem:[%s1 + $0x1f0] sm:$0xff]
  %v2806 = vld [vmem:[%s1 + $0x1f8] sm:$0xff]
  %v2807 = vld [vmem:[%s1 + $0x200] sm:$0xff]
  %v2808 = vld [vmem:[%s1 + $0x208] sm:$0xff]
  %v2809 = vld [vmem:[%s1 + $0x210] sm:$0xff]
  %v2810 = vld [vmem:[%s1 + $0x218] sm:$0xff]
  %v2811 = vld [vmem:[%s1 + $0x220] sm:$0xff]
  %v2812 = vld [vmem:[%s1 + $0x228] sm:$0xff]
  %v2813 = vld [vmem:[%s1 + $0x230] sm:$0xff]
  %v2814 = vld [vmem:[%s1 + $0x238] sm:$0xff]
  %v2815 = vld [vmem:[%s1 + $0x240] sm:$0xff]
  %v2816 = vld [vmem:[%s1 + $0x248] sm:$0xff]
  %v2817 = vld [vmem:[%s1 + $0x250] sm:$0xff]
  %v2818 = vld [vmem:[%s1 + $0x258] sm:$0xff]
  %v2819 = vld [vmem:[%s1 + $0x260] sm:$0xff]
  %v2820 = vld [vmem:[%s1 + $0x268] sm:$0xff]
  %v2821 = vld [vmem:[%s1 + $0x270] sm:$0xff]
  %v2822 = vld [vmem:[%s1 + $0x278] sm:$0xff]
  %v2823 = vld [vmem:[%s1 + $0x280] sm:$0xff]
  %v2824 = vld [vmem:[%s1 + $0x288] sm:$0xff]
  %v2825 = vld [vmem:[%s1 + $0x290] sm:$0xff]
  %v2826 = vld [vmem:[%s1 + $0x298] sm:$0xff]
  %v2827 = vld [vmem:[%s1 + $0x2a0] sm:$0xff]
  %v2828 = vld [vmem:[%s1 + $0x2a8] sm:$0xff]
  %v2829 = vld [vmem:[%s1 + $0x2b0] sm:$0xff]
  %v2830 = vld [vmem:[%s1 + $0x2b8] sm:$0xff]
  %v2831 = vld [vmem:[%s1 + $0x2c0] sm:$0xff]
  %v2832 = vld [vmem:[%s1 + $0x2c8] sm:$0xff]
  %v2833 = vld [vmem:[%s1 + $0x2d0] sm:$0xff]
  %v2834 = vld [vmem:[%s1 + $0x2d8] sm:$0xff]
  %v2835 = vld [vmem:[%s1 + $0x2e0] sm:$0xff]
  %v2836 = vld [vmem:[%s1 + $0x2e8] sm:$0xff]
  %v2837 = vld [vmem:[%s1 + $0x2f0] sm:$0xff]
  %v2838 = vld [vmem:[%s1 + $0x2f8] sm:$0xff]
  %v2840 = vsel %vm158, %v2744, 0
  %v2843 = vsel %vm158, %v2746, 0
  %v2846 = vsel %vm158, %v2748, 0
  %v2849 = vsel %vm158, %v2750, 0
  %v2852 = vsel %vm158, %v2752, 0
  %v2855 = vsel %vm158, %v2754, 0
  %v2858 = vsel %vm158, %v2756, 0
  %v2861 = vsel %vm158, %v2758, 0
  %v2864 = vsel %vm158, %v2760, 0
  %v2867 = vsel %vm158, %v2762, 0
  %v2870 = vsel %vm158, %v2764, 0
  %v2873 = vsel %vm158, %v2766, 0
  %v2876 = vsel %vm158, %v2768, 0
  %v2879 = vsel %vm158, %v2770, 0
  %v2882 = vsel %vm158, %v2772, 0
  %v2885 = vsel %vm158, %v2774, 0
  %v2888 = vsel %vm158, %v2776, 0
  %v2891 = vsel %vm158, %v2778, 0
  %v2894 = vsel %vm158, %v2780, 0
  %v2897 = vsel %vm158, %v2782, 0
  %v2900 = vsel %vm158, %v2784, 0
  %v2903 = vsel %vm158, %v2786, 0
  %v2906 = vsel %vm158, %v2788, 0
  %v2909 = vsel %vm158, %v2790, 0
  %v2912 = vsel %vm158, %v2792, 0
  %v2915 = vsel %vm158, %v2794, 0
  %v2918 = vsel %vm158, %v2796, 0
  %v2921 = vsel %vm158, %v2798, 0
  %v2924 = vsel %vm158, %v2800, 0
  %v2927 = vsel %vm158, %v2802, 0
  %v2930 = vsel %vm158, %v2804, 0
  %v2933 = vsel %vm158, %v2806, 0
  %v2936 = vsel %vm158, %v2808, 0
  %v2939 = vsel %vm158, %v2810, 0
  %v2942 = vsel %vm158, %v2812, 0
  %v2945 = vsel %vm158, %v2814, 0
  %v2948 = vsel %vm158, %v2816, 0
  %v2951 = vsel %vm158, %v2818, 0
  %v2954 = vsel %vm158, %v2820, 0
  %v2957 = vsel %vm158, %v2822, 0
  %v2960 = vsel %vm158, %v2824, 0
  %v2963 = vsel %vm158, %v2826, 0
  %v2966 = vsel %vm158, %v2828, 0
  %v2969 = vsel %vm158, %v2830, 0
  %v2972 = vsel %vm158, %v2832, 0
  %v2975 = vsel %vm158, %v2834, 0
  %v2978 = vsel %vm158, %v2836, 0
  %v2981 = vsel %vm158, %v2838, 0
  %2983 = vmatpush.msra.mxu0 %v2734
  %2984 = vmatpush.msra.mxu0 %v2733
  %2985 = vmatpush.msra.mxu0 %v2732
  %2986 = vmatpush.msra.mxu0 %v2731
  %2987 = vmatpush.msra.mxu0 %v2730
  %2988 = vmatpush.msra.mxu0 %v2729
  %2989 = vmatpush.msra.mxu0 %v2728
  %2990 = vmatpush.msra.mxu0 %v2727
  %2991 = vmatpush.msra.mxu0 %v2726
  %2992 = vmatpush.msra.mxu0 %v2725
  %2993 = vmatpush.msra.mxu0 %v2724
  %2994 = vmatpush.msra.mxu0 %v2723
  %2995 = vmatpush.msra.mxu0 %v2722
  %2996 = vmatpush.msra.mxu0 %v2721
  %2997 = vmatpush.msra.mxu0 %v2720
  %2998 = vmatpush.msra.mxu0 %v2719
  %2999 = vmatmul.f32.gmra.mxu0 %v2743
  %v3000 = vpop.f32.mrf.mxu0
  %v3001 = vadd.f32 0.0, %v3000
  %3002 = vmatmul.f32.gmra.mxu0 %v2745
  %v3003 = vpop.f32.mrf.mxu0
  %v3004 = vadd.f32 0.0, %v3003
  %3005 = vmatmul.f32.gmra.mxu0 %v2747
  %v3006 = vpop.f32.mrf.mxu0
  %v3007 = vadd.f32 0.0, %v3006
  %3008 = vmatmul.f32.gmra.mxu0 %v2749
  %v3009 = vpop.f32.mrf.mxu0
  %v3010 = vadd.f32 0.0, %v3009
  %3011 = vmatmul.f32.gmra.mxu0 %v2751
  %v3012 = vpop.f32.mrf.mxu0
  %v3013 = vadd.f32 0.0, %v3012
  %3014 = vmatmul.f32.gmra.mxu0 %v2753
  %v3015 = vpop.f32.mrf.mxu0
  %v3016 = vadd.f32 0.0, %v3015
  %3017 = vmatmul.f32.gmra.mxu0 %v2755
  %v3018 = vpop.f32.mrf.mxu0
  %v3019 = vadd.f32 0.0, %v3018
  %3020 = vmatmul.f32.gmra.mxu0 %v2757
  %v3021 = vpop.f32.mrf.mxu0
  %v3022 = vadd.f32 0.0, %v3021
  %3023 = vmatmul.f32.gmra.mxu0 %v2759
  %v3024 = vpop.f32.mrf.mxu0
  %v3025 = vadd.f32 0.0, %v3024
  %3026 = vmatmul.f32.gmra.mxu0 %v2761
  %v3027 = vpop.f32.mrf.mxu0
  %v3028 = vadd.f32 0.0, %v3027
  %3029 = vmatmul.f32.gmra.mxu0 %v2763
  %v3030 = vpop.f32.mrf.mxu0
  %v3031 = vadd.f32 0.0, %v3030
  %3032 = vmatmul.f32.gmra.mxu0 %v2765
  %v3033 = vpop.f32.mrf.mxu0
  %v3034 = vadd.f32 0.0, %v3033
  %3035 = vmatmul.f32.gmra.mxu0 %v2767
  %v3036 = vpop.f32.mrf.mxu0
  %v3037 = vadd.f32 0.0, %v3036
  %3038 = vmatmul.f32.gmra.mxu0 %v2769
  %v3039 = vpop.f32.mrf.mxu0
  %v3040 = vadd.f32 0.0, %v3039
  %3041 = vmatmul.f32.gmra.mxu0 %v2771
  %v3042 = vpop.f32.mrf.mxu0
  %v3043 = vadd.f32 0.0, %v3042
  %3044 = vmatmul.f32.gmra.mxu0 %v2773
  %v3045 = vpop.f32.mrf.mxu0
  %v3046 = vadd.f32 0.0, %v3045
  %3047 = vmatmul.f32.gmra.mxu0 %v2775
  %v3048 = vpop.f32.mrf.mxu0
  %v3049 = vadd.f32 0.0, %v3048
  %3050 = vmatmul.f32.gmra.mxu0 %v2777
  %v3051 = vpop.f32.mrf.mxu0
  %v3052 = vadd.f32 0.0, %v3051
  %3053 = vmatmul.f32.gmra.mxu0 %v2779
  %v3054 = vpop.f32.mrf.mxu0
  %v3055 = vadd.f32 0.0, %v3054
  %3056 = vmatmul.f32.gmra.mxu0 %v2781
  %v3057 = vpop.f32.mrf.mxu0
  %v3058 = vadd.f32 0.0, %v3057
  %3059 = vmatmul.f32.gmra.mxu0 %v2783
  %v3060 = vpop.f32.mrf.mxu0
  %v3061 = vadd.f32 0.0, %v3060
  %3062 = vmatmul.f32.gmra.mxu0 %v2785
  %v3063 = vpop.f32.mrf.mxu0
  %v3064 = vadd.f32 0.0, %v3063
  %3065 = vmatmul.f32.gmra.mxu0 %v2787
  %v3066 = vpop.f32.mrf.mxu0
  %v3067 = vadd.f32 0.0, %v3066
  %3068 = vmatmul.f32.gmra.mxu0 %v2789
  %v3069 = vpop.f32.mrf.mxu0
  %v3070 = vadd.f32 0.0, %v3069
  %3071 = vmatmul.f32.gmra.mxu0 %v2791
  %v3072 = vpop.f32.mrf.mxu0
  %v3073 = vadd.f32 0.0, %v3072
  %3074 = vmatmul.f32.gmra.mxu0 %v2793
  %v3075 = vpop.f32.mrf.mxu0
  %v3076 = vadd.f32 0.0, %v3075
  %3077 = vmatmul.f32.gmra.mxu0 %v2795
  %v3078 = vpop.f32.mrf.mxu0
  %v3079 = vadd.f32 0.0, %v3078
  %3080 = vmatmul.f32.gmra.mxu0 %v2797
  %v3081 = vpop.f32.mrf.mxu0
  %v3082 = vadd.f32 0.0, %v3081
  %3083 = vmatmul.f32.gmra.mxu0 %v2799
  %v3084 = vpop.f32.mrf.mxu0
  %v3085 = vadd.f32 0.0, %v3084
  %3086 = vmatmul.f32.gmra.mxu0 %v2801
  %v3087 = vpop.f32.mrf.mxu0
  %v3088 = vadd.f32 0.0, %v3087
  %3089 = vmatmul.f32.gmra.mxu0 %v2803
  %v3090 = vpop.f32.mrf.mxu0
  %v3091 = vadd.f32 0.0, %v3090
  %3092 = vmatmul.f32.gmra.mxu0 %v2805
  %v3093 = vpop.f32.mrf.mxu0
  %v3094 = vadd.f32 0.0, %v3093
  %3095 = vmatmul.f32.gmra.mxu0 %v2807
  %v3096 = vpop.f32.mrf.mxu0
  %v3097 = vadd.f32 0.0, %v3096
  %3098 = vmatmul.f32.gmra.mxu0 %v2809
  %v3099 = vpop.f32.mrf.mxu0
  %v3100 = vadd.f32 0.0, %v3099
  %3101 = vmatmul.f32.gmra.mxu0 %v2811
  %v3102 = vpop.f32.mrf.mxu0
  %v3103 = vadd.f32 0.0, %v3102
  %3104 = vmatmul.f32.gmra.mxu0 %v2813
  %v3105 = vpop.f32.mrf.mxu0
  %v3106 = vadd.f32 0.0, %v3105
  %3107 = vmatmul.f32.gmra.mxu0 %v2815
  %v3108 = vpop.f32.mrf.mxu0
  %v3109 = vadd.f32 0.0, %v3108
  %3110 = vmatmul.f32.gmra.mxu0 %v2817
  %v3111 = vpop.f32.mrf.mxu0
  %v3112 = vadd.f32 0.0, %v3111
  %3113 = vmatmul.f32.gmra.mxu0 %v2819
  %v3114 = vpop.f32.mrf.mxu0
  %v3115 = vadd.f32 0.0, %v3114
  %3116 = vmatmul.f32.gmra.mxu0 %v2821
  %v3117 = vpop.f32.mrf.mxu0
  %v3118 = vadd.f32 0.0, %v3117
  %3119 = vmatmul.f32.gmra.mxu0 %v2823
  %v3120 = vpop.f32.mrf.mxu0
  %v3121 = vadd.f32 0.0, %v3120
  %3122 = vmatmul.f32.gmra.mxu0 %v2825
  %v3123 = vpop.f32.mrf.mxu0
  %v3124 = vadd.f32 0.0, %v3123
  %3125 = vmatmul.f32.gmra.mxu0 %v2827
  %v3126 = vpop.f32.mrf.mxu0
  %v3127 = vadd.f32 0.0, %v3126
  %3128 = vmatmul.f32.gmra.mxu0 %v2829
  %v3129 = vpop.f32.mrf.mxu0
  %v3130 = vadd.f32 0.0, %v3129
  %3131 = vmatmul.f32.gmra.mxu0 %v2831
  %v3132 = vpop.f32.mrf.mxu0
  %v3133 = vadd.f32 0.0, %v3132
  %3134 = vmatmul.f32.gmra.mxu0 %v2833
  %v3135 = vpop.f32.mrf.mxu0
  %v3136 = vadd.f32 0.0, %v3135
  %3137 = vmatmul.f32.gmra.mxu0 %v2835
  %v3138 = vpop.f32.mrf.mxu0
  %v3139 = vadd.f32 0.0, %v3138
  %3140 = vmatmul.f32.gmra.mxu0 %v2837
  %v3141 = vpop.f32.mrf.mxu0
  %v3142 = vadd.f32 0.0, %v3141
  %3143 = vdwg.mxu0
  %3144 = vmatpush.msra.mxu0 0.0
  %3145 = vmatpush.msra.mxu0 0.0
  %3146 = vmatpush.msra.mxu0 0.0
  %3147 = vmatpush.msra.mxu0 0.0
  %3148 = vmatpush.msra.mxu0 0.0
  %3149 = vmatpush.msra.mxu0 0.0
  %3150 = vmatpush.msra.mxu0 0.0
  %3151 = vmatpush.msra.mxu0 0.0
  %3152 = vmatpush.msra.mxu0 %v2742
  %3153 = vmatpush.msra.mxu0 %v2741
  %3154 = vmatpush.msra.mxu0 %v2740
  %3155 = vmatpush.msra.mxu0 %v2739
  %3156 = vmatpush.msra.mxu0 %v2738
  %3157 = vmatpush.msra.mxu0 %v2737
  %3158 = vmatpush.msra.mxu0 %v2736
  %3159 = vmatpush.msra.mxu0 %v2735
  %3160 = vmatmul.f32.gmra.mxu0 %v2840
  %v3161 = vpop.f32.mrf.mxu0
  %v3162 = vadd.f32 %v3001, %v3161
  %3163 = vmatmul.f32.gmra.mxu0 %v2843
  %v3164 = vpop.f32.mrf.mxu0
  %v3165 = vadd.f32 %v3004, %v3164
  %3166 = vmatmul.f32.gmra.mxu0 %v2846
  %v3167 = vpop.f32.mrf.mxu0
  %v3168 = vadd.f32 %v3007, %v3167
  %3169 = vmatmul.f32.gmra.mxu0 %v2849
  %v3170 = vpop.f32.mrf.mxu0
  %v3171 = vadd.f32 %v3010, %v3170
  %3172 = vmatmul.f32.gmra.mxu0 %v2852
  %v3173 = vpop.f32.mrf.mxu0
  %v3174 = vadd.f32 %v3013, %v3173
  %3175 = vmatmul.f32.gmra.mxu0 %v2855
  %v3176 = vpop.f32.mrf.mxu0
  %v3177 = vadd.f32 %v3016, %v3176
  %3178 = vmatmul.f32.gmra.mxu0 %v2858
  %v3179 = vpop.f32.mrf.mxu0
  %v3180 = vadd.f32 %v3019, %v3179
  %3181 = vmatmul.f32.gmra.mxu0 %v2861
  %v3182 = vpop.f32.mrf.mxu0
  %v3183 = vadd.f32 %v3022, %v3182
  %3184 = vmatmul.f32.gmra.mxu0 %v2864
  %v3185 = vpop.f32.mrf.mxu0
  %v3186 = vadd.f32 %v3025, %v3185
  %3187 = vmatmul.f32.gmra.mxu0 %v2867
  %v3188 = vpop.f32.mrf.mxu0
  %v3189 = vadd.f32 %v3028, %v3188
  %3190 = vmatmul.f32.gmra.mxu0 %v2870
  %v3191 = vpop.f32.mrf.mxu0
  %v3192 = vadd.f32 %v3031, %v3191
  %3193 = vmatmul.f32.gmra.mxu0 %v2873
  %v3194 = vpop.f32.mrf.mxu0
  %v3195 = vadd.f32 %v3034, %v3194
  %3196 = vmatmul.f32.gmra.mxu0 %v2876
  %v3197 = vpop.f32.mrf.mxu0
  %v3198 = vadd.f32 %v3037, %v3197
  %3199 = vmatmul.f32.gmra.mxu0 %v2879
  %v3200 = vpop.f32.mrf.mxu0
  %v3201 = vadd.f32 %v3040, %v3200
  %3202 = vmatmul.f32.gmra.mxu0 %v2882
  %v3203 = vpop.f32.mrf.mxu0
  %v3204 = vadd.f32 %v3043, %v3203
  %3205 = vmatmul.f32.gmra.mxu0 %v2885
  %v3206 = vpop.f32.mrf.mxu0
  %v3207 = vadd.f32 %v3046, %v3206
  %3208 = vmatmul.f32.gmra.mxu0 %v2888
  %v3209 = vpop.f32.mrf.mxu0
  %v3210 = vadd.f32 %v3049, %v3209
  %3211 = vmatmul.f32.gmra.mxu0 %v2891
  %v3212 = vpop.f32.mrf.mxu0
  %v3213 = vadd.f32 %v3052, %v3212
  %3214 = vmatmul.f32.gmra.mxu0 %v2894
  %v3215 = vpop.f32.mrf.mxu0
  %v3216 = vadd.f32 %v3055, %v3215
  %3217 = vmatmul.f32.gmra.mxu0 %v2897
  %v3218 = vpop.f32.mrf.mxu0
  %v3219 = vadd.f32 %v3058, %v3218
  %3220 = vmatmul.f32.gmra.mxu0 %v2900
  %v3221 = vpop.f32.mrf.mxu0
  %v3222 = vadd.f32 %v3061, %v3221
  %3223 = vmatmul.f32.gmra.mxu0 %v2903
  %v3224 = vpop.f32.mrf.mxu0
  %v3225 = vadd.f32 %v3064, %v3224
  %3226 = vmatmul.f32.gmra.mxu0 %v2906
  %v3227 = vpop.f32.mrf.mxu0
  %v3228 = vadd.f32 %v3067, %v3227
  %3229 = vmatmul.f32.gmra.mxu0 %v2909
  %v3230 = vpop.f32.mrf.mxu0
  %v3231 = vadd.f32 %v3070, %v3230
  %3232 = vmatmul.f32.gmra.mxu0 %v2912
  %v3233 = vpop.f32.mrf.mxu0
  %v3234 = vadd.f32 %v3073, %v3233
  %3235 = vmatmul.f32.gmra.mxu0 %v2915
  %v3236 = vpop.f32.mrf.mxu0
  %v3237 = vadd.f32 %v3076, %v3236
  %3238 = vmatmul.f32.gmra.mxu0 %v2918
  %v3239 = vpop.f32.mrf.mxu0
  %v3240 = vadd.f32 %v3079, %v3239
  %3241 = vmatmul.f32.gmra.mxu0 %v2921
  %v3242 = vpop.f32.mrf.mxu0
  %v3243 = vadd.f32 %v3082, %v3242
  %3244 = vmatmul.f32.gmra.mxu0 %v2924
  %v3245 = vpop.f32.mrf.mxu0
  %v3246 = vadd.f32 %v3085, %v3245
  %3247 = vmatmul.f32.gmra.mxu0 %v2927
  %v3248 = vpop.f32.mrf.mxu0
  %v3249 = vadd.f32 %v3088, %v3248
  %3250 = vmatmul.f32.gmra.mxu0 %v2930
  %v3251 = vpop.f32.mrf.mxu0
  %v3252 = vadd.f32 %v3091, %v3251
  %3253 = vmatmul.f32.gmra.mxu0 %v2933
  %v3254 = vpop.f32.mrf.mxu0
  %v3255 = vadd.f32 %v3094, %v3254
  %3256 = vmatmul.f32.gmra.mxu0 %v2936
  %v3257 = vpop.f32.mrf.mxu0
  %v3258 = vadd.f32 %v3097, %v3257
  %3259 = vmatmul.f32.gmra.mxu0 %v2939
  %v3260 = vpop.f32.mrf.mxu0
  %v3261 = vadd.f32 %v3100, %v3260
  %3262 = vmatmul.f32.gmra.mxu0 %v2942
  %v3263 = vpop.f32.mrf.mxu0
  %v3264 = vadd.f32 %v3103, %v3263
  %3265 = vmatmul.f32.gmra.mxu0 %v2945
  %v3266 = vpop.f32.mrf.mxu0
  %v3267 = vadd.f32 %v3106, %v3266
  %3268 = vmatmul.f32.gmra.mxu0 %v2948
  %v3269 = vpop.f32.mrf.mxu0
  %v3270 = vadd.f32 %v3109, %v3269
  %3271 = vmatmul.f32.gmra.mxu0 %v2951
  %v3272 = vpop.f32.mrf.mxu0
  %v3273 = vadd.f32 %v3112, %v3272
  %3274 = vmatmul.f32.gmra.mxu0 %v2954
  %v3275 = vpop.f32.mrf.mxu0
  %v3276 = vadd.f32 %v3115, %v3275
  %3277 = vmatmul.f32.gmra.mxu0 %v2957
  %v3278 = vpop.f32.mrf.mxu0
  %v3279 = vadd.f32 %v3118, %v3278
  %3280 = vmatmul.f32.gmra.mxu0 %v2960
  %v3281 = vpop.f32.mrf.mxu0
  %v3282 = vadd.f32 %v3121, %v3281
  %3283 = vmatmul.f32.gmra.mxu0 %v2963
  %v3284 = vpop.f32.mrf.mxu0
  %v3285 = vadd.f32 %v3124, %v3284
  %3286 = vmatmul.f32.gmra.mxu0 %v2966
  %v3287 = vpop.f32.mrf.mxu0
  %v3288 = vadd.f32 %v3127, %v3287
  %3289 = vmatmul.f32.gmra.mxu0 %v2969
  %v3290 = vpop.f32.mrf.mxu0
  %v3291 = vadd.f32 %v3130, %v3290
  %3292 = vmatmul.f32.gmra.mxu0 %v2972
  %v3293 = vpop.f32.mrf.mxu0
  %v3294 = vadd.f32 %v3133, %v3293
  %3295 = vmatmul.f32.gmra.mxu0 %v2975
  %v3296 = vpop.f32.mrf.mxu0
  %v3297 = vadd.f32 %v3136, %v3296
  %3298 = vmatmul.f32.gmra.mxu0 %v2978
  %v3299 = vpop.f32.mrf.mxu0
  %v3300 = vadd.f32 %v3139, %v3299
  %3301 = vmatmul.f32.gmra.mxu0 %v2981
  %v3302 = vpop.f32.mrf.mxu0
  %v3303 = vadd.f32 %v3142, %v3302
  %3304 = vdwg.mxu0
  %v3305 = vmax.f32 %v3162, %v3234
  %v3306 = vmax.f32 %v3165, %v3237
  %v3307 = vmax.f32 %v3168, %v3240
  %v3308 = vmax.f32 %v3171, %v3243
  %v3309 = vmax.f32 %v3174, %v3246
  %v3310 = vmax.f32 %v3177, %v3249
  %v3311 = vmax.f32 %v3180, %v3252
  %v3312 = vmax.f32 %v3183, %v3255
  %v3313 = vmax.f32 %v3186, %v3258
  %v3314 = vmax.f32 %v3189, %v3261
  %v3315 = vmax.f32 %v3192, %v3264
  %v3316 = vmax.f32 %v3195, %v3267
  %v3317 = vmax.f32 %v3198, %v3270
  %v3318 = vmax.f32 %v3201, %v3273
  %v3319 = vmax.f32 %v3204, %v3276
  %v3320 = vmax.f32 %v3207, %v3279
  %v3321 = vmax.f32 %v3210, %v3282
  %v3322 = vmax.f32 %v3213, %v3285
  %v3323 = vmax.f32 %v3216, %v3288
  %v3324 = vmax.f32 %v3219, %v3291
  %v3325 = vmax.f32 %v3222, %v3294
  %v3326 = vmax.f32 %v3225, %v3297
  %v3327 = vmax.f32 %v3228, %v3300
  %v3328 = vmax.f32 %v3231, %v3303
  %v3329 = vmax.f32 %v3305, %v3317
  %v3330 = vmax.f32 %v3306, %v3318
  %v3331 = vmax.f32 %v3307, %v3319
  %v3332 = vmax.f32 %v3308, %v3320
  %v3333 = vmax.f32 %v3309, %v3321
  %v3334 = vmax.f32 %v3310, %v3322
  %v3335 = vmax.f32 %v3311, %v3323
  %v3336 = vmax.f32 %v3312, %v3324
  %v3337 = vmax.f32 %v3313, %v3325
  %v3338 = vmax.f32 %v3314, %v3326
  %v3339 = vmax.f32 %v3315, %v3327
  %v3340 = vmax.f32 %v3316, %v3328
  %v3341 = vld [vmem:[%s2] sm:$0xff]
  %v3342 = vld [vmem:[%s2 + $0x8] sm:$0xff]
  %v3343 = vld [vmem:[%s2 + $0x10] sm:$0xff]
  %v3344 = vld [vmem:[%s2 + $0x18] sm:$0xff]
  %v3345 = vld [vmem:[%s2 + $0x20] sm:$0xff]
  %v3346 = vld [vmem:[%s2 + $0x28] sm:$0xff]
  %v3347 = vld [vmem:[%s2 + $0x30] sm:$0xff]
  %v3348 = vld [vmem:[%s2 + $0x38] sm:$0xff]
  %v3349 = vld [vmem:[%s2 + $0x40] sm:$0xff]
  %v3350 = vld [vmem:[%s2 + $0x48] sm:$0xff]
  %v3351 = vld [vmem:[%s2 + $0x50] sm:$0xff]
  %v3352 = vld [vmem:[%s2 + $0x58] sm:$0xff]
  %v3353 = vadd.f32 %v3329, %v3341
  %v3354 = vadd.f32 %v3330, %v3342
  %v3355 = vadd.f32 %v3331, %v3343
  %v3356 = vadd.f32 %v3332, %v3344
  %v3357 = vadd.f32 %v3333, %v3345
  %v3358 = vadd.f32 %v3334, %v3346
  %v3359 = vadd.f32 %v3335, %v3347
  %v3360 = vadd.f32 %v3336, %v3348
  %v3361 = vadd.f32 %v3337, %v3349
  %v3362 = vadd.f32 %v3338, %v3350
  %v3363 = vadd.f32 %v3339, %v3351
  %v3364 = vadd.f32 %v3340, %v3352
  %v3365 = vmax.f32 %v3353, 0.0
  %v3366 = vmax.f32 %v3354, 0.0
  %v3367 = vmax.f32 %v3355, 0.0
  %v3368 = vmax.f32 %v3356, 0.0
  %v3369 = vmax.f32 %v3357, 0.0
  %v3370 = vmax.f32 %v3358, 0.0
  %v3371 = vmax.f32 %v3359, 0.0
  %v3372 = vmax.f32 %v3360, 0.0
  %v3373 = vmax.f32 %v3361, 0.0
  %v3374 = vmax.f32 %v3362, 0.0
  %v3375 = vmax.f32 %v3363, 0.0
  %v3376 = vmax.f32 %v3364, 0.0
  %3377 = vst [vmem:[#allocation2 + $0x180] sm:$0xff] %v3365
  %3378 = vst [vmem:[#allocation2 + $0x188] sm:$0xff] %v3366
  %3379 = vst [vmem:[#allocation2 + $0x190] sm:$0xff] %v3367
  %3380 = vst [vmem:[#allocation2 + $0x198] sm:$0xff] %v3368
  %3381 = vst [vmem:[#allocation2 + $0x1a0] sm:$0xff] %v3369
  %3382 = vst [vmem:[#allocation2 + $0x1a8] sm:$0xff] %v3370
  %3383 = vst [vmem:[#allocation2 + $0x1b0] sm:$0xff] %v3371
  %3384 = vst [vmem:[#allocation2 + $0x1b8] sm:$0xff] %v3372
  %3385 = vst [vmem:[#allocation2 + $0x1c0] sm:$0xff] %v3373
  %3386 = vst [vmem:[#allocation2 + $0x1c8] sm:$0xff] %v3374
  %3387 = vst [vmem:[#allocation2 + $0x1d0] sm:$0xff] %v3375
  %3388 = vst [vmem:[#allocation2 + $0x1d8] sm:$0xff] %v3376
  %v3389 = vld [vmem:[%s0 + $0x140] sm:$0xff]
  %v3390 = vld [vmem:[%s0 + $0x148] sm:$0xff]
  %v3391 = vld [vmem:[%s0 + $0x150] sm:$0xff]
  %v3392 = vld [vmem:[%s0 + $0x158] sm:$0xff]
  %v3393 = vld [vmem:[%s0 + $0x160] sm:$0xff]
  %v3394 = vld [vmem:[%s0 + $0x168] sm:$0xff]
  %v3395 = vld [vmem:[%s0 + $0x170] sm:$0xff]
  %v3396 = vld [vmem:[%s0 + $0x178] sm:$0xff]
  %v3397 = vld [vmem:[%s0 + $0x180] sm:$0xff]
  %v3398 = vld [vmem:[%s0 + $0x188] sm:$0xff]
  %v3399 = vld [vmem:[%s0 + $0x190] sm:$0xff]
  %v3400 = vld [vmem:[%s0 + $0x198] sm:$0xff]
  %v3401 = vld [vmem:[%s0 + $0x1a0] sm:$0xff]
  %v3402 = vld [vmem:[%s0 + $0x1a8] sm:$0xff]
  %v3403 = vld [vmem:[%s0 + $0x1b0] sm:$0xff]
  %v3404 = vld [vmem:[%s0 + $0x1b8] sm:$0xff]
  %v3405 = vld [vmem:[%s0 + $0x1c0] sm:$0xff]
  %v3406 = vld [vmem:[%s0 + $0x1c8] sm:$0xff]
  %v3407 = vld [vmem:[%s0 + $0x1d0] sm:$0xff]
  %v3408 = vld [vmem:[%s0 + $0x1d8] sm:$0xff]
  %v3409 = vld [vmem:[%s0 + $0x1e0] sm:$0xff]
  %v3410 = vld [vmem:[%s0 + $0x1e8] sm:$0xff]
  %v3411 = vld [vmem:[%s0 + $0x1f0] sm:$0xff]
  %v3412 = vld [vmem:[%s0 + $0x1f8] sm:$0xff]
  %v3413 = vld [vmem:[%s1] sm:$0xff]
  %v3414 = vld [vmem:[%s1 + $0x8] sm:$0xff]
  %v3415 = vld [vmem:[%s1 + $0x10] sm:$0xff]
  %v3416 = vld [vmem:[%s1 + $0x18] sm:$0xff]
  %v3417 = vld [vmem:[%s1 + $0x20] sm:$0xff]
  %v3418 = vld [vmem:[%s1 + $0x28] sm:$0xff]
  %v3419 = vld [vmem:[%s1 + $0x30] sm:$0xff]
  %v3420 = vld [vmem:[%s1 + $0x38] sm:$0xff]
  %v3421 = vld [vmem:[%s1 + $0x40] sm:$0xff]
  %v3422 = vld [vmem:[%s1 + $0x48] sm:$0xff]
  %v3423 = vld [vmem:[%s1 + $0x50] sm:$0xff]
  %v3424 = vld [vmem:[%s1 + $0x58] sm:$0xff]
  %v3425 = vld [vmem:[%s1 + $0x60] sm:$0xff]
  %v3426 = vld [vmem:[%s1 + $0x68] sm:$0xff]
  %v3427 = vld [vmem:[%s1 + $0x70] sm:$0xff]
  %v3428 = vld [vmem:[%s1 + $0x78] sm:$0xff]
  %v3429 = vld [vmem:[%s1 + $0x80] sm:$0xff]
  %v3430 = vld [vmem:[%s1 + $0x88] sm:$0xff]
  %v3431 = vld [vmem:[%s1 + $0x90] sm:$0xff]
  %v3432 = vld [vmem:[%s1 + $0x98] sm:$0xff]
  %v3433 = vld [vmem:[%s1 + $0xa0] sm:$0xff]
  %v3434 = vld [vmem:[%s1 + $0xa8] sm:$0xff]
  %v3435 = vld [vmem:[%s1 + $0xb0] sm:$0xff]
  %v3436 = vld [vmem:[%s1 + $0xb8] sm:$0xff]
  %v3437 = vld [vmem:[%s1 + $0xc0] sm:$0xff]
  %v3438 = vld [vmem:[%s1 + $0xc8] sm:$0xff]
  %v3439 = vld [vmem:[%s1 + $0xd0] sm:$0xff]
  %v3440 = vld [vmem:[%s1 + $0xd8] sm:$0xff]
  %v3441 = vld [vmem:[%s1 + $0xe0] sm:$0xff]
  %v3442 = vld [vmem:[%s1 + $0xe8] sm:$0xff]
  %v3443 = vld [vmem:[%s1 + $0xf0] sm:$0xff]
  %v3444 = vld [vmem:[%s1 + $0xf8] sm:$0xff]
  %v3445 = vld [vmem:[%s1 + $0x100] sm:$0xff]
  %v3446 = vld [vmem:[%s1 + $0x108] sm:$0xff]
  %v3447 = vld [vmem:[%s1 + $0x110] sm:$0xff]
  %v3448 = vld [vmem:[%s1 + $0x118] sm:$0xff]
  %v3449 = vld [vmem:[%s1 + $0x120] sm:$0xff]
  %v3450 = vld [vmem:[%s1 + $0x128] sm:$0xff]
  %v3451 = vld [vmem:[%s1 + $0x130] sm:$0xff]
  %v3452 = vld [vmem:[%s1 + $0x138] sm:$0xff]
  %v3453 = vld [vmem:[%s1 + $0x140] sm:$0xff]
  %v3454 = vld [vmem:[%s1 + $0x148] sm:$0xff]
  %v3455 = vld [vmem:[%s1 + $0x150] sm:$0xff]
  %v3456 = vld [vmem:[%s1 + $0x158] sm:$0xff]
  %v3457 = vld [vmem:[%s1 + $0x160] sm:$0xff]
  %v3458 = vld [vmem:[%s1 + $0x168] sm:$0xff]
  %v3459 = vld [vmem:[%s1 + $0x170] sm:$0xff]
  %v3460 = vld [vmem:[%s1 + $0x178] sm:$0xff]
  %v3461 = vld [vmem:[%s1 + $0x180] sm:$0xff]
  %v3462 = vld [vmem:[%s1 + $0x188] sm:$0xff]
  %v3463 = vld [vmem:[%s1 + $0x190] sm:$0xff]
  %v3464 = vld [vmem:[%s1 + $0x198] sm:$0xff]
  %v3465 = vld [vmem:[%s1 + $0x1a0] sm:$0xff]
  %v3466 = vld [vmem:[%s1 + $0x1a8] sm:$0xff]
  %v3467 = vld [vmem:[%s1 + $0x1b0] sm:$0xff]
  %v3468 = vld [vmem:[%s1 + $0x1b8] sm:$0xff]
  %v3469 = vld [vmem:[%s1 + $0x1c0] sm:$0xff]
  %v3470 = vld [vmem:[%s1 + $0x1c8] sm:$0xff]
  %v3471 = vld [vmem:[%s1 + $0x1d0] sm:$0xff]
  %v3472 = vld [vmem:[%s1 + $0x1d8] sm:$0xff]
  %v3473 = vld [vmem:[%s1 + $0x1e0] sm:$0xff]
  %v3474 = vld [vmem:[%s1 + $0x1e8] sm:$0xff]
  %v3475 = vld [vmem:[%s1 + $0x1f0] sm:$0xff]
  %v3476 = vld [vmem:[%s1 + $0x1f8] sm:$0xff]
  %v3477 = vld [vmem:[%s1 + $0x200] sm:$0xff]
  %v3478 = vld [vmem:[%s1 + $0x208] sm:$0xff]
  %v3479 = vld [vmem:[%s1 + $0x210] sm:$0xff]
  %v3480 = vld [vmem:[%s1 + $0x218] sm:$0xff]
  %v3481 = vld [vmem:[%s1 + $0x220] sm:$0xff]
  %v3482 = vld [vmem:[%s1 + $0x228] sm:$0xff]
  %v3483 = vld [vmem:[%s1 + $0x230] sm:$0xff]
  %v3484 = vld [vmem:[%s1 + $0x238] sm:$0xff]
  %v3485 = vld [vmem:[%s1 + $0x240] sm:$0xff]
  %v3486 = vld [vmem:[%s1 + $0x248] sm:$0xff]
  %v3487 = vld [vmem:[%s1 + $0x250] sm:$0xff]
  %v3488 = vld [vmem:[%s1 + $0x258] sm:$0xff]
  %v3489 = vld [vmem:[%s1 + $0x260] sm:$0xff]
  %v3490 = vld [vmem:[%s1 + $0x268] sm:$0xff]
  %v3491 = vld [vmem:[%s1 + $0x270] sm:$0xff]
  %v3492 = vld [vmem:[%s1 + $0x278] sm:$0xff]
  %v3493 = vld [vmem:[%s1 + $0x280] sm:$0xff]
  %v3494 = vld [vmem:[%s1 + $0x288] sm:$0xff]
  %v3495 = vld [vmem:[%s1 + $0x290] sm:$0xff]
  %v3496 = vld [vmem:[%s1 + $0x298] sm:$0xff]
  %v3497 = vld [vmem:[%s1 + $0x2a0] sm:$0xff]
  %v3498 = vld [vmem:[%s1 + $0x2a8] sm:$0xff]
  %v3499 = vld [vmem:[%s1 + $0x2b0] sm:$0xff]
  %v3500 = vld [vmem:[%s1 + $0x2b8] sm:$0xff]
  %v3501 = vld [vmem:[%s1 + $0x2c0] sm:$0xff]
  %v3502 = vld [vmem:[%s1 + $0x2c8] sm:$0xff]
  %v3503 = vld [vmem:[%s1 + $0x2d0] sm:$0xff]
  %v3504 = vld [vmem:[%s1 + $0x2d8] sm:$0xff]
  %v3505 = vld [vmem:[%s1 + $0x2e0] sm:$0xff]
  %v3506 = vld [vmem:[%s1 + $0x2e8] sm:$0xff]
  %v3507 = vld [vmem:[%s1 + $0x2f0] sm:$0xff]
  %v3508 = vld [vmem:[%s1 + $0x2f8] sm:$0xff]
  %v3510 = vsel %vm158, %v3414, 0
  %v3513 = vsel %vm158, %v3416, 0
  %v3516 = vsel %vm158, %v3418, 0
  %v3519 = vsel %vm158, %v3420, 0
  %v3522 = vsel %vm158, %v3422, 0
  %v3525 = vsel %vm158, %v3424, 0
  %v3528 = vsel %vm158, %v3426, 0
  %v3531 = vsel %vm158, %v3428, 0
  %v3534 = vsel %vm158, %v3430, 0
  %v3537 = vsel %vm158, %v3432, 0
  %v3540 = vsel %vm158, %v3434, 0
  %v3543 = vsel %vm158, %v3436, 0
  %v3546 = vsel %vm158, %v3438, 0
  %v3549 = vsel %vm158, %v3440, 0
  %v3552 = vsel %vm158, %v3442, 0
  %v3555 = vsel %vm158, %v3444, 0
  %v3558 = vsel %vm158, %v3446, 0
  %v3561 = vsel %vm158, %v3448, 0
  %v3564 = vsel %vm158, %v3450, 0
  %v3567 = vsel %vm158, %v3452, 0
  %v3570 = vsel %vm158, %v3454, 0
  %v3573 = vsel %vm158, %v3456, 0
  %v3576 = vsel %vm158, %v3458, 0
  %v3579 = vsel %vm158, %v3460, 0
  %v3582 = vsel %vm158, %v3462, 0
  %v3585 = vsel %vm158, %v3464, 0
  %v3588 = vsel %vm158, %v3466, 0
  %v3591 = vsel %vm158, %v3468, 0
  %v3594 = vsel %vm158, %v3470, 0
  %v3597 = vsel %vm158, %v3472, 0
  %v3600 = vsel %vm158, %v3474, 0
  %v3603 = vsel %vm158, %v3476, 0
  %v3606 = vsel %vm158, %v3478, 0
  %v3609 = vsel %vm158, %v3480, 0
  %v3612 = vsel %vm158, %v3482, 0
  %v3615 = vsel %vm158, %v3484, 0
  %v3618 = vsel %vm158, %v3486, 0
  %v3621 = vsel %vm158, %v3488, 0
  %v3624 = vsel %vm158, %v3490, 0
  %v3627 = vsel %vm158, %v3492, 0
  %v3630 = vsel %vm158, %v3494, 0
  %v3633 = vsel %vm158, %v3496, 0
  %v3636 = vsel %vm158, %v3498, 0
  %v3639 = vsel %vm158, %v3500, 0
  %v3642 = vsel %vm158, %v3502, 0
  %v3645 = vsel %vm158, %v3504, 0
  %v3648 = vsel %vm158, %v3506, 0
  %v3651 = vsel %vm158, %v3508, 0
  %3653 = vmatpush.msra.mxu0 %v3404
  %3654 = vmatpush.msra.mxu0 %v3403
  %3655 = vmatpush.msra.mxu0 %v3402
  %3656 = vmatpush.msra.mxu0 %v3401
  %3657 = vmatpush.msra.mxu0 %v3400
  %3658 = vmatpush.msra.mxu0 %v3399
  %3659 = vmatpush.msra.mxu0 %v3398
  %3660 = vmatpush.msra.mxu0 %v3397
  %3661 = vmatpush.msra.mxu0 %v3396
  %3662 = vmatpush.msra.mxu0 %v3395
  %3663 = vmatpush.msra.mxu0 %v3394
  %3664 = vmatpush.msra.mxu0 %v3393
  %3665 = vmatpush.msra.mxu0 %v3392
  %3666 = vmatpush.msra.mxu0 %v3391
  %3667 = vmatpush.msra.mxu0 %v3390
  %3668 = vmatpush.msra.mxu0 %v3389
  %3669 = vmatmul.f32.gmra.mxu0 %v3413
  %v3670 = vpop.f32.mrf.mxu0
  %v3671 = vadd.f32 0.0, %v3670
  %3672 = vmatmul.f32.gmra.mxu0 %v3415
  %v3673 = vpop.f32.mrf.mxu0
  %v3674 = vadd.f32 0.0, %v3673
  %3675 = vmatmul.f32.gmra.mxu0 %v3417
  %v3676 = vpop.f32.mrf.mxu0
  %v3677 = vadd.f32 0.0, %v3676
  %3678 = vmatmul.f32.gmra.mxu0 %v3419
  %v3679 = vpop.f32.mrf.mxu0
  %v3680 = vadd.f32 0.0, %v3679
  %3681 = vmatmul.f32.gmra.mxu0 %v3421
  %v3682 = vpop.f32.mrf.mxu0
  %v3683 = vadd.f32 0.0, %v3682
  %3684 = vmatmul.f32.gmra.mxu0 %v3423
  %v3685 = vpop.f32.mrf.mxu0
  %v3686 = vadd.f32 0.0, %v3685
  %3687 = vmatmul.f32.gmra.mxu0 %v3425
  %v3688 = vpop.f32.mrf.mxu0
  %v3689 = vadd.f32 0.0, %v3688
  %3690 = vmatmul.f32.gmra.mxu0 %v3427
  %v3691 = vpop.f32.mrf.mxu0
  %v3692 = vadd.f32 0.0, %v3691
  %3693 = vmatmul.f32.gmra.mxu0 %v3429
  %v3694 = vpop.f32.mrf.mxu0
  %v3695 = vadd.f32 0.0, %v3694
  %3696 = vmatmul.f32.gmra.mxu0 %v3431
  %v3697 = vpop.f32.mrf.mxu0
  %v3698 = vadd.f32 0.0, %v3697
  %3699 = vmatmul.f32.gmra.mxu0 %v3433
  %v3700 = vpop.f32.mrf.mxu0
  %v3701 = vadd.f32 0.0, %v3700
  %3702 = vmatmul.f32.gmra.mxu0 %v3435
  %v3703 = vpop.f32.mrf.mxu0
  %v3704 = vadd.f32 0.0, %v3703
  %3705 = vmatmul.f32.gmra.mxu0 %v3437
  %v3706 = vpop.f32.mrf.mxu0
  %v3707 = vadd.f32 0.0, %v3706
  %3708 = vmatmul.f32.gmra.mxu0 %v3439
  %v3709 = vpop.f32.mrf.mxu0
  %v3710 = vadd.f32 0.0, %v3709
  %3711 = vmatmul.f32.gmra.mxu0 %v3441
  %v3712 = vpop.f32.mrf.mxu0
  %v3713 = vadd.f32 0.0, %v3712
  %3714 = vmatmul.f32.gmra.mxu0 %v3443
  %v3715 = vpop.f32.mrf.mxu0
  %v3716 = vadd.f32 0.0, %v3715
  %3717 = vmatmul.f32.gmra.mxu0 %v3445
  %v3718 = vpop.f32.mrf.mxu0
  %v3719 = vadd.f32 0.0, %v3718
  %3720 = vmatmul.f32.gmra.mxu0 %v3447
  %v3721 = vpop.f32.mrf.mxu0
  %v3722 = vadd.f32 0.0, %v3721
  %3723 = vmatmul.f32.gmra.mxu0 %v3449
  %v3724 = vpop.f32.mrf.mxu0
  %v3725 = vadd.f32 0.0, %v3724
  %3726 = vmatmul.f32.gmra.mxu0 %v3451
  %v3727 = vpop.f32.mrf.mxu0
  %v3728 = vadd.f32 0.0, %v3727
  %3729 = vmatmul.f32.gmra.mxu0 %v3453
  %v3730 = vpop.f32.mrf.mxu0
  %v3731 = vadd.f32 0.0, %v3730
  %3732 = vmatmul.f32.gmra.mxu0 %v3455
  %v3733 = vpop.f32.mrf.mxu0
  %v3734 = vadd.f32 0.0, %v3733
  %3735 = vmatmul.f32.gmra.mxu0 %v3457
  %v3736 = vpop.f32.mrf.mxu0
  %v3737 = vadd.f32 0.0, %v3736
  %3738 = vmatmul.f32.gmra.mxu0 %v3459
  %v3739 = vpop.f32.mrf.mxu0
  %v3740 = vadd.f32 0.0, %v3739
  %3741 = vmatmul.f32.gmra.mxu0 %v3461
  %v3742 = vpop.f32.mrf.mxu0
  %v3743 = vadd.f32 0.0, %v3742
  %3744 = vmatmul.f32.gmra.mxu0 %v3463
  %v3745 = vpop.f32.mrf.mxu0
  %v3746 = vadd.f32 0.0, %v3745
  %3747 = vmatmul.f32.gmra.mxu0 %v3465
  %v3748 = vpop.f32.mrf.mxu0
  %v3749 = vadd.f32 0.0, %v3748
  %3750 = vmatmul.f32.gmra.mxu0 %v3467
  %v3751 = vpop.f32.mrf.mxu0
  %v3752 = vadd.f32 0.0, %v3751
  %3753 = vmatmul.f32.gmra.mxu0 %v3469
  %v3754 = vpop.f32.mrf.mxu0
  %v3755 = vadd.f32 0.0, %v3754
  %3756 = vmatmul.f32.gmra.mxu0 %v3471
  %v3757 = vpop.f32.mrf.mxu0
  %v3758 = vadd.f32 0.0, %v3757
  %3759 = vmatmul.f32.gmra.mxu0 %v3473
  %v3760 = vpop.f32.mrf.mxu0
  %v3761 = vadd.f32 0.0, %v3760
  %3762 = vmatmul.f32.gmra.mxu0 %v3475
  %v3763 = vpop.f32.mrf.mxu0
  %v3764 = vadd.f32 0.0, %v3763
  %3765 = vmatmul.f32.gmra.mxu0 %v3477
  %v3766 = vpop.f32.mrf.mxu0
  %v3767 = vadd.f32 0.0, %v3766
  %3768 = vmatmul.f32.gmra.mxu0 %v3479
  %v3769 = vpop.f32.mrf.mxu0
  %v3770 = vadd.f32 0.0, %v3769
  %3771 = vmatmul.f32.gmra.mxu0 %v3481
  %v3772 = vpop.f32.mrf.mxu0
  %v3773 = vadd.f32 0.0, %v3772
  %3774 = vmatmul.f32.gmra.mxu0 %v3483
  %v3775 = vpop.f32.mrf.mxu0
  %v3776 = vadd.f32 0.0, %v3775
  %3777 = vmatmul.f32.gmra.mxu0 %v3485
  %v3778 = vpop.f32.mrf.mxu0
  %v3779 = vadd.f32 0.0, %v3778
  %3780 = vmatmul.f32.gmra.mxu0 %v3487
  %v3781 = vpop.f32.mrf.mxu0
  %v3782 = vadd.f32 0.0, %v3781
  %3783 = vmatmul.f32.gmra.mxu0 %v3489
  %v3784 = vpop.f32.mrf.mxu0
  %v3785 = vadd.f32 0.0, %v3784
  %3786 = vmatmul.f32.gmra.mxu0 %v3491
  %v3787 = vpop.f32.mrf.mxu0
  %v3788 = vadd.f32 0.0, %v3787
  %3789 = vmatmul.f32.gmra.mxu0 %v3493
  %v3790 = vpop.f32.mrf.mxu0
  %v3791 = vadd.f32 0.0, %v3790
  %3792 = vmatmul.f32.gmra.mxu0 %v3495
  %v3793 = vpop.f32.mrf.mxu0
  %v3794 = vadd.f32 0.0, %v3793
  %3795 = vmatmul.f32.gmra.mxu0 %v3497
  %v3796 = vpop.f32.mrf.mxu0
  %v3797 = vadd.f32 0.0, %v3796
  %3798 = vmatmul.f32.gmra.mxu0 %v3499
  %v3799 = vpop.f32.mrf.mxu0
  %v3800 = vadd.f32 0.0, %v3799
  %3801 = vmatmul.f32.gmra.mxu0 %v3501
  %v3802 = vpop.f32.mrf.mxu0
  %v3803 = vadd.f32 0.0, %v3802
  %3804 = vmatmul.f32.gmra.mxu0 %v3503
  %v3805 = vpop.f32.mrf.mxu0
  %v3806 = vadd.f32 0.0, %v3805
  %3807 = vmatmul.f32.gmra.mxu0 %v3505
  %v3808 = vpop.f32.mrf.mxu0
  %v3809 = vadd.f32 0.0, %v3808
  %3810 = vmatmul.f32.gmra.mxu0 %v3507
  %v3811 = vpop.f32.mrf.mxu0
  %v3812 = vadd.f32 0.0, %v3811
  %3813 = vdwg.mxu0
  %3814 = vmatpush.msra.mxu0 0.0
  %3815 = vmatpush.msra.mxu0 0.0
  %3816 = vmatpush.msra.mxu0 0.0
  %3817 = vmatpush.msra.mxu0 0.0
  %3818 = vmatpush.msra.mxu0 0.0
  %3819 = vmatpush.msra.mxu0 0.0
  %3820 = vmatpush.msra.mxu0 0.0
  %3821 = vmatpush.msra.mxu0 0.0
  %3822 = vmatpush.msra.mxu0 %v3412
  %3823 = vmatpush.msra.mxu0 %v3411
  %3824 = vmatpush.msra.mxu0 %v3410
  %3825 = vmatpush.msra.mxu0 %v3409
  %3826 = vmatpush.msra.mxu0 %v3408
  %3827 = vmatpush.msra.mxu0 %v3407
  %3828 = vmatpush.msra.mxu0 %v3406
  %3829 = vmatpush.msra.mxu0 %v3405
  %3830 = vmatmul.f32.gmra.mxu0 %v3510
  %v3831 = vpop.f32.mrf.mxu0
  %v3832 = vadd.f32 %v3671, %v3831
  %3833 = vmatmul.f32.gmra.mxu0 %v3513
  %v3834 = vpop.f32.mrf.mxu0
  %v3835 = vadd.f32 %v3674, %v3834
  %3836 = vmatmul.f32.gmra.mxu0 %v3516
  %v3837 = vpop.f32.mrf.mxu0
  %v3838 = vadd.f32 %v3677, %v3837
  %3839 = vmatmul.f32.gmra.mxu0 %v3519
  %v3840 = vpop.f32.mrf.mxu0
  %v3841 = vadd.f32 %v3680, %v3840
  %3842 = vmatmul.f32.gmra.mxu0 %v3522
  %v3843 = vpop.f32.mrf.mxu0
  %v3844 = vadd.f32 %v3683, %v3843
  %3845 = vmatmul.f32.gmra.mxu0 %v3525
  %v3846 = vpop.f32.mrf.mxu0
  %v3847 = vadd.f32 %v3686, %v3846
  %3848 = vmatmul.f32.gmra.mxu0 %v3528
  %v3849 = vpop.f32.mrf.mxu0
  %v3850 = vadd.f32 %v3689, %v3849
  %3851 = vmatmul.f32.gmra.mxu0 %v3531
  %v3852 = vpop.f32.mrf.mxu0
  %v3853 = vadd.f32 %v3692, %v3852
  %3854 = vmatmul.f32.gmra.mxu0 %v3534
  %v3855 = vpop.f32.mrf.mxu0
  %v3856 = vadd.f32 %v3695, %v3855
  %3857 = vmatmul.f32.gmra.mxu0 %v3537
  %v3858 = vpop.f32.mrf.mxu0
  %v3859 = vadd.f32 %v3698, %v3858
  %3860 = vmatmul.f32.gmra.mxu0 %v3540
  %v3861 = vpop.f32.mrf.mxu0
  %v3862 = vadd.f32 %v3701, %v3861
  %3863 = vmatmul.f32.gmra.mxu0 %v3543
  %v3864 = vpop.f32.mrf.mxu0
  %v3865 = vadd.f32 %v3704, %v3864
  %3866 = vmatmul.f32.gmra.mxu0 %v3546
  %v3867 = vpop.f32.mrf.mxu0
  %v3868 = vadd.f32 %v3707, %v3867
  %3869 = vmatmul.f32.gmra.mxu0 %v3549
  %v3870 = vpop.f32.mrf.mxu0
  %v3871 = vadd.f32 %v3710, %v3870
  %3872 = vmatmul.f32.gmra.mxu0 %v3552
  %v3873 = vpop.f32.mrf.mxu0
  %v3874 = vadd.f32 %v3713, %v3873
  %3875 = vmatmul.f32.gmra.mxu0 %v3555
  %v3876 = vpop.f32.mrf.mxu0
  %v3877 = vadd.f32 %v3716, %v3876
  %3878 = vmatmul.f32.gmra.mxu0 %v3558
  %v3879 = vpop.f32.mrf.mxu0
  %v3880 = vadd.f32 %v3719, %v3879
  %3881 = vmatmul.f32.gmra.mxu0 %v3561
  %v3882 = vpop.f32.mrf.mxu0
  %v3883 = vadd.f32 %v3722, %v3882
  %3884 = vmatmul.f32.gmra.mxu0 %v3564
  %v3885 = vpop.f32.mrf.mxu0
  %v3886 = vadd.f32 %v3725, %v3885
  %3887 = vmatmul.f32.gmra.mxu0 %v3567
  %v3888 = vpop.f32.mrf.mxu0
  %v3889 = vadd.f32 %v3728, %v3888
  %3890 = vmatmul.f32.gmra.mxu0 %v3570
  %v3891 = vpop.f32.mrf.mxu0
  %v3892 = vadd.f32 %v3731, %v3891
  %3893 = vmatmul.f32.gmra.mxu0 %v3573
  %v3894 = vpop.f32.mrf.mxu0
  %v3895 = vadd.f32 %v3734, %v3894
  %3896 = vmatmul.f32.gmra.mxu0 %v3576
  %v3897 = vpop.f32.mrf.mxu0
  %v3898 = vadd.f32 %v3737, %v3897
  %3899 = vmatmul.f32.gmra.mxu0 %v3579
  %v3900 = vpop.f32.mrf.mxu0
  %v3901 = vadd.f32 %v3740, %v3900
  %3902 = vmatmul.f32.gmra.mxu0 %v3582
  %v3903 = vpop.f32.mrf.mxu0
  %v3904 = vadd.f32 %v3743, %v3903
  %3905 = vmatmul.f32.gmra.mxu0 %v3585
  %v3906 = vpop.f32.mrf.mxu0
  %v3907 = vadd.f32 %v3746, %v3906
  %3908 = vmatmul.f32.gmra.mxu0 %v3588
  %v3909 = vpop.f32.mrf.mxu0
  %v3910 = vadd.f32 %v3749, %v3909
  %3911 = vmatmul.f32.gmra.mxu0 %v3591
  %v3912 = vpop.f32.mrf.mxu0
  %v3913 = vadd.f32 %v3752, %v3912
  %3914 = vmatmul.f32.gmra.mxu0 %v3594
  %v3915 = vpop.f32.mrf.mxu0
  %v3916 = vadd.f32 %v3755, %v3915
  %3917 = vmatmul.f32.gmra.mxu0 %v3597
  %v3918 = vpop.f32.mrf.mxu0
  %v3919 = vadd.f32 %v3758, %v3918
  %3920 = vmatmul.f32.gmra.mxu0 %v3600
  %v3921 = vpop.f32.mrf.mxu0
  %v3922 = vadd.f32 %v3761, %v3921
  %3923 = vmatmul.f32.gmra.mxu0 %v3603
  %v3924 = vpop.f32.mrf.mxu0
  %v3925 = vadd.f32 %v3764, %v3924
  %3926 = vmatmul.f32.gmra.mxu0 %v3606
  %v3927 = vpop.f32.mrf.mxu0
  %v3928 = vadd.f32 %v3767, %v3927
  %3929 = vmatmul.f32.gmra.mxu0 %v3609
  %v3930 = vpop.f32.mrf.mxu0
  %v3931 = vadd.f32 %v3770, %v3930
  %3932 = vmatmul.f32.gmra.mxu0 %v3612
  %v3933 = vpop.f32.mrf.mxu0
  %v3934 = vadd.f32 %v3773, %v3933
  %3935 = vmatmul.f32.gmra.mxu0 %v3615
  %v3936 = vpop.f32.mrf.mxu0
  %v3937 = vadd.f32 %v3776, %v3936
  %3938 = vmatmul.f32.gmra.mxu0 %v3618
  %v3939 = vpop.f32.mrf.mxu0
  %v3940 = vadd.f32 %v3779, %v3939
  %3941 = vmatmul.f32.gmra.mxu0 %v3621
  %v3942 = vpop.f32.mrf.mxu0
  %v3943 = vadd.f32 %v3782, %v3942
  %3944 = vmatmul.f32.gmra.mxu0 %v3624
  %v3945 = vpop.f32.mrf.mxu0
  %v3946 = vadd.f32 %v3785, %v3945
  %3947 = vmatmul.f32.gmra.mxu0 %v3627
  %v3948 = vpop.f32.mrf.mxu0
  %v3949 = vadd.f32 %v3788, %v3948
  %3950 = vmatmul.f32.gmra.mxu0 %v3630
  %v3951 = vpop.f32.mrf.mxu0
  %v3952 = vadd.f32 %v3791, %v3951
  %3953 = vmatmul.f32.gmra.mxu0 %v3633
  %v3954 = vpop.f32.mrf.mxu0
  %v3955 = vadd.f32 %v3794, %v3954
  %3956 = vmatmul.f32.gmra.mxu0 %v3636
  %v3957 = vpop.f32.mrf.mxu0
  %v3958 = vadd.f32 %v3797, %v3957
  %3959 = vmatmul.f32.gmra.mxu0 %v3639
  %v3960 = vpop.f32.mrf.mxu0
  %v3961 = vadd.f32 %v3800, %v3960
  %3962 = vmatmul.f32.gmra.mxu0 %v3642
  %v3963 = vpop.f32.mrf.mxu0
  %v3964 = vadd.f32 %v3803, %v3963
  %3965 = vmatmul.f32.gmra.mxu0 %v3645
  %v3966 = vpop.f32.mrf.mxu0
  %v3967 = vadd.f32 %v3806, %v3966
  %3968 = vmatmul.f32.gmra.mxu0 %v3648
  %v3969 = vpop.f32.mrf.mxu0
  %v3970 = vadd.f32 %v3809, %v3969
  %3971 = vmatmul.f32.gmra.mxu0 %v3651
  %v3972 = vpop.f32.mrf.mxu0
  %v3973 = vadd.f32 %v3812, %v3972
  %3974 = vdwg.mxu0
  %v3975 = vmax.f32 %v3832, %v3904
  %v3976 = vmax.f32 %v3835, %v3907
  %v3977 = vmax.f32 %v3838, %v3910
  %v3978 = vmax.f32 %v3841, %v3913
  %v3979 = vmax.f32 %v3844, %v3916
  %v3980 = vmax.f32 %v3847, %v3919
  %v3981 = vmax.f32 %v3850, %v3922
  %v3982 = vmax.f32 %v3853, %v3925
  %v3983 = vmax.f32 %v3856, %v3928
  %v3984 = vmax.f32 %v3859, %v3931
  %v3985 = vmax.f32 %v3862, %v3934
  %v3986 = vmax.f32 %v3865, %v3937
  %v3987 = vmax.f32 %v3868, %v3940
  %v3988 = vmax.f32 %v3871, %v3943
  %v3989 = vmax.f32 %v3874, %v3946
  %v3990 = vmax.f32 %v3877, %v3949
  %v3991 = vmax.f32 %v3880, %v3952
  %v3992 = vmax.f32 %v3883, %v3955
  %v3993 = vmax.f32 %v3886, %v3958
  %v3994 = vmax.f32 %v3889, %v3961
  %v3995 = vmax.f32 %v3892, %v3964
  %v3996 = vmax.f32 %v3895, %v3967
  %v3997 = vmax.f32 %v3898, %v3970
  %v3998 = vmax.f32 %v3901, %v3973
  %v3999 = vmax.f32 %v3975, %v3987
  %v4000 = vmax.f32 %v3976, %v3988
  %v4001 = vmax.f32 %v3977, %v3989
  %v4002 = vmax.f32 %v3978, %v3990
  %v4003 = vmax.f32 %v3979, %v3991
  %v4004 = vmax.f32 %v3980, %v3992
  %v4005 = vmax.f32 %v3981, %v3993
  %v4006 = vmax.f32 %v3982, %v3994
  %v4007 = vmax.f32 %v3983, %v3995
  %v4008 = vmax.f32 %v3984, %v3996
  %v4009 = vmax.f32 %v3985, %v3997
  %v4010 = vmax.f32 %v3986, %v3998
  %v4011 = vld [vmem:[%s2] sm:$0xff]
  %v4012 = vld [vmem:[%s2 + $0x8] sm:$0xff]
  %v4013 = vld [vmem:[%s2 + $0x10] sm:$0xff]
  %v4014 = vld [vmem:[%s2 + $0x18] sm:$0xff]
  %v4015 = vld [vmem:[%s2 + $0x20] sm:$0xff]
  %v4016 = vld [vmem:[%s2 + $0x28] sm:$0xff]
  %v4017 = vld [vmem:[%s2 + $0x30] sm:$0xff]
  %v4018 = vld [vmem:[%s2 + $0x38] sm:$0xff]
  %v4019 = vld [vmem:[%s2 + $0x40] sm:$0xff]
  %v4020 = vld [vmem:[%s2 + $0x48] sm:$0xff]
  %v4021 = vld [vmem:[%s2 + $0x50] sm:$0xff]
  %v4022 = vld [vmem:[%s2 + $0x58] sm:$0xff]
  %v4023 = vadd.f32 %v3999, %v4011
  %v4024 = vadd.f32 %v4000, %v4012
  %v4025 = vadd.f32 %v4001, %v4013
  %v4026 = vadd.f32 %v4002, %v4014
  %v4027 = vadd.f32 %v4003, %v4015
  %v4028 = vadd.f32 %v4004, %v4016
  %v4029 = vadd.f32 %v4005, %v4017
  %v4030 = vadd.f32 %v4006, %v4018
  %v4031 = vadd.f32 %v4007, %v4019
  %v4032 = vadd.f32 %v4008, %v4020
  %v4033 = vadd.f32 %v4009, %v4021
  %v4034 = vadd.f32 %v4010, %v4022
  %v4035 = vmax.f32 %v4023, 0.0
  %v4036 = vmax.f32 %v4024, 0.0
  %v4037 = vmax.f32 %v4025, 0.0
  %v4038 = vmax.f32 %v4026, 0.0
  %v4039 = vmax.f32 %v4027, 0.0
  %v4040 = vmax.f32 %v4028, 0.0
  %v4041 = vmax.f32 %v4029, 0.0
  %v4042 = vmax.f32 %v4030, 0.0
  %v4043 = vmax.f32 %v4031, 0.0
  %v4044 = vmax.f32 %v4032, 0.0
  %v4045 = vmax.f32 %v4033, 0.0
  %v4046 = vmax.f32 %v4034, 0.0
  %4047 = vst [vmem:[#allocation2 + $0x1e0] sm:$0xff] %v4035
  %4048 = vst [vmem:[#allocation2 + $0x1e8] sm:$0xff] %v4036
  %4049 = vst [vmem:[#allocation2 + $0x1f0] sm:$0xff] %v4037
  %4050 = vst [vmem:[#allocation2 + $0x1f8] sm:$0xff] %v4038
  %4051 = vst [vmem:[#allocation2 + $0x200] sm:$0xff] %v4039
  %4052 = vst [vmem:[#allocation2 + $0x208] sm:$0xff] %v4040
  %4053 = vst [vmem:[#allocation2 + $0x210] sm:$0xff] %v4041
  %4054 = vst [vmem:[#allocation2 + $0x218] sm:$0xff] %v4042
  %4055 = vst [vmem:[#allocation2 + $0x220] sm:$0xff] %v4043
  %4056 = vst [vmem:[#allocation2 + $0x228] sm:$0xff] %v4044
  %4057 = vst [vmem:[#allocation2 + $0x230] sm:$0xff] %v4045
  %4058 = vst [vmem:[#allocation2 + $0x238] sm:$0xff] %v4046
  %v4059 = vld [vmem:[%s0 + $0x180] sm:$0xff]
  %v4060 = vld [vmem:[%s0 + $0x188] sm:$0xff]
  %v4061 = vld [vmem:[%s0 + $0x190] sm:$0xff]
  %v4062 = vld [vmem:[%s0 + $0x198] sm:$0xff]
  %v4063 = vld [vmem:[%s0 + $0x1a0] sm:$0xff]
  %v4064 = vld [vmem:[%s0 + $0x1a8] sm:$0xff]
  %v4065 = vld [vmem:[%s0 + $0x1b0] sm:$0xff]
  %v4066 = vld [vmem:[%s0 + $0x1b8] sm:$0xff]
  %v4067 = vld [vmem:[%s0 + $0x1c0] sm:$0xff]
  %v4068 = vld [vmem:[%s0 + $0x1c8] sm:$0xff]
  %v4069 = vld [vmem:[%s0 + $0x1d0] sm:$0xff]
  %v4070 = vld [vmem:[%s0 + $0x1d8] sm:$0xff]
  %v4071 = vld [vmem:[%s0 + $0x1e0] sm:$0xff]
  %v4072 = vld [vmem:[%s0 + $0x1e8] sm:$0xff]
  %v4073 = vld [vmem:[%s0 + $0x1f0] sm:$0xff]
  %v4074 = vld [vmem:[%s0 + $0x1f8] sm:$0xff]
  %v4075 = vld [vmem:[%s0 + $0x200] sm:$0xff]
  %v4076 = vld [vmem:[%s0 + $0x208] sm:$0xff]
  %v4077 = vld [vmem:[%s0 + $0x210] sm:$0xff]
  %v4078 = vld [vmem:[%s0 + $0x218] sm:$0xff]
  %v4079 = vld [vmem:[%s0 + $0x220] sm:$0xff]
  %v4080 = vld [vmem:[%s0 + $0x228] sm:$0xff]
  %v4081 = vld [vmem:[%s0 + $0x230] sm:$0xff]
  %v4082 = vld [vmem:[%s0 + $0x238] sm:$0xff]
  %v4083 = vld [vmem:[%s1] sm:$0xff]
  %v4084 = vld [vmem:[%s1 + $0x8] sm:$0xff]
  %v4085 = vld [vmem:[%s1 + $0x10] sm:$0xff]
  %v4086 = vld [vmem:[%s1 + $0x18] sm:$0xff]
  %v4087 = vld [vmem:[%s1 + $0x20] sm:$0xff]
  %v4088 = vld [vmem:[%s1 + $0x28] sm:$0xff]
  %v4089 = vld [vmem:[%s1 + $0x30] sm:$0xff]
  %v4090 = vld [vmem:[%s1 + $0x38] sm:$0xff]
  %v4091 = vld [vmem:[%s1 + $0x40] sm:$0xff]
  %v4092 = vld [vmem:[%s1 + $0x48] sm:$0xff]
  %v4093 = vld [vmem:[%s1 + $0x50] sm:$0xff]
  %v4094 = vld [vmem:[%s1 + $0x58] sm:$0xff]
  %v4095 = vld [vmem:[%s1 + $0x60] sm:$0xff]
  %v4096 = vld [vmem:[%s1 + $0x68] sm:$0xff]
  %v4097 = vld [vmem:[%s1 + $0x70] sm:$0xff]
  %v4098 = vld [vmem:[%s1 + $0x78] sm:$0xff]
  %v4099 = vld [vmem:[%s1 + $0x80] sm:$0xff]
  %v4100 = vld [vmem:[%s1 + $0x88] sm:$0xff]
  %v4101 = vld [vmem:[%s1 + $0x90] sm:$0xff]
  %v4102 = vld [vmem:[%s1 + $0x98] sm:$0xff]
  %v4103 = vld [vmem:[%s1 + $0xa0] sm:$0xff]
  %v4104 = vld [vmem:[%s1 + $0xa8] sm:$0xff]
  %v4105 = vld [vmem:[%s1 + $0xb0] sm:$0xff]
  %v4106 = vld [vmem:[%s1 + $0xb8] sm:$0xff]
  %v4107 = vld [vmem:[%s1 + $0xc0] sm:$0xff]
  %v4108 = vld [vmem:[%s1 + $0xc8] sm:$0xff]
  %v4109 = vld [vmem:[%s1 + $0xd0] sm:$0xff]
  %v4110 = vld [vmem:[%s1 + $0xd8] sm:$0xff]
  %v4111 = vld [vmem:[%s1 + $0xe0] sm:$0xff]
  %v4112 = vld [vmem:[%s1 + $0xe8] sm:$0xff]
  %v4113 = vld [vmem:[%s1 + $0xf0] sm:$0xff]
  %v4114 = vld [vmem:[%s1 + $0xf8] sm:$0xff]
  %v4115 = vld [vmem:[%s1 + $0x100] sm:$0xff]
  %v4116 = vld [vmem:[%s1 + $0x108] sm:$0xff]
  %v4117 = vld [vmem:[%s1 + $0x110] sm:$0xff]
  %v4118 = vld [vmem:[%s1 + $0x118] sm:$0xff]
  %v4119 = vld [vmem:[%s1 + $0x120] sm:$0xff]
  %v4120 = vld [vmem:[%s1 + $0x128] sm:$0xff]
  %v4121 = vld [vmem:[%s1 + $0x130] sm:$0xff]
  %v4122 = vld [vmem:[%s1 + $0x138] sm:$0xff]
  %v4123 = vld [vmem:[%s1 + $0x140] sm:$0xff]
  %v4124 = vld [vmem:[%s1 + $0x148] sm:$0xff]
  %v4125 = vld [vmem:[%s1 + $0x150] sm:$0xff]
  %v4126 = vld [vmem:[%s1 + $0x158] sm:$0xff]
  %v4127 = vld [vmem:[%s1 + $0x160] sm:$0xff]
  %v4128 = vld [vmem:[%s1 + $0x168] sm:$0xff]
  %v4129 = vld [vmem:[%s1 + $0x170] sm:$0xff]
  %v4130 = vld [vmem:[%s1 + $0x178] sm:$0xff]
  %v4131 = vld [vmem:[%s1 + $0x180] sm:$0xff]
  %v4132 = vld [vmem:[%s1 + $0x188] sm:$0xff]
  %v4133 = vld [vmem:[%s1 + $0x190] sm:$0xff]
  %v4134 = vld [vmem:[%s1 + $0x198] sm:$0xff]
  %v4135 = vld [vmem:[%s1 + $0x1a0] sm:$0xff]
  %v4136 = vld [vmem:[%s1 + $0x1a8] sm:$0xff]
  %v4137 = vld [vmem:[%s1 + $0x1b0] sm:$0xff]
  %v4138 = vld [vmem:[%s1 + $0x1b8] sm:$0xff]
  %v4139 = vld [vmem:[%s1 + $0x1c0] sm:$0xff]
  %v4140 = vld [vmem:[%s1 + $0x1c8] sm:$0xff]
  %v4141 = vld [vmem:[%s1 + $0x1d0] sm:$0xff]
  %v4142 = vld [vmem:[%s1 + $0x1d8] sm:$0xff]
  %v4143 = vld [vmem:[%s1 + $0x1e0] sm:$0xff]
  %v4144 = vld [vmem:[%s1 + $0x1e8] sm:$0xff]
  %v4145 = vld [vmem:[%s1 + $0x1f0] sm:$0xff]
  %v4146 = vld [vmem:[%s1 + $0x1f8] sm:$0xff]
  %v4147 = vld [vmem:[%s1 + $0x200] sm:$0xff]
  %v4148 = vld [vmem:[%s1 + $0x208] sm:$0xff]
  %v4149 = vld [vmem:[%s1 + $0x210] sm:$0xff]
  %v4150 = vld [vmem:[%s1 + $0x218] sm:$0xff]
  %v4151 = vld [vmem:[%s1 + $0x220] sm:$0xff]
  %v4152 = vld [vmem:[%s1 + $0x228] sm:$0xff]
  %v4153 = vld [vmem:[%s1 + $0x230] sm:$0xff]
  %v4154 = vld [vmem:[%s1 + $0x238] sm:$0xff]
  %v4155 = vld [vmem:[%s1 + $0x240] sm:$0xff]
  %v4156 = vld [vmem:[%s1 + $0x248] sm:$0xff]
  %v4157 = vld [vmem:[%s1 + $0x250] sm:$0xff]
  %v4158 = vld [vmem:[%s1 + $0x258] sm:$0xff]
  %v4159 = vld [vmem:[%s1 + $0x260] sm:$0xff]
  %v4160 = vld [vmem:[%s1 + $0x268] sm:$0xff]
  %v4161 = vld [vmem:[%s1 + $0x270] sm:$0xff]
  %v4162 = vld [vmem:[%s1 + $0x278] sm:$0xff]
  %v4163 = vld [vmem:[%s1 + $0x280] sm:$0xff]
  %v4164 = vld [vmem:[%s1 + $0x288] sm:$0xff]
  %v4165 = vld [vmem:[%s1 + $0x290] sm:$0xff]
  %v4166 = vld [vmem:[%s1 + $0x298] sm:$0xff]
  %v4167 = vld [vmem:[%s1 + $0x2a0] sm:$0xff]
  %v4168 = vld [vmem:[%s1 + $0x2a8] sm:$0xff]
  %v4169 = vld [vmem:[%s1 + $0x2b0] sm:$0xff]
  %v4170 = vld [vmem:[%s1 + $0x2b8] sm:$0xff]
  %v4171 = vld [vmem:[%s1 + $0x2c0] sm:$0xff]
  %v4172 = vld [vmem:[%s1 + $0x2c8] sm:$0xff]
  %v4173 = vld [vmem:[%s1 + $0x2d0] sm:$0xff]
  %v4174 = vld [vmem:[%s1 + $0x2d8] sm:$0xff]
  %v4175 = vld [vmem:[%s1 + $0x2e0] sm:$0xff]
  %v4176 = vld [vmem:[%s1 + $0x2e8] sm:$0xff]
  %v4177 = vld [vmem:[%s1 + $0x2f0] sm:$0xff]
  %v4178 = vld [vmem:[%s1 + $0x2f8] sm:$0xff]
  %v4180 = vsel %vm158, %v4084, 0
  %v4183 = vsel %vm158, %v4086, 0
  %v4186 = vsel %vm158, %v4088, 0
  %v4189 = vsel %vm158, %v4090, 0
  %v4192 = vsel %vm158, %v4092, 0
  %v4195 = vsel %vm158, %v4094, 0
  %v4198 = vsel %vm158, %v4096, 0
  %v4201 = vsel %vm158, %v4098, 0
  %v4204 = vsel %vm158, %v4100, 0
  %v4207 = vsel %vm158, %v4102, 0
  %v4210 = vsel %vm158, %v4104, 0
  %v4213 = vsel %vm158, %v4106, 0
  %v4216 = vsel %vm158, %v4108, 0
  %v4219 = vsel %vm158, %v4110, 0
  %v4222 = vsel %vm158, %v4112, 0
  %v4225 = vsel %vm158, %v4114, 0
  %v4228 = vsel %vm158, %v4116, 0
  %v4231 = vsel %vm158, %v4118, 0
  %v4234 = vsel %vm158, %v4120, 0
  %v4237 = vsel %vm158, %v4122, 0
  %v4240 = vsel %vm158, %v4124, 0
  %v4243 = vsel %vm158, %v4126, 0
  %v4246 = vsel %vm158, %v4128, 0
  %v4249 = vsel %vm158, %v4130, 0
  %v4252 = vsel %vm158, %v4132, 0
  %v4255 = vsel %vm158, %v4134, 0
  %v4258 = vsel %vm158, %v4136, 0
  %v4261 = vsel %vm158, %v4138, 0
  %v4264 = vsel %vm158, %v4140, 0
  %v4267 = vsel %vm158, %v4142, 0
  %v4270 = vsel %vm158, %v4144, 0
  %v4273 = vsel %vm158, %v4146, 0
  %v4276 = vsel %vm158, %v4148, 0
  %v4279 = vsel %vm158, %v4150, 0
  %v4282 = vsel %vm158, %v4152, 0
  %v4285 = vsel %vm158, %v4154, 0
  %v4288 = vsel %vm158, %v4156, 0
  %v4291 = vsel %vm158, %v4158, 0
  %v4294 = vsel %vm158, %v4160, 0
  %v4297 = vsel %vm158, %v4162, 0
  %v4300 = vsel %vm158, %v4164, 0
  %v4303 = vsel %vm158, %v4166, 0
  %v4306 = vsel %vm158, %v4168, 0
  %v4309 = vsel %vm158, %v4170, 0
  %v4312 = vsel %vm158, %v4172, 0
  %v4315 = vsel %vm158, %v4174, 0
  %v4318 = vsel %vm158, %v4176, 0
  %v4321 = vsel %vm158, %v4178, 0
  %4323 = vmatpush.msra.mxu0 %v4074
  %4324 = vmatpush.msra.mxu0 %v4073
  %4325 = vmatpush.msra.mxu0 %v4072
  %4326 = vmatpush.msra.mxu0 %v4071
  %4327 = vmatpush.msra.mxu0 %v4070
  %4328 = vmatpush.msra.mxu0 %v4069
  %4329 = vmatpush.msra.mxu0 %v4068
  %4330 = vmatpush.msra.mxu0 %v4067
  %4331 = vmatpush.msra.mxu0 %v4066
  %4332 = vmatpush.msra.mxu0 %v4065
  %4333 = vmatpush.msra.mxu0 %v4064
  %4334 = vmatpush.msra.mxu0 %v4063
  %4335 = vmatpush.msra.mxu0 %v4062
  %4336 = vmatpush.msra.mxu0 %v4061
  %4337 = vmatpush.msra.mxu0 %v4060
  %4338 = vmatpush.msra.mxu0 %v4059
  %4339 = vmatmul.f32.gmra.mxu0 %v4083
  %v4340 = vpop.f32.mrf.mxu0
  %v4341 = vadd.f32 0.0, %v4340
  %4342 = vmatmul.f32.gmra.mxu0 %v4085
  %v4343 = vpop.f32.mrf.mxu0
  %v4344 = vadd.f32 0.0, %v4343
  %4345 = vmatmul.f32.gmra.mxu0 %v4087
  %v4346 = vpop.f32.mrf.mxu0
  %v4347 = vadd.f32 0.0, %v4346
  %4348 = vmatmul.f32.gmra.mxu0 %v4089
  %v4349 = vpop.f32.mrf.mxu0
  %v4350 = vadd.f32 0.0, %v4349
  %4351 = vmatmul.f32.gmra.mxu0 %v4091
  %v4352 = vpop.f32.mrf.mxu0
  %v4353 = vadd.f32 0.0, %v4352
  %4354 = vmatmul.f32.gmra.mxu0 %v4093
  %v4355 = vpop.f32.mrf.mxu0
  %v4356 = vadd.f32 0.0, %v4355
  %4357 = vmatmul.f32.gmra.mxu0 %v4095
  %v4358 = vpop.f32.mrf.mxu0
  %v4359 = vadd.f32 0.0, %v4358
  %4360 = vmatmul.f32.gmra.mxu0 %v4097
  %v4361 = vpop.f32.mrf.mxu0
  %v4362 = vadd.f32 0.0, %v4361
  %4363 = vmatmul.f32.gmra.mxu0 %v4099
  %v4364 = vpop.f32.mrf.mxu0
  %v4365 = vadd.f32 0.0, %v4364
  %4366 = vmatmul.f32.gmra.mxu0 %v4101
  %v4367 = vpop.f32.mrf.mxu0
  %v4368 = vadd.f32 0.0, %v4367
  %4369 = vmatmul.f32.gmra.mxu0 %v4103
  %v4370 = vpop.f32.mrf.mxu0
  %v4371 = vadd.f32 0.0, %v4370
  %4372 = vmatmul.f32.gmra.mxu0 %v4105
  %v4373 = vpop.f32.mrf.mxu0
  %v4374 = vadd.f32 0.0, %v4373
  %4375 = vmatmul.f32.gmra.mxu0 %v4107
  %v4376 = vpop.f32.mrf.mxu0
  %v4377 = vadd.f32 0.0, %v4376
  %4378 = vmatmul.f32.gmra.mxu0 %v4109
  %v4379 = vpop.f32.mrf.mxu0
  %v4380 = vadd.f32 0.0, %v4379
  %4381 = vmatmul.f32.gmra.mxu0 %v4111
  %v4382 = vpop.f32.mrf.mxu0
  %v4383 = vadd.f32 0.0, %v4382
  %4384 = vmatmul.f32.gmra.mxu0 %v4113
  %v4385 = vpop.f32.mrf.mxu0
  %v4386 = vadd.f32 0.0, %v4385
  %4387 = vmatmul.f32.gmra.mxu0 %v4115
  %v4388 = vpop.f32.mrf.mxu0
  %v4389 = vadd.f32 0.0, %v4388
  %4390 = vmatmul.f32.gmra.mxu0 %v4117
  %v4391 = vpop.f32.mrf.mxu0
  %v4392 = vadd.f32 0.0, %v4391
  %4393 = vmatmul.f32.gmra.mxu0 %v4119
  %v4394 = vpop.f32.mrf.mxu0
  %v4395 = vadd.f32 0.0, %v4394
  %4396 = vmatmul.f32.gmra.mxu0 %v4121
  %v4397 = vpop.f32.mrf.mxu0
  %v4398 = vadd.f32 0.0, %v4397
  %4399 = vmatmul.f32.gmra.mxu0 %v4123
  %v4400 = vpop.f32.mrf.mxu0
  %v4401 = vadd.f32 0.0, %v4400
  %4402 = vmatmul.f32.gmra.mxu0 %v4125
  %v4403 = vpop.f32.mrf.mxu0
  %v4404 = vadd.f32 0.0, %v4403
  %4405 = vmatmul.f32.gmra.mxu0 %v4127
  %v4406 = vpop.f32.mrf.mxu0
  %v4407 = vadd.f32 0.0, %v4406
  %4408 = vmatmul.f32.gmra.mxu0 %v4129
  %v4409 = vpop.f32.mrf.mxu0
  %v4410 = vadd.f32 0.0, %v4409
  %4411 = vmatmul.f32.gmra.mxu0 %v4131
  %v4412 = vpop.f32.mrf.mxu0
  %v4413 = vadd.f32 0.0, %v4412
  %4414 = vmatmul.f32.gmra.mxu0 %v4133
  %v4415 = vpop.f32.mrf.mxu0
  %v4416 = vadd.f32 0.0, %v4415
  %4417 = vmatmul.f32.gmra.mxu0 %v4135
  %v4418 = vpop.f32.mrf.mxu0
  %v4419 = vadd.f32 0.0, %v4418
  %4420 = vmatmul.f32.gmra.mxu0 %v4137
  %v4421 = vpop.f32.mrf.mxu0
  %v4422 = vadd.f32 0.0, %v4421
  %4423 = vmatmul.f32.gmra.mxu0 %v4139
  %v4424 = vpop.f32.mrf.mxu0
  %v4425 = vadd.f32 0.0, %v4424
  %4426 = vmatmul.f32.gmra.mxu0 %v4141
  %v4427 = vpop.f32.mrf.mxu0
  %v4428 = vadd.f32 0.0, %v4427
  %4429 = vmatmul.f32.gmra.mxu0 %v4143
  %v4430 = vpop.f32.mrf.mxu0
  %v4431 = vadd.f32 0.0, %v4430
  %4432 = vmatmul.f32.gmra.mxu0 %v4145
  %v4433 = vpop.f32.mrf.mxu0
  %v4434 = vadd.f32 0.0, %v4433
  %4435 = vmatmul.f32.gmra.mxu0 %v4147
  %v4436 = vpop.f32.mrf.mxu0
  %v4437 = vadd.f32 0.0, %v4436
  %4438 = vmatmul.f32.gmra.mxu0 %v4149
  %v4439 = vpop.f32.mrf.mxu0
  %v4440 = vadd.f32 0.0, %v4439
  %4441 = vmatmul.f32.gmra.mxu0 %v4151
  %v4442 = vpop.f32.mrf.mxu0
  %v4443 = vadd.f32 0.0, %v4442
  %4444 = vmatmul.f32.gmra.mxu0 %v4153
  %v4445 = vpop.f32.mrf.mxu0
  %v4446 = vadd.f32 0.0, %v4445
  %4447 = vmatmul.f32.gmra.mxu0 %v4155
  %v4448 = vpop.f32.mrf.mxu0
  %v4449 = vadd.f32 0.0, %v4448
  %4450 = vmatmul.f32.gmra.mxu0 %v4157
  %v4451 = vpop.f32.mrf.mxu0
  %v4452 = vadd.f32 0.0, %v4451
  %4453 = vmatmul.f32.gmra.mxu0 %v4159
  %v4454 = vpop.f32.mrf.mxu0
  %v4455 = vadd.f32 0.0, %v4454
  %4456 = vmatmul.f32.gmra.mxu0 %v4161
  %v4457 = vpop.f32.mrf.mxu0
  %v4458 = vadd.f32 0.0, %v4457
  %4459 = vmatmul.f32.gmra.mxu0 %v4163
  %v4460 = vpop.f32.mrf.mxu0
  %v4461 = vadd.f32 0.0, %v4460
  %4462 = vmatmul.f32.gmra.mxu0 %v4165
  %v4463 = vpop.f32.mrf.mxu0
  %v4464 = vadd.f32 0.0, %v4463
  %4465 = vmatmul.f32.gmra.mxu0 %v4167
  %v4466 = vpop.f32.mrf.mxu0
  %v4467 = vadd.f32 0.0, %v4466
  %4468 = vmatmul.f32.gmra.mxu0 %v4169
  %v4469 = vpop.f32.mrf.mxu0
  %v4470 = vadd.f32 0.0, %v4469
  %4471 = vmatmul.f32.gmra.mxu0 %v4171
  %v4472 = vpop.f32.mrf.mxu0
  %v4473 = vadd.f32 0.0, %v4472
  %4474 = vmatmul.f32.gmra.mxu0 %v4173
  %v4475 = vpop.f32.mrf.mxu0
  %v4476 = vadd.f32 0.0, %v4475
  %4477 = vmatmul.f32.gmra.mxu0 %v4175
  %v4478 = vpop.f32.mrf.mxu0
  %v4479 = vadd.f32 0.0, %v4478
  %4480 = vmatmul.f32.gmra.mxu0 %v4177
  %v4481 = vpop.f32.mrf.mxu0
  %v4482 = vadd.f32 0.0, %v4481
  %4483 = vdwg.mxu0
  %4484 = vmatpush.msra.mxu0 0.0
  %4485 = vmatpush.msra.mxu0 0.0
  %4486 = vmatpush.msra.mxu0 0.0
  %4487 = vmatpush.msra.mxu0 0.0
  %4488 = vmatpush.msra.mxu0 0.0
  %4489 = vmatpush.msra.mxu0 0.0
  %4490 = vmatpush.msra.mxu0 0.0
  %4491 = vmatpush.msra.mxu0 0.0
  %4492 = vmatpush.msra.mxu0 %v4082
  %4493 = vmatpush.msra.mxu0 %v4081
  %4494 = vmatpush.msra.mxu0 %v4080
  %4495 = vmatpush.msra.mxu0 %v4079
  %4496 = vmatpush.msra.mxu0 %v4078
  %4497 = vmatpush.msra.mxu0 %v4077
  %4498 = vmatpush.msra.mxu0 %v4076
  %4499 = vmatpush.msra.mxu0 %v4075
  %4500 = vmatmul.f32.gmra.mxu0 %v4180
  %v4501 = vpop.f32.mrf.mxu0
  %v4502 = vadd.f32 %v4341, %v4501
  %4503 = vmatmul.f32.gmra.mxu0 %v4183
  %v4504 = vpop.f32.mrf.mxu0
  %v4505 = vadd.f32 %v4344, %v4504
  %4506 = vmatmul.f32.gmra.mxu0 %v4186
  %v4507 = vpop.f32.mrf.mxu0
  %v4508 = vadd.f32 %v4347, %v4507
  %4509 = vmatmul.f32.gmra.mxu0 %v4189
  %v4510 = vpop.f32.mrf.mxu0
  %v4511 = vadd.f32 %v4350, %v4510
  %4512 = vmatmul.f32.gmra.mxu0 %v4192
  %v4513 = vpop.f32.mrf.mxu0
  %v4514 = vadd.f32 %v4353, %v4513
  %4515 = vmatmul.f32.gmra.mxu0 %v4195
  %v4516 = vpop.f32.mrf.mxu0
  %v4517 = vadd.f32 %v4356, %v4516
  %4518 = vmatmul.f32.gmra.mxu0 %v4198
  %v4519 = vpop.f32.mrf.mxu0
  %v4520 = vadd.f32 %v4359, %v4519
  %4521 = vmatmul.f32.gmra.mxu0 %v4201
  %v4522 = vpop.f32.mrf.mxu0
  %v4523 = vadd.f32 %v4362, %v4522
  %4524 = vmatmul.f32.gmra.mxu0 %v4204
  %v4525 = vpop.f32.mrf.mxu0
  %v4526 = vadd.f32 %v4365, %v4525
  %4527 = vmatmul.f32.gmra.mxu0 %v4207
  %v4528 = vpop.f32.mrf.mxu0
  %v4529 = vadd.f32 %v4368, %v4528
  %4530 = vmatmul.f32.gmra.mxu0 %v4210
  %v4531 = vpop.f32.mrf.mxu0
  %v4532 = vadd.f32 %v4371, %v4531
  %4533 = vmatmul.f32.gmra.mxu0 %v4213
  %v4534 = vpop.f32.mrf.mxu0
  %v4535 = vadd.f32 %v4374, %v4534
  %4536 = vmatmul.f32.gmra.mxu0 %v4216
  %v4537 = vpop.f32.mrf.mxu0
  %v4538 = vadd.f32 %v4377, %v4537
  %4539 = vmatmul.f32.gmra.mxu0 %v4219
  %v4540 = vpop.f32.mrf.mxu0
  %v4541 = vadd.f32 %v4380, %v4540
  %4542 = vmatmul.f32.gmra.mxu0 %v4222
  %v4543 = vpop.f32.mrf.mxu0
  %v4544 = vadd.f32 %v4383, %v4543
  %4545 = vmatmul.f32.gmra.mxu0 %v4225
  %v4546 = vpop.f32.mrf.mxu0
  %v4547 = vadd.f32 %v4386, %v4546
  %4548 = vmatmul.f32.gmra.mxu0 %v4228
  %v4549 = vpop.f32.mrf.mxu0
  %v4550 = vadd.f32 %v4389, %v4549
  %4551 = vmatmul.f32.gmra.mxu0 %v4231
  %v4552 = vpop.f32.mrf.mxu0
  %v4553 = vadd.f32 %v4392, %v4552
  %4554 = vmatmul.f32.gmra.mxu0 %v4234
  %v4555 = vpop.f32.mrf.mxu0
  %v4556 = vadd.f32 %v4395, %v4555
  %4557 = vmatmul.f32.gmra.mxu0 %v4237
  %v4558 = vpop.f32.mrf.mxu0
  %v4559 = vadd.f32 %v4398, %v4558
  %4560 = vmatmul.f32.gmra.mxu0 %v4240
  %v4561 = vpop.f32.mrf.mxu0
  %v4562 = vadd.f32 %v4401, %v4561
  %4563 = vmatmul.f32.gmra.mxu0 %v4243
  %v4564 = vpop.f32.mrf.mxu0
  %v4565 = vadd.f32 %v4404, %v4564
  %4566 = vmatmul.f32.gmra.mxu0 %v4246
  %v4567 = vpop.f32.mrf.mxu0
  %v4568 = vadd.f32 %v4407, %v4567
  %4569 = vmatmul.f32.gmra.mxu0 %v4249
  %v4570 = vpop.f32.mrf.mxu0
  %v4571 = vadd.f32 %v4410, %v4570
  %4572 = vmatmul.f32.gmra.mxu0 %v4252
  %v4573 = vpop.f32.mrf.mxu0
  %v4574 = vadd.f32 %v4413, %v4573
  %4575 = vmatmul.f32.gmra.mxu0 %v4255
  %v4576 = vpop.f32.mrf.mxu0
  %v4577 = vadd.f32 %v4416, %v4576
  %4578 = vmatmul.f32.gmra.mxu0 %v4258
  %v4579 = vpop.f32.mrf.mxu0
  %v4580 = vadd.f32 %v4419, %v4579
  %4581 = vmatmul.f32.gmra.mxu0 %v4261
  %v4582 = vpop.f32.mrf.mxu0
  %v4583 = vadd.f32 %v4422, %v4582
  %4584 = vmatmul.f32.gmra.mxu0 %v4264
  %v4585 = vpop.f32.mrf.mxu0
  %v4586 = vadd.f32 %v4425, %v4585
  %4587 = vmatmul.f32.gmra.mxu0 %v4267
  %v4588 = vpop.f32.mrf.mxu0
  %v4589 = vadd.f32 %v4428, %v4588
  %4590 = vmatmul.f32.gmra.mxu0 %v4270
  %v4591 = vpop.f32.mrf.mxu0
  %v4592 = vadd.f32 %v4431, %v4591
  %4593 = vmatmul.f32.gmra.mxu0 %v4273
  %v4594 = vpop.f32.mrf.mxu0
  %v4595 = vadd.f32 %v4434, %v4594
  %4596 = vmatmul.f32.gmra.mxu0 %v4276
  %v4597 = vpop.f32.mrf.mxu0
  %v4598 = vadd.f32 %v4437, %v4597
  %4599 = vmatmul.f32.gmra.mxu0 %v4279
  %v4600 = vpop.f32.mrf.mxu0
  %v4601 = vadd.f32 %v4440, %v4600
  %4602 = vmatmul.f32.gmra.mxu0 %v4282
  %v4603 = vpop.f32.mrf.mxu0
  %v4604 = vadd.f32 %v4443, %v4603
  %4605 = vmatmul.f32.gmra.mxu0 %v4285
  %v4606 = vpop.f32.mrf.mxu0
  %v4607 = vadd.f32 %v4446, %v4606
  %4608 = vmatmul.f32.gmra.mxu0 %v4288
  %v4609 = vpop.f32.mrf.mxu0
  %v4610 = vadd.f32 %v4449, %v4609
  %4611 = vmatmul.f32.gmra.mxu0 %v4291
  %v4612 = vpop.f32.mrf.mxu0
  %v4613 = vadd.f32 %v4452, %v4612
  %4614 = vmatmul.f32.gmra.mxu0 %v4294
  %v4615 = vpop.f32.mrf.mxu0
  %v4616 = vadd.f32 %v4455, %v4615
  %4617 = vmatmul.f32.gmra.mxu0 %v4297
  %v4618 = vpop.f32.mrf.mxu0
  %v4619 = vadd.f32 %v4458, %v4618
  %4620 = vmatmul.f32.gmra.mxu0 %v4300
  %v4621 = vpop.f32.mrf.mxu0
  %v4622 = vadd.f32 %v4461, %v4621
  %4623 = vmatmul.f32.gmra.mxu0 %v4303
  %v4624 = vpop.f32.mrf.mxu0
  %v4625 = vadd.f32 %v4464, %v4624
  %4626 = vmatmul.f32.gmra.mxu0 %v4306
  %v4627 = vpop.f32.mrf.mxu0
  %v4628 = vadd.f32 %v4467, %v4627
  %4629 = vmatmul.f32.gmra.mxu0 %v4309
  %v4630 = vpop.f32.mrf.mxu0
  %v4631 = vadd.f32 %v4470, %v4630
  %4632 = vmatmul.f32.gmra.mxu0 %v4312
  %v4633 = vpop.f32.mrf.mxu0
  %v4634 = vadd.f32 %v4473, %v4633
  %4635 = vmatmul.f32.gmra.mxu0 %v4315
  %v4636 = vpop.f32.mrf.mxu0
  %v4637 = vadd.f32 %v4476, %v4636
  %4638 = vmatmul.f32.gmra.mxu0 %v4318
  %v4639 = vpop.f32.mrf.mxu0
  %v4640 = vadd.f32 %v4479, %v4639
  %4641 = vmatmul.f32.gmra.mxu0 %v4321
  %v4642 = vpop.f32.mrf.mxu0
  %v4643 = vadd.f32 %v4482, %v4642
  %4644 = vdwg.mxu0
  %v4645 = vmax.f32 %v4502, %v4574
  %v4646 = vmax.f32 %v4505, %v4577
  %v4647 = vmax.f32 %v4508, %v4580
  %v4648 = vmax.f32 %v4511, %v4583
  %v4649 = vmax.f32 %v4514, %v4586
  %v4650 = vmax.f32 %v4517, %v4589
  %v4651 = vmax.f32 %v4520, %v4592
  %v4652 = vmax.f32 %v4523, %v4595
  %v4653 = vmax.f32 %v4526, %v4598
  %v4654 = vmax.f32 %v4529, %v4601
  %v4655 = vmax.f32 %v4532, %v4604
  %v4656 = vmax.f32 %v4535, %v4607
  %v4657 = vmax.f32 %v4538, %v4610
  %v4658 = vmax.f32 %v4541, %v4613
  %v4659 = vmax.f32 %v4544, %v4616
  %v4660 = vmax.f32 %v4547, %v4619
  %v4661 = vmax.f32 %v4550, %v4622
  %v4662 = vmax.f32 %v4553, %v4625
  %v4663 = vmax.f32 %v4556, %v4628
  %v4664 = vmax.f32 %v4559, %v4631
  %v4665 = vmax.f32 %v4562, %v4634
  %v4666 = vmax.f32 %v4565, %v4637
  %v4667 = vmax.f32 %v4568, %v4640
  %v4668 = vmax.f32 %v4571, %v4643
  %v4669 = vmax.f32 %v4645, %v4657
  %v4670 = vmax.f32 %v4646, %v4658
  %v4671 = vmax.f32 %v4647, %v4659
  %v4672 = vmax.f32 %v4648, %v4660
  %v4673 = vmax.f32 %v4649, %v4661
  %v4674 = vmax.f32 %v4650, %v4662
  %v4675 = vmax.f32 %v4651, %v4663
  %v4676 = vmax.f32 %v4652, %v4664
  %v4677 = vmax.f32 %v4653, %v4665
  %v4678 = vmax.f32 %v4654, %v4666
  %v4679 = vmax.f32 %v4655, %v4667
  %v4680 = vmax.f32 %v4656, %v4668
  %v4681 = vld [vmem:[%s2] sm:$0xff]
  %v4682 = vld [vmem:[%s2 + $0x8] sm:$0xff]
  %v4683 = vld [vmem:[%s2 + $0x10] sm:$0xff]
  %v4684 = vld [vmem:[%s2 + $0x18] sm:$0xff]
  %v4685 = vld [vmem:[%s2 + $0x20] sm:$0xff]
  %v4686 = vld [vmem:[%s2 + $0x28] sm:$0xff]
  %v4687 = vld [vmem:[%s2 + $0x30] sm:$0xff]
  %v4688 = vld [vmem:[%s2 + $0x38] sm:$0xff]
  %v4689 = vld [vmem:[%s2 + $0x40] sm:$0xff]
  %v4690 = vld [vmem:[%s2 + $0x48] sm:$0xff]
  %v4691 = vld [vmem:[%s2 + $0x50] sm:$0xff]
  %v4692 = vld [vmem:[%s2 + $0x58] sm:$0xff]
  %v4693 = vadd.f32 %v4669, %v4681
  %v4694 = vadd.f32 %v4670, %v4682
  %v4695 = vadd.f32 %v4671, %v4683
  %v4696 = vadd.f32 %v4672, %v4684
  %v4697 = vadd.f32 %v4673, %v4685
  %v4698 = vadd.f32 %v4674, %v4686
  %v4699 = vadd.f32 %v4675, %v4687
  %v4700 = vadd.f32 %v4676, %v4688
  %v4701 = vadd.f32 %v4677, %v4689
  %v4702 = vadd.f32 %v4678, %v4690
  %v4703 = vadd.f32 %v4679, %v4691
  %v4704 = vadd.f32 %v4680, %v4692
  %v4705 = vmax.f32 %v4693, 0.0
  %v4706 = vmax.f32 %v4694, 0.0
  %v4707 = vmax.f32 %v4695, 0.0
  %v4708 = vmax.f32 %v4696, 0.0
  %v4709 = vmax.f32 %v4697, 0.0
  %v4710 = vmax.f32 %v4698, 0.0
  %v4711 = vmax.f32 %v4699, 0.0
  %v4712 = vmax.f32 %v4700, 0.0
  %v4713 = vmax.f32 %v4701, 0.0
  %v4714 = vmax.f32 %v4702, 0.0
  %v4715 = vmax.f32 %v4703, 0.0
  %v4716 = vmax.f32 %v4704, 0.0
  %4717 = vst [vmem:[#allocation2 + $0x240] sm:$0xff] %v4705
  %4718 = vst [vmem:[#allocation2 + $0x248] sm:$0xff] %v4706
  %4719 = vst [vmem:[#allocation2 + $0x250] sm:$0xff] %v4707
  %4720 = vst [vmem:[#allocation2 + $0x258] sm:$0xff] %v4708
  %4721 = vst [vmem:[#allocation2 + $0x260] sm:$0xff] %v4709
  %4722 = vst [vmem:[#allocation2 + $0x268] sm:$0xff] %v4710
  %4723 = vst [vmem:[#allocation2 + $0x270] sm:$0xff] %v4711
  %4724 = vst [vmem:[#allocation2 + $0x278] sm:$0xff] %v4712
  %4725 = vst [vmem:[#allocation2 + $0x280] sm:$0xff] %v4713
  %4726 = vst [vmem:[#allocation2 + $0x288] sm:$0xff] %v4714
  %4727 = vst [vmem:[#allocation2 + $0x290] sm:$0xff] %v4715
  %4728 = vst [vmem:[#allocation2 + $0x298] sm:$0xff] %v4716
  %v4729 = vld [vmem:[%s0 + $0x1c0] sm:$0xff]
  %v4730 = vld [vmem:[%s0 + $0x1c8] sm:$0xff]
  %v4731 = vld [vmem:[%s0 + $0x1d0] sm:$0xff]
  %v4732 = vld [vmem:[%s0 + $0x1d8] sm:$0xff]
  %v4733 = vld [vmem:[%s0 + $0x1e0] sm:$0xff]
  %v4734 = vld [vmem:[%s0 + $0x1e8] sm:$0xff]
  %v4735 = vld [vmem:[%s0 + $0x1f0] sm:$0xff]
  %v4736 = vld [vmem:[%s0 + $0x1f8] sm:$0xff]
  %v4737 = vld [vmem:[%s0 + $0x200] sm:$0xff]
  %v4738 = vld [vmem:[%s0 + $0x208] sm:$0xff]
  %v4739 = vld [vmem:[%s0 + $0x210] sm:$0xff]
  %v4740 = vld [vmem:[%s0 + $0x218] sm:$0xff]
  %v4741 = vld [vmem:[%s0 + $0x220] sm:$0xff]
  %v4742 = vld [vmem:[%s0 + $0x228] sm:$0xff]
  %v4743 = vld [vmem:[%s0 + $0x230] sm:$0xff]
  %v4744 = vld [vmem:[%s0 + $0x238] sm:$0xff]
  %v4745 = vld [vmem:[%s0 + $0x240] sm:$0xff]
  %v4746 = vld [vmem:[%s0 + $0x248] sm:$0xff]
  %v4747 = vld [vmem:[%s0 + $0x250] sm:$0xff]
  %v4748 = vld [vmem:[%s0 + $0x258] sm:$0xff]
  %v4749 = vld [vmem:[%s0 + $0x260] sm:$0xff]
  %v4750 = vld [vmem:[%s0 + $0x268] sm:$0xff]
  %v4751 = vld [vmem:[%s0 + $0x270] sm:$0xff]
  %v4752 = vld [vmem:[%s0 + $0x278] sm:$0xff]
  %v4753 = vld [vmem:[%s1] sm:$0xff]
  %v4754 = vld [vmem:[%s1 + $0x8] sm:$0xff]
  %v4755 = vld [vmem:[%s1 + $0x10] sm:$0xff]
  %v4756 = vld [vmem:[%s1 + $0x18] sm:$0xff]
  %v4757 = vld [vmem:[%s1 + $0x20] sm:$0xff]
  %v4758 = vld [vmem:[%s1 + $0x28] sm:$0xff]
  %v4759 = vld [vmem:[%s1 + $0x30] sm:$0xff]
  %v4760 = vld [vmem:[%s1 + $0x38] sm:$0xff]
  %v4761 = vld [vmem:[%s1 + $0x40] sm:$0xff]
  %v4762 = vld [vmem:[%s1 + $0x48] sm:$0xff]
  %v4763 = vld [vmem:[%s1 + $0x50] sm:$0xff]
  %v4764 = vld [vmem:[%s1 + $0x58] sm:$0xff]
  %v4765 = vld [vmem:[%s1 + $0x60] sm:$0xff]
  %v4766 = vld [vmem:[%s1 + $0x68] sm:$0xff]
  %v4767 = vld [vmem:[%s1 + $0x70] sm:$0xff]
  %v4768 = vld [vmem:[%s1 + $0x78] sm:$0xff]
  %v4769 = vld [vmem:[%s1 + $0x80] sm:$0xff]
  %v4770 = vld [vmem:[%s1 + $0x88] sm:$0xff]
  %v4771 = vld [vmem:[%s1 + $0x90] sm:$0xff]
  %v4772 = vld [vmem:[%s1 + $0x98] sm:$0xff]
  %v4773 = vld [vmem:[%s1 + $0xa0] sm:$0xff]
  %v4774 = vld [vmem:[%s1 + $0xa8] sm:$0xff]
  %v4775 = vld [vmem:[%s1 + $0xb0] sm:$0xff]
  %v4776 = vld [vmem:[%s1 + $0xb8] sm:$0xff]
  %v4777 = vld [vmem:[%s1 + $0xc0] sm:$0xff]
  %v4778 = vld [vmem:[%s1 + $0xc8] sm:$0xff]
  %v4779 = vld [vmem:[%s1 + $0xd0] sm:$0xff]
  %v4780 = vld [vmem:[%s1 + $0xd8] sm:$0xff]
  %v4781 = vld [vmem:[%s1 + $0xe0] sm:$0xff]
  %v4782 = vld [vmem:[%s1 + $0xe8] sm:$0xff]
  %v4783 = vld [vmem:[%s1 + $0xf0] sm:$0xff]
  %v4784 = vld [vmem:[%s1 + $0xf8] sm:$0xff]
  %v4785 = vld [vmem:[%s1 + $0x100] sm:$0xff]
  %v4786 = vld [vmem:[%s1 + $0x108] sm:$0xff]
  %v4787 = vld [vmem:[%s1 + $0x110] sm:$0xff]
  %v4788 = vld [vmem:[%s1 + $0x118] sm:$0xff]
  %v4789 = vld [vmem:[%s1 + $0x120] sm:$0xff]
  %v4790 = vld [vmem:[%s1 + $0x128] sm:$0xff]
  %v4791 = vld [vmem:[%s1 + $0x130] sm:$0xff]
  %v4792 = vld [vmem:[%s1 + $0x138] sm:$0xff]
  %v4793 = vld [vmem:[%s1 + $0x140] sm:$0xff]
  %v4794 = vld [vmem:[%s1 + $0x148] sm:$0xff]
  %v4795 = vld [vmem:[%s1 + $0x150] sm:$0xff]
  %v4796 = vld [vmem:[%s1 + $0x158] sm:$0xff]
  %v4797 = vld [vmem:[%s1 + $0x160] sm:$0xff]
  %v4798 = vld [vmem:[%s1 + $0x168] sm:$0xff]
  %v4799 = vld [vmem:[%s1 + $0x170] sm:$0xff]
  %v4800 = vld [vmem:[%s1 + $0x178] sm:$0xff]
  %v4801 = vld [vmem:[%s1 + $0x180] sm:$0xff]
  %v4802 = vld [vmem:[%s1 + $0x188] sm:$0xff]
  %v4803 = vld [vmem:[%s1 + $0x190] sm:$0xff]
  %v4804 = vld [vmem:[%s1 + $0x198] sm:$0xff]
  %v4805 = vld [vmem:[%s1 + $0x1a0] sm:$0xff]
  %v4806 = vld [vmem:[%s1 + $0x1a8] sm:$0xff]
  %v4807 = vld [vmem:[%s1 + $0x1b0] sm:$0xff]
  %v4808 = vld [vmem:[%s1 + $0x1b8] sm:$0xff]
  %v4809 = vld [vmem:[%s1 + $0x1c0] sm:$0xff]
  %v4810 = vld [vmem:[%s1 + $0x1c8] sm:$0xff]
  %v4811 = vld [vmem:[%s1 + $0x1d0] sm:$0xff]
  %v4812 = vld [vmem:[%s1 + $0x1d8] sm:$0xff]
  %v4813 = vld [vmem:[%s1 + $0x1e0] sm:$0xff]
  %v4814 = vld [vmem:[%s1 + $0x1e8] sm:$0xff]
  %v4815 = vld [vmem:[%s1 + $0x1f0] sm:$0xff]
  %v4816 = vld [vmem:[%s1 + $0x1f8] sm:$0xff]
  %v4817 = vld [vmem:[%s1 + $0x200] sm:$0xff]
  %v4818 = vld [vmem:[%s1 + $0x208] sm:$0xff]
  %v4819 = vld [vmem:[%s1 + $0x210] sm:$0xff]
  %v4820 = vld [vmem:[%s1 + $0x218] sm:$0xff]
  %v4821 = vld [vmem:[%s1 + $0x220] sm:$0xff]
  %v4822 = vld [vmem:[%s1 + $0x228] sm:$0xff]
  %v4823 = vld [vmem:[%s1 + $0x230] sm:$0xff]
  %v4824 = vld [vmem:[%s1 + $0x238] sm:$0xff]
  %v4825 = vld [vmem:[%s1 + $0x240] sm:$0xff]
  %v4826 = vld [vmem:[%s1 + $0x248] sm:$0xff]
  %v4827 = vld [vmem:[%s1 + $0x250] sm:$0xff]
  %v4828 = vld [vmem:[%s1 + $0x258] sm:$0xff]
  %v4829 = vld [vmem:[%s1 + $0x260] sm:$0xff]
  %v4830 = vld [vmem:[%s1 + $0x268] sm:$0xff]
  %v4831 = vld [vmem:[%s1 + $0x270] sm:$0xff]
  %v4832 = vld [vmem:[%s1 + $0x278] sm:$0xff]
  %v4833 = vld [vmem:[%s1 + $0x280] sm:$0xff]
  %v4834 = vld [vmem:[%s1 + $0x288] sm:$0xff]
  %v4835 = vld [vmem:[%s1 + $0x290] sm:$0xff]
  %v4836 = vld [vmem:[%s1 + $0x298] sm:$0xff]
  %v4837 = vld [vmem:[%s1 + $0x2a0] sm:$0xff]
  %v4838 = vld [vmem:[%s1 + $0x2a8] sm:$0xff]
  %v4839 = vld [vmem:[%s1 + $0x2b0] sm:$0xff]
  %v4840 = vld [vmem:[%s1 + $0x2b8] sm:$0xff]
  %v4841 = vld [vmem:[%s1 + $0x2c0] sm:$0xff]
  %v4842 = vld [vmem:[%s1 + $0x2c8] sm:$0xff]
  %v4843 = vld [vmem:[%s1 + $0x2d0] sm:$0xff]
  %v4844 = vld [vmem:[%s1 + $0x2d8] sm:$0xff]
  %v4845 = vld [vmem:[%s1 + $0x2e0] sm:$0xff]
  %v4846 = vld [vmem:[%s1 + $0x2e8] sm:$0xff]
  %v4847 = vld [vmem:[%s1 + $0x2f0] sm:$0xff]
  %v4848 = vld [vmem:[%s1 + $0x2f8] sm:$0xff]
  %v4850 = vsel %vm158, %v4754, 0
  %v4853 = vsel %vm158, %v4756, 0
  %v4856 = vsel %vm158, %v4758, 0
  %v4859 = vsel %vm158, %v4760, 0
  %v4862 = vsel %vm158, %v4762, 0
  %v4865 = vsel %vm158, %v4764, 0
  %v4868 = vsel %vm158, %v4766, 0
  %v4871 = vsel %vm158, %v4768, 0
  %v4874 = vsel %vm158, %v4770, 0
  %v4877 = vsel %vm158, %v4772, 0
  %v4880 = vsel %vm158, %v4774, 0
  %v4883 = vsel %vm158, %v4776, 0
  %v4886 = vsel %vm158, %v4778, 0
  %v4889 = vsel %vm158, %v4780, 0
  %v4892 = vsel %vm158, %v4782, 0
  %v4895 = vsel %vm158, %v4784, 0
  %v4898 = vsel %vm158, %v4786, 0
  %v4901 = vsel %vm158, %v4788, 0
  %v4904 = vsel %vm158, %v4790, 0
  %v4907 = vsel %vm158, %v4792, 0
  %v4910 = vsel %vm158, %v4794, 0
  %v4913 = vsel %vm158, %v4796, 0
  %v4916 = vsel %vm158, %v4798, 0
  %v4919 = vsel %vm158, %v4800, 0
  %v4922 = vsel %vm158, %v4802, 0
  %v4925 = vsel %vm158, %v4804, 0
  %v4928 = vsel %vm158, %v4806, 0
  %v4931 = vsel %vm158, %v4808, 0
  %v4934 = vsel %vm158, %v4810, 0
  %v4937 = vsel %vm158, %v4812, 0
  %v4940 = vsel %vm158, %v4814, 0
  %v4943 = vsel %vm158, %v4816, 0
  %v4946 = vsel %vm158, %v4818, 0
  %v4949 = vsel %vm158, %v4820, 0
  %v4952 = vsel %vm158, %v4822, 0
  %v4955 = vsel %vm158, %v4824, 0
  %v4958 = vsel %vm158, %v4826, 0
  %v4961 = vsel %vm158, %v4828, 0
  %v4964 = vsel %vm158, %v4830, 0
  %v4967 = vsel %vm158, %v4832, 0
  %v4970 = vsel %vm158, %v4834, 0
  %v4973 = vsel %vm158, %v4836, 0
  %v4976 = vsel %vm158, %v4838, 0
  %v4979 = vsel %vm158, %v4840, 0
  %v4982 = vsel %vm158, %v4842, 0
  %v4985 = vsel %vm158, %v4844, 0
  %v4988 = vsel %vm158, %v4846, 0
  %v4991 = vsel %vm158, %v4848, 0
  %4993 = vmatpush.msra.mxu0 %v4744
  %4994 = vmatpush.msra.mxu0 %v4743
  %4995 = vmatpush.msra.mxu0 %v4742
  %4996 = vmatpush.msra.mxu0 %v4741
  %4997 = vmatpush.msra.mxu0 %v4740
  %4998 = vmatpush.msra.mxu0 %v4739
  %4999 = vmatpush.msra.mxu0 %v4738
  %5000 = vmatpush.msra.mxu0 %v4737
  %5001 = vmatpush.msra.mxu0 %v4736
  %5002 = vmatpush.msra.mxu0 %v4735
  %5003 = vmatpush.msra.mxu0 %v4734
  %5004 = vmatpush.msra.mxu0 %v4733
  %5005 = vmatpush.msra.mxu0 %v4732
  %5006 = vmatpush.msra.mxu0 %v4731
  %5007 = vmatpush.msra.mxu0 %v4730
  %5008 = vmatpush.msra.mxu0 %v4729
  %5009 = vmatmul.f32.gmra.mxu0 %v4753
  %v5010 = vpop.f32.mrf.mxu0
  %v5011 = vadd.f32 0.0, %v5010
  %5012 = vmatmul.f32.gmra.mxu0 %v4755
  %v5013 = vpop.f32.mrf.mxu0
  %v5014 = vadd.f32 0.0, %v5013
  %5015 = vmatmul.f32.gmra.mxu0 %v4757
  %v5016 = vpop.f32.mrf.mxu0
  %v5017 = vadd.f32 0.0, %v5016
  %5018 = vmatmul.f32.gmra.mxu0 %v4759
  %v5019 = vpop.f32.mrf.mxu0
  %v5020 = vadd.f32 0.0, %v5019
  %5021 = vmatmul.f32.gmra.mxu0 %v4761
  %v5022 = vpop.f32.mrf.mxu0
  %v5023 = vadd.f32 0.0, %v5022
  %5024 = vmatmul.f32.gmra.mxu0 %v4763
  %v5025 = vpop.f32.mrf.mxu0
  %v5026 = vadd.f32 0.0, %v5025
  %5027 = vmatmul.f32.gmra.mxu0 %v4765
  %v5028 = vpop.f32.mrf.mxu0
  %v5029 = vadd.f32 0.0, %v5028
  %5030 = vmatmul.f32.gmra.mxu0 %v4767
  %v5031 = vpop.f32.mrf.mxu0
  %v5032 = vadd.f32 0.0, %v5031
  %5033 = vmatmul.f32.gmra.mxu0 %v4769
  %v5034 = vpop.f32.mrf.mxu0
  %v5035 = vadd.f32 0.0, %v5034
  %5036 = vmatmul.f32.gmra.mxu0 %v4771
  %v5037 = vpop.f32.mrf.mxu0
  %v5038 = vadd.f32 0.0, %v5037
  %5039 = vmatmul.f32.gmra.mxu0 %v4773
  %v5040 = vpop.f32.mrf.mxu0
  %v5041 = vadd.f32 0.0, %v5040
  %5042 = vmatmul.f32.gmra.mxu0 %v4775
  %v5043 = vpop.f32.mrf.mxu0
  %v5044 = vadd.f32 0.0, %v5043
  %5045 = vmatmul.f32.gmra.mxu0 %v4777
  %v5046 = vpop.f32.mrf.mxu0
  %v5047 = vadd.f32 0.0, %v5046
  %5048 = vmatmul.f32.gmra.mxu0 %v4779
  %v5049 = vpop.f32.mrf.mxu0
  %v5050 = vadd.f32 0.0, %v5049
  %5051 = vmatmul.f32.gmra.mxu0 %v4781
  %v5052 = vpop.f32.mrf.mxu0
  %v5053 = vadd.f32 0.0, %v5052
  %5054 = vmatmul.f32.gmra.mxu0 %v4783
  %v5055 = vpop.f32.mrf.mxu0
  %v5056 = vadd.f32 0.0, %v5055
  %5057 = vmatmul.f32.gmra.mxu0 %v4785
  %v5058 = vpop.f32.mrf.mxu0
  %v5059 = vadd.f32 0.0, %v5058
  %5060 = vmatmul.f32.gmra.mxu0 %v4787
  %v5061 = vpop.f32.mrf.mxu0
  %v5062 = vadd.f32 0.0, %v5061
  %5063 = vmatmul.f32.gmra.mxu0 %v4789
  %v5064 = vpop.f32.mrf.mxu0
  %v5065 = vadd.f32 0.0, %v5064
  %5066 = vmatmul.f32.gmra.mxu0 %v4791
  %v5067 = vpop.f32.mrf.mxu0
  %v5068 = vadd.f32 0.0, %v5067
  %5069 = vmatmul.f32.gmra.mxu0 %v4793
  %v5070 = vpop.f32.mrf.mxu0
  %v5071 = vadd.f32 0.0, %v5070
  %5072 = vmatmul.f32.gmra.mxu0 %v4795
  %v5073 = vpop.f32.mrf.mxu0
  %v5074 = vadd.f32 0.0, %v5073
  %5075 = vmatmul.f32.gmra.mxu0 %v4797
  %v5076 = vpop.f32.mrf.mxu0
  %v5077 = vadd.f32 0.0, %v5076
  %5078 = vmatmul.f32.gmra.mxu0 %v4799
  %v5079 = vpop.f32.mrf.mxu0
  %v5080 = vadd.f32 0.0, %v5079
  %5081 = vmatmul.f32.gmra.mxu0 %v4801
  %v5082 = vpop.f32.mrf.mxu0
  %v5083 = vadd.f32 0.0, %v5082
  %5084 = vmatmul.f32.gmra.mxu0 %v4803
  %v5085 = vpop.f32.mrf.mxu0
  %v5086 = vadd.f32 0.0, %v5085
  %5087 = vmatmul.f32.gmra.mxu0 %v4805
  %v5088 = vpop.f32.mrf.mxu0
  %v5089 = vadd.f32 0.0, %v5088
  %5090 = vmatmul.f32.gmra.mxu0 %v4807
  %v5091 = vpop.f32.mrf.mxu0
  %v5092 = vadd.f32 0.0, %v5091
  %5093 = vmatmul.f32.gmra.mxu0 %v4809
  %v5094 = vpop.f32.mrf.mxu0
  %v5095 = vadd.f32 0.0, %v5094
  %5096 = vmatmul.f32.gmra.mxu0 %v4811
  %v5097 = vpop.f32.mrf.mxu0
  %v5098 = vadd.f32 0.0, %v5097
  %5099 = vmatmul.f32.gmra.mxu0 %v4813
  %v5100 = vpop.f32.mrf.mxu0
  %v5101 = vadd.f32 0.0, %v5100
  %5102 = vmatmul.f32.gmra.mxu0 %v4815
  %v5103 = vpop.f32.mrf.mxu0
  %v5104 = vadd.f32 0.0, %v5103
  %5105 = vmatmul.f32.gmra.mxu0 %v4817
  %v5106 = vpop.f32.mrf.mxu0
  %v5107 = vadd.f32 0.0, %v5106
  %5108 = vmatmul.f32.gmra.mxu0 %v4819
  %v5109 = vpop.f32.mrf.mxu0
  %v5110 = vadd.f32 0.0, %v5109
  %5111 = vmatmul.f32.gmra.mxu0 %v4821
  %v5112 = vpop.f32.mrf.mxu0
  %v5113 = vadd.f32 0.0, %v5112
  %5114 = vmatmul.f32.gmra.mxu0 %v4823
  %v5115 = vpop.f32.mrf.mxu0
  %v5116 = vadd.f32 0.0, %v5115
  %5117 = vmatmul.f32.gmra.mxu0 %v4825
  %v5118 = vpop.f32.mrf.mxu0
  %v5119 = vadd.f32 0.0, %v5118
  %5120 = vmatmul.f32.gmra.mxu0 %v4827
  %v5121 = vpop.f32.mrf.mxu0
  %v5122 = vadd.f32 0.0, %v5121
  %5123 = vmatmul.f32.gmra.mxu0 %v4829
  %v5124 = vpop.f32.mrf.mxu0
  %v5125 = vadd.f32 0.0, %v5124
  %5126 = vmatmul.f32.gmra.mxu0 %v4831
  %v5127 = vpop.f32.mrf.mxu0
  %v5128 = vadd.f32 0.0, %v5127
  %5129 = vmatmul.f32.gmra.mxu0 %v4833
  %v5130 = vpop.f32.mrf.mxu0
  %v5131 = vadd.f32 0.0, %v5130
  %5132 = vmatmul.f32.gmra.mxu0 %v4835
  %v5133 = vpop.f32.mrf.mxu0
  %v5134 = vadd.f32 0.0, %v5133
  %5135 = vmatmul.f32.gmra.mxu0 %v4837
  %v5136 = vpop.f32.mrf.mxu0
  %v5137 = vadd.f32 0.0, %v5136
  %5138 = vmatmul.f32.gmra.mxu0 %v4839
  %v5139 = vpop.f32.mrf.mxu0
  %v5140 = vadd.f32 0.0, %v5139
  %5141 = vmatmul.f32.gmra.mxu0 %v4841
  %v5142 = vpop.f32.mrf.mxu0
  %v5143 = vadd.f32 0.0, %v5142
  %5144 = vmatmul.f32.gmra.mxu0 %v4843
  %v5145 = vpop.f32.mrf.mxu0
  %v5146 = vadd.f32 0.0, %v5145
  %5147 = vmatmul.f32.gmra.mxu0 %v4845
  %v5148 = vpop.f32.mrf.mxu0
  %v5149 = vadd.f32 0.0, %v5148
  %5150 = vmatmul.f32.gmra.mxu0 %v4847
  %v5151 = vpop.f32.mrf.mxu0
  %v5152 = vadd.f32 0.0, %v5151
  %5153 = vdwg.mxu0
  %5154 = vmatpush.msra.mxu0 0.0
  %5155 = vmatpush.msra.mxu0 0.0
  %5156 = vmatpush.msra.mxu0 0.0
  %5157 = vmatpush.msra.mxu0 0.0
  %5158 = vmatpush.msra.mxu0 0.0
  %5159 = vmatpush.msra.mxu0 0.0
  %5160 = vmatpush.msra.mxu0 0.0
  %5161 = vmatpush.msra.mxu0 0.0
  %5162 = vmatpush.msra.mxu0 %v4752
  %5163 = vmatpush.msra.mxu0 %v4751
  %5164 = vmatpush.msra.mxu0 %v4750
  %5165 = vmatpush.msra.mxu0 %v4749
  %5166 = vmatpush.msra.mxu0 %v4748
  %5167 = vmatpush.msra.mxu0 %v4747
  %5168 = vmatpush.msra.mxu0 %v4746
  %5169 = vmatpush.msra.mxu0 %v4745
  %5170 = vmatmul.f32.gmra.mxu0 %v4850
  %v5171 = vpop.f32.mrf.mxu0
  %v5172 = vadd.f32 %v5011, %v5171
  %5173 = vmatmul.f32.gmra.mxu0 %v4853
  %v5174 = vpop.f32.mrf.mxu0
  %v5175 = vadd.f32 %v5014, %v5174
  %5176 = vmatmul.f32.gmra.mxu0 %v4856
  %v5177 = vpop.f32.mrf.mxu0
  %v5178 = vadd.f32 %v5017, %v5177
  %5179 = vmatmul.f32.gmra.mxu0 %v4859
  %v5180 = vpop.f32.mrf.mxu0
  %v5181 = vadd.f32 %v5020, %v5180
  %5182 = vmatmul.f32.gmra.mxu0 %v4862
  %v5183 = vpop.f32.mrf.mxu0
  %v5184 = vadd.f32 %v5023, %v5183
  %5185 = vmatmul.f32.gmra.mxu0 %v4865
  %v5186 = vpop.f32.mrf.mxu0
  %v5187 = vadd.f32 %v5026, %v5186
  %5188 = vmatmul.f32.gmra.mxu0 %v4868
  %v5189 = vpop.f32.mrf.mxu0
  %v5190 = vadd.f32 %v5029, %v5189
  %5191 = vmatmul.f32.gmra.mxu0 %v4871
  %v5192 = vpop.f32.mrf.mxu0
  %v5193 = vadd.f32 %v5032, %v5192
  %5194 = vmatmul.f32.gmra.mxu0 %v4874
  %v5195 = vpop.f32.mrf.mxu0
  %v5196 = vadd.f32 %v5035, %v5195
  %5197 = vmatmul.f32.gmra.mxu0 %v4877
  %v5198 = vpop.f32.mrf.mxu0
  %v5199 = vadd.f32 %v5038, %v5198
  %5200 = vmatmul.f32.gmra.mxu0 %v4880
  %v5201 = vpop.f32.mrf.mxu0
  %v5202 = vadd.f32 %v5041, %v5201
  %5203 = vmatmul.f32.gmra.mxu0 %v4883
  %v5204 = vpop.f32.mrf.mxu0
  %v5205 = vadd.f32 %v5044, %v5204
  %5206 = vmatmul.f32.gmra.mxu0 %v4886
  %v5207 = vpop.f32.mrf.mxu0
  %v5208 = vadd.f32 %v5047, %v5207
  %5209 = vmatmul.f32.gmra.mxu0 %v4889
  %v5210 = vpop.f32.mrf.mxu0
  %v5211 = vadd.f32 %v5050, %v5210
  %5212 = vmatmul.f32.gmra.mxu0 %v4892
  %v5213 = vpop.f32.mrf.mxu0
  %v5214 = vadd.f32 %v5053, %v5213
  %5215 = vmatmul.f32.gmra.mxu0 %v4895
  %v5216 = vpop.f32.mrf.mxu0
  %v5217 = vadd.f32 %v5056, %v5216
  %5218 = vmatmul.f32.gmra.mxu0 %v4898
  %v5219 = vpop.f32.mrf.mxu0
  %v5220 = vadd.f32 %v5059, %v5219
  %5221 = vmatmul.f32.gmra.mxu0 %v4901
  %v5222 = vpop.f32.mrf.mxu0
  %v5223 = vadd.f32 %v5062, %v5222
  %5224 = vmatmul.f32.gmra.mxu0 %v4904
  %v5225 = vpop.f32.mrf.mxu0
  %v5226 = vadd.f32 %v5065, %v5225
  %5227 = vmatmul.f32.gmra.mxu0 %v4907
  %v5228 = vpop.f32.mrf.mxu0
  %v5229 = vadd.f32 %v5068, %v5228
  %5230 = vmatmul.f32.gmra.mxu0 %v4910
  %v5231 = vpop.f32.mrf.mxu0
  %v5232 = vadd.f32 %v5071, %v5231
  %5233 = vmatmul.f32.gmra.mxu0 %v4913
  %v5234 = vpop.f32.mrf.mxu0
  %v5235 = vadd.f32 %v5074, %v5234
  %5236 = vmatmul.f32.gmra.mxu0 %v4916
  %v5237 = vpop.f32.mrf.mxu0
  %v5238 = vadd.f32 %v5077, %v5237
  %5239 = vmatmul.f32.gmra.mxu0 %v4919
  %v5240 = vpop.f32.mrf.mxu0
  %v5241 = vadd.f32 %v5080, %v5240
  %5242 = vmatmul.f32.gmra.mxu0 %v4922
  %v5243 = vpop.f32.mrf.mxu0
  %v5244 = vadd.f32 %v5083, %v5243
  %5245 = vmatmul.f32.gmra.mxu0 %v4925
  %v5246 = vpop.f32.mrf.mxu0
  %v5247 = vadd.f32 %v5086, %v5246
  %5248 = vmatmul.f32.gmra.mxu0 %v4928
  %v5249 = vpop.f32.mrf.mxu0
  %v5250 = vadd.f32 %v5089, %v5249
  %5251 = vmatmul.f32.gmra.mxu0 %v4931
  %v5252 = vpop.f32.mrf.mxu0
  %v5253 = vadd.f32 %v5092, %v5252
  %5254 = vmatmul.f32.gmra.mxu0 %v4934
  %v5255 = vpop.f32.mrf.mxu0
  %v5256 = vadd.f32 %v5095, %v5255
  %5257 = vmatmul.f32.gmra.mxu0 %v4937
  %v5258 = vpop.f32.mrf.mxu0
  %v5259 = vadd.f32 %v5098, %v5258
  %5260 = vmatmul.f32.gmra.mxu0 %v4940
  %v5261 = vpop.f32.mrf.mxu0
  %v5262 = vadd.f32 %v5101, %v5261
  %5263 = vmatmul.f32.gmra.mxu0 %v4943
  %v5264 = vpop.f32.mrf.mxu0
  %v5265 = vadd.f32 %v5104, %v5264
  %5266 = vmatmul.f32.gmra.mxu0 %v4946
  %v5267 = vpop.f32.mrf.mxu0
  %v5268 = vadd.f32 %v5107, %v5267
  %5269 = vmatmul.f32.gmra.mxu0 %v4949
  %v5270 = vpop.f32.mrf.mxu0
  %v5271 = vadd.f32 %v5110, %v5270
  %5272 = vmatmul.f32.gmra.mxu0 %v4952
  %v5273 = vpop.f32.mrf.mxu0
  %v5274 = vadd.f32 %v5113, %v5273
  %5275 = vmatmul.f32.gmra.mxu0 %v4955
  %v5276 = vpop.f32.mrf.mxu0
  %v5277 = vadd.f32 %v5116, %v5276
  %5278 = vmatmul.f32.gmra.mxu0 %v4958
  %v5279 = vpop.f32.mrf.mxu0
  %v5280 = vadd.f32 %v5119, %v5279
  %5281 = vmatmul.f32.gmra.mxu0 %v4961
  %v5282 = vpop.f32.mrf.mxu0
  %v5283 = vadd.f32 %v5122, %v5282
  %5284 = vmatmul.f32.gmra.mxu0 %v4964
  %v5285 = vpop.f32.mrf.mxu0
  %v5286 = vadd.f32 %v5125, %v5285
  %5287 = vmatmul.f32.gmra.mxu0 %v4967
  %v5288 = vpop.f32.mrf.mxu0
  %v5289 = vadd.f32 %v5128, %v5288
  %5290 = vmatmul.f32.gmra.mxu0 %v4970
  %v5291 = vpop.f32.mrf.mxu0
  %v5292 = vadd.f32 %v5131, %v5291
  %5293 = vmatmul.f32.gmra.mxu0 %v4973
  %v5294 = vpop.f32.mrf.mxu0
  %v5295 = vadd.f32 %v5134, %v5294
  %5296 = vmatmul.f32.gmra.mxu0 %v4976
  %v5297 = vpop.f32.mrf.mxu0
  %v5298 = vadd.f32 %v5137, %v5297
  %5299 = vmatmul.f32.gmra.mxu0 %v4979
  %v5300 = vpop.f32.mrf.mxu0
  %v5301 = vadd.f32 %v5140, %v5300
  %5302 = vmatmul.f32.gmra.mxu0 %v4982
  %v5303 = vpop.f32.mrf.mxu0
  %v5304 = vadd.f32 %v5143, %v5303
  %5305 = vmatmul.f32.gmra.mxu0 %v4985
  %v5306 = vpop.f32.mrf.mxu0
  %v5307 = vadd.f32 %v5146, %v5306
  %5308 = vmatmul.f32.gmra.mxu0 %v4988
  %v5309 = vpop.f32.mrf.mxu0
  %v5310 = vadd.f32 %v5149, %v5309
  %5311 = vmatmul.f32.gmra.mxu0 %v4991
  %v5312 = vpop.f32.mrf.mxu0
  %v5313 = vadd.f32 %v5152, %v5312
  %5314 = vdwg.mxu0
  %v5315 = vmax.f32 %v5172, %v5244
  %v5316 = vmax.f32 %v5175, %v5247
  %v5317 = vmax.f32 %v5178, %v5250
  %v5318 = vmax.f32 %v5181, %v5253
  %v5319 = vmax.f32 %v5184, %v5256
  %v5320 = vmax.f32 %v5187, %v5259
  %v5321 = vmax.f32 %v5190, %v5262
  %v5322 = vmax.f32 %v5193, %v5265
  %v5323 = vmax.f32 %v5196, %v5268
  %v5324 = vmax.f32 %v5199, %v5271
  %v5325 = vmax.f32 %v5202, %v5274
  %v5326 = vmax.f32 %v5205, %v5277
  %v5327 = vmax.f32 %v5208, %v5280
  %v5328 = vmax.f32 %v5211, %v5283
  %v5329 = vmax.f32 %v5214, %v5286
  %v5330 = vmax.f32 %v5217, %v5289
  %v5331 = vmax.f32 %v5220, %v5292
  %v5332 = vmax.f32 %v5223, %v5295
  %v5333 = vmax.f32 %v5226, %v5298
  %v5334 = vmax.f32 %v5229, %v5301
  %v5335 = vmax.f32 %v5232, %v5304
  %v5336 = vmax.f32 %v5235, %v5307
  %v5337 = vmax.f32 %v5238, %v5310
  %v5338 = vmax.f32 %v5241, %v5313
  %v5339 = vmax.f32 %v5315, %v5327
  %v5340 = vmax.f32 %v5316, %v5328
  %v5341 = vmax.f32 %v5317, %v5329
  %v5342 = vmax.f32 %v5318, %v5330
  %v5343 = vmax.f32 %v5319, %v5331
  %v5344 = vmax.f32 %v5320, %v5332
  %v5345 = vmax.f32 %v5321, %v5333
  %v5346 = vmax.f32 %v5322, %v5334
  %v5347 = vmax.f32 %v5323, %v5335
  %v5348 = vmax.f32 %v5324, %v5336
  %v5349 = vmax.f32 %v5325, %v5337
  %v5350 = vmax.f32 %v5326, %v5338
  %v5351 = vld [vmem:[%s2] sm:$0xff]
  %v5352 = vld [vmem:[%s2 + $0x8] sm:$0xff]
  %v5353 = vld [vmem:[%s2 + $0x10] sm:$0xff]
  %v5354 = vld [vmem:[%s2 + $0x18] sm:$0xff]
  %v5355 = vld [vmem:[%s2 + $0x20] sm:$0xff]
  %v5356 = vld [vmem:[%s2 + $0x28] sm:$0xff]
  %v5357 = vld [vmem:[%s2 + $0x30] sm:$0xff]
  %v5358 = vld [vmem:[%s2 + $0x38] sm:$0xff]
  %v5359 = vld [vmem:[%s2 + $0x40] sm:$0xff]
  %v5360 = vld [vmem:[%s2 + $0x48] sm:$0xff]
  %v5361 = vld [vmem:[%s2 + $0x50] sm:$0xff]
  %v5362 = vld [vmem:[%s2 + $0x58] sm:$0xff]
  %v5363 = vadd.f32 %v5339, %v5351
  %v5364 = vadd.f32 %v5340, %v5352
  %v5365 = vadd.f32 %v5341, %v5353
  %v5366 = vadd.f32 %v5342, %v5354
  %v5367 = vadd.f32 %v5343, %v5355
  %v5368 = vadd.f32 %v5344, %v5356
  %v5369 = vadd.f32 %v5345, %v5357
  %v5370 = vadd.f32 %v5346, %v5358
  %v5371 = vadd.f32 %v5347, %v5359
  %v5372 = vadd.f32 %v5348, %v5360
  %v5373 = vadd.f32 %v5349, %v5361
  %v5374 = vadd.f32 %v5350, %v5362
  %v5375 = vmax.f32 %v5363, 0.0
  %v5376 = vmax.f32 %v5364, 0.0
  %v5377 = vmax.f32 %v5365, 0.0
  %v5378 = vmax.f32 %v5366, 0.0
  %v5379 = vmax.f32 %v5367, 0.0
  %v5380 = vmax.f32 %v5368, 0.0
  %v5381 = vmax.f32 %v5369, 0.0
  %v5382 = vmax.f32 %v5370, 0.0
  %v5383 = vmax.f32 %v5371, 0.0
  %v5384 = vmax.f32 %v5372, 0.0
  %v5385 = vmax.f32 %v5373, 0.0
  %v5386 = vmax.f32 %v5374, 0.0
  %5387 = vst [vmem:[#allocation2 + $0x2a0] sm:$0xff] %v5375
  %5388 = vst [vmem:[#allocation2 + $0x2a8] sm:$0xff] %v5376
  %5389 = vst [vmem:[#allocation2 + $0x2b0] sm:$0xff] %v5377
  %5390 = vst [vmem:[#allocation2 + $0x2b8] sm:$0xff] %v5378
  %5391 = vst [vmem:[#allocation2 + $0x2c0] sm:$0xff] %v5379
  %5392 = vst [vmem:[#allocation2 + $0x2c8] sm:$0xff] %v5380
  %5393 = vst [vmem:[#allocation2 + $0x2d0] sm:$0xff] %v5381
  %5394 = vst [vmem:[#allocation2 + $0x2d8] sm:$0xff] %v5382
  %5395 = vst [vmem:[#allocation2 + $0x2e0] sm:$0xff] %v5383
  %5396 = vst [vmem:[#allocation2 + $0x2e8] sm:$0xff] %v5384
  %5397 = vst [vmem:[#allocation2 + $0x2f0] sm:$0xff] %v5385
  %5398 = vst [vmem:[#allocation2 + $0x2f8] sm:$0xff] %v5386
  %v5399 = vld [vmem:[%s0 + $0x200] sm:$0xff]
  %v5400 = vld [vmem:[%s0 + $0x208] sm:$0xff]
  %v5401 = vld [vmem:[%s0 + $0x210] sm:$0xff]
  %v5402 = vld [vmem:[%s0 + $0x218] sm:$0xff]
  %v5403 = vld [vmem:[%s0 + $0x220] sm:$0xff]
  %v5404 = vld [vmem:[%s0 + $0x228] sm:$0xff]
  %v5405 = vld [vmem:[%s0 + $0x230] sm:$0xff]
  %v5406 = vld [vmem:[%s0 + $0x238] sm:$0xff]
  %v5407 = vld [vmem:[%s0 + $0x240] sm:$0xff]
  %v5408 = vld [vmem:[%s0 + $0x248] sm:$0xff]
  %v5409 = vld [vmem:[%s0 + $0x250] sm:$0xff]
  %v5410 = vld [vmem:[%s0 + $0x258] sm:$0xff]
  %v5411 = vld [vmem:[%s0 + $0x260] sm:$0xff]
  %v5412 = vld [vmem:[%s0 + $0x268] sm:$0xff]
  %v5413 = vld [vmem:[%s0 + $0x270] sm:$0xff]
  %v5414 = vld [vmem:[%s0 + $0x278] sm:$0xff]
  %v5415 = vld [vmem:[%s0 + $0x280] sm:$0xff]
  %v5416 = vld [vmem:[%s0 + $0x288] sm:$0xff]
  %v5417 = vld [vmem:[%s0 + $0x290] sm:$0xff]
  %v5418 = vld [vmem:[%s0 + $0x298] sm:$0xff]
  %v5419 = vld [vmem:[%s0 + $0x2a0] sm:$0xff]
  %v5420 = vld [vmem:[%s0 + $0x2a8] sm:$0xff]
  %v5421 = vld [vmem:[%s0 + $0x2b0] sm:$0xff]
  %v5422 = vld [vmem:[%s0 + $0x2b8] sm:$0xff]
  %v5423 = vld [vmem:[%s1] sm:$0xff]
  %v5424 = vld [vmem:[%s1 + $0x8] sm:$0xff]
  %v5425 = vld [vmem:[%s1 + $0x10] sm:$0xff]
  %v5426 = vld [vmem:[%s1 + $0x18] sm:$0xff]
  %v5427 = vld [vmem:[%s1 + $0x20] sm:$0xff]
  %v5428 = vld [vmem:[%s1 + $0x28] sm:$0xff]
  %v5429 = vld [vmem:[%s1 + $0x30] sm:$0xff]
  %v5430 = vld [vmem:[%s1 + $0x38] sm:$0xff]
  %v5431 = vld [vmem:[%s1 + $0x40] sm:$0xff]
  %v5432 = vld [vmem:[%s1 + $0x48] sm:$0xff]
  %v5433 = vld [vmem:[%s1 + $0x50] sm:$0xff]
  %v5434 = vld [vmem:[%s1 + $0x58] sm:$0xff]
  %v5435 = vld [vmem:[%s1 + $0x60] sm:$0xff]
  %v5436 = vld [vmem:[%s1 + $0x68] sm:$0xff]
  %v5437 = vld [vmem:[%s1 + $0x70] sm:$0xff]
  %v5438 = vld [vmem:[%s1 + $0x78] sm:$0xff]
  %v5439 = vld [vmem:[%s1 + $0x80] sm:$0xff]
  %v5440 = vld [vmem:[%s1 + $0x88] sm:$0xff]
  %v5441 = vld [vmem:[%s1 + $0x90] sm:$0xff]
  %v5442 = vld [vmem:[%s1 + $0x98] sm:$0xff]
  %v5443 = vld [vmem:[%s1 + $0xa0] sm:$0xff]
  %v5444 = vld [vmem:[%s1 + $0xa8] sm:$0xff]
  %v5445 = vld [vmem:[%s1 + $0xb0] sm:$0xff]
  %v5446 = vld [vmem:[%s1 + $0xb8] sm:$0xff]
  %v5447 = vld [vmem:[%s1 + $0xc0] sm:$0xff]
  %v5448 = vld [vmem:[%s1 + $0xc8] sm:$0xff]
  %v5449 = vld [vmem:[%s1 + $0xd0] sm:$0xff]
  %v5450 = vld [vmem:[%s1 + $0xd8] sm:$0xff]
  %v5451 = vld [vmem:[%s1 + $0xe0] sm:$0xff]
  %v5452 = vld [vmem:[%s1 + $0xe8] sm:$0xff]
  %v5453 = vld [vmem:[%s1 + $0xf0] sm:$0xff]
  %v5454 = vld [vmem:[%s1 + $0xf8] sm:$0xff]
  %v5455 = vld [vmem:[%s1 + $0x100] sm:$0xff]
  %v5456 = vld [vmem:[%s1 + $0x108] sm:$0xff]
  %v5457 = vld [vmem:[%s1 + $0x110] sm:$0xff]
  %v5458 = vld [vmem:[%s1 + $0x118] sm:$0xff]
  %v5459 = vld [vmem:[%s1 + $0x120] sm:$0xff]
  %v5460 = vld [vmem:[%s1 + $0x128] sm:$0xff]
  %v5461 = vld [vmem:[%s1 + $0x130] sm:$0xff]
  %v5462 = vld [vmem:[%s1 + $0x138] sm:$0xff]
  %v5463 = vld [vmem:[%s1 + $0x140] sm:$0xff]
  %v5464 = vld [vmem:[%s1 + $0x148] sm:$0xff]
  %v5465 = vld [vmem:[%s1 + $0x150] sm:$0xff]
  %v5466 = vld [vmem:[%s1 + $0x158] sm:$0xff]
  %v5467 = vld [vmem:[%s1 + $0x160] sm:$0xff]
  %v5468 = vld [vmem:[%s1 + $0x168] sm:$0xff]
  %v5469 = vld [vmem:[%s1 + $0x170] sm:$0xff]
  %v5470 = vld [vmem:[%s1 + $0x178] sm:$0xff]
  %v5471 = vld [vmem:[%s1 + $0x180] sm:$0xff]
  %v5472 = vld [vmem:[%s1 + $0x188] sm:$0xff]
  %v5473 = vld [vmem:[%s1 + $0x190] sm:$0xff]
  %v5474 = vld [vmem:[%s1 + $0x198] sm:$0xff]
  %v5475 = vld [vmem:[%s1 + $0x1a0] sm:$0xff]
  %v5476 = vld [vmem:[%s1 + $0x1a8] sm:$0xff]
  %v5477 = vld [vmem:[%s1 + $0x1b0] sm:$0xff]
  %v5478 = vld [vmem:[%s1 + $0x1b8] sm:$0xff]
  %v5479 = vld [vmem:[%s1 + $0x1c0] sm:$0xff]
  %v5480 = vld [vmem:[%s1 + $0x1c8] sm:$0xff]
  %v5481 = vld [vmem:[%s1 + $0x1d0] sm:$0xff]
  %v5482 = vld [vmem:[%s1 + $0x1d8] sm:$0xff]
  %v5483 = vld [vmem:[%s1 + $0x1e0] sm:$0xff]
  %v5484 = vld [vmem:[%s1 + $0x1e8] sm:$0xff]
  %v5485 = vld [vmem:[%s1 + $0x1f0] sm:$0xff]
  %v5486 = vld [vmem:[%s1 + $0x1f8] sm:$0xff]
  %v5487 = vld [vmem:[%s1 + $0x200] sm:$0xff]
  %v5488 = vld [vmem:[%s1 + $0x208] sm:$0xff]
  %v5489 = vld [vmem:[%s1 + $0x210] sm:$0xff]
  %v5490 = vld [vmem:[%s1 + $0x218] sm:$0xff]
  %v5491 = vld [vmem:[%s1 + $0x220] sm:$0xff]
  %v5492 = vld [vmem:[%s1 + $0x228] sm:$0xff]
  %v5493 = vld [vmem:[%s1 + $0x230] sm:$0xff]
  %v5494 = vld [vmem:[%s1 + $0x238] sm:$0xff]
  %v5495 = vld [vmem:[%s1 + $0x240] sm:$0xff]
  %v5496 = vld [vmem:[%s1 + $0x248] sm:$0xff]
  %v5497 = vld [vmem:[%s1 + $0x250] sm:$0xff]
  %v5498 = vld [vmem:[%s1 + $0x258] sm:$0xff]
  %v5499 = vld [vmem:[%s1 + $0x260] sm:$0xff]
  %v5500 = vld [vmem:[%s1 + $0x268] sm:$0xff]
  %v5501 = vld [vmem:[%s1 + $0x270] sm:$0xff]
  %v5502 = vld [vmem:[%s1 + $0x278] sm:$0xff]
  %v5503 = vld [vmem:[%s1 + $0x280] sm:$0xff]
  %v5504 = vld [vmem:[%s1 + $0x288] sm:$0xff]
  %v5505 = vld [vmem:[%s1 + $0x290] sm:$0xff]
  %v5506 = vld [vmem:[%s1 + $0x298] sm:$0xff]
  %v5507 = vld [vmem:[%s1 + $0x2a0] sm:$0xff]
  %v5508 = vld [vmem:[%s1 + $0x2a8] sm:$0xff]
  %v5509 = vld [vmem:[%s1 + $0x2b0] sm:$0xff]
  %v5510 = vld [vmem:[%s1 + $0x2b8] sm:$0xff]
  %v5511 = vld [vmem:[%s1 + $0x2c0] sm:$0xff]
  %v5512 = vld [vmem:[%s1 + $0x2c8] sm:$0xff]
  %v5513 = vld [vmem:[%s1 + $0x2d0] sm:$0xff]
  %v5514 = vld [vmem:[%s1 + $0x2d8] sm:$0xff]
  %v5515 = vld [vmem:[%s1 + $0x2e0] sm:$0xff]
  %v5516 = vld [vmem:[%s1 + $0x2e8] sm:$0xff]
  %v5517 = vld [vmem:[%s1 + $0x2f0] sm:$0xff]
  %v5518 = vld [vmem:[%s1 + $0x2f8] sm:$0xff]
  %v5520 = vsel %vm158, %v5424, 0
  %v5523 = vsel %vm158, %v5426, 0
  %v5526 = vsel %vm158, %v5428, 0
  %v5529 = vsel %vm158, %v5430, 0
  %v5532 = vsel %vm158, %v5432, 0
  %v5535 = vsel %vm158, %v5434, 0
  %v5538 = vsel %vm158, %v5436, 0
  %v5541 = vsel %vm158, %v5438, 0
  %v5544 = vsel %vm158, %v5440, 0
  %v5547 = vsel %vm158, %v5442, 0
  %v5550 = vsel %vm158, %v5444, 0
  %v5553 = vsel %vm158, %v5446, 0
  %v5556 = vsel %vm158, %v5448, 0
  %v5559 = vsel %vm158, %v5450, 0
  %v5562 = vsel %vm158, %v5452, 0
  %v5565 = vsel %vm158, %v5454, 0
  %v5568 = vsel %vm158, %v5456, 0
  %v5571 = vsel %vm158, %v5458, 0
  %v5574 = vsel %vm158, %v5460, 0
  %v5577 = vsel %vm158, %v5462, 0
  %v5580 = vsel %vm158, %v5464, 0
  %v5583 = vsel %vm158, %v5466, 0
  %v5586 = vsel %vm158, %v5468, 0
  %v5589 = vsel %vm158, %v5470, 0
  %v5592 = vsel %vm158, %v5472, 0
  %v5595 = vsel %vm158, %v5474, 0
  %v5598 = vsel %vm158, %v5476, 0
  %v5601 = vsel %vm158, %v5478, 0
  %v5604 = vsel %vm158, %v5480, 0
  %v5607 = vsel %vm158, %v5482, 0
  %v5610 = vsel %vm158, %v5484, 0
  %v5613 = vsel %vm158, %v5486, 0
  %v5616 = vsel %vm158, %v5488, 0
  %v5619 = vsel %vm158, %v5490, 0
  %v5622 = vsel %vm158, %v5492, 0
  %v5625 = vsel %vm158, %v5494, 0
  %v5628 = vsel %vm158, %v5496, 0
  %v5631 = vsel %vm158, %v5498, 0
  %v5634 = vsel %vm158, %v5500, 0
  %v5637 = vsel %vm158, %v5502, 0
  %v5640 = vsel %vm158, %v5504, 0
  %v5643 = vsel %vm158, %v5506, 0
  %v5646 = vsel %vm158, %v5508, 0
  %v5649 = vsel %vm158, %v5510, 0
  %v5652 = vsel %vm158, %v5512, 0
  %v5655 = vsel %vm158, %v5514, 0
  %v5658 = vsel %vm158, %v5516, 0
  %v5661 = vsel %vm158, %v5518, 0
  %5663 = vmatpush.msra.mxu0 %v5414
  %5664 = vmatpush.msra.mxu0 %v5413
  %5665 = vmatpush.msra.mxu0 %v5412
  %5666 = vmatpush.msra.mxu0 %v5411
  %5667 = vmatpush.msra.mxu0 %v5410
  %5668 = vmatpush.msra.mxu0 %v5409
  %5669 = vmatpush.msra.mxu0 %v5408
  %5670 = vmatpush.msra.mxu0 %v5407
  %5671 = vmatpush.msra.mxu0 %v5406
  %5672 = vmatpush.msra.mxu0 %v5405
  %5673 = vmatpush.msra.mxu0 %v5404
  %5674 = vmatpush.msra.mxu0 %v5403
  %5675 = vmatpush.msra.mxu0 %v5402
  %5676 = vmatpush.msra.mxu0 %v5401
  %5677 = vmatpush.msra.mxu0 %v5400
  %5678 = vmatpush.msra.mxu0 %v5399
  %5679 = vmatmul.f32.gmra.mxu0 %v5423
  %v5680 = vpop.f32.mrf.mxu0
  %v5681 = vadd.f32 0.0, %v5680
  %5682 = vmatmul.f32.gmra.mxu0 %v5425
  %v5683 = vpop.f32.mrf.mxu0
  %v5684 = vadd.f32 0.0, %v5683
  %5685 = vmatmul.f32.gmra.mxu0 %v5427
  %v5686 = vpop.f32.mrf.mxu0
  %v5687 = vadd.f32 0.0, %v5686
  %5688 = vmatmul.f32.gmra.mxu0 %v5429
  %v5689 = vpop.f32.mrf.mxu0
  %v5690 = vadd.f32 0.0, %v5689
  %5691 = vmatmul.f32.gmra.mxu0 %v5431
  %v5692 = vpop.f32.mrf.mxu0
  %v5693 = vadd.f32 0.0, %v5692
  %5694 = vmatmul.f32.gmra.mxu0 %v5433
  %v5695 = vpop.f32.mrf.mxu0
  %v5696 = vadd.f32 0.0, %v5695
  %5697 = vmatmul.f32.gmra.mxu0 %v5435
  %v5698 = vpop.f32.mrf.mxu0
  %v5699 = vadd.f32 0.0, %v5698
  %5700 = vmatmul.f32.gmra.mxu0 %v5437
  %v5701 = vpop.f32.mrf.mxu0
  %v5702 = vadd.f32 0.0, %v5701
  %5703 = vmatmul.f32.gmra.mxu0 %v5439
  %v5704 = vpop.f32.mrf.mxu0
  %v5705 = vadd.f32 0.0, %v5704
  %5706 = vmatmul.f32.gmra.mxu0 %v5441
  %v5707 = vpop.f32.mrf.mxu0
  %v5708 = vadd.f32 0.0, %v5707
  %5709 = vmatmul.f32.gmra.mxu0 %v5443
  %v5710 = vpop.f32.mrf.mxu0
  %v5711 = vadd.f32 0.0, %v5710
  %5712 = vmatmul.f32.gmra.mxu0 %v5445
  %v5713 = vpop.f32.mrf.mxu0
  %v5714 = vadd.f32 0.0, %v5713
  %5715 = vmatmul.f32.gmra.mxu0 %v5447
  %v5716 = vpop.f32.mrf.mxu0
  %v5717 = vadd.f32 0.0, %v5716
  %5718 = vmatmul.f32.gmra.mxu0 %v5449
  %v5719 = vpop.f32.mrf.mxu0
  %v5720 = vadd.f32 0.0, %v5719
  %5721 = vmatmul.f32.gmra.mxu0 %v5451
  %v5722 = vpop.f32.mrf.mxu0
  %v5723 = vadd.f32 0.0, %v5722
  %5724 = vmatmul.f32.gmra.mxu0 %v5453
  %v5725 = vpop.f32.mrf.mxu0
  %v5726 = vadd.f32 0.0, %v5725
  %5727 = vmatmul.f32.gmra.mxu0 %v5455
  %v5728 = vpop.f32.mrf.mxu0
  %v5729 = vadd.f32 0.0, %v5728
  %5730 = vmatmul.f32.gmra.mxu0 %v5457
  %v5731 = vpop.f32.mrf.mxu0
  %v5732 = vadd.f32 0.0, %v5731
  %5733 = vmatmul.f32.gmra.mxu0 %v5459
  %v5734 = vpop.f32.mrf.mxu0
  %v5735 = vadd.f32 0.0, %v5734
  %5736 = vmatmul.f32.gmra.mxu0 %v5461
  %v5737 = vpop.f32.mrf.mxu0
  %v5738 = vadd.f32 0.0, %v5737
  %5739 = vmatmul.f32.gmra.mxu0 %v5463
  %v5740 = vpop.f32.mrf.mxu0
  %v5741 = vadd.f32 0.0, %v5740
  %5742 = vmatmul.f32.gmra.mxu0 %v5465
  %v5743 = vpop.f32.mrf.mxu0
  %v5744 = vadd.f32 0.0, %v5743
  %5745 = vmatmul.f32.gmra.mxu0 %v5467
  %v5746 = vpop.f32.mrf.mxu0
  %v5747 = vadd.f32 0.0, %v5746
  %5748 = vmatmul.f32.gmra.mxu0 %v5469
  %v5749 = vpop.f32.mrf.mxu0
  %v5750 = vadd.f32 0.0, %v5749
  %5751 = vmatmul.f32.gmra.mxu0 %v5471
  %v5752 = vpop.f32.mrf.mxu0
  %v5753 = vadd.f32 0.0, %v5752
  %5754 = vmatmul.f32.gmra.mxu0 %v5473
  %v5755 = vpop.f32.mrf.mxu0
  %v5756 = vadd.f32 0.0, %v5755
  %5757 = vmatmul.f32.gmra.mxu0 %v5475
  %v5758 = vpop.f32.mrf.mxu0
  %v5759 = vadd.f32 0.0, %v5758
  %5760 = vmatmul.f32.gmra.mxu0 %v5477
  %v5761 = vpop.f32.mrf.mxu0
  %v5762 = vadd.f32 0.0, %v5761
  %5763 = vmatmul.f32.gmra.mxu0 %v5479
  %v5764 = vpop.f32.mrf.mxu0
  %v5765 = vadd.f32 0.0, %v5764
  %5766 = vmatmul.f32.gmra.mxu0 %v5481
  %v5767 = vpop.f32.mrf.mxu0
  %v5768 = vadd.f32 0.0, %v5767
  %5769 = vmatmul.f32.gmra.mxu0 %v5483
  %v5770 = vpop.f32.mrf.mxu0
  %v5771 = vadd.f32 0.0, %v5770
  %5772 = vmatmul.f32.gmra.mxu0 %v5485
  %v5773 = vpop.f32.mrf.mxu0
  %v5774 = vadd.f32 0.0, %v5773
  %5775 = vmatmul.f32.gmra.mxu0 %v5487
  %v5776 = vpop.f32.mrf.mxu0
  %v5777 = vadd.f32 0.0, %v5776
  %5778 = vmatmul.f32.gmra.mxu0 %v5489
  %v5779 = vpop.f32.mrf.mxu0
  %v5780 = vadd.f32 0.0, %v5779
  %5781 = vmatmul.f32.gmra.mxu0 %v5491
  %v5782 = vpop.f32.mrf.mxu0
  %v5783 = vadd.f32 0.0, %v5782
  %5784 = vmatmul.f32.gmra.mxu0 %v5493
  %v5785 = vpop.f32.mrf.mxu0
  %v5786 = vadd.f32 0.0, %v5785
  %5787 = vmatmul.f32.gmra.mxu0 %v5495
  %v5788 = vpop.f32.mrf.mxu0
  %v5789 = vadd.f32 0.0, %v5788
  %5790 = vmatmul.f32.gmra.mxu0 %v5497
  %v5791 = vpop.f32.mrf.mxu0
  %v5792 = vadd.f32 0.0, %v5791
  %5793 = vmatmul.f32.gmra.mxu0 %v5499
  %v5794 = vpop.f32.mrf.mxu0
  %v5795 = vadd.f32 0.0, %v5794
  %5796 = vmatmul.f32.gmra.mxu0 %v5501
  %v5797 = vpop.f32.mrf.mxu0
  %v5798 = vadd.f32 0.0, %v5797
  %5799 = vmatmul.f32.gmra.mxu0 %v5503
  %v5800 = vpop.f32.mrf.mxu0
  %v5801 = vadd.f32 0.0, %v5800
  %5802 = vmatmul.f32.gmra.mxu0 %v5505
  %v5803 = vpop.f32.mrf.mxu0
  %v5804 = vadd.f32 0.0, %v5803
  %5805 = vmatmul.f32.gmra.mxu0 %v5507
  %v5806 = vpop.f32.mrf.mxu0
  %v5807 = vadd.f32 0.0, %v5806
  %5808 = vmatmul.f32.gmra.mxu0 %v5509
  %v5809 = vpop.f32.mrf.mxu0
  %v5810 = vadd.f32 0.0, %v5809
  %5811 = vmatmul.f32.gmra.mxu0 %v5511
  %v5812 = vpop.f32.mrf.mxu0
  %v5813 = vadd.f32 0.0, %v5812
  %5814 = vmatmul.f32.gmra.mxu0 %v5513
  %v5815 = vpop.f32.mrf.mxu0
  %v5816 = vadd.f32 0.0, %v5815
  %5817 = vmatmul.f32.gmra.mxu0 %v5515
  %v5818 = vpop.f32.mrf.mxu0
  %v5819 = vadd.f32 0.0, %v5818
  %5820 = vmatmul.f32.gmra.mxu0 %v5517
  %v5821 = vpop.f32.mrf.mxu0
  %v5822 = vadd.f32 0.0, %v5821
  %5823 = vdwg.mxu0
  %5824 = vmatpush.msra.mxu0 0.0
  %5825 = vmatpush.msra.mxu0 0.0
  %5826 = vmatpush.msra.mxu0 0.0
  %5827 = vmatpush.msra.mxu0 0.0
  %5828 = vmatpush.msra.mxu0 0.0
  %5829 = vmatpush.msra.mxu0 0.0
  %5830 = vmatpush.msra.mxu0 0.0
  %5831 = vmatpush.msra.mxu0 0.0
  %5832 = vmatpush.msra.mxu0 %v5422
  %5833 = vmatpush.msra.mxu0 %v5421
  %5834 = vmatpush.msra.mxu0 %v5420
  %5835 = vmatpush.msra.mxu0 %v5419
  %5836 = vmatpush.msra.mxu0 %v5418
  %5837 = vmatpush.msra.mxu0 %v5417
  %5838 = vmatpush.msra.mxu0 %v5416
  %5839 = vmatpush.msra.mxu0 %v5415
  %5840 = vmatmul.f32.gmra.mxu0 %v5520
  %v5841 = vpop.f32.mrf.mxu0
  %v5842 = vadd.f32 %v5681, %v5841
  %5843 = vmatmul.f32.gmra.mxu0 %v5523
  %v5844 = vpop.f32.mrf.mxu0
  %v5845 = vadd.f32 %v5684, %v5844
  %5846 = vmatmul.f32.gmra.mxu0 %v5526
  %v5847 = vpop.f32.mrf.mxu0
  %v5848 = vadd.f32 %v5687, %v5847
  %5849 = vmatmul.f32.gmra.mxu0 %v5529
  %v5850 = vpop.f32.mrf.mxu0
  %v5851 = vadd.f32 %v5690, %v5850
  %5852 = vmatmul.f32.gmra.mxu0 %v5532
  %v5853 = vpop.f32.mrf.mxu0
  %v5854 = vadd.f32 %v5693, %v5853
  %5855 = vmatmul.f32.gmra.mxu0 %v5535
  %v5856 = vpop.f32.mrf.mxu0
  %v5857 = vadd.f32 %v5696, %v5856
  %5858 = vmatmul.f32.gmra.mxu0 %v5538
  %v5859 = vpop.f32.mrf.mxu0
  %v5860 = vadd.f32 %v5699, %v5859
  %5861 = vmatmul.f32.gmra.mxu0 %v5541
  %v5862 = vpop.f32.mrf.mxu0
  %v5863 = vadd.f32 %v5702, %v5862
  %5864 = vmatmul.f32.gmra.mxu0 %v5544
  %v5865 = vpop.f32.mrf.mxu0
  %v5866 = vadd.f32 %v5705, %v5865
  %5867 = vmatmul.f32.gmra.mxu0 %v5547
  %v5868 = vpop.f32.mrf.mxu0
  %v5869 = vadd.f32 %v5708, %v5868
  %5870 = vmatmul.f32.gmra.mxu0 %v5550
  %v5871 = vpop.f32.mrf.mxu0
  %v5872 = vadd.f32 %v5711, %v5871
  %5873 = vmatmul.f32.gmra.mxu0 %v5553
  %v5874 = vpop.f32.mrf.mxu0
  %v5875 = vadd.f32 %v5714, %v5874
  %5876 = vmatmul.f32.gmra.mxu0 %v5556
  %v5877 = vpop.f32.mrf.mxu0
  %v5878 = vadd.f32 %v5717, %v5877
  %5879 = vmatmul.f32.gmra.mxu0 %v5559
  %v5880 = vpop.f32.mrf.mxu0
  %v5881 = vadd.f32 %v5720, %v5880
  %5882 = vmatmul.f32.gmra.mxu0 %v5562
  %v5883 = vpop.f32.mrf.mxu0
  %v5884 = vadd.f32 %v5723, %v5883
  %5885 = vmatmul.f32.gmra.mxu0 %v5565
  %v5886 = vpop.f32.mrf.mxu0
  %v5887 = vadd.f32 %v5726, %v5886
  %5888 = vmatmul.f32.gmra.mxu0 %v5568
  %v5889 = vpop.f32.mrf.mxu0
  %v5890 = vadd.f32 %v5729, %v5889
  %5891 = vmatmul.f32.gmra.mxu0 %v5571
  %v5892 = vpop.f32.mrf.mxu0
  %v5893 = vadd.f32 %v5732, %v5892
  %5894 = vmatmul.f32.gmra.mxu0 %v5574
  %v5895 = vpop.f32.mrf.mxu0
  %v5896 = vadd.f32 %v5735, %v5895
  %5897 = vmatmul.f32.gmra.mxu0 %v5577
  %v5898 = vpop.f32.mrf.mxu0
  %v5899 = vadd.f32 %v5738, %v5898
  %5900 = vmatmul.f32.gmra.mxu0 %v5580
  %v5901 = vpop.f32.mrf.mxu0
  %v5902 = vadd.f32 %v5741, %v5901
  %5903 = vmatmul.f32.gmra.mxu0 %v5583
  %v5904 = vpop.f32.mrf.mxu0
  %v5905 = vadd.f32 %v5744, %v5904
  %5906 = vmatmul.f32.gmra.mxu0 %v5586
  %v5907 = vpop.f32.mrf.mxu0
  %v5908 = vadd.f32 %v5747, %v5907
  %5909 = vmatmul.f32.gmra.mxu0 %v5589
  %v5910 = vpop.f32.mrf.mxu0
  %v5911 = vadd.f32 %v5750, %v5910
  %5912 = vmatmul.f32.gmra.mxu0 %v5592
  %v5913 = vpop.f32.mrf.mxu0
  %v5914 = vadd.f32 %v5753, %v5913
  %5915 = vmatmul.f32.gmra.mxu0 %v5595
  %v5916 = vpop.f32.mrf.mxu0
  %v5917 = vadd.f32 %v5756, %v5916
  %5918 = vmatmul.f32.gmra.mxu0 %v5598
  %v5919 = vpop.f32.mrf.mxu0
  %v5920 = vadd.f32 %v5759, %v5919
  %5921 = vmatmul.f32.gmra.mxu0 %v5601
  %v5922 = vpop.f32.mrf.mxu0
  %v5923 = vadd.f32 %v5762, %v5922
  %5924 = vmatmul.f32.gmra.mxu0 %v5604
  %v5925 = vpop.f32.mrf.mxu0
  %v5926 = vadd.f32 %v5765, %v5925
  %5927 = vmatmul.f32.gmra.mxu0 %v5607
  %v5928 = vpop.f32.mrf.mxu0
  %v5929 = vadd.f32 %v5768, %v5928
  %5930 = vmatmul.f32.gmra.mxu0 %v5610
  %v5931 = vpop.f32.mrf.mxu0
  %v5932 = vadd.f32 %v5771, %v5931
  %5933 = vmatmul.f32.gmra.mxu0 %v5613
  %v5934 = vpop.f32.mrf.mxu0
  %v5935 = vadd.f32 %v5774, %v5934
  %5936 = vmatmul.f32.gmra.mxu0 %v5616
  %v5937 = vpop.f32.mrf.mxu0
  %v5938 = vadd.f32 %v5777, %v5937
  %5939 = vmatmul.f32.gmra.mxu0 %v5619
  %v5940 = vpop.f32.mrf.mxu0
  %v5941 = vadd.f32 %v5780, %v5940
  %5942 = vmatmul.f32.gmra.mxu0 %v5622
  %v5943 = vpop.f32.mrf.mxu0
  %v5944 = vadd.f32 %v5783, %v5943
  %5945 = vmatmul.f32.gmra.mxu0 %v5625
  %v5946 = vpop.f32.mrf.mxu0
  %v5947 = vadd.f32 %v5786, %v5946
  %5948 = vmatmul.f32.gmra.mxu0 %v5628
  %v5949 = vpop.f32.mrf.mxu0
  %v5950 = vadd.f32 %v5789, %v5949
  %5951 = vmatmul.f32.gmra.mxu0 %v5631
  %v5952 = vpop.f32.mrf.mxu0
  %v5953 = vadd.f32 %v5792, %v5952
  %5954 = vmatmul.f32.gmra.mxu0 %v5634
  %v5955 = vpop.f32.mrf.mxu0
  %v5956 = vadd.f32 %v5795, %v5955
  %5957 = vmatmul.f32.gmra.mxu0 %v5637
  %v5958 = vpop.f32.mrf.mxu0
  %v5959 = vadd.f32 %v5798, %v5958
  %5960 = vmatmul.f32.gmra.mxu0 %v5640
  %v5961 = vpop.f32.mrf.mxu0
  %v5962 = vadd.f32 %v5801, %v5961
  %5963 = vmatmul.f32.gmra.mxu0 %v5643
  %v5964 = vpop.f32.mrf.mxu0
  %v5965 = vadd.f32 %v5804, %v5964
  %5966 = vmatmul.f32.gmra.mxu0 %v5646
  %v5967 = vpop.f32.mrf.mxu0
  %v5968 = vadd.f32 %v5807, %v5967
  %5969 = vmatmul.f32.gmra.mxu0 %v5649
  %v5970 = vpop.f32.mrf.mxu0
  %v5971 = vadd.f32 %v5810, %v5970
  %5972 = vmatmul.f32.gmra.mxu0 %v5652
  %v5973 = vpop.f32.mrf.mxu0
  %v5974 = vadd.f32 %v5813, %v5973
  %5975 = vmatmul.f32.gmra.mxu0 %v5655
  %v5976 = vpop.f32.mrf.mxu0
  %v5977 = vadd.f32 %v5816, %v5976
  %5978 = vmatmul.f32.gmra.mxu0 %v5658
  %v5979 = vpop.f32.mrf.mxu0
  %v5980 = vadd.f32 %v5819, %v5979
  %5981 = vmatmul.f32.gmra.mxu0 %v5661
  %v5982 = vpop.f32.mrf.mxu0
  %v5983 = vadd.f32 %v5822, %v5982
  %5984 = vdwg.mxu0
  %v5985 = vmax.f32 %v5842, %v5914
  %v5986 = vmax.f32 %v5845, %v5917
  %v5987 = vmax.f32 %v5848, %v5920
  %v5988 = vmax.f32 %v5851, %v5923
  %v5989 = vmax.f32 %v5854, %v5926
  %v5990 = vmax.f32 %v5857, %v5929
  %v5991 = vmax.f32 %v5860, %v5932
  %v5992 = vmax.f32 %v5863, %v5935
  %v5993 = vmax.f32 %v5866, %v5938
  %v5994 = vmax.f32 %v5869, %v5941
  %v5995 = vmax.f32 %v5872, %v5944
  %v5996 = vmax.f32 %v5875, %v5947
  %v5997 = vmax.f32 %v5878, %v5950
  %v5998 = vmax.f32 %v5881, %v5953
  %v5999 = vmax.f32 %v5884, %v5956
  %v6000 = vmax.f32 %v5887, %v5959
  %v6001 = vmax.f32 %v5890, %v5962
  %v6002 = vmax.f32 %v5893, %v5965
  %v6003 = vmax.f32 %v5896, %v5968
  %v6004 = vmax.f32 %v5899, %v5971
  %v6005 = vmax.f32 %v5902, %v5974
  %v6006 = vmax.f32 %v5905, %v5977
  %v6007 = vmax.f32 %v5908, %v5980
  %v6008 = vmax.f32 %v5911, %v5983
  %v6009 = vmax.f32 %v5985, %v5997
  %v6010 = vmax.f32 %v5986, %v5998
  %v6011 = vmax.f32 %v5987, %v5999
  %v6012 = vmax.f32 %v5988, %v6000
  %v6013 = vmax.f32 %v5989, %v6001
  %v6014 = vmax.f32 %v5990, %v6002
  %v6015 = vmax.f32 %v5991, %v6003
  %v6016 = vmax.f32 %v5992, %v6004
  %v6017 = vmax.f32 %v5993, %v6005
  %v6018 = vmax.f32 %v5994, %v6006
  %v6019 = vmax.f32 %v5995, %v6007
  %v6020 = vmax.f32 %v5996, %v6008
  %v6021 = vld [vmem:[%s2] sm:$0xff]
  %v6022 = vld [vmem:[%s2 + $0x8] sm:$0xff]
  %v6023 = vld [vmem:[%s2 + $0x10] sm:$0xff]
  %v6024 = vld [vmem:[%s2 + $0x18] sm:$0xff]
  %v6025 = vld [vmem:[%s2 + $0x20] sm:$0xff]
  %v6026 = vld [vmem:[%s2 + $0x28] sm:$0xff]
  %v6027 = vld [vmem:[%s2 + $0x30] sm:$0xff]
  %v6028 = vld [vmem:[%s2 + $0x38] sm:$0xff]
  %v6029 = vld [vmem:[%s2 + $0x40] sm:$0xff]
  %v6030 = vld [vmem:[%s2 + $0x48] sm:$0xff]
  %v6031 = vld [vmem:[%s2 + $0x50] sm:$0xff]
  %v6032 = vld [vmem:[%s2 + $0x58] sm:$0xff]
  %v6033 = vadd.f32 %v6009, %v6021
  %v6034 = vadd.f32 %v6010, %v6022
  %v6035 = vadd.f32 %v6011, %v6023
  %v6036 = vadd.f32 %v6012, %v6024
  %v6037 = vadd.f32 %v6013, %v6025
  %v6038 = vadd.f32 %v6014, %v6026
  %v6039 = vadd.f32 %v6015, %v6027
  %v6040 = vadd.f32 %v6016, %v6028
  %v6041 = vadd.f32 %v6017, %v6029
  %v6042 = vadd.f32 %v6018, %v6030
  %v6043 = vadd.f32 %v6019, %v6031
  %v6044 = vadd.f32 %v6020, %v6032
  %v6045 = vmax.f32 %v6033, 0.0
  %v6046 = vmax.f32 %v6034, 0.0
  %v6047 = vmax.f32 %v6035, 0.0
  %v6048 = vmax.f32 %v6036, 0.0
  %v6049 = vmax.f32 %v6037, 0.0
  %v6050 = vmax.f32 %v6038, 0.0
  %v6051 = vmax.f32 %v6039, 0.0
  %v6052 = vmax.f32 %v6040, 0.0
  %v6053 = vmax.f32 %v6041, 0.0
  %v6054 = vmax.f32 %v6042, 0.0
  %v6055 = vmax.f32 %v6043, 0.0
  %v6056 = vmax.f32 %v6044, 0.0
  %6057 = vst [vmem:[#allocation2 + $0x300] sm:$0xff] %v6045
  %6058 = vst [vmem:[#allocation2 + $0x308] sm:$0xff] %v6046
  %6059 = vst [vmem:[#allocation2 + $0x310] sm:$0xff] %v6047
  %6060 = vst [vmem:[#allocation2 + $0x318] sm:$0xff] %v6048
  %6061 = vst [vmem:[#allocation2 + $0x320] sm:$0xff] %v6049
  %6062 = vst [vmem:[#allocation2 + $0x328] sm:$0xff] %v6050
  %6063 = vst [vmem:[#allocation2 + $0x330] sm:$0xff] %v6051
  %6064 = vst [vmem:[#allocation2 + $0x338] sm:$0xff] %v6052
  %6065 = vst [vmem:[#allocation2 + $0x340] sm:$0xff] %v6053
  %6066 = vst [vmem:[#allocation2 + $0x348] sm:$0xff] %v6054
  %6067 = vst [vmem:[#allocation2 + $0x350] sm:$0xff] %v6055
  %6068 = vst [vmem:[#allocation2 + $0x358] sm:$0xff] %v6056
  %v6069 = vld [vmem:[%s0 + $0x240] sm:$0xff]
  %v6070 = vld [vmem:[%s0 + $0x248] sm:$0xff]
  %v6071 = vld [vmem:[%s0 + $0x250] sm:$0xff]
  %v6072 = vld [vmem:[%s0 + $0x258] sm:$0xff]
  %v6073 = vld [vmem:[%s0 + $0x260] sm:$0xff]
  %v6074 = vld [vmem:[%s0 + $0x268] sm:$0xff]
  %v6075 = vld [vmem:[%s0 + $0x270] sm:$0xff]
  %v6076 = vld [vmem:[%s0 + $0x278] sm:$0xff]
  %v6077 = vld [vmem:[%s0 + $0x280] sm:$0xff]
  %v6078 = vld [vmem:[%s0 + $0x288] sm:$0xff]
  %v6079 = vld [vmem:[%s0 + $0x290] sm:$0xff]
  %v6080 = vld [vmem:[%s0 + $0x298] sm:$0xff]
  %v6081 = vld [vmem:[%s0 + $0x2a0] sm:$0xff]
  %v6082 = vld [vmem:[%s0 + $0x2a8] sm:$0xff]
  %v6083 = vld [vmem:[%s0 + $0x2b0] sm:$0xff]
  %v6084 = vld [vmem:[%s0 + $0x2b8] sm:$0xff]
  %v6085 = vld [vmem:[%s0 + $0x2c0] sm:$0xff]
  %v6086 = vld [vmem:[%s0 + $0x2c8] sm:$0xff]
  %v6087 = vld [vmem:[%s0 + $0x2d0] sm:$0xff]
  %v6088 = vld [vmem:[%s0 + $0x2d8] sm:$0xff]
  %v6089 = vld [vmem:[%s0 + $0x2e0] sm:$0xff]
  %v6090 = vld [vmem:[%s0 + $0x2e8] sm:$0xff]
  %v6091 = vld [vmem:[%s0 + $0x2f0] sm:$0xff]
  %v6092 = vld [vmem:[%s0 + $0x2f8] sm:$0xff]
  %v6093 = vld [vmem:[%s1] sm:$0xff]
  %v6094 = vld [vmem:[%s1 + $0x8] sm:$0xff]
  %v6095 = vld [vmem:[%s1 + $0x10] sm:$0xff]
  %v6096 = vld [vmem:[%s1 + $0x18] sm:$0xff]
  %v6097 = vld [vmem:[%s1 + $0x20] sm:$0xff]
  %v6098 = vld [vmem:[%s1 + $0x28] sm:$0xff]
  %v6099 = vld [vmem:[%s1 + $0x30] sm:$0xff]
  %v6100 = vld [vmem:[%s1 + $0x38] sm:$0xff]
  %v6101 = vld [vmem:[%s1 + $0x40] sm:$0xff]
  %v6102 = vld [vmem:[%s1 + $0x48] sm:$0xff]
  %v6103 = vld [vmem:[%s1 + $0x50] sm:$0xff]
  %v6104 = vld [vmem:[%s1 + $0x58] sm:$0xff]
  %v6105 = vld [vmem:[%s1 + $0x60] sm:$0xff]
  %v6106 = vld [vmem:[%s1 + $0x68] sm:$0xff]
  %v6107 = vld [vmem:[%s1 + $0x70] sm:$0xff]
  %v6108 = vld [vmem:[%s1 + $0x78] sm:$0xff]
  %v6109 = vld [vmem:[%s1 + $0x80] sm:$0xff]
  %v6110 = vld [vmem:[%s1 + $0x88] sm:$0xff]
  %v6111 = vld [vmem:[%s1 + $0x90] sm:$0xff]
  %v6112 = vld [vmem:[%s1 + $0x98] sm:$0xff]
  %v6113 = vld [vmem:[%s1 + $0xa0] sm:$0xff]
  %v6114 = vld [vmem:[%s1 + $0xa8] sm:$0xff]
  %v6115 = vld [vmem:[%s1 + $0xb0] sm:$0xff]
  %v6116 = vld [vmem:[%s1 + $0xb8] sm:$0xff]
  %v6117 = vld [vmem:[%s1 + $0xc0] sm:$0xff]
  %v6118 = vld [vmem:[%s1 + $0xc8] sm:$0xff]
  %v6119 = vld [vmem:[%s1 + $0xd0] sm:$0xff]
  %v6120 = vld [vmem:[%s1 + $0xd8] sm:$0xff]
  %v6121 = vld [vmem:[%s1 + $0xe0] sm:$0xff]
  %v6122 = vld [vmem:[%s1 + $0xe8] sm:$0xff]
  %v6123 = vld [vmem:[%s1 + $0xf0] sm:$0xff]
  %v6124 = vld [vmem:[%s1 + $0xf8] sm:$0xff]
  %v6125 = vld [vmem:[%s1 + $0x100] sm:$0xff]
  %v6126 = vld [vmem:[%s1 + $0x108] sm:$0xff]
  %v6127 = vld [vmem:[%s1 + $0x110] sm:$0xff]
  %v6128 = vld [vmem:[%s1 + $0x118] sm:$0xff]
  %v6129 = vld [vmem:[%s1 + $0x120] sm:$0xff]
  %v6130 = vld [vmem:[%s1 + $0x128] sm:$0xff]
  %v6131 = vld [vmem:[%s1 + $0x130] sm:$0xff]
  %v6132 = vld [vmem:[%s1 + $0x138] sm:$0xff]
  %v6133 = vld [vmem:[%s1 + $0x140] sm:$0xff]
  %v6134 = vld [vmem:[%s1 + $0x148] sm:$0xff]
  %v6135 = vld [vmem:[%s1 + $0x150] sm:$0xff]
  %v6136 = vld [vmem:[%s1 + $0x158] sm:$0xff]
  %v6137 = vld [vmem:[%s1 + $0x160] sm:$0xff]
  %v6138 = vld [vmem:[%s1 + $0x168] sm:$0xff]
  %v6139 = vld [vmem:[%s1 + $0x170] sm:$0xff]
  %v6140 = vld [vmem:[%s1 + $0x178] sm:$0xff]
  %v6141 = vld [vmem:[%s1 + $0x180] sm:$0xff]
  %v6142 = vld [vmem:[%s1 + $0x188] sm:$0xff]
  %v6143 = vld [vmem:[%s1 + $0x190] sm:$0xff]
  %v6144 = vld [vmem:[%s1 + $0x198] sm:$0xff]
  %v6145 = vld [vmem:[%s1 + $0x1a0] sm:$0xff]
  %v6146 = vld [vmem:[%s1 + $0x1a8] sm:$0xff]
  %v6147 = vld [vmem:[%s1 + $0x1b0] sm:$0xff]
  %v6148 = vld [vmem:[%s1 + $0x1b8] sm:$0xff]
  %v6149 = vld [vmem:[%s1 + $0x1c0] sm:$0xff]
  %v6150 = vld [vmem:[%s1 + $0x1c8] sm:$0xff]
  %v6151 = vld [vmem:[%s1 + $0x1d0] sm:$0xff]
  %v6152 = vld [vmem:[%s1 + $0x1d8] sm:$0xff]
  %v6153 = vld [vmem:[%s1 + $0x1e0] sm:$0xff]
  %v6154 = vld [vmem:[%s1 + $0x1e8] sm:$0xff]
  %v6155 = vld [vmem:[%s1 + $0x1f0] sm:$0xff]
  %v6156 = vld [vmem:[%s1 + $0x1f8] sm:$0xff]
  %v6157 = vld [vmem:[%s1 + $0x200] sm:$0xff]
  %v6158 = vld [vmem:[%s1 + $0x208] sm:$0xff]
  %v6159 = vld [vmem:[%s1 + $0x210] sm:$0xff]
  %v6160 = vld [vmem:[%s1 + $0x218] sm:$0xff]
  %v6161 = vld [vmem:[%s1 + $0x220] sm:$0xff]
  %v6162 = vld [vmem:[%s1 + $0x228] sm:$0xff]
  %v6163 = vld [vmem:[%s1 + $0x230] sm:$0xff]
  %v6164 = vld [vmem:[%s1 + $0x238] sm:$0xff]
  %v6165 = vld [vmem:[%s1 + $0x240] sm:$0xff]
  %v6166 = vld [vmem:[%s1 + $0x248] sm:$0xff]
  %v6167 = vld [vmem:[%s1 + $0x250] sm:$0xff]
  %v6168 = vld [vmem:[%s1 + $0x258] sm:$0xff]
  %v6169 = vld [vmem:[%s1 + $0x260] sm:$0xff]
  %v6170 = vld [vmem:[%s1 + $0x268] sm:$0xff]
  %v6171 = vld [vmem:[%s1 + $0x270] sm:$0xff]
  %v6172 = vld [vmem:[%s1 + $0x278] sm:$0xff]
  %v6173 = vld [vmem:[%s1 + $0x280] sm:$0xff]
  %v6174 = vld [vmem:[%s1 + $0x288] sm:$0xff]
  %v6175 = vld [vmem:[%s1 + $0x290] sm:$0xff]
  %v6176 = vld [vmem:[%s1 + $0x298] sm:$0xff]
  %v6177 = vld [vmem:[%s1 + $0x2a0] sm:$0xff]
  %v6178 = vld [vmem:[%s1 + $0x2a8] sm:$0xff]
  %v6179 = vld [vmem:[%s1 + $0x2b0] sm:$0xff]
  %v6180 = vld [vmem:[%s1 + $0x2b8] sm:$0xff]
  %v6181 = vld [vmem:[%s1 + $0x2c0] sm:$0xff]
  %v6182 = vld [vmem:[%s1 + $0x2c8] sm:$0xff]
  %v6183 = vld [vmem:[%s1 + $0x2d0] sm:$0xff]
  %v6184 = vld [vmem:[%s1 + $0x2d8] sm:$0xff]
  %v6185 = vld [vmem:[%s1 + $0x2e0] sm:$0xff]
  %v6186 = vld [vmem:[%s1 + $0x2e8] sm:$0xff]
  %v6187 = vld [vmem:[%s1 + $0x2f0] sm:$0xff]
  %v6188 = vld [vmem:[%s1 + $0x2f8] sm:$0xff]
  %v6190 = vsel %vm158, %v6094, 0
  %v6193 = vsel %vm158, %v6096, 0
  %v6196 = vsel %vm158, %v6098, 0
  %v6199 = vsel %vm158, %v6100, 0
  %v6202 = vsel %vm158, %v6102, 0
  %v6205 = vsel %vm158, %v6104, 0
  %v6208 = vsel %vm158, %v6106, 0
  %v6211 = vsel %vm158, %v6108, 0
  %v6214 = vsel %vm158, %v6110, 0
  %v6217 = vsel %vm158, %v6112, 0
  %v6220 = vsel %vm158, %v6114, 0
  %v6223 = vsel %vm158, %v6116, 0
  %v6226 = vsel %vm158, %v6118, 0
  %v6229 = vsel %vm158, %v6120, 0
  %v6232 = vsel %vm158, %v6122, 0
  %v6235 = vsel %vm158, %v6124, 0
  %v6238 = vsel %vm158, %v6126, 0
  %v6241 = vsel %vm158, %v6128, 0
  %v6244 = vsel %vm158, %v6130, 0
  %v6247 = vsel %vm158, %v6132, 0
  %v6250 = vsel %vm158, %v6134, 0
  %v6253 = vsel %vm158, %v6136, 0
  %v6256 = vsel %vm158, %v6138, 0
  %v6259 = vsel %vm158, %v6140, 0
  %v6262 = vsel %vm158, %v6142, 0
  %v6265 = vsel %vm158, %v6144, 0
  %v6268 = vsel %vm158, %v6146, 0
  %v6271 = vsel %vm158, %v6148, 0
  %v6274 = vsel %vm158, %v6150, 0
  %v6277 = vsel %vm158, %v6152, 0
  %v6280 = vsel %vm158, %v6154, 0
  %v6283 = vsel %vm158, %v6156, 0
  %v6286 = vsel %vm158, %v6158, 0
  %v6289 = vsel %vm158, %v6160, 0
  %v6292 = vsel %vm158, %v6162, 0
  %v6295 = vsel %vm158, %v6164, 0
  %v6298 = vsel %vm158, %v6166, 0
  %v6301 = vsel %vm158, %v6168, 0
  %v6304 = vsel %vm158, %v6170, 0
  %v6307 = vsel %vm158, %v6172, 0
  %v6310 = vsel %vm158, %v6174, 0
  %v6313 = vsel %vm158, %v6176, 0
  %v6316 = vsel %vm158, %v6178, 0
  %v6319 = vsel %vm158, %v6180, 0
  %v6322 = vsel %vm158, %v6182, 0
  %v6325 = vsel %vm158, %v6184, 0
  %v6328 = vsel %vm158, %v6186, 0
  %v6331 = vsel %vm158, %v6188, 0
  %6333 = vmatpush.msra.mxu0 %v6084
  %6334 = vmatpush.msra.mxu0 %v6083
  %6335 = vmatpush.msra.mxu0 %v6082
  %6336 = vmatpush.msra.mxu0 %v6081
  %6337 = vmatpush.msra.mxu0 %v6080
  %6338 = vmatpush.msra.mxu0 %v6079
  %6339 = vmatpush.msra.mxu0 %v6078
  %6340 = vmatpush.msra.mxu0 %v6077
  %6341 = vmatpush.msra.mxu0 %v6076
  %6342 = vmatpush.msra.mxu0 %v6075
  %6343 = vmatpush.msra.mxu0 %v6074
  %6344 = vmatpush.msra.mxu0 %v6073
  %6345 = vmatpush.msra.mxu0 %v6072
  %6346 = vmatpush.msra.mxu0 %v6071
  %6347 = vmatpush.msra.mxu0 %v6070
  %6348 = vmatpush.msra.mxu0 %v6069
  %6349 = vmatmul.f32.gmra.mxu0 %v6093
  %v6350 = vpop.f32.mrf.mxu0
  %v6351 = vadd.f32 0.0, %v6350
  %6352 = vmatmul.f32.gmra.mxu0 %v6095
  %v6353 = vpop.f32.mrf.mxu0
  %v6354 = vadd.f32 0.0, %v6353
  %6355 = vmatmul.f32.gmra.mxu0 %v6097
  %v6356 = vpop.f32.mrf.mxu0
  %v6357 = vadd.f32 0.0, %v6356
  %6358 = vmatmul.f32.gmra.mxu0 %v6099
  %v6359 = vpop.f32.mrf.mxu0
  %v6360 = vadd.f32 0.0, %v6359
  %6361 = vmatmul.f32.gmra.mxu0 %v6101
  %v6362 = vpop.f32.mrf.mxu0
  %v6363 = vadd.f32 0.0, %v6362
  %6364 = vmatmul.f32.gmra.mxu0 %v6103
  %v6365 = vpop.f32.mrf.mxu0
  %v6366 = vadd.f32 0.0, %v6365
  %6367 = vmatmul.f32.gmra.mxu0 %v6105
  %v6368 = vpop.f32.mrf.mxu0
  %v6369 = vadd.f32 0.0, %v6368
  %6370 = vmatmul.f32.gmra.mxu0 %v6107
  %v6371 = vpop.f32.mrf.mxu0
  %v6372 = vadd.f32 0.0, %v6371
  %6373 = vmatmul.f32.gmra.mxu0 %v6109
  %v6374 = vpop.f32.mrf.mxu0
  %v6375 = vadd.f32 0.0, %v6374
  %6376 = vmatmul.f32.gmra.mxu0 %v6111
  %v6377 = vpop.f32.mrf.mxu0
  %v6378 = vadd.f32 0.0, %v6377
  %6379 = vmatmul.f32.gmra.mxu0 %v6113
  %v6380 = vpop.f32.mrf.mxu0
  %v6381 = vadd.f32 0.0, %v6380
  %6382 = vmatmul.f32.gmra.mxu0 %v6115
  %v6383 = vpop.f32.mrf.mxu0
  %v6384 = vadd.f32 0.0, %v6383
  %6385 = vmatmul.f32.gmra.mxu0 %v6117
  %v6386 = vpop.f32.mrf.mxu0
  %v6387 = vadd.f32 0.0, %v6386
  %6388 = vmatmul.f32.gmra.mxu0 %v6119
  %v6389 = vpop.f32.mrf.mxu0
  %v6390 = vadd.f32 0.0, %v6389
  %6391 = vmatmul.f32.gmra.mxu0 %v6121
  %v6392 = vpop.f32.mrf.mxu0
  %v6393 = vadd.f32 0.0, %v6392
  %6394 = vmatmul.f32.gmra.mxu0 %v6123
  %v6395 = vpop.f32.mrf.mxu0
  %v6396 = vadd.f32 0.0, %v6395
  %6397 = vmatmul.f32.gmra.mxu0 %v6125
  %v6398 = vpop.f32.mrf.mxu0
  %v6399 = vadd.f32 0.0, %v6398
  %6400 = vmatmul.f32.gmra.mxu0 %v6127
  %v6401 = vpop.f32.mrf.mxu0
  %v6402 = vadd.f32 0.0, %v6401
  %6403 = vmatmul.f32.gmra.mxu0 %v6129
  %v6404 = vpop.f32.mrf.mxu0
  %v6405 = vadd.f32 0.0, %v6404
  %6406 = vmatmul.f32.gmra.mxu0 %v6131
  %v6407 = vpop.f32.mrf.mxu0
  %v6408 = vadd.f32 0.0, %v6407
  %6409 = vmatmul.f32.gmra.mxu0 %v6133
  %v6410 = vpop.f32.mrf.mxu0
  %v6411 = vadd.f32 0.0, %v6410
  %6412 = vmatmul.f32.gmra.mxu0 %v6135
  %v6413 = vpop.f32.mrf.mxu0
  %v6414 = vadd.f32 0.0, %v6413
  %6415 = vmatmul.f32.gmra.mxu0 %v6137
  %v6416 = vpop.f32.mrf.mxu0
  %v6417 = vadd.f32 0.0, %v6416
  %6418 = vmatmul.f32.gmra.mxu0 %v6139
  %v6419 = vpop.f32.mrf.mxu0
  %v6420 = vadd.f32 0.0, %v6419
  %6421 = vmatmul.f32.gmra.mxu0 %v6141
  %v6422 = vpop.f32.mrf.mxu0
  %v6423 = vadd.f32 0.0, %v6422
  %6424 = vmatmul.f32.gmra.mxu0 %v6143
  %v6425 = vpop.f32.mrf.mxu0
  %v6426 = vadd.f32 0.0, %v6425
  %6427 = vmatmul.f32.gmra.mxu0 %v6145
  %v6428 = vpop.f32.mrf.mxu0
  %v6429 = vadd.f32 0.0, %v6428
  %6430 = vmatmul.f32.gmra.mxu0 %v6147
  %v6431 = vpop.f32.mrf.mxu0
  %v6432 = vadd.f32 0.0, %v6431
  %6433 = vmatmul.f32.gmra.mxu0 %v6149
  %v6434 = vpop.f32.mrf.mxu0
  %v6435 = vadd.f32 0.0, %v6434
  %6436 = vmatmul.f32.gmra.mxu0 %v6151
  %v6437 = vpop.f32.mrf.mxu0
  %v6438 = vadd.f32 0.0, %v6437
  %6439 = vmatmul.f32.gmra.mxu0 %v6153
  %v6440 = vpop.f32.mrf.mxu0
  %v6441 = vadd.f32 0.0, %v6440
  %6442 = vmatmul.f32.gmra.mxu0 %v6155
  %v6443 = vpop.f32.mrf.mxu0
  %v6444 = vadd.f32 0.0, %v6443
  %6445 = vmatmul.f32.gmra.mxu0 %v6157
  %v6446 = vpop.f32.mrf.mxu0
  %v6447 = vadd.f32 0.0, %v6446
  %6448 = vmatmul.f32.gmra.mxu0 %v6159
  %v6449 = vpop.f32.mrf.mxu0
  %v6450 = vadd.f32 0.0, %v6449
  %6451 = vmatmul.f32.gmra.mxu0 %v6161
  %v6452 = vpop.f32.mrf.mxu0
  %v6453 = vadd.f32 0.0, %v6452
  %6454 = vmatmul.f32.gmra.mxu0 %v6163
  %v6455 = vpop.f32.mrf.mxu0
  %v6456 = vadd.f32 0.0, %v6455
  %6457 = vmatmul.f32.gmra.mxu0 %v6165
  %v6458 = vpop.f32.mrf.mxu0
  %v6459 = vadd.f32 0.0, %v6458
  %6460 = vmatmul.f32.gmra.mxu0 %v6167
  %v6461 = vpop.f32.mrf.mxu0
  %v6462 = vadd.f32 0.0, %v6461
  %6463 = vmatmul.f32.gmra.mxu0 %v6169
  %v6464 = vpop.f32.mrf.mxu0
  %v6465 = vadd.f32 0.0, %v6464
  %6466 = vmatmul.f32.gmra.mxu0 %v6171
  %v6467 = vpop.f32.mrf.mxu0
  %v6468 = vadd.f32 0.0, %v6467
  %6469 = vmatmul.f32.gmra.mxu0 %v6173
  %v6470 = vpop.f32.mrf.mxu0
  %v6471 = vadd.f32 0.0, %v6470
  %6472 = vmatmul.f32.gmra.mxu0 %v6175
  %v6473 = vpop.f32.mrf.mxu0
  %v6474 = vadd.f32 0.0, %v6473
  %6475 = vmatmul.f32.gmra.mxu0 %v6177
  %v6476 = vpop.f32.mrf.mxu0
  %v6477 = vadd.f32 0.0, %v6476
  %6478 = vmatmul.f32.gmra.mxu0 %v6179
  %v6479 = vpop.f32.mrf.mxu0
  %v6480 = vadd.f32 0.0, %v6479
  %6481 = vmatmul.f32.gmra.mxu0 %v6181
  %v6482 = vpop.f32.mrf.mxu0
  %v6483 = vadd.f32 0.0, %v6482
  %6484 = vmatmul.f32.gmra.mxu0 %v6183
  %v6485 = vpop.f32.mrf.mxu0
  %v6486 = vadd.f32 0.0, %v6485
  %6487 = vmatmul.f32.gmra.mxu0 %v6185
  %v6488 = vpop.f32.mrf.mxu0
  %v6489 = vadd.f32 0.0, %v6488
  %6490 = vmatmul.f32.gmra.mxu0 %v6187
  %v6491 = vpop.f32.mrf.mxu0
  %v6492 = vadd.f32 0.0, %v6491
  %6493 = vdwg.mxu0
  %6494 = vmatpush.msra.mxu0 0.0
  %6495 = vmatpush.msra.mxu0 0.0
  %6496 = vmatpush.msra.mxu0 0.0
  %6497 = vmatpush.msra.mxu0 0.0
  %6498 = vmatpush.msra.mxu0 0.0
  %6499 = vmatpush.msra.mxu0 0.0
  %6500 = vmatpush.msra.mxu0 0.0
  %6501 = vmatpush.msra.mxu0 0.0
  %6502 = vmatpush.msra.mxu0 %v6092
  %6503 = vmatpush.msra.mxu0 %v6091
  %6504 = vmatpush.msra.mxu0 %v6090
  %6505 = vmatpush.msra.mxu0 %v6089
  %6506 = vmatpush.msra.mxu0 %v6088
  %6507 = vmatpush.msra.mxu0 %v6087
  %6508 = vmatpush.msra.mxu0 %v6086
  %6509 = vmatpush.msra.mxu0 %v6085
  %6510 = vmatmul.f32.gmra.mxu0 %v6190
  %v6511 = vpop.f32.mrf.mxu0
  %v6512 = vadd.f32 %v6351, %v6511
  %6513 = vmatmul.f32.gmra.mxu0 %v6193
  %v6514 = vpop.f32.mrf.mxu0
  %v6515 = vadd.f32 %v6354, %v6514
  %6516 = vmatmul.f32.gmra.mxu0 %v6196
  %v6517 = vpop.f32.mrf.mxu0
  %v6518 = vadd.f32 %v6357, %v6517
  %6519 = vmatmul.f32.gmra.mxu0 %v6199
  %v6520 = vpop.f32.mrf.mxu0
  %v6521 = vadd.f32 %v6360, %v6520
  %6522 = vmatmul.f32.gmra.mxu0 %v6202
  %v6523 = vpop.f32.mrf.mxu0
  %v6524 = vadd.f32 %v6363, %v6523
  %6525 = vmatmul.f32.gmra.mxu0 %v6205
  %v6526 = vpop.f32.mrf.mxu0
  %v6527 = vadd.f32 %v6366, %v6526
  %6528 = vmatmul.f32.gmra.mxu0 %v6208
  %v6529 = vpop.f32.mrf.mxu0
  %v6530 = vadd.f32 %v6369, %v6529
  %6531 = vmatmul.f32.gmra.mxu0 %v6211
  %v6532 = vpop.f32.mrf.mxu0
  %v6533 = vadd.f32 %v6372, %v6532
  %6534 = vmatmul.f32.gmra.mxu0 %v6214
  %v6535 = vpop.f32.mrf.mxu0
  %v6536 = vadd.f32 %v6375, %v6535
  %6537 = vmatmul.f32.gmra.mxu0 %v6217
  %v6538 = vpop.f32.mrf.mxu0
  %v6539 = vadd.f32 %v6378, %v6538
  %6540 = vmatmul.f32.gmra.mxu0 %v6220
  %v6541 = vpop.f32.mrf.mxu0
  %v6542 = vadd.f32 %v6381, %v6541
  %6543 = vmatmul.f32.gmra.mxu0 %v6223
  %v6544 = vpop.f32.mrf.mxu0
  %v6545 = vadd.f32 %v6384, %v6544
  %6546 = vmatmul.f32.gmra.mxu0 %v6226
  %v6547 = vpop.f32.mrf.mxu0
  %v6548 = vadd.f32 %v6387, %v6547
  %6549 = vmatmul.f32.gmra.mxu0 %v6229
  %v6550 = vpop.f32.mrf.mxu0
  %v6551 = vadd.f32 %v6390, %v6550
  %6552 = vmatmul.f32.gmra.mxu0 %v6232
  %v6553 = vpop.f32.mrf.mxu0
  %v6554 = vadd.f32 %v6393, %v6553
  %6555 = vmatmul.f32.gmra.mxu0 %v6235
  %v6556 = vpop.f32.mrf.mxu0
  %v6557 = vadd.f32 %v6396, %v6556
  %6558 = vmatmul.f32.gmra.mxu0 %v6238
  %v6559 = vpop.f32.mrf.mxu0
  %v6560 = vadd.f32 %v6399, %v6559
  %6561 = vmatmul.f32.gmra.mxu0 %v6241
  %v6562 = vpop.f32.mrf.mxu0
  %v6563 = vadd.f32 %v6402, %v6562
  %6564 = vmatmul.f32.gmra.mxu0 %v6244
  %v6565 = vpop.f32.mrf.mxu0
  %v6566 = vadd.f32 %v6405, %v6565
  %6567 = vmatmul.f32.gmra.mxu0 %v6247
  %v6568 = vpop.f32.mrf.mxu0
  %v6569 = vadd.f32 %v6408, %v6568
  %6570 = vmatmul.f32.gmra.mxu0 %v6250
  %v6571 = vpop.f32.mrf.mxu0
  %v6572 = vadd.f32 %v6411, %v6571
  %6573 = vmatmul.f32.gmra.mxu0 %v6253
  %v6574 = vpop.f32.mrf.mxu0
  %v6575 = vadd.f32 %v6414, %v6574
  %6576 = vmatmul.f32.gmra.mxu0 %v6256
  %v6577 = vpop.f32.mrf.mxu0
  %v6578 = vadd.f32 %v6417, %v6577
  %6579 = vmatmul.f32.gmra.mxu0 %v6259
  %v6580 = vpop.f32.mrf.mxu0
  %v6581 = vadd.f32 %v6420, %v6580
  %6582 = vmatmul.f32.gmra.mxu0 %v6262
  %v6583 = vpop.f32.mrf.mxu0
  %v6584 = vadd.f32 %v6423, %v6583
  %6585 = vmatmul.f32.gmra.mxu0 %v6265
  %v6586 = vpop.f32.mrf.mxu0
  %v6587 = vadd.f32 %v6426, %v6586
  %6588 = vmatmul.f32.gmra.mxu0 %v6268
  %v6589 = vpop.f32.mrf.mxu0
  %v6590 = vadd.f32 %v6429, %v6589
  %6591 = vmatmul.f32.gmra.mxu0 %v6271
  %v6592 = vpop.f32.mrf.mxu0
  %v6593 = vadd.f32 %v6432, %v6592
  %6594 = vmatmul.f32.gmra.mxu0 %v6274
  %v6595 = vpop.f32.mrf.mxu0
  %v6596 = vadd.f32 %v6435, %v6595
  %6597 = vmatmul.f32.gmra.mxu0 %v6277
  %v6598 = vpop.f32.mrf.mxu0
  %v6599 = vadd.f32 %v6438, %v6598
  %6600 = vmatmul.f32.gmra.mxu0 %v6280
  %v6601 = vpop.f32.mrf.mxu0
  %v6602 = vadd.f32 %v6441, %v6601
  %6603 = vmatmul.f32.gmra.mxu0 %v6283
  %v6604 = vpop.f32.mrf.mxu0
  %v6605 = vadd.f32 %v6444, %v6604
  %6606 = vmatmul.f32.gmra.mxu0 %v6286
  %v6607 = vpop.f32.mrf.mxu0
  %v6608 = vadd.f32 %v6447, %v6607
  %6609 = vmatmul.f32.gmra.mxu0 %v6289
  %v6610 = vpop.f32.mrf.mxu0
  %v6611 = vadd.f32 %v6450, %v6610
  %6612 = vmatmul.f32.gmra.mxu0 %v6292
  %v6613 = vpop.f32.mrf.mxu0
  %v6614 = vadd.f32 %v6453, %v6613
  %6615 = vmatmul.f32.gmra.mxu0 %v6295
  %v6616 = vpop.f32.mrf.mxu0
  %v6617 = vadd.f32 %v6456, %v6616
  %6618 = vmatmul.f32.gmra.mxu0 %v6298
  %v6619 = vpop.f32.mrf.mxu0
  %v6620 = vadd.f32 %v6459, %v6619
  %6621 = vmatmul.f32.gmra.mxu0 %v6301
  %v6622 = vpop.f32.mrf.mxu0
  %v6623 = vadd.f32 %v6462, %v6622
  %6624 = vmatmul.f32.gmra.mxu0 %v6304
  %v6625 = vpop.f32.mrf.mxu0
  %v6626 = vadd.f32 %v6465, %v6625
  %6627 = vmatmul.f32.gmra.mxu0 %v6307
  %v6628 = vpop.f32.mrf.mxu0
  %v6629 = vadd.f32 %v6468, %v6628
  %6630 = vmatmul.f32.gmra.mxu0 %v6310
  %v6631 = vpop.f32.mrf.mxu0
  %v6632 = vadd.f32 %v6471, %v6631
  %6633 = vmatmul.f32.gmra.mxu0 %v6313
  %v6634 = vpop.f32.mrf.mxu0
  %v6635 = vadd.f32 %v6474, %v6634
  %6636 = vmatmul.f32.gmra.mxu0 %v6316
  %v6637 = vpop.f32.mrf.mxu0
  %v6638 = vadd.f32 %v6477, %v6637
  %6639 = vmatmul.f32.gmra.mxu0 %v6319
  %v6640 = vpop.f32.mrf.mxu0
  %v6641 = vadd.f32 %v6480, %v6640
  %6642 = vmatmul.f32.gmra.mxu0 %v6322
  %v6643 = vpop.f32.mrf.mxu0
  %v6644 = vadd.f32 %v6483, %v6643
  %6645 = vmatmul.f32.gmra.mxu0 %v6325
  %v6646 = vpop.f32.mrf.mxu0
  %v6647 = vadd.f32 %v6486, %v6646
  %6648 = vmatmul.f32.gmra.mxu0 %v6328
  %v6649 = vpop.f32.mrf.mxu0
  %v6650 = vadd.f32 %v6489, %v6649
  %6651 = vmatmul.f32.gmra.mxu0 %v6331
  %v6652 = vpop.f32.mrf.mxu0
  %v6653 = vadd.f32 %v6492, %v6652
  %6654 = vdwg.mxu0
  %v6655 = vmax.f32 %v6512, %v6584
  %v6656 = vmax.f32 %v6515, %v6587
  %v6657 = vmax.f32 %v6518, %v6590
  %v6658 = vmax.f32 %v6521, %v6593
  %v6659 = vmax.f32 %v6524, %v6596
  %v6660 = vmax.f32 %v6527, %v6599
  %v6661 = vmax.f32 %v6530, %v6602
  %v6662 = vmax.f32 %v6533, %v6605
  %v6663 = vmax.f32 %v6536, %v6608
  %v6664 = vmax.f32 %v6539, %v6611
  %v6665 = vmax.f32 %v6542, %v6614
  %v6666 = vmax.f32 %v6545, %v6617
  %v6667 = vmax.f32 %v6548, %v6620
  %v6668 = vmax.f32 %v6551, %v6623
  %v6669 = vmax.f32 %v6554, %v6626
  %v6670 = vmax.f32 %v6557, %v6629
  %v6671 = vmax.f32 %v6560, %v6632
  %v6672 = vmax.f32 %v6563, %v6635
  %v6673 = vmax.f32 %v6566, %v6638
  %v6674 = vmax.f32 %v6569, %v6641
  %v6675 = vmax.f32 %v6572, %v6644
  %v6676 = vmax.f32 %v6575, %v6647
  %v6677 = vmax.f32 %v6578, %v6650
  %v6678 = vmax.f32 %v6581, %v6653
  %v6679 = vmax.f32 %v6655, %v6667
  %v6680 = vmax.f32 %v6656, %v6668
  %v6681 = vmax.f32 %v6657, %v6669
  %v6682 = vmax.f32 %v6658, %v6670
  %v6683 = vmax.f32 %v6659, %v6671
  %v6684 = vmax.f32 %v6660, %v6672
  %v6685 = vmax.f32 %v6661, %v6673
  %v6686 = vmax.f32 %v6662, %v6674
  %v6687 = vmax.f32 %v6663, %v6675
  %v6688 = vmax.f32 %v6664, %v6676
  %v6689 = vmax.f32 %v6665, %v6677
  %v6690 = vmax.f32 %v6666, %v6678
  %v6691 = vld [vmem:[%s2] sm:$0xff]
  %v6692 = vld [vmem:[%s2 + $0x8] sm:$0xff]
  %v6693 = vld [vmem:[%s2 + $0x10] sm:$0xff]
  %v6694 = vld [vmem:[%s2 + $0x18] sm:$0xff]
  %v6695 = vld [vmem:[%s2 + $0x20] sm:$0xff]
  %v6696 = vld [vmem:[%s2 + $0x28] sm:$0xff]
  %v6697 = vld [vmem:[%s2 + $0x30] sm:$0xff]
  %v6698 = vld [vmem:[%s2 + $0x38] sm:$0xff]
  %v6699 = vld [vmem:[%s2 + $0x40] sm:$0xff]
  %v6700 = vld [vmem:[%s2 + $0x48] sm:$0xff]
  %v6701 = vld [vmem:[%s2 + $0x50] sm:$0xff]
  %v6702 = vld [vmem:[%s2 + $0x58] sm:$0xff]
  %v6703 = vadd.f32 %v6679, %v6691
  %v6704 = vadd.f32 %v6680, %v6692
  %v6705 = vadd.f32 %v6681, %v6693
  %v6706 = vadd.f32 %v6682, %v6694
  %v6707 = vadd.f32 %v6683, %v6695
  %v6708 = vadd.f32 %v6684, %v6696
  %v6709 = vadd.f32 %v6685, %v6697
  %v6710 = vadd.f32 %v6686, %v6698
  %v6711 = vadd.f32 %v6687, %v6699
  %v6712 = vadd.f32 %v6688, %v6700
  %v6713 = vadd.f32 %v6689, %v6701
  %v6714 = vadd.f32 %v6690, %v6702
  %v6715 = vmax.f32 %v6703, 0.0
  %v6716 = vmax.f32 %v6704, 0.0
  %v6717 = vmax.f32 %v6705, 0.0
  %v6718 = vmax.f32 %v6706, 0.0
  %v6719 = vmax.f32 %v6707, 0.0
  %v6720 = vmax.f32 %v6708, 0.0
  %v6721 = vmax.f32 %v6709, 0.0
  %v6722 = vmax.f32 %v6710, 0.0
  %v6723 = vmax.f32 %v6711, 0.0
  %v6724 = vmax.f32 %v6712, 0.0
  %v6725 = vmax.f32 %v6713, 0.0
  %v6726 = vmax.f32 %v6714, 0.0
  %6727 = vst [vmem:[#allocation2 + $0x360] sm:$0xff] %v6715
  %6728 = vst [vmem:[#allocation2 + $0x368] sm:$0xff] %v6716
  %6729 = vst [vmem:[#allocation2 + $0x370] sm:$0xff] %v6717
  %6730 = vst [vmem:[#allocation2 + $0x378] sm:$0xff] %v6718
  %6731 = vst [vmem:[#allocation2 + $0x380] sm:$0xff] %v6719
  %6732 = vst [vmem:[#allocation2 + $0x388] sm:$0xff] %v6720
  %6733 = vst [vmem:[#allocation2 + $0x390] sm:$0xff] %v6721
  %6734 = vst [vmem:[#allocation2 + $0x398] sm:$0xff] %v6722
  %6735 = vst [vmem:[#allocation2 + $0x3a0] sm:$0xff] %v6723
  %6736 = vst [vmem:[#allocation2 + $0x3a8] sm:$0xff] %v6724
  %6737 = vst [vmem:[#allocation2 + $0x3b0] sm:$0xff] %v6725
  %6738 = vst [vmem:[#allocation2 + $0x3b8] sm:$0xff] %v6726
  %v6739 = vld [vmem:[%s0 + $0x280] sm:$0xff]
  %v6740 = vld [vmem:[%s0 + $0x288] sm:$0xff]
  %v6741 = vld [vmem:[%s0 + $0x290] sm:$0xff]
  %v6742 = vld [vmem:[%s0 + $0x298] sm:$0xff]
  %v6743 = vld [vmem:[%s0 + $0x2a0] sm:$0xff]
  %v6744 = vld [vmem:[%s0 + $0x2a8] sm:$0xff]
  %v6745 = vld [vmem:[%s0 + $0x2b0] sm:$0xff]
  %v6746 = vld [vmem:[%s0 + $0x2b8] sm:$0xff]
  %v6747 = vld [vmem:[%s0 + $0x2c0] sm:$0xff]
  %v6748 = vld [vmem:[%s0 + $0x2c8] sm:$0xff]
  %v6749 = vld [vmem:[%s0 + $0x2d0] sm:$0xff]
  %v6750 = vld [vmem:[%s0 + $0x2d8] sm:$0xff]
  %v6751 = vld [vmem:[%s0 + $0x2e0] sm:$0xff]
  %v6752 = vld [vmem:[%s0 + $0x2e8] sm:$0xff]
  %v6753 = vld [vmem:[%s0 + $0x2f0] sm:$0xff]
  %v6754 = vld [vmem:[%s0 + $0x2f8] sm:$0xff]
  %v6755 = vld [vmem:[%s0 + $0x300] sm:$0xff]
  %v6756 = vld [vmem:[%s0 + $0x308] sm:$0xff]
  %v6757 = vld [vmem:[%s0 + $0x310] sm:$0xff]
  %v6758 = vld [vmem:[%s0 + $0x318] sm:$0xff]
  %v6759 = vld [vmem:[%s0 + $0x320] sm:$0xff]
  %v6760 = vld [vmem:[%s0 + $0x328] sm:$0xff]
  %v6761 = vld [vmem:[%s0 + $0x330] sm:$0xff]
  %v6762 = vld [vmem:[%s0 + $0x338] sm:$0xff]
  %v6763 = vld [vmem:[%s1] sm:$0xff]
  %v6764 = vld [vmem:[%s1 + $0x8] sm:$0xff]
  %v6765 = vld [vmem:[%s1 + $0x10] sm:$0xff]
  %v6766 = vld [vmem:[%s1 + $0x18] sm:$0xff]
  %v6767 = vld [vmem:[%s1 + $0x20] sm:$0xff]
  %v6768 = vld [vmem:[%s1 + $0x28] sm:$0xff]
  %v6769 = vld [vmem:[%s1 + $0x30] sm:$0xff]
  %v6770 = vld [vmem:[%s1 + $0x38] sm:$0xff]
  %v6771 = vld [vmem:[%s1 + $0x40] sm:$0xff]
  %v6772 = vld [vmem:[%s1 + $0x48] sm:$0xff]
  %v6773 = vld [vmem:[%s1 + $0x50] sm:$0xff]
  %v6774 = vld [vmem:[%s1 + $0x58] sm:$0xff]
  %v6775 = vld [vmem:[%s1 + $0x60] sm:$0xff]
  %v6776 = vld [vmem:[%s1 + $0x68] sm:$0xff]
  %v6777 = vld [vmem:[%s1 + $0x70] sm:$0xff]
  %v6778 = vld [vmem:[%s1 + $0x78] sm:$0xff]
  %v6779 = vld [vmem:[%s1 + $0x80] sm:$0xff]
  %v6780 = vld [vmem:[%s1 + $0x88] sm:$0xff]
  %v6781 = vld [vmem:[%s1 + $0x90] sm:$0xff]
  %v6782 = vld [vmem:[%s1 + $0x98] sm:$0xff]
  %v6783 = vld [vmem:[%s1 + $0xa0] sm:$0xff]
  %v6784 = vld [vmem:[%s1 + $0xa8] sm:$0xff]
  %v6785 = vld [vmem:[%s1 + $0xb0] sm:$0xff]
  %v6786 = vld [vmem:[%s1 + $0xb8] sm:$0xff]
  %v6787 = vld [vmem:[%s1 + $0xc0] sm:$0xff]
  %v6788 = vld [vmem:[%s1 + $0xc8] sm:$0xff]
  %v6789 = vld [vmem:[%s1 + $0xd0] sm:$0xff]
  %v6790 = vld [vmem:[%s1 + $0xd8] sm:$0xff]
  %v6791 = vld [vmem:[%s1 + $0xe0] sm:$0xff]
  %v6792 = vld [vmem:[%s1 + $0xe8] sm:$0xff]
  %v6793 = vld [vmem:[%s1 + $0xf0] sm:$0xff]
  %v6794 = vld [vmem:[%s1 + $0xf8] sm:$0xff]
  %v6795 = vld [vmem:[%s1 + $0x100] sm:$0xff]
  %v6796 = vld [vmem:[%s1 + $0x108] sm:$0xff]
  %v6797 = vld [vmem:[%s1 + $0x110] sm:$0xff]
  %v6798 = vld [vmem:[%s1 + $0x118] sm:$0xff]
  %v6799 = vld [vmem:[%s1 + $0x120] sm:$0xff]
  %v6800 = vld [vmem:[%s1 + $0x128] sm:$0xff]
  %v6801 = vld [vmem:[%s1 + $0x130] sm:$0xff]
  %v6802 = vld [vmem:[%s1 + $0x138] sm:$0xff]
  %v6803 = vld [vmem:[%s1 + $0x140] sm:$0xff]
  %v6804 = vld [vmem:[%s1 + $0x148] sm:$0xff]
  %v6805 = vld [vmem:[%s1 + $0x150] sm:$0xff]
  %v6806 = vld [vmem:[%s1 + $0x158] sm:$0xff]
  %v6807 = vld [vmem:[%s1 + $0x160] sm:$0xff]
  %v6808 = vld [vmem:[%s1 + $0x168] sm:$0xff]
  %v6809 = vld [vmem:[%s1 + $0x170] sm:$0xff]
  %v6810 = vld [vmem:[%s1 + $0x178] sm:$0xff]
  %v6811 = vld [vmem:[%s1 + $0x180] sm:$0xff]
  %v6812 = vld [vmem:[%s1 + $0x188] sm:$0xff]
  %v6813 = vld [vmem:[%s1 + $0x190] sm:$0xff]
  %v6814 = vld [vmem:[%s1 + $0x198] sm:$0xff]
  %v6815 = vld [vmem:[%s1 + $0x1a0] sm:$0xff]
  %v6816 = vld [vmem:[%s1 + $0x1a8] sm:$0xff]
  %v6817 = vld [vmem:[%s1 + $0x1b0] sm:$0xff]
  %v6818 = vld [vmem:[%s1 + $0x1b8] sm:$0xff]
  %v6819 = vld [vmem:[%s1 + $0x1c0] sm:$0xff]
  %v6820 = vld [vmem:[%s1 + $0x1c8] sm:$0xff]
  %v6821 = vld [vmem:[%s1 + $0x1d0] sm:$0xff]
  %v6822 = vld [vmem:[%s1 + $0x1d8] sm:$0xff]
  %v6823 = vld [vmem:[%s1 + $0x1e0] sm:$0xff]
  %v6824 = vld [vmem:[%s1 + $0x1e8] sm:$0xff]
  %v6825 = vld [vmem:[%s1 + $0x1f0] sm:$0xff]
  %v6826 = vld [vmem:[%s1 + $0x1f8] sm:$0xff]
  %v6827 = vld [vmem:[%s1 + $0x200] sm:$0xff]
  %v6828 = vld [vmem:[%s1 + $0x208] sm:$0xff]
  %v6829 = vld [vmem:[%s1 + $0x210] sm:$0xff]
  %v6830 = vld [vmem:[%s1 + $0x218] sm:$0xff]
  %v6831 = vld [vmem:[%s1 + $0x220] sm:$0xff]
  %v6832 = vld [vmem:[%s1 + $0x228] sm:$0xff]
  %v6833 = vld [vmem:[%s1 + $0x230] sm:$0xff]
  %v6834 = vld [vmem:[%s1 + $0x238] sm:$0xff]
  %v6835 = vld [vmem:[%s1 + $0x240] sm:$0xff]
  %v6836 = vld [vmem:[%s1 + $0x248] sm:$0xff]
  %v6837 = vld [vmem:[%s1 + $0x250] sm:$0xff]
  %v6838 = vld [vmem:[%s1 + $0x258] sm:$0xff]
  %v6839 = vld [vmem:[%s1 + $0x260] sm:$0xff]
  %v6840 = vld [vmem:[%s1 + $0x268] sm:$0xff]
  %v6841 = vld [vmem:[%s1 + $0x270] sm:$0xff]
  %v6842 = vld [vmem:[%s1 + $0x278] sm:$0xff]
  %v6843 = vld [vmem:[%s1 + $0x280] sm:$0xff]
  %v6844 = vld [vmem:[%s1 + $0x288] sm:$0xff]
  %v6845 = vld [vmem:[%s1 + $0x290] sm:$0xff]
  %v6846 = vld [vmem:[%s1 + $0x298] sm:$0xff]
  %v6847 = vld [vmem:[%s1 + $0x2a0] sm:$0xff]
  %v6848 = vld [vmem:[%s1 + $0x2a8] sm:$0xff]
  %v6849 = vld [vmem:[%s1 + $0x2b0] sm:$0xff]
  %v6850 = vld [vmem:[%s1 + $0x2b8] sm:$0xff]
  %v6851 = vld [vmem:[%s1 + $0x2c0] sm:$0xff]
  %v6852 = vld [vmem:[%s1 + $0x2c8] sm:$0xff]
  %v6853 = vld [vmem:[%s1 + $0x2d0] sm:$0xff]
  %v6854 = vld [vmem:[%s1 + $0x2d8] sm:$0xff]
  %v6855 = vld [vmem:[%s1 + $0x2e0] sm:$0xff]
  %v6856 = vld [vmem:[%s1 + $0x2e8] sm:$0xff]
  %v6857 = vld [vmem:[%s1 + $0x2f0] sm:$0xff]
  %v6858 = vld [vmem:[%s1 + $0x2f8] sm:$0xff]
  %v6860 = vsel %vm158, %v6764, 0
  %v6863 = vsel %vm158, %v6766, 0
  %v6866 = vsel %vm158, %v6768, 0
  %v6869 = vsel %vm158, %v6770, 0
  %v6872 = vsel %vm158, %v6772, 0
  %v6875 = vsel %vm158, %v6774, 0
  %v6878 = vsel %vm158, %v6776, 0
  %v6881 = vsel %vm158, %v6778, 0
  %v6884 = vsel %vm158, %v6780, 0
  %v6887 = vsel %vm158, %v6782, 0
  %v6890 = vsel %vm158, %v6784, 0
  %v6893 = vsel %vm158, %v6786, 0
  %v6896 = vsel %vm158, %v6788, 0
  %v6899 = vsel %vm158, %v6790, 0
  %v6902 = vsel %vm158, %v6792, 0
  %v6905 = vsel %vm158, %v6794, 0
  %v6908 = vsel %vm158, %v6796, 0
  %v6911 = vsel %vm158, %v6798, 0
  %v6914 = vsel %vm158, %v6800, 0
  %v6917 = vsel %vm158, %v6802, 0
  %v6920 = vsel %vm158, %v6804, 0
  %v6923 = vsel %vm158, %v6806, 0
  %v6926 = vsel %vm158, %v6808, 0
  %v6929 = vsel %vm158, %v6810, 0
  %v6932 = vsel %vm158, %v6812, 0
  %v6935 = vsel %vm158, %v6814, 0
  %v6938 = vsel %vm158, %v6816, 0
  %v6941 = vsel %vm158, %v6818, 0
  %v6944 = vsel %vm158, %v6820, 0
  %v6947 = vsel %vm158, %v6822, 0
  %v6950 = vsel %vm158, %v6824, 0
  %v6953 = vsel %vm158, %v6826, 0
  %v6956 = vsel %vm158, %v6828, 0
  %v6959 = vsel %vm158, %v6830, 0
  %v6962 = vsel %vm158, %v6832, 0
  %v6965 = vsel %vm158, %v6834, 0
  %v6968 = vsel %vm158, %v6836, 0
  %v6971 = vsel %vm158, %v6838, 0
  %v6974 = vsel %vm158, %v6840, 0
  %v6977 = vsel %vm158, %v6842, 0
  %v6980 = vsel %vm158, %v6844, 0
  %v6983 = vsel %vm158, %v6846, 0
  %v6986 = vsel %vm158, %v6848, 0
  %v6989 = vsel %vm158, %v6850, 0
  %v6992 = vsel %vm158, %v6852, 0
  %v6995 = vsel %vm158, %v6854, 0
  %v6998 = vsel %vm158, %v6856, 0
  %v7001 = vsel %vm158, %v6858, 0
  %7003 = vmatpush.msra.mxu0 %v6754
  %7004 = vmatpush.msra.mxu0 %v6753
  %7005 = vmatpush.msra.mxu0 %v6752
  %7006 = vmatpush.msra.mxu0 %v6751
  %7007 = vmatpush.msra.mxu0 %v6750
  %7008 = vmatpush.msra.mxu0 %v6749
  %7009 = vmatpush.msra.mxu0 %v6748
  %7010 = vmatpush.msra.mxu0 %v6747
  %7011 = vmatpush.msra.mxu0 %v6746
  %7012 = vmatpush.msra.mxu0 %v6745
  %7013 = vmatpush.msra.mxu0 %v6744
  %7014 = vmatpush.msra.mxu0 %v6743
  %7015 = vmatpush.msra.mxu0 %v6742
  %7016 = vmatpush.msra.mxu0 %v6741
  %7017 = vmatpush.msra.mxu0 %v6740
  %7018 = vmatpush.msra.mxu0 %v6739
  %7019 = vmatmul.f32.gmra.mxu0 %v6763
  %v7020 = vpop.f32.mrf.mxu0
  %v7021 = vadd.f32 0.0, %v7020
  %7022 = vmatmul.f32.gmra.mxu0 %v6765
  %v7023 = vpop.f32.mrf.mxu0
  %v7024 = vadd.f32 0.0, %v7023
  %7025 = vmatmul.f32.gmra.mxu0 %v6767
  %v7026 = vpop.f32.mrf.mxu0
  %v7027 = vadd.f32 0.0, %v7026
  %7028 = vmatmul.f32.gmra.mxu0 %v6769
  %v7029 = vpop.f32.mrf.mxu0
  %v7030 = vadd.f32 0.0, %v7029
  %7031 = vmatmul.f32.gmra.mxu0 %v6771
  %v7032 = vpop.f32.mrf.mxu0
  %v7033 = vadd.f32 0.0, %v7032
  %7034 = vmatmul.f32.gmra.mxu0 %v6773
  %v7035 = vpop.f32.mrf.mxu0
  %v7036 = vadd.f32 0.0, %v7035
  %7037 = vmatmul.f32.gmra.mxu0 %v6775
  %v7038 = vpop.f32.mrf.mxu0
  %v7039 = vadd.f32 0.0, %v7038
  %7040 = vmatmul.f32.gmra.mxu0 %v6777
  %v7041 = vpop.f32.mrf.mxu0
  %v7042 = vadd.f32 0.0, %v7041
  %7043 = vmatmul.f32.gmra.mxu0 %v6779
  %v7044 = vpop.f32.mrf.mxu0
  %v7045 = vadd.f32 0.0, %v7044
  %7046 = vmatmul.f32.gmra.mxu0 %v6781
  %v7047 = vpop.f32.mrf.mxu0
  %v7048 = vadd.f32 0.0, %v7047
  %7049 = vmatmul.f32.gmra.mxu0 %v6783
  %v7050 = vpop.f32.mrf.mxu0
  %v7051 = vadd.f32 0.0, %v7050
  %7052 = vmatmul.f32.gmra.mxu0 %v6785
  %v7053 = vpop.f32.mrf.mxu0
  %v7054 = vadd.f32 0.0, %v7053
  %7055 = vmatmul.f32.gmra.mxu0 %v6787
  %v7056 = vpop.f32.mrf.mxu0
  %v7057 = vadd.f32 0.0, %v7056
  %7058 = vmatmul.f32.gmra.mxu0 %v6789
  %v7059 = vpop.f32.mrf.mxu0
  %v7060 = vadd.f32 0.0, %v7059
  %7061 = vmatmul.f32.gmra.mxu0 %v6791
  %v7062 = vpop.f32.mrf.mxu0
  %v7063 = vadd.f32 0.0, %v7062
  %7064 = vmatmul.f32.gmra.mxu0 %v6793
  %v7065 = vpop.f32.mrf.mxu0
  %v7066 = vadd.f32 0.0, %v7065
  %7067 = vmatmul.f32.gmra.mxu0 %v6795
  %v7068 = vpop.f32.mrf.mxu0
  %v7069 = vadd.f32 0.0, %v7068
  %7070 = vmatmul.f32.gmra.mxu0 %v6797
  %v7071 = vpop.f32.mrf.mxu0
  %v7072 = vadd.f32 0.0, %v7071
  %7073 = vmatmul.f32.gmra.mxu0 %v6799
  %v7074 = vpop.f32.mrf.mxu0
  %v7075 = vadd.f32 0.0, %v7074
  %7076 = vmatmul.f32.gmra.mxu0 %v6801
  %v7077 = vpop.f32.mrf.mxu0
  %v7078 = vadd.f32 0.0, %v7077
  %7079 = vmatmul.f32.gmra.mxu0 %v6803
  %v7080 = vpop.f32.mrf.mxu0
  %v7081 = vadd.f32 0.0, %v7080
  %7082 = vmatmul.f32.gmra.mxu0 %v6805
  %v7083 = vpop.f32.mrf.mxu0
  %v7084 = vadd.f32 0.0, %v7083
  %7085 = vmatmul.f32.gmra.mxu0 %v6807
  %v7086 = vpop.f32.mrf.mxu0
  %v7087 = vadd.f32 0.0, %v7086
  %7088 = vmatmul.f32.gmra.mxu0 %v6809
  %v7089 = vpop.f32.mrf.mxu0
  %v7090 = vadd.f32 0.0, %v7089
  %7091 = vmatmul.f32.gmra.mxu0 %v6811
  %v7092 = vpop.f32.mrf.mxu0
  %v7093 = vadd.f32 0.0, %v7092
  %7094 = vmatmul.f32.gmra.mxu0 %v6813
  %v7095 = vpop.f32.mrf.mxu0
  %v7096 = vadd.f32 0.0, %v7095
  %7097 = vmatmul.f32.gmra.mxu0 %v6815
  %v7098 = vpop.f32.mrf.mxu0
  %v7099 = vadd.f32 0.0, %v7098
  %7100 = vmatmul.f32.gmra.mxu0 %v6817
  %v7101 = vpop.f32.mrf.mxu0
  %v7102 = vadd.f32 0.0, %v7101
  %7103 = vmatmul.f32.gmra.mxu0 %v6819
  %v7104 = vpop.f32.mrf.mxu0
  %v7105 = vadd.f32 0.0, %v7104
  %7106 = vmatmul.f32.gmra.mxu0 %v6821
  %v7107 = vpop.f32.mrf.mxu0
  %v7108 = vadd.f32 0.0, %v7107
  %7109 = vmatmul.f32.gmra.mxu0 %v6823
  %v7110 = vpop.f32.mrf.mxu0
  %v7111 = vadd.f32 0.0, %v7110
  %7112 = vmatmul.f32.gmra.mxu0 %v6825
  %v7113 = vpop.f32.mrf.mxu0
  %v7114 = vadd.f32 0.0, %v7113
  %7115 = vmatmul.f32.gmra.mxu0 %v6827
  %v7116 = vpop.f32.mrf.mxu0
  %v7117 = vadd.f32 0.0, %v7116
  %7118 = vmatmul.f32.gmra.mxu0 %v6829
  %v7119 = vpop.f32.mrf.mxu0
  %v7120 = vadd.f32 0.0, %v7119
  %7121 = vmatmul.f32.gmra.mxu0 %v6831
  %v7122 = vpop.f32.mrf.mxu0
  %v7123 = vadd.f32 0.0, %v7122
  %7124 = vmatmul.f32.gmra.mxu0 %v6833
  %v7125 = vpop.f32.mrf.mxu0
  %v7126 = vadd.f32 0.0, %v7125
  %7127 = vmatmul.f32.gmra.mxu0 %v6835
  %v7128 = vpop.f32.mrf.mxu0
  %v7129 = vadd.f32 0.0, %v7128
  %7130 = vmatmul.f32.gmra.mxu0 %v6837
  %v7131 = vpop.f32.mrf.mxu0
  %v7132 = vadd.f32 0.0, %v7131
  %7133 = vmatmul.f32.gmra.mxu0 %v6839
  %v7134 = vpop.f32.mrf.mxu0
  %v7135 = vadd.f32 0.0, %v7134
  %7136 = vmatmul.f32.gmra.mxu0 %v6841
  %v7137 = vpop.f32.mrf.mxu0
  %v7138 = vadd.f32 0.0, %v7137
  %7139 = vmatmul.f32.gmra.mxu0 %v6843
  %v7140 = vpop.f32.mrf.mxu0
  %v7141 = vadd.f32 0.0, %v7140
  %7142 = vmatmul.f32.gmra.mxu0 %v6845
  %v7143 = vpop.f32.mrf.mxu0
  %v7144 = vadd.f32 0.0, %v7143
  %7145 = vmatmul.f32.gmra.mxu0 %v6847
  %v7146 = vpop.f32.mrf.mxu0
  %v7147 = vadd.f32 0.0, %v7146
  %7148 = vmatmul.f32.gmra.mxu0 %v6849
  %v7149 = vpop.f32.mrf.mxu0
  %v7150 = vadd.f32 0.0, %v7149
  %7151 = vmatmul.f32.gmra.mxu0 %v6851
  %v7152 = vpop.f32.mrf.mxu0
  %v7153 = vadd.f32 0.0, %v7152
  %7154 = vmatmul.f32.gmra.mxu0 %v6853
  %v7155 = vpop.f32.mrf.mxu0
  %v7156 = vadd.f32 0.0, %v7155
  %7157 = vmatmul.f32.gmra.mxu0 %v6855
  %v7158 = vpop.f32.mrf.mxu0
  %v7159 = vadd.f32 0.0, %v7158
  %7160 = vmatmul.f32.gmra.mxu0 %v6857
  %v7161 = vpop.f32.mrf.mxu0
  %v7162 = vadd.f32 0.0, %v7161
  %7163 = vdwg.mxu0
  %7164 = vmatpush.msra.mxu0 0.0
  %7165 = vmatpush.msra.mxu0 0.0
  %7166 = vmatpush.msra.mxu0 0.0
  %7167 = vmatpush.msra.mxu0 0.0
  %7168 = vmatpush.msra.mxu0 0.0
  %7169 = vmatpush.msra.mxu0 0.0
  %7170 = vmatpush.msra.mxu0 0.0
  %7171 = vmatpush.msra.mxu0 0.0
  %7172 = vmatpush.msra.mxu0 %v6762
  %7173 = vmatpush.msra.mxu0 %v6761
  %7174 = vmatpush.msra.mxu0 %v6760
  %7175 = vmatpush.msra.mxu0 %v6759
  %7176 = vmatpush.msra.mxu0 %v6758
  %7177 = vmatpush.msra.mxu0 %v6757
  %7178 = vmatpush.msra.mxu0 %v6756
  %7179 = vmatpush.msra.mxu0 %v6755
  %7180 = vmatmul.f32.gmra.mxu0 %v6860
  %v7181 = vpop.f32.mrf.mxu0
  %v7182 = vadd.f32 %v7021, %v7181
  %7183 = vmatmul.f32.gmra.mxu0 %v6863
  %v7184 = vpop.f32.mrf.mxu0
  %v7185 = vadd.f32 %v7024, %v7184
  %7186 = vmatmul.f32.gmra.mxu0 %v6866
  %v7187 = vpop.f32.mrf.mxu0
  %v7188 = vadd.f32 %v7027, %v7187
  %7189 = vmatmul.f32.gmra.mxu0 %v6869
  %v7190 = vpop.f32.mrf.mxu0
  %v7191 = vadd.f32 %v7030, %v7190
  %7192 = vmatmul.f32.gmra.mxu0 %v6872
  %v7193 = vpop.f32.mrf.mxu0
  %v7194 = vadd.f32 %v7033, %v7193
  %7195 = vmatmul.f32.gmra.mxu0 %v6875
  %v7196 = vpop.f32.mrf.mxu0
  %v7197 = vadd.f32 %v7036, %v7196
  %7198 = vmatmul.f32.gmra.mxu0 %v6878
  %v7199 = vpop.f32.mrf.mxu0
  %v7200 = vadd.f32 %v7039, %v7199
  %7201 = vmatmul.f32.gmra.mxu0 %v6881
  %v7202 = vpop.f32.mrf.mxu0
  %v7203 = vadd.f32 %v7042, %v7202
  %7204 = vmatmul.f32.gmra.mxu0 %v6884
  %v7205 = vpop.f32.mrf.mxu0
  %v7206 = vadd.f32 %v7045, %v7205
  %7207 = vmatmul.f32.gmra.mxu0 %v6887
  %v7208 = vpop.f32.mrf.mxu0
  %v7209 = vadd.f32 %v7048, %v7208
  %7210 = vmatmul.f32.gmra.mxu0 %v6890
  %v7211 = vpop.f32.mrf.mxu0
  %v7212 = vadd.f32 %v7051, %v7211
  %7213 = vmatmul.f32.gmra.mxu0 %v6893
  %v7214 = vpop.f32.mrf.mxu0
  %v7215 = vadd.f32 %v7054, %v7214
  %7216 = vmatmul.f32.gmra.mxu0 %v6896
  %v7217 = vpop.f32.mrf.mxu0
  %v7218 = vadd.f32 %v7057, %v7217
  %7219 = vmatmul.f32.gmra.mxu0 %v6899
  %v7220 = vpop.f32.mrf.mxu0
  %v7221 = vadd.f32 %v7060, %v7220
  %7222 = vmatmul.f32.gmra.mxu0 %v6902
  %v7223 = vpop.f32.mrf.mxu0
  %v7224 = vadd.f32 %v7063, %v7223
  %7225 = vmatmul.f32.gmra.mxu0 %v6905
  %v7226 = vpop.f32.mrf.mxu0
  %v7227 = vadd.f32 %v7066, %v7226
  %7228 = vmatmul.f32.gmra.mxu0 %v6908
  %v7229 = vpop.f32.mrf.mxu0
  %v7230 = vadd.f32 %v7069, %v7229
  %7231 = vmatmul.f32.gmra.mxu0 %v6911
  %v7232 = vpop.f32.mrf.mxu0
  %v7233 = vadd.f32 %v7072, %v7232
  %7234 = vmatmul.f32.gmra.mxu0 %v6914
  %v7235 = vpop.f32.mrf.mxu0
  %v7236 = vadd.f32 %v7075, %v7235
  %7237 = vmatmul.f32.gmra.mxu0 %v6917
  %v7238 = vpop.f32.mrf.mxu0
  %v7239 = vadd.f32 %v7078, %v7238
  %7240 = vmatmul.f32.gmra.mxu0 %v6920
  %v7241 = vpop.f32.mrf.mxu0
  %v7242 = vadd.f32 %v7081, %v7241
  %7243 = vmatmul.f32.gmra.mxu0 %v6923
  %v7244 = vpop.f32.mrf.mxu0
  %v7245 = vadd.f32 %v7084, %v7244
  %7246 = vmatmul.f32.gmra.mxu0 %v6926
  %v7247 = vpop.f32.mrf.mxu0
  %v7248 = vadd.f32 %v7087, %v7247
  %7249 = vmatmul.f32.gmra.mxu0 %v6929
  %v7250 = vpop.f32.mrf.mxu0
  %v7251 = vadd.f32 %v7090, %v7250
  %7252 = vmatmul.f32.gmra.mxu0 %v6932
  %v7253 = vpop.f32.mrf.mxu0
  %v7254 = vadd.f32 %v7093, %v7253
  %7255 = vmatmul.f32.gmra.mxu0 %v6935
  %v7256 = vpop.f32.mrf.mxu0
  %v7257 = vadd.f32 %v7096, %v7256
  %7258 = vmatmul.f32.gmra.mxu0 %v6938
  %v7259 = vpop.f32.mrf.mxu0
  %v7260 = vadd.f32 %v7099, %v7259
  %7261 = vmatmul.f32.gmra.mxu0 %v6941
  %v7262 = vpop.f32.mrf.mxu0
  %v7263 = vadd.f32 %v7102, %v7262
  %7264 = vmatmul.f32.gmra.mxu0 %v6944
  %v7265 = vpop.f32.mrf.mxu0
  %v7266 = vadd.f32 %v7105, %v7265
  %7267 = vmatmul.f32.gmra.mxu0 %v6947
  %v7268 = vpop.f32.mrf.mxu0
  %v7269 = vadd.f32 %v7108, %v7268
  %7270 = vmatmul.f32.gmra.mxu0 %v6950
  %v7271 = vpop.f32.mrf.mxu0
  %v7272 = vadd.f32 %v7111, %v7271
  %7273 = vmatmul.f32.gmra.mxu0 %v6953
  %v7274 = vpop.f32.mrf.mxu0
  %v7275 = vadd.f32 %v7114, %v7274
  %7276 = vmatmul.f32.gmra.mxu0 %v6956
  %v7277 = vpop.f32.mrf.mxu0
  %v7278 = vadd.f32 %v7117, %v7277
  %7279 = vmatmul.f32.gmra.mxu0 %v6959
  %v7280 = vpop.f32.mrf.mxu0
  %v7281 = vadd.f32 %v7120, %v7280
  %7282 = vmatmul.f32.gmra.mxu0 %v6962
  %v7283 = vpop.f32.mrf.mxu0
  %v7284 = vadd.f32 %v7123, %v7283
  %7285 = vmatmul.f32.gmra.mxu0 %v6965
  %v7286 = vpop.f32.mrf.mxu0
  %v7287 = vadd.f32 %v7126, %v7286
  %7288 = vmatmul.f32.gmra.mxu0 %v6968
  %v7289 = vpop.f32.mrf.mxu0
  %v7290 = vadd.f32 %v7129, %v7289
  %7291 = vmatmul.f32.gmra.mxu0 %v6971
  %v7292 = vpop.f32.mrf.mxu0
  %v7293 = vadd.f32 %v7132, %v7292
  %7294 = vmatmul.f32.gmra.mxu0 %v6974
  %v7295 = vpop.f32.mrf.mxu0
  %v7296 = vadd.f32 %v7135, %v7295
  %7297 = vmatmul.f32.gmra.mxu0 %v6977
  %v7298 = vpop.f32.mrf.mxu0
  %v7299 = vadd.f32 %v7138, %v7298
  %7300 = vmatmul.f32.gmra.mxu0 %v6980
  %v7301 = vpop.f32.mrf.mxu0
  %v7302 = vadd.f32 %v7141, %v7301
  %7303 = vmatmul.f32.gmra.mxu0 %v6983
  %v7304 = vpop.f32.mrf.mxu0
  %v7305 = vadd.f32 %v7144, %v7304
  %7306 = vmatmul.f32.gmra.mxu0 %v6986
  %v7307 = vpop.f32.mrf.mxu0
  %v7308 = vadd.f32 %v7147, %v7307
  %7309 = vmatmul.f32.gmra.mxu0 %v6989
  %v7310 = vpop.f32.mrf.mxu0
  %v7311 = vadd.f32 %v7150, %v7310
  %7312 = vmatmul.f32.gmra.mxu0 %v6992
  %v7313 = vpop.f32.mrf.mxu0
  %v7314 = vadd.f32 %v7153, %v7313
  %7315 = vmatmul.f32.gmra.mxu0 %v6995
  %v7316 = vpop.f32.mrf.mxu0
  %v7317 = vadd.f32 %v7156, %v7316
  %7318 = vmatmul.f32.gmra.mxu0 %v6998
  %v7319 = vpop.f32.mrf.mxu0
  %v7320 = vadd.f32 %v7159, %v7319
  %7321 = vmatmul.f32.gmra.mxu0 %v7001
  %v7322 = vpop.f32.mrf.mxu0
  %v7323 = vadd.f32 %v7162, %v7322
  %7324 = vdwg.mxu0
  %v7325 = vmax.f32 %v7182, %v7254
  %v7326 = vmax.f32 %v7185, %v7257
  %v7327 = vmax.f32 %v7188, %v7260
  %v7328 = vmax.f32 %v7191, %v7263
  %v7329 = vmax.f32 %v7194, %v7266
  %v7330 = vmax.f32 %v7197, %v7269
  %v7331 = vmax.f32 %v7200, %v7272
  %v7332 = vmax.f32 %v7203, %v7275
  %v7333 = vmax.f32 %v7206, %v7278
  %v7334 = vmax.f32 %v7209, %v7281
  %v7335 = vmax.f32 %v7212, %v7284
  %v7336 = vmax.f32 %v7215, %v7287
  %v7337 = vmax.f32 %v7218, %v7290
  %v7338 = vmax.f32 %v7221, %v7293
  %v7339 = vmax.f32 %v7224, %v7296
  %v7340 = vmax.f32 %v7227, %v7299
  %v7341 = vmax.f32 %v7230, %v7302
  %v7342 = vmax.f32 %v7233, %v7305
  %v7343 = vmax.f32 %v7236, %v7308
  %v7344 = vmax.f32 %v7239, %v7311
  %v7345 = vmax.f32 %v7242, %v7314
  %v7346 = vmax.f32 %v7245, %v7317
  %v7347 = vmax.f32 %v7248, %v7320
  %v7348 = vmax.f32 %v7251, %v7323
  %v7349 = vmax.f32 %v7325, %v7337
  %v7350 = vmax.f32 %v7326, %v7338
  %v7351 = vmax.f32 %v7327, %v7339
  %v7352 = vmax.f32 %v7328, %v7340
  %v7353 = vmax.f32 %v7329, %v7341
  %v7354 = vmax.f32 %v7330, %v7342
  %v7355 = vmax.f32 %v7331, %v7343
  %v7356 = vmax.f32 %v7332, %v7344
  %v7357 = vmax.f32 %v7333, %v7345
  %v7358 = vmax.f32 %v7334, %v7346
  %v7359 = vmax.f32 %v7335, %v7347
  %v7360 = vmax.f32 %v7336, %v7348
  %v7361 = vld [vmem:[%s2] sm:$0xff]
  %v7362 = vld [vmem:[%s2 + $0x8] sm:$0xff]
  %v7363 = vld [vmem:[%s2 + $0x10] sm:$0xff]
  %v7364 = vld [vmem:[%s2 + $0x18] sm:$0xff]
  %v7365 = vld [vmem:[%s2 + $0x20] sm:$0xff]
  %v7366 = vld [vmem:[%s2 + $0x28] sm:$0xff]
  %v7367 = vld [vmem:[%s2 + $0x30] sm:$0xff]
  %v7368 = vld [vmem:[%s2 + $0x38] sm:$0xff]
  %v7369 = vld [vmem:[%s2 + $0x40] sm:$0xff]
  %v7370 = vld [vmem:[%s2 + $0x48] sm:$0xff]
  %v7371 = vld [vmem:[%s2 + $0x50] sm:$0xff]
  %v7372 = vld [vmem:[%s2 + $0x58] sm:$0xff]
  %v7373 = vadd.f32 %v7349, %v7361
  %v7374 = vadd.f32 %v7350, %v7362
  %v7375 = vadd.f32 %v7351, %v7363
  %v7376 = vadd.f32 %v7352, %v7364
  %v7377 = vadd.f32 %v7353, %v7365
  %v7378 = vadd.f32 %v7354, %v7366
  %v7379 = vadd.f32 %v7355, %v7367
  %v7380 = vadd.f32 %v7356, %v7368
  %v7381 = vadd.f32 %v7357, %v7369
  %v7382 = vadd.f32 %v7358, %v7370
  %v7383 = vadd.f32 %v7359, %v7371
  %v7384 = vadd.f32 %v7360, %v7372
  %v7385 = vmax.f32 %v7373, 0.0
  %v7386 = vmax.f32 %v7374, 0.0
  %v7387 = vmax.f32 %v7375, 0.0
  %v7388 = vmax.f32 %v7376, 0.0
  %v7389 = vmax.f32 %v7377, 0.0
  %v7390 = vmax.f32 %v7378, 0.0
  %v7391 = vmax.f32 %v7379, 0.0
  %v7392 = vmax.f32 %v7380, 0.0
  %v7393 = vmax.f32 %v7381, 0.0
  %v7394 = vmax.f32 %v7382, 0.0
  %v7395 = vmax.f32 %v7383, 0.0
  %v7396 = vmax.f32 %v7384, 0.0
  %7397 = vst [vmem:[#allocation2 + $0x3c0] sm:$0xff] %v7385
  %7398 = vst [vmem:[#allocation2 + $0x3c8] sm:$0xff] %v7386
  %7399 = vst [vmem:[#allocation2 + $0x3d0] sm:$0xff] %v7387
  %7400 = vst [vmem:[#allocation2 + $0x3d8] sm:$0xff] %v7388
  %7401 = vst [vmem:[#allocation2 + $0x3e0] sm:$0xff] %v7389
  %7402 = vst [vmem:[#allocation2 + $0x3e8] sm:$0xff] %v7390
  %7403 = vst [vmem:[#allocation2 + $0x3f0] sm:$0xff] %v7391
  %7404 = vst [vmem:[#allocation2 + $0x3f8] sm:$0xff] %v7392
  %7405 = vst [vmem:[#allocation2 + $0x400] sm:$0xff] %v7393
  %7406 = vst [vmem:[#allocation2 + $0x408] sm:$0xff] %v7394
  %7407 = vst [vmem:[#allocation2 + $0x410] sm:$0xff] %v7395
  %7408 = vst [vmem:[#allocation2 + $0x418] sm:$0xff] %v7396
  %v7409 = vld [vmem:[%s0 + $0x2c0] sm:$0xff]
  %v7410 = vld [vmem:[%s0 + $0x2c8] sm:$0xff]
  %v7411 = vld [vmem:[%s0 + $0x2d0] sm:$0xff]
  %v7412 = vld [vmem:[%s0 + $0x2d8] sm:$0xff]
  %v7413 = vld [vmem:[%s0 + $0x2e0] sm:$0xff]
  %v7414 = vld [vmem:[%s0 + $0x2e8] sm:$0xff]
  %v7415 = vld [vmem:[%s0 + $0x2f0] sm:$0xff]
  %v7416 = vld [vmem:[%s0 + $0x2f8] sm:$0xff]
  %v7417 = vld [vmem:[%s0 + $0x300] sm:$0xff]
  %v7418 = vld [vmem:[%s0 + $0x308] sm:$0xff]
  %v7419 = vld [vmem:[%s0 + $0x310] sm:$0xff]
  %v7420 = vld [vmem:[%s0 + $0x318] sm:$0xff]
  %v7421 = vld [vmem:[%s0 + $0x320] sm:$0xff]
  %v7422 = vld [vmem:[%s0 + $0x328] sm:$0xff]
  %v7423 = vld [vmem:[%s0 + $0x330] sm:$0xff]
  %v7424 = vld [vmem:[%s0 + $0x338] sm:$0xff]
  %v7425 = vld [vmem:[%s0 + $0x340] sm:$0xff]
  %v7426 = vld [vmem:[%s0 + $0x348] sm:$0xff]
  %v7427 = vld [vmem:[%s0 + $0x350] sm:$0xff]
  %v7428 = vld [vmem:[%s0 + $0x358] sm:$0xff]
  %v7429 = vld [vmem:[%s0 + $0x360] sm:$0xff]
  %v7430 = vld [vmem:[%s0 + $0x368] sm:$0xff]
  %v7431 = vld [vmem:[%s0 + $0x370] sm:$0xff]
  %v7432 = vld [vmem:[%s0 + $0x378] sm:$0xff]
  %v7433 = vld [vmem:[%s1] sm:$0xff]
  %v7434 = vld [vmem:[%s1 + $0x8] sm:$0xff]
  %v7435 = vld [vmem:[%s1 + $0x10] sm:$0xff]
  %v7436 = vld [vmem:[%s1 + $0x18] sm:$0xff]
  %v7437 = vld [vmem:[%s1 + $0x20] sm:$0xff]
  %v7438 = vld [vmem:[%s1 + $0x28] sm:$0xff]
  %v7439 = vld [vmem:[%s1 + $0x30] sm:$0xff]
  %v7440 = vld [vmem:[%s1 + $0x38] sm:$0xff]
  %v7441 = vld [vmem:[%s1 + $0x40] sm:$0xff]
  %v7442 = vld [vmem:[%s1 + $0x48] sm:$0xff]
  %v7443 = vld [vmem:[%s1 + $0x50] sm:$0xff]
  %v7444 = vld [vmem:[%s1 + $0x58] sm:$0xff]
  %v7445 = vld [vmem:[%s1 + $0x60] sm:$0xff]
  %v7446 = vld [vmem:[%s1 + $0x68] sm:$0xff]
  %v7447 = vld [vmem:[%s1 + $0x70] sm:$0xff]
  %v7448 = vld [vmem:[%s1 + $0x78] sm:$0xff]
  %v7449 = vld [vmem:[%s1 + $0x80] sm:$0xff]
  %v7450 = vld [vmem:[%s1 + $0x88] sm:$0xff]
  %v7451 = vld [vmem:[%s1 + $0x90] sm:$0xff]
  %v7452 = vld [vmem:[%s1 + $0x98] sm:$0xff]
  %v7453 = vld [vmem:[%s1 + $0xa0] sm:$0xff]
  %v7454 = vld [vmem:[%s1 + $0xa8] sm:$0xff]
  %v7455 = vld [vmem:[%s1 + $0xb0] sm:$0xff]
  %v7456 = vld [vmem:[%s1 + $0xb8] sm:$0xff]
  %v7457 = vld [vmem:[%s1 + $0xc0] sm:$0xff]
  %v7458 = vld [vmem:[%s1 + $0xc8] sm:$0xff]
  %v7459 = vld [vmem:[%s1 + $0xd0] sm:$0xff]
  %v7460 = vld [vmem:[%s1 + $0xd8] sm:$0xff]
  %v7461 = vld [vmem:[%s1 + $0xe0] sm:$0xff]
  %v7462 = vld [vmem:[%s1 + $0xe8] sm:$0xff]
  %v7463 = vld [vmem:[%s1 + $0xf0] sm:$0xff]
  %v7464 = vld [vmem:[%s1 + $0xf8] sm:$0xff]
  %v7465 = vld [vmem:[%s1 + $0x100] sm:$0xff]
  %v7466 = vld [vmem:[%s1 + $0x108] sm:$0xff]
  %v7467 = vld [vmem:[%s1 + $0x110] sm:$0xff]
  %v7468 = vld [vmem:[%s1 + $0x118] sm:$0xff]
  %v7469 = vld [vmem:[%s1 + $0x120] sm:$0xff]
  %v7470 = vld [vmem:[%s1 + $0x128] sm:$0xff]
  %v7471 = vld [vmem:[%s1 + $0x130] sm:$0xff]
  %v7472 = vld [vmem:[%s1 + $0x138] sm:$0xff]
  %v7473 = vld [vmem:[%s1 + $0x140] sm:$0xff]
  %v7474 = vld [vmem:[%s1 + $0x148] sm:$0xff]
  %v7475 = vld [vmem:[%s1 + $0x150] sm:$0xff]
  %v7476 = vld [vmem:[%s1 + $0x158] sm:$0xff]
  %v7477 = vld [vmem:[%s1 + $0x160] sm:$0xff]
  %v7478 = vld [vmem:[%s1 + $0x168] sm:$0xff]
  %v7479 = vld [vmem:[%s1 + $0x170] sm:$0xff]
  %v7480 = vld [vmem:[%s1 + $0x178] sm:$0xff]
  %v7481 = vld [vmem:[%s1 + $0x180] sm:$0xff]
  %v7482 = vld [vmem:[%s1 + $0x188] sm:$0xff]
  %v7483 = vld [vmem:[%s1 + $0x190] sm:$0xff]
  %v7484 = vld [vmem:[%s1 + $0x198] sm:$0xff]
  %v7485 = vld [vmem:[%s1 + $0x1a0] sm:$0xff]
  %v7486 = vld [vmem:[%s1 + $0x1a8] sm:$0xff]
  %v7487 = vld [vmem:[%s1 + $0x1b0] sm:$0xff]
  %v7488 = vld [vmem:[%s1 + $0x1b8] sm:$0xff]
  %v7489 = vld [vmem:[%s1 + $0x1c0] sm:$0xff]
  %v7490 = vld [vmem:[%s1 + $0x1c8] sm:$0xff]
  %v7491 = vld [vmem:[%s1 + $0x1d0] sm:$0xff]
  %v7492 = vld [vmem:[%s1 + $0x1d8] sm:$0xff]
  %v7493 = vld [vmem:[%s1 + $0x1e0] sm:$0xff]
  %v7494 = vld [vmem:[%s1 + $0x1e8] sm:$0xff]
  %v7495 = vld [vmem:[%s1 + $0x1f0] sm:$0xff]
  %v7496 = vld [vmem:[%s1 + $0x1f8] sm:$0xff]
  %v7497 = vld [vmem:[%s1 + $0x200] sm:$0xff]
  %v7498 = vld [vmem:[%s1 + $0x208] sm:$0xff]
  %v7499 = vld [vmem:[%s1 + $0x210] sm:$0xff]
  %v7500 = vld [vmem:[%s1 + $0x218] sm:$0xff]
  %v7501 = vld [vmem:[%s1 + $0x220] sm:$0xff]
  %v7502 = vld [vmem:[%s1 + $0x228] sm:$0xff]
  %v7503 = vld [vmem:[%s1 + $0x230] sm:$0xff]
  %v7504 = vld [vmem:[%s1 + $0x238] sm:$0xff]
  %v7505 = vld [vmem:[%s1 + $0x240] sm:$0xff]
  %v7506 = vld [vmem:[%s1 + $0x248] sm:$0xff]
  %v7507 = vld [vmem:[%s1 + $0x250] sm:$0xff]
  %v7508 = vld [vmem:[%s1 + $0x258] sm:$0xff]
  %v7509 = vld [vmem:[%s1 + $0x260] sm:$0xff]
  %v7510 = vld [vmem:[%s1 + $0x268] sm:$0xff]
  %v7511 = vld [vmem:[%s1 + $0x270] sm:$0xff]
  %v7512 = vld [vmem:[%s1 + $0x278] sm:$0xff]
  %v7513 = vld [vmem:[%s1 + $0x280] sm:$0xff]
  %v7514 = vld [vmem:[%s1 + $0x288] sm:$0xff]
  %v7515 = vld [vmem:[%s1 + $0x290] sm:$0xff]
  %v7516 = vld [vmem:[%s1 + $0x298] sm:$0xff]
  %v7517 = vld [vmem:[%s1 + $0x2a0] sm:$0xff]
  %v7518 = vld [vmem:[%s1 + $0x2a8] sm:$0xff]
  %v7519 = vld [vmem:[%s1 + $0x2b0] sm:$0xff]
  %v7520 = vld [vmem:[%s1 + $0x2b8] sm:$0xff]
  %v7521 = vld [vmem:[%s1 + $0x2c0] sm:$0xff]
  %v7522 = vld [vmem:[%s1 + $0x2c8] sm:$0xff]
  %v7523 = vld [vmem:[%s1 + $0x2d0] sm:$0xff]
  %v7524 = vld [vmem:[%s1 + $0x2d8] sm:$0xff]
  %v7525 = vld [vmem:[%s1 + $0x2e0] sm:$0xff]
  %v7526 = vld [vmem:[%s1 + $0x2e8] sm:$0xff]
  %v7527 = vld [vmem:[%s1 + $0x2f0] sm:$0xff]
  %v7528 = vld [vmem:[%s1 + $0x2f8] sm:$0xff]
  %v7530 = vsel %vm158, %v7434, 0
  %v7533 = vsel %vm158, %v7436, 0
  %v7536 = vsel %vm158, %v7438, 0
  %v7539 = vsel %vm158, %v7440, 0
  %v7542 = vsel %vm158, %v7442, 0
  %v7545 = vsel %vm158, %v7444, 0
  %v7548 = vsel %vm158, %v7446, 0
  %v7551 = vsel %vm158, %v7448, 0
  %v7554 = vsel %vm158, %v7450, 0
  %v7557 = vsel %vm158, %v7452, 0
  %v7560 = vsel %vm158, %v7454, 0
  %v7563 = vsel %vm158, %v7456, 0
  %v7566 = vsel %vm158, %v7458, 0
  %v7569 = vsel %vm158, %v7460, 0
  %v7572 = vsel %vm158, %v7462, 0
  %v7575 = vsel %vm158, %v7464, 0
  %v7578 = vsel %vm158, %v7466, 0
  %v7581 = vsel %vm158, %v7468, 0
  %v7584 = vsel %vm158, %v7470, 0
  %v7587 = vsel %vm158, %v7472, 0
  %v7590 = vsel %vm158, %v7474, 0
  %v7593 = vsel %vm158, %v7476, 0
  %v7596 = vsel %vm158, %v7478, 0
  %v7599 = vsel %vm158, %v7480, 0
  %v7602 = vsel %vm158, %v7482, 0
  %v7605 = vsel %vm158, %v7484, 0
  %v7608 = vsel %vm158, %v7486, 0
  %v7611 = vsel %vm158, %v7488, 0
  %v7614 = vsel %vm158, %v7490, 0
  %v7617 = vsel %vm158, %v7492, 0
  %v7620 = vsel %vm158, %v7494, 0
  %v7623 = vsel %vm158, %v7496, 0
  %v7626 = vsel %vm158, %v7498, 0
  %v7629 = vsel %vm158, %v7500, 0
  %v7632 = vsel %vm158, %v7502, 0
  %v7635 = vsel %vm158, %v7504, 0
  %v7638 = vsel %vm158, %v7506, 0
  %v7641 = vsel %vm158, %v7508, 0
  %v7644 = vsel %vm158, %v7510, 0
  %v7647 = vsel %vm158, %v7512, 0
  %v7650 = vsel %vm158, %v7514, 0
  %v7653 = vsel %vm158, %v7516, 0
  %v7656 = vsel %vm158, %v7518, 0
  %v7659 = vsel %vm158, %v7520, 0
  %v7662 = vsel %vm158, %v7522, 0
  %v7665 = vsel %vm158, %v7524, 0
  %v7668 = vsel %vm158, %v7526, 0
  %v7671 = vsel %vm158, %v7528, 0
  %7673 = vmatpush.msra.mxu0 %v7424
  %7674 = vmatpush.msra.mxu0 %v7423
  %7675 = vmatpush.msra.mxu0 %v7422
  %7676 = vmatpush.msra.mxu0 %v7421
  %7677 = vmatpush.msra.mxu0 %v7420
  %7678 = vmatpush.msra.mxu0 %v7419
  %7679 = vmatpush.msra.mxu0 %v7418
  %7680 = vmatpush.msra.mxu0 %v7417
  %7681 = vmatpush.msra.mxu0 %v7416
  %7682 = vmatpush.msra.mxu0 %v7415
  %7683 = vmatpush.msra.mxu0 %v7414
  %7684 = vmatpush.msra.mxu0 %v7413
  %7685 = vmatpush.msra.mxu0 %v7412
  %7686 = vmatpush.msra.mxu0 %v7411
  %7687 = vmatpush.msra.mxu0 %v7410
  %7688 = vmatpush.msra.mxu0 %v7409
  %7689 = vmatmul.f32.gmra.mxu0 %v7433
  %v7690 = vpop.f32.mrf.mxu0
  %v7691 = vadd.f32 0.0, %v7690
  %7692 = vmatmul.f32.gmra.mxu0 %v7435
  %v7693 = vpop.f32.mrf.mxu0
  %v7694 = vadd.f32 0.0, %v7693
  %7695 = vmatmul.f32.gmra.mxu0 %v7437
  %v7696 = vpop.f32.mrf.mxu0
  %v7697 = vadd.f32 0.0, %v7696
  %7698 = vmatmul.f32.gmra.mxu0 %v7439
  %v7699 = vpop.f32.mrf.mxu0
  %v7700 = vadd.f32 0.0, %v7699
  %7701 = vmatmul.f32.gmra.mxu0 %v7441
  %v7702 = vpop.f32.mrf.mxu0
  %v7703 = vadd.f32 0.0, %v7702
  %7704 = vmatmul.f32.gmra.mxu0 %v7443
  %v7705 = vpop.f32.mrf.mxu0
  %v7706 = vadd.f32 0.0, %v7705
  %7707 = vmatmul.f32.gmra.mxu0 %v7445
  %v7708 = vpop.f32.mrf.mxu0
  %v7709 = vadd.f32 0.0, %v7708
  %7710 = vmatmul.f32.gmra.mxu0 %v7447
  %v7711 = vpop.f32.mrf.mxu0
  %v7712 = vadd.f32 0.0, %v7711
  %7713 = vmatmul.f32.gmra.mxu0 %v7449
  %v7714 = vpop.f32.mrf.mxu0
  %v7715 = vadd.f32 0.0, %v7714
  %7716 = vmatmul.f32.gmra.mxu0 %v7451
  %v7717 = vpop.f32.mrf.mxu0
  %v7718 = vadd.f32 0.0, %v7717
  %7719 = vmatmul.f32.gmra.mxu0 %v7453
  %v7720 = vpop.f32.mrf.mxu0
  %v7721 = vadd.f32 0.0, %v7720
  %7722 = vmatmul.f32.gmra.mxu0 %v7455
  %v7723 = vpop.f32.mrf.mxu0
  %v7724 = vadd.f32 0.0, %v7723
  %7725 = vmatmul.f32.gmra.mxu0 %v7457
  %v7726 = vpop.f32.mrf.mxu0
  %v7727 = vadd.f32 0.0, %v7726
  %7728 = vmatmul.f32.gmra.mxu0 %v7459
  %v7729 = vpop.f32.mrf.mxu0
  %v7730 = vadd.f32 0.0, %v7729
  %7731 = vmatmul.f32.gmra.mxu0 %v7461
  %v7732 = vpop.f32.mrf.mxu0
  %v7733 = vadd.f32 0.0, %v7732
  %7734 = vmatmul.f32.gmra.mxu0 %v7463
  %v7735 = vpop.f32.mrf.mxu0
  %v7736 = vadd.f32 0.0, %v7735
  %7737 = vmatmul.f32.gmra.mxu0 %v7465
  %v7738 = vpop.f32.mrf.mxu0
  %v7739 = vadd.f32 0.0, %v7738
  %7740 = vmatmul.f32.gmra.mxu0 %v7467
  %v7741 = vpop.f32.mrf.mxu0
  %v7742 = vadd.f32 0.0, %v7741
  %7743 = vmatmul.f32.gmra.mxu0 %v7469
  %v7744 = vpop.f32.mrf.mxu0
  %v7745 = vadd.f32 0.0, %v7744
  %7746 = vmatmul.f32.gmra.mxu0 %v7471
  %v7747 = vpop.f32.mrf.mxu0
  %v7748 = vadd.f32 0.0, %v7747
  %7749 = vmatmul.f32.gmra.mxu0 %v7473
  %v7750 = vpop.f32.mrf.mxu0
  %v7751 = vadd.f32 0.0, %v7750
  %7752 = vmatmul.f32.gmra.mxu0 %v7475
  %v7753 = vpop.f32.mrf.mxu0
  %v7754 = vadd.f32 0.0, %v7753
  %7755 = vmatmul.f32.gmra.mxu0 %v7477
  %v7756 = vpop.f32.mrf.mxu0
  %v7757 = vadd.f32 0.0, %v7756
  %7758 = vmatmul.f32.gmra.mxu0 %v7479
  %v7759 = vpop.f32.mrf.mxu0
  %v7760 = vadd.f32 0.0, %v7759
  %7761 = vmatmul.f32.gmra.mxu0 %v7481
  %v7762 = vpop.f32.mrf.mxu0
  %v7763 = vadd.f32 0.0, %v7762
  %7764 = vmatmul.f32.gmra.mxu0 %v7483
  %v7765 = vpop.f32.mrf.mxu0
  %v7766 = vadd.f32 0.0, %v7765
  %7767 = vmatmul.f32.gmra.mxu0 %v7485
  %v7768 = vpop.f32.mrf.mxu0
  %v7769 = vadd.f32 0.0, %v7768
  %7770 = vmatmul.f32.gmra.mxu0 %v7487
  %v7771 = vpop.f32.mrf.mxu0
  %v7772 = vadd.f32 0.0, %v7771
  %7773 = vmatmul.f32.gmra.mxu0 %v7489
  %v7774 = vpop.f32.mrf.mxu0
  %v7775 = vadd.f32 0.0, %v7774
  %7776 = vmatmul.f32.gmra.mxu0 %v7491
  %v7777 = vpop.f32.mrf.mxu0
  %v7778 = vadd.f32 0.0, %v7777
  %7779 = vmatmul.f32.gmra.mxu0 %v7493
  %v7780 = vpop.f32.mrf.mxu0
  %v7781 = vadd.f32 0.0, %v7780
  %7782 = vmatmul.f32.gmra.mxu0 %v7495
  %v7783 = vpop.f32.mrf.mxu0
  %v7784 = vadd.f32 0.0, %v7783
  %7785 = vmatmul.f32.gmra.mxu0 %v7497
  %v7786 = vpop.f32.mrf.mxu0
  %v7787 = vadd.f32 0.0, %v7786
  %7788 = vmatmul.f32.gmra.mxu0 %v7499
  %v7789 = vpop.f32.mrf.mxu0
  %v7790 = vadd.f32 0.0, %v7789
  %7791 = vmatmul.f32.gmra.mxu0 %v7501
  %v7792 = vpop.f32.mrf.mxu0
  %v7793 = vadd.f32 0.0, %v7792
  %7794 = vmatmul.f32.gmra.mxu0 %v7503
  %v7795 = vpop.f32.mrf.mxu0
  %v7796 = vadd.f32 0.0, %v7795
  %7797 = vmatmul.f32.gmra.mxu0 %v7505
  %v7798 = vpop.f32.mrf.mxu0
  %v7799 = vadd.f32 0.0, %v7798
  %7800 = vmatmul.f32.gmra.mxu0 %v7507
  %v7801 = vpop.f32.mrf.mxu0
  %v7802 = vadd.f32 0.0, %v7801
  %7803 = vmatmul.f32.gmra.mxu0 %v7509
  %v7804 = vpop.f32.mrf.mxu0
  %v7805 = vadd.f32 0.0, %v7804
  %7806 = vmatmul.f32.gmra.mxu0 %v7511
  %v7807 = vpop.f32.mrf.mxu0
  %v7808 = vadd.f32 0.0, %v7807
  %7809 = vmatmul.f32.gmra.mxu0 %v7513
  %v7810 = vpop.f32.mrf.mxu0
  %v7811 = vadd.f32 0.0, %v7810
  %7812 = vmatmul.f32.gmra.mxu0 %v7515
  %v7813 = vpop.f32.mrf.mxu0
  %v7814 = vadd.f32 0.0, %v7813
  %7815 = vmatmul.f32.gmra.mxu0 %v7517
  %v7816 = vpop.f32.mrf.mxu0
  %v7817 = vadd.f32 0.0, %v7816
  %7818 = vmatmul.f32.gmra.mxu0 %v7519
  %v7819 = vpop.f32.mrf.mxu0
  %v7820 = vadd.f32 0.0, %v7819
  %7821 = vmatmul.f32.gmra.mxu0 %v7521
  %v7822 = vpop.f32.mrf.mxu0
  %v7823 = vadd.f32 0.0, %v7822
  %7824 = vmatmul.f32.gmra.mxu0 %v7523
  %v7825 = vpop.f32.mrf.mxu0
  %v7826 = vadd.f32 0.0, %v7825
  %7827 = vmatmul.f32.gmra.mxu0 %v7525
  %v7828 = vpop.f32.mrf.mxu0
  %v7829 = vadd.f32 0.0, %v7828
  %7830 = vmatmul.f32.gmra.mxu0 %v7527
  %v7831 = vpop.f32.mrf.mxu0
  %v7832 = vadd.f32 0.0, %v7831
  %7833 = vdwg.mxu0
  %7834 = vmatpush.msra.mxu0 0.0
  %7835 = vmatpush.msra.mxu0 0.0
  %7836 = vmatpush.msra.mxu0 0.0
  %7837 = vmatpush.msra.mxu0 0.0
  %7838 = vmatpush.msra.mxu0 0.0
  %7839 = vmatpush.msra.mxu0 0.0
  %7840 = vmatpush.msra.mxu0 0.0
  %7841 = vmatpush.msra.mxu0 0.0
  %7842 = vmatpush.msra.mxu0 %v7432
  %7843 = vmatpush.msra.mxu0 %v7431
  %7844 = vmatpush.msra.mxu0 %v7430
  %7845 = vmatpush.msra.mxu0 %v7429
  %7846 = vmatpush.msra.mxu0 %v7428
  %7847 = vmatpush.msra.mxu0 %v7427
  %7848 = vmatpush.msra.mxu0 %v7426
  %7849 = vmatpush.msra.mxu0 %v7425
  %7850 = vmatmul.f32.gmra.mxu0 %v7530
  %v7851 = vpop.f32.mrf.mxu0
  %v7852 = vadd.f32 %v7691, %v7851
  %7853 = vmatmul.f32.gmra.mxu0 %v7533
  %v7854 = vpop.f32.mrf.mxu0
  %v7855 = vadd.f32 %v7694, %v7854
  %7856 = vmatmul.f32.gmra.mxu0 %v7536
  %v7857 = vpop.f32.mrf.mxu0
  %v7858 = vadd.f32 %v7697, %v7857
  %7859 = vmatmul.f32.gmra.mxu0 %v7539
  %v7860 = vpop.f32.mrf.mxu0
  %v7861 = vadd.f32 %v7700, %v7860
  %7862 = vmatmul.f32.gmra.mxu0 %v7542
  %v7863 = vpop.f32.mrf.mxu0
  %v7864 = vadd.f32 %v7703, %v7863
  %7865 = vmatmul.f32.gmra.mxu0 %v7545
  %v7866 = vpop.f32.mrf.mxu0
  %v7867 = vadd.f32 %v7706, %v7866
  %7868 = vmatmul.f32.gmra.mxu0 %v7548
  %v7869 = vpop.f32.mrf.mxu0
  %v7870 = vadd.f32 %v7709, %v7869
  %7871 = vmatmul.f32.gmra.mxu0 %v7551
  %v7872 = vpop.f32.mrf.mxu0
  %v7873 = vadd.f32 %v7712, %v7872
  %7874 = vmatmul.f32.gmra.mxu0 %v7554
  %v7875 = vpop.f32.mrf.mxu0
  %v7876 = vadd.f32 %v7715, %v7875
  %7877 = vmatmul.f32.gmra.mxu0 %v7557
  %v7878 = vpop.f32.mrf.mxu0
  %v7879 = vadd.f32 %v7718, %v7878
  %7880 = vmatmul.f32.gmra.mxu0 %v7560
  %v7881 = vpop.f32.mrf.mxu0
  %v7882 = vadd.f32 %v7721, %v7881
  %7883 = vmatmul.f32.gmra.mxu0 %v7563
  %v7884 = vpop.f32.mrf.mxu0
  %v7885 = vadd.f32 %v7724, %v7884
  %7886 = vmatmul.f32.gmra.mxu0 %v7566
  %v7887 = vpop.f32.mrf.mxu0
  %v7888 = vadd.f32 %v7727, %v7887
  %7889 = vmatmul.f32.gmra.mxu0 %v7569
  %v7890 = vpop.f32.mrf.mxu0
  %v7891 = vadd.f32 %v7730, %v7890
  %7892 = vmatmul.f32.gmra.mxu0 %v7572
  %v7893 = vpop.f32.mrf.mxu0
  %v7894 = vadd.f32 %v7733, %v7893
  %7895 = vmatmul.f32.gmra.mxu0 %v7575
  %v7896 = vpop.f32.mrf.mxu0
  %v7897 = vadd.f32 %v7736, %v7896
  %7898 = vmatmul.f32.gmra.mxu0 %v7578
  %v7899 = vpop.f32.mrf.mxu0
  %v7900 = vadd.f32 %v7739, %v7899
  %7901 = vmatmul.f32.gmra.mxu0 %v7581
  %v7902 = vpop.f32.mrf.mxu0
  %v7903 = vadd.f32 %v7742, %v7902
  %7904 = vmatmul.f32.gmra.mxu0 %v7584
  %v7905 = vpop.f32.mrf.mxu0
  %v7906 = vadd.f32 %v7745, %v7905
  %7907 = vmatmul.f32.gmra.mxu0 %v7587
  %v7908 = vpop.f32.mrf.mxu0
  %v7909 = vadd.f32 %v7748, %v7908
  %7910 = vmatmul.f32.gmra.mxu0 %v7590
  %v7911 = vpop.f32.mrf.mxu0
  %v7912 = vadd.f32 %v7751, %v7911
  %7913 = vmatmul.f32.gmra.mxu0 %v7593
  %v7914 = vpop.f32.mrf.mxu0
  %v7915 = vadd.f32 %v7754, %v7914
  %7916 = vmatmul.f32.gmra.mxu0 %v7596
  %v7917 = vpop.f32.mrf.mxu0
  %v7918 = vadd.f32 %v7757, %v7917
  %7919 = vmatmul.f32.gmra.mxu0 %v7599
  %v7920 = vpop.f32.mrf.mxu0
  %v7921 = vadd.f32 %v7760, %v7920
  %7922 = vmatmul.f32.gmra.mxu0 %v7602
  %v7923 = vpop.f32.mrf.mxu0
  %v7924 = vadd.f32 %v7763, %v7923
  %7925 = vmatmul.f32.gmra.mxu0 %v7605
  %v7926 = vpop.f32.mrf.mxu0
  %v7927 = vadd.f32 %v7766, %v7926
  %7928 = vmatmul.f32.gmra.mxu0 %v7608
  %v7929 = vpop.f32.mrf.mxu0
  %v7930 = vadd.f32 %v7769, %v7929
  %7931 = vmatmul.f32.gmra.mxu0 %v7611
  %v7932 = vpop.f32.mrf.mxu0
  %v7933 = vadd.f32 %v7772, %v7932
  %7934 = vmatmul.f32.gmra.mxu0 %v7614
  %v7935 = vpop.f32.mrf.mxu0
  %v7936 = vadd.f32 %v7775, %v7935
  %7937 = vmatmul.f32.gmra.mxu0 %v7617
  %v7938 = vpop.f32.mrf.mxu0
  %v7939 = vadd.f32 %v7778, %v7938
  %7940 = vmatmul.f32.gmra.mxu0 %v7620
  %v7941 = vpop.f32.mrf.mxu0
  %v7942 = vadd.f32 %v7781, %v7941
  %7943 = vmatmul.f32.gmra.mxu0 %v7623
  %v7944 = vpop.f32.mrf.mxu0
  %v7945 = vadd.f32 %v7784, %v7944
  %7946 = vmatmul.f32.gmra.mxu0 %v7626
  %v7947 = vpop.f32.mrf.mxu0
  %v7948 = vadd.f32 %v7787, %v7947
  %7949 = vmatmul.f32.gmra.mxu0 %v7629
  %v7950 = vpop.f32.mrf.mxu0
  %v7951 = vadd.f32 %v7790, %v7950
  %7952 = vmatmul.f32.gmra.mxu0 %v7632
  %v7953 = vpop.f32.mrf.mxu0
  %v7954 = vadd.f32 %v7793, %v7953
  %7955 = vmatmul.f32.gmra.mxu0 %v7635
  %v7956 = vpop.f32.mrf.mxu0
  %v7957 = vadd.f32 %v7796, %v7956
  %7958 = vmatmul.f32.gmra.mxu0 %v7638
  %v7959 = vpop.f32.mrf.mxu0
  %v7960 = vadd.f32 %v7799, %v7959
  %7961 = vmatmul.f32.gmra.mxu0 %v7641
  %v7962 = vpop.f32.mrf.mxu0
  %v7963 = vadd.f32 %v7802, %v7962
  %7964 = vmatmul.f32.gmra.mxu0 %v7644
  %v7965 = vpop.f32.mrf.mxu0
  %v7966 = vadd.f32 %v7805, %v7965
  %7967 = vmatmul.f32.gmra.mxu0 %v7647
  %v7968 = vpop.f32.mrf.mxu0
  %v7969 = vadd.f32 %v7808, %v7968
  %7970 = vmatmul.f32.gmra.mxu0 %v7650
  %v7971 = vpop.f32.mrf.mxu0
  %v7972 = vadd.f32 %v7811, %v7971
  %7973 = vmatmul.f32.gmra.mxu0 %v7653
  %v7974 = vpop.f32.mrf.mxu0
  %v7975 = vadd.f32 %v7814, %v7974
  %7976 = vmatmul.f32.gmra.mxu0 %v7656
  %v7977 = vpop.f32.mrf.mxu0
  %v7978 = vadd.f32 %v7817, %v7977
  %7979 = vmatmul.f32.gmra.mxu0 %v7659
  %v7980 = vpop.f32.mrf.mxu0
  %v7981 = vadd.f32 %v7820, %v7980
  %7982 = vmatmul.f32.gmra.mxu0 %v7662
  %v7983 = vpop.f32.mrf.mxu0
  %v7984 = vadd.f32 %v7823, %v7983
  %7985 = vmatmul.f32.gmra.mxu0 %v7665
  %v7986 = vpop.f32.mrf.mxu0
  %v7987 = vadd.f32 %v7826, %v7986
  %7988 = vmatmul.f32.gmra.mxu0 %v7668
  %v7989 = vpop.f32.mrf.mxu0
  %v7990 = vadd.f32 %v7829, %v7989
  %7991 = vmatmul.f32.gmra.mxu0 %v7671
  %v7992 = vpop.f32.mrf.mxu0
  %v7993 = vadd.f32 %v7832, %v7992
  %7994 = vdwg.mxu0
  %v7995 = vmax.f32 %v7852, %v7924
  %v7996 = vmax.f32 %v7855, %v7927
  %v7997 = vmax.f32 %v7858, %v7930
  %v7998 = vmax.f32 %v7861, %v7933
  %v7999 = vmax.f32 %v7864, %v7936
  %v8000 = vmax.f32 %v7867, %v7939
  %v8001 = vmax.f32 %v7870, %v7942
  %v8002 = vmax.f32 %v7873, %v7945
  %v8003 = vmax.f32 %v7876, %v7948
  %v8004 = vmax.f32 %v7879, %v7951
  %v8005 = vmax.f32 %v7882, %v7954
  %v8006 = vmax.f32 %v7885, %v7957
  %v8007 = vmax.f32 %v7888, %v7960
  %v8008 = vmax.f32 %v7891, %v7963
  %v8009 = vmax.f32 %v7894, %v7966
  %v8010 = vmax.f32 %v7897, %v7969
  %v8011 = vmax.f32 %v7900, %v7972
  %v8012 = vmax.f32 %v7903, %v7975
  %v8013 = vmax.f32 %v7906, %v7978
  %v8014 = vmax.f32 %v7909, %v7981
  %v8015 = vmax.f32 %v7912, %v7984
  %v8016 = vmax.f32 %v7915, %v7987
  %v8017 = vmax.f32 %v7918, %v7990
  %v8018 = vmax.f32 %v7921, %v7993
  %v8019 = vmax.f32 %v7995, %v8007
  %v8020 = vmax.f32 %v7996, %v8008
  %v8021 = vmax.f32 %v7997, %v8009
  %v8022 = vmax.f32 %v7998, %v8010
  %v8023 = vmax.f32 %v7999, %v8011
  %v8024 = vmax.f32 %v8000, %v8012
  %v8025 = vmax.f32 %v8001, %v8013
  %v8026 = vmax.f32 %v8002, %v8014
  %v8027 = vmax.f32 %v8003, %v8015
  %v8028 = vmax.f32 %v8004, %v8016
  %v8029 = vmax.f32 %v8005, %v8017
  %v8030 = vmax.f32 %v8006, %v8018
  %v8031 = vld [vmem:[%s2] sm:$0xff]
  %v8032 = vld [vmem:[%s2 + $0x8] sm:$0xff]
  %v8033 = vld [vmem:[%s2 + $0x10] sm:$0xff]
  %v8034 = vld [vmem:[%s2 + $0x18] sm:$0xff]
  %v8035 = vld [vmem:[%s2 + $0x20] sm:$0xff]
  %v8036 = vld [vmem:[%s2 + $0x28] sm:$0xff]
  %v8037 = vld [vmem:[%s2 + $0x30] sm:$0xff]
  %v8038 = vld [vmem:[%s2 + $0x38] sm:$0xff]
  %v8039 = vld [vmem:[%s2 + $0x40] sm:$0xff]
  %v8040 = vld [vmem:[%s2 + $0x48] sm:$0xff]
  %v8041 = vld [vmem:[%s2 + $0x50] sm:$0xff]
  %v8042 = vld [vmem:[%s2 + $0x58] sm:$0xff]
  %v8043 = vadd.f32 %v8019, %v8031
  %v8044 = vadd.f32 %v8020, %v8032
  %v8045 = vadd.f32 %v8021, %v8033
  %v8046 = vadd.f32 %v8022, %v8034
  %v8047 = vadd.f32 %v8023, %v8035
  %v8048 = vadd.f32 %v8024, %v8036
  %v8049 = vadd.f32 %v8025, %v8037
  %v8050 = vadd.f32 %v8026, %v8038
  %v8051 = vadd.f32 %v8027, %v8039
  %v8052 = vadd.f32 %v8028, %v8040
  %v8053 = vadd.f32 %v8029, %v8041
  %v8054 = vadd.f32 %v8030, %v8042
  %v8055 = vmax.f32 %v8043, 0.0
  %v8056 = vmax.f32 %v8044, 0.0
  %v8057 = vmax.f32 %v8045, 0.0
  %v8058 = vmax.f32 %v8046, 0.0
  %v8059 = vmax.f32 %v8047, 0.0
  %v8060 = vmax.f32 %v8048, 0.0
  %v8061 = vmax.f32 %v8049, 0.0
  %v8062 = vmax.f32 %v8050, 0.0
  %v8063 = vmax.f32 %v8051, 0.0
  %v8064 = vmax.f32 %v8052, 0.0
  %v8065 = vmax.f32 %v8053, 0.0
  %v8066 = vmax.f32 %v8054, 0.0
  %8067 = vst [vmem:[#allocation2 + $0x420] sm:$0xff] %v8055
  %8068 = vst [vmem:[#allocation2 + $0x428] sm:$0xff] %v8056
  %8069 = vst [vmem:[#allocation2 + $0x430] sm:$0xff] %v8057
  %8070 = vst [vmem:[#allocation2 + $0x438] sm:$0xff] %v8058
  %8071 = vst [vmem:[#allocation2 + $0x440] sm:$0xff] %v8059
  %8072 = vst [vmem:[#allocation2 + $0x448] sm:$0xff] %v8060
  %8073 = vst [vmem:[#allocation2 + $0x450] sm:$0xff] %v8061
  %8074 = vst [vmem:[#allocation2 + $0x458] sm:$0xff] %v8062
  %8075 = vst [vmem:[#allocation2 + $0x460] sm:$0xff] %v8063
  %8076 = vst [vmem:[#allocation2 + $0x468] sm:$0xff] %v8064
  %8077 = vst [vmem:[#allocation2 + $0x470] sm:$0xff] %v8065
  %8078 = vst [vmem:[#allocation2 + $0x478] sm:$0xff] %v8066
  %v8079 = vld [vmem:[#allocation2] sm:$0xff]
  %v8080 = vld [vmem:[#allocation2 + $0x8] sm:$0xff]
  %v8081 = vld [vmem:[#allocation2 + $0x10] sm:$0xff]
  %v8082 = vld [vmem:[#allocation2 + $0x18] sm:$0xff]
  %v8083 = vld [vmem:[#allocation2 + $0x20] sm:$0xff]
  %v8084 = vld [vmem:[#allocation2 + $0x28] sm:$0xff]
  %v8085 = vld [vmem:[#allocation2 + $0x30] sm:$0xff]
  %v8086 = vld [vmem:[#allocation2 + $0x38] sm:$0xff]
  %v8087 = vld [vmem:[#allocation2 + $0x40] sm:$0xff]
  %v8088 = vld [vmem:[#allocation2 + $0x48] sm:$0xff]
  %v8089 = vld [vmem:[#allocation2 + $0x50] sm:$0xff]
  %v8090 = vld [vmem:[#allocation2 + $0x58] sm:$0xff]
  %v8091 = vld [vmem:[#allocation2 + $0x60] sm:$0xff]
  %v8092 = vld [vmem:[#allocation2 + $0x68] sm:$0xff]
  %v8093 = vld [vmem:[#allocation2 + $0x70] sm:$0xff]
  %v8094 = vld [vmem:[#allocation2 + $0x78] sm:$0xff]
  %v8095 = vld [vmem:[#allocation2 + $0x80] sm:$0xff]
  %v8096 = vld [vmem:[#allocation2 + $0x88] sm:$0xff]
  %v8097 = vld [vmem:[#allocation2 + $0x90] sm:$0xff]
  %v8098 = vld [vmem:[#allocation2 + $0x98] sm:$0xff]
  %v8099 = vld [vmem:[#allocation2 + $0xa0] sm:$0xff]
  %v8100 = vld [vmem:[#allocation2 + $0xa8] sm:$0xff]
  %v8101 = vld [vmem:[#allocation2 + $0xb0] sm:$0xff]
  %v8102 = vld [vmem:[#allocation2 + $0xb8] sm:$0xff]
  %v8103 = vld [vmem:[#allocation2 + $0xc0] sm:$0xff]
  %v8104 = vld [vmem:[#allocation2 + $0xc8] sm:$0xff]
  %v8105 = vld [vmem:[#allocation2 + $0xd0] sm:$0xff]
  %v8106 = vld [vmem:[#allocation2 + $0xd8] sm:$0xff]
  %v8107 = vld [vmem:[#allocation2 + $0xe0] sm:$0xff]
  %v8108 = vld [vmem:[#allocation2 + $0xe8] sm:$0xff]
  %v8109 = vld [vmem:[#allocation2 + $0xf0] sm:$0xff]
  %v8110 = vld [vmem:[#allocation2 + $0xf8] sm:$0xff]
  %v8111 = vld [vmem:[#allocation2 + $0x100] sm:$0xff]
  %v8112 = vld [vmem:[#allocation2 + $0x108] sm:$0xff]
  %v8113 = vld [vmem:[#allocation2 + $0x110] sm:$0xff]
  %v8114 = vld [vmem:[#allocation2 + $0x118] sm:$0xff]
  %v8115 = vld [vmem:[#allocation2 + $0x120] sm:$0xff]
  %v8116 = vld [vmem:[#allocation2 + $0x128] sm:$0xff]
  %v8117 = vld [vmem:[#allocation2 + $0x130] sm:$0xff]
  %v8118 = vld [vmem:[#allocation2 + $0x138] sm:$0xff]
  %v8119 = vld [vmem:[#allocation2 + $0x140] sm:$0xff]
  %v8120 = vld [vmem:[#allocation2 + $0x148] sm:$0xff]
  %v8121 = vld [vmem:[#allocation2 + $0x150] sm:$0xff]
  %v8122 = vld [vmem:[#allocation2 + $0x158] sm:$0xff]
  %v8123 = vld [vmem:[#allocation2 + $0x160] sm:$0xff]
  %v8124 = vld [vmem:[#allocation2 + $0x168] sm:$0xff]
  %v8125 = vld [vmem:[#allocation2 + $0x170] sm:$0xff]
  %v8126 = vld [vmem:[#allocation2 + $0x178] sm:$0xff]
  %v8127 = vld [vmem:[#allocation2 + $0x180] sm:$0xff]
  %v8128 = vld [vmem:[#allocation2 + $0x188] sm:$0xff]
  %v8129 = vld [vmem:[#allocation2 + $0x190] sm:$0xff]
  %v8130 = vld [vmem:[#allocation2 + $0x198] sm:$0xff]
  %v8131 = vld [vmem:[#allocation2 + $0x1a0] sm:$0xff]
  %v8132 = vld [vmem:[#allocation2 + $0x1a8] sm:$0xff]
  %v8133 = vld [vmem:[#allocation2 + $0x1b0] sm:$0xff]
  %v8134 = vld [vmem:[#allocation2 + $0x1b8] sm:$0xff]
  %v8135 = vld [vmem:[#allocation2 + $0x1c0] sm:$0xff]
  %v8136 = vld [vmem:[#allocation2 + $0x1c8] sm:$0xff]
  %v8137 = vld [vmem:[#allocation2 + $0x1d0] sm:$0xff]
  %v8138 = vld [vmem:[#allocation2 + $0x1d8] sm:$0xff]
  %v8139 = vld [vmem:[#allocation2 + $0x1e0] sm:$0xff]
  %v8140 = vld [vmem:[#allocation2 + $0x1e8] sm:$0xff]
  %v8141 = vld [vmem:[#allocation2 + $0x1f0] sm:$0xff]
  %v8142 = vld [vmem:[#allocation2 + $0x1f8] sm:$0xff]
  %v8143 = vld [vmem:[#allocation2 + $0x200] sm:$0xff]
  %v8144 = vld [vmem:[#allocation2 + $0x208] sm:$0xff]
  %v8145 = vld [vmem:[#allocation2 + $0x210] sm:$0xff]
  %v8146 = vld [vmem:[#allocation2 + $0x218] sm:$0xff]
  %v8147 = vld [vmem:[#allocation2 + $0x220] sm:$0xff]
  %v8148 = vld [vmem:[#allocation2 + $0x228] sm:$0xff]
  %v8149 = vld [vmem:[#allocation2 + $0x230] sm:$0xff]
  %v8150 = vld [vmem:[#allocation2 + $0x238] sm:$0xff]
  %v8151 = vld [vmem:[%s3] sm:$0xff]
  %v8152 = vld [vmem:[%s3 + $0x8] sm:$0xff]
  %v8153 = vld [vmem:[%s3 + $0x10] sm:$0xff]
  %v8154 = vld [vmem:[%s3 + $0x18] sm:$0xff]
  %v8155 = vld [vmem:[%s3 + $0x20] sm:$0xff]
  %v8156 = vld [vmem:[%s3 + $0x28] sm:$0xff]
  %v8157 = vld [vmem:[%s3 + $0x30] sm:$0xff]
  %v8158 = vld [vmem:[%s3 + $0x38] sm:$0xff]
  %v8159 = vld [vmem:[%s3 + $0x40] sm:$0xff]
  %v8160 = vld [vmem:[%s3 + $0x48] sm:$0xff]
  %v8161 = vld [vmem:[%s3 + $0x50] sm:$0xff]
  %v8162 = vld [vmem:[%s3 + $0x58] sm:$0xff]
  %v8163 = vld [vmem:[%s3 + $0x60] sm:$0xff]
  %v8164 = vld [vmem:[%s3 + $0x68] sm:$0xff]
  %v8165 = vld [vmem:[%s3 + $0x70] sm:$0xff]
  %v8166 = vld [vmem:[%s3 + $0x78] sm:$0xff]
  %v8167 = vld [vmem:[%s3 + $0x80] sm:$0xff]
  %v8168 = vld [vmem:[%s3 + $0x88] sm:$0xff]
  %v8169 = vld [vmem:[%s3 + $0x90] sm:$0xff]
  %v8170 = vld [vmem:[%s3 + $0x98] sm:$0xff]
  %v8171 = vld [vmem:[%s3 + $0xa0] sm:$0xff]
  %v8172 = vld [vmem:[%s3 + $0xa8] sm:$0xff]
  %v8173 = vld [vmem:[%s3 + $0xb0] sm:$0xff]
  %v8174 = vld [vmem:[%s3 + $0xb8] sm:$0xff]
  %v8175 = vld [vmem:[%s3 + $0xc0] sm:$0xff]
  %v8176 = vld [vmem:[%s3 + $0xc8] sm:$0xff]
  %v8177 = vld [vmem:[%s3 + $0xd0] sm:$0xff]
  %v8178 = vld [vmem:[%s3 + $0xd8] sm:$0xff]
  %v8179 = vld [vmem:[%s3 + $0xe0] sm:$0xff]
  %v8180 = vld [vmem:[%s3 + $0xe8] sm:$0xff]
  %v8181 = vld [vmem:[%s3 + $0xf0] sm:$0xff]
  %v8182 = vld [vmem:[%s3 + $0xf8] sm:$0xff]
  %v8183 = vld [vmem:[%s3 + $0x100] sm:$0xff]
  %v8184 = vld [vmem:[%s3 + $0x108] sm:$0xff]
  %v8185 = vld [vmem:[%s3 + $0x110] sm:$0xff]
  %v8186 = vld [vmem:[%s3 + $0x118] sm:$0xff]
  %v8187 = vld [vmem:[%s3 + $0x120] sm:$0xff]
  %v8188 = vld [vmem:[%s3 + $0x128] sm:$0xff]
  %v8189 = vld [vmem:[%s3 + $0x130] sm:$0xff]
  %v8190 = vld [vmem:[%s3 + $0x138] sm:$0xff]
  %v8191 = vld [vmem:[%s3 + $0x140] sm:$0xff]
  %v8192 = vld [vmem:[%s3 + $0x148] sm:$0xff]
  %v8193 = vld [vmem:[%s3 + $0x150] sm:$0xff]
  %v8194 = vld [vmem:[%s3 + $0x158] sm:$0xff]
  %v8195 = vld [vmem:[%s3 + $0x160] sm:$0xff]
  %v8196 = vld [vmem:[%s3 + $0x168] sm:$0xff]
  %v8197 = vld [vmem:[%s3 + $0x170] sm:$0xff]
  %v8198 = vld [vmem:[%s3 + $0x178] sm:$0xff]
  %v8199 = vld [vmem:[%s3 + $0x180] sm:$0xff]
  %v8200 = vld [vmem:[%s3 + $0x188] sm:$0xff]
  %v8201 = vld [vmem:[%s3 + $0x190] sm:$0xff]
  %v8202 = vld [vmem:[%s3 + $0x198] sm:$0xff]
  %v8203 = vld [vmem:[%s3 + $0x1a0] sm:$0xff]
  %v8204 = vld [vmem:[%s3 + $0x1a8] sm:$0xff]
  %v8205 = vld [vmem:[%s3 + $0x1b0] sm:$0xff]
  %v8206 = vld [vmem:[%s3 + $0x1b8] sm:$0xff]
  %v8207 = vld [vmem:[%s3 + $0x1c0] sm:$0xff]
  %v8208 = vld [vmem:[%s3 + $0x1c8] sm:$0xff]
  %v8209 = vld [vmem:[%s3 + $0x1d0] sm:$0xff]
  %v8210 = vld [vmem:[%s3 + $0x1d8] sm:$0xff]
  %v8211 = vld [vmem:[%s3 + $0x1e0] sm:$0xff]
  %v8212 = vld [vmem:[%s3 + $0x1e8] sm:$0xff]
  %v8213 = vld [vmem:[%s3 + $0x1f0] sm:$0xff]
  %v8214 = vld [vmem:[%s3 + $0x1f8] sm:$0xff]
  %v8215 = vld [vmem:[%s3 + $0x200] sm:$0xff]
  %v8216 = vld [vmem:[%s3 + $0x208] sm:$0xff]
  %v8217 = vld [vmem:[%s3 + $0x210] sm:$0xff]
  %v8218 = vld [vmem:[%s3 + $0x218] sm:$0xff]
  %v8219 = vld [vmem:[%s3 + $0x220] sm:$0xff]
  %v8220 = vld [vmem:[%s3 + $0x228] sm:$0xff]
  %v8221 = vld [vmem:[%s3 + $0x230] sm:$0xff]
  %v8222 = vld [vmem:[%s3 + $0x238] sm:$0xff]
  %v8223 = vld [vmem:[%s3 + $0x240] sm:$0xff]
  %v8224 = vld [vmem:[%s3 + $0x248] sm:$0xff]
  %v8225 = vld [vmem:[%s3 + $0x250] sm:$0xff]
  %v8226 = vld [vmem:[%s3 + $0x258] sm:$0xff]
  %v8227 = vld [vmem:[%s3 + $0x260] sm:$0xff]
  %v8228 = vld [vmem:[%s3 + $0x268] sm:$0xff]
  %v8229 = vld [vmem:[%s3 + $0x270] sm:$0xff]
  %v8230 = vld [vmem:[%s3 + $0x278] sm:$0xff]
  %v8231 = vld [vmem:[%s3 + $0x280] sm:$0xff]
  %v8232 = vld [vmem:[%s3 + $0x288] sm:$0xff]
  %v8233 = vld [vmem:[%s3 + $0x290] sm:$0xff]
  %v8234 = vld [vmem:[%s3 + $0x298] sm:$0xff]
  %v8235 = vld [vmem:[%s3 + $0x2a0] sm:$0xff]
  %v8236 = vld [vmem:[%s3 + $0x2a8] sm:$0xff]
  %v8237 = vld [vmem:[%s3 + $0x2b0] sm:$0xff]
  %v8238 = vld [vmem:[%s3 + $0x2b8] sm:$0xff]
  %v8239 = vld [vmem:[%s3 + $0x2c0] sm:$0xff]
  %v8240 = vld [vmem:[%s3 + $0x2c8] sm:$0xff]
  %v8241 = vld [vmem:[%s3 + $0x2d0] sm:$0xff]
  %v8242 = vld [vmem:[%s3 + $0x2d8] sm:$0xff]
  %v8243 = vld [vmem:[%s3 + $0x2e0] sm:$0xff]
  %v8244 = vld [vmem:[%s3 + $0x2e8] sm:$0xff]
  %v8245 = vld [vmem:[%s3 + $0x2f0] sm:$0xff]
  %v8246 = vld [vmem:[%s3 + $0x2f8] sm:$0xff]
  %v8247 = vld [vmem:[%s3 + $0x300] sm:$0xff]
  %v8248 = vld [vmem:[%s3 + $0x308] sm:$0xff]
  %v8249 = vld [vmem:[%s3 + $0x310] sm:$0xff]
  %v8250 = vld [vmem:[%s3 + $0x318] sm:$0xff]
  %v8251 = vld [vmem:[%s3 + $0x320] sm:$0xff]
  %v8252 = vld [vmem:[%s3 + $0x328] sm:$0xff]
  %v8253 = vld [vmem:[%s3 + $0x330] sm:$0xff]
  %v8254 = vld [vmem:[%s3 + $0x338] sm:$0xff]
  %v8255 = vld [vmem:[%s3 + $0x340] sm:$0xff]
  %v8256 = vld [vmem:[%s3 + $0x348] sm:$0xff]
  %v8257 = vld [vmem:[%s3 + $0x350] sm:$0xff]
  %v8258 = vld [vmem:[%s3 + $0x358] sm:$0xff]
  %v8259 = vld [vmem:[%s3 + $0x360] sm:$0xff]
  %v8260 = vld [vmem:[%s3 + $0x368] sm:$0xff]
  %v8261 = vld [vmem:[%s3 + $0x370] sm:$0xff]
  %v8262 = vld [vmem:[%s3 + $0x378] sm:$0xff]
  %v8263 = vld [vmem:[%s3 + $0x380] sm:$0xff]
  %v8264 = vld [vmem:[%s3 + $0x388] sm:$0xff]
  %v8265 = vld [vmem:[%s3 + $0x390] sm:$0xff]
  %v8266 = vld [vmem:[%s3 + $0x398] sm:$0xff]
  %v8267 = vld [vmem:[%s3 + $0x3a0] sm:$0xff]
  %v8268 = vld [vmem:[%s3 + $0x3a8] sm:$0xff]
  %v8269 = vld [vmem:[%s3 + $0x3b0] sm:$0xff]
  %v8270 = vld [vmem:[%s3 + $0x3b8] sm:$0xff]
  %v8271 = vld [vmem:[%s3 + $0x3c0] sm:$0xff]
  %v8272 = vld [vmem:[%s3 + $0x3c8] sm:$0xff]
  %v8273 = vld [vmem:[%s3 + $0x3d0] sm:$0xff]
  %v8274 = vld [vmem:[%s3 + $0x3d8] sm:$0xff]
  %v8275 = vld [vmem:[%s3 + $0x3e0] sm:$0xff]
  %v8276 = vld [vmem:[%s3 + $0x3e8] sm:$0xff]
  %v8277 = vld [vmem:[%s3 + $0x3f0] sm:$0xff]
  %v8278 = vld [vmem:[%s3 + $0x3f8] sm:$0xff]
  %v8279 = vld [vmem:[%s3 + $0x400] sm:$0xff]
  %v8280 = vld [vmem:[%s3 + $0x408] sm:$0xff]
  %v8281 = vld [vmem:[%s3 + $0x410] sm:$0xff]
  %v8282 = vld [vmem:[%s3 + $0x418] sm:$0xff]
  %v8283 = vld [vmem:[%s3 + $0x420] sm:$0xff]
  %v8284 = vld [vmem:[%s3 + $0x428] sm:$0xff]
  %v8285 = vld [vmem:[%s3 + $0x430] sm:$0xff]
  %v8286 = vld [vmem:[%s3 + $0x438] sm:$0xff]
  %v8287 = vld [vmem:[%s3 + $0x440] sm:$0xff]
  %v8288 = vld [vmem:[%s3 + $0x448] sm:$0xff]
  %v8289 = vld [vmem:[%s3 + $0x450] sm:$0xff]
  %v8290 = vld [vmem:[%s3 + $0x458] sm:$0xff]
  %v8291 = vld [vmem:[%s3 + $0x460] sm:$0xff]
  %v8292 = vld [vmem:[%s3 + $0x468] sm:$0xff]
  %v8293 = vld [vmem:[%s3 + $0x470] sm:$0xff]
  %v8294 = vld [vmem:[%s3 + $0x478] sm:$0xff]
  %v8295 = vld [vmem:[%s3 + $0x480] sm:$0xff]
  %v8296 = vld [vmem:[%s3 + $0x488] sm:$0xff]
  %v8297 = vld [vmem:[%s3 + $0x490] sm:$0xff]
  %v8298 = vld [vmem:[%s3 + $0x498] sm:$0xff]
  %v8299 = vld [vmem:[%s3 + $0x4a0] sm:$0xff]
  %v8300 = vld [vmem:[%s3 + $0x4a8] sm:$0xff]
  %v8301 = vld [vmem:[%s3 + $0x4b0] sm:$0xff]
  %v8302 = vld [vmem:[%s3 + $0x4b8] sm:$0xff]
  %v8303 = vld [vmem:[%s3 + $0x4c0] sm:$0xff]
  %v8304 = vld [vmem:[%s3 + $0x4c8] sm:$0xff]
  %v8305 = vld [vmem:[%s3 + $0x4d0] sm:$0xff]
  %v8306 = vld [vmem:[%s3 + $0x4d8] sm:$0xff]
  %v8307 = vld [vmem:[%s3 + $0x4e0] sm:$0xff]
  %v8308 = vld [vmem:[%s3 + $0x4e8] sm:$0xff]
  %v8309 = vld [vmem:[%s3 + $0x4f0] sm:$0xff]
  %v8310 = vld [vmem:[%s3 + $0x4f8] sm:$0xff]
  %v8312 = vsel %vm158, %v8155, 0
  %v8315 = vsel %vm158, %v8160, 0
  %v8318 = vsel %vm158, %v8165, 0
  %v8321 = vsel %vm158, %v8170, 0
  %v8324 = vsel %vm158, %v8175, 0
  %v8327 = vsel %vm158, %v8180, 0
  %v8330 = vsel %vm158, %v8185, 0
  %v8333 = vsel %vm158, %v8190, 0
  %v8336 = vsel %vm158, %v8195, 0
  %v8339 = vsel %vm158, %v8200, 0
  %v8342 = vsel %vm158, %v8205, 0
  %v8345 = vsel %vm158, %v8210, 0
  %v8348 = vsel %vm158, %v8215, 0
  %v8351 = vsel %vm158, %v8220, 0
  %v8354 = vsel %vm158, %v8225, 0
  %v8357 = vsel %vm158, %v8230, 0
  %v8360 = vsel %vm158, %v8235, 0
  %v8363 = vsel %vm158, %v8240, 0
  %v8366 = vsel %vm158, %v8245, 0
  %v8369 = vsel %vm158, %v8250, 0
  %v8372 = vsel %vm158, %v8255, 0
  %v8375 = vsel %vm158, %v8260, 0
  %v8378 = vsel %vm158, %v8265, 0
  %v8381 = vsel %vm158, %v8270, 0
  %v8384 = vsel %vm158, %v8275, 0
  %v8387 = vsel %vm158, %v8280, 0
  %v8390 = vsel %vm158, %v8285, 0
  %v8393 = vsel %vm158, %v8290, 0
  %v8396 = vsel %vm158, %v8295, 0
  %v8399 = vsel %vm158, %v8300, 0
  %v8402 = vsel %vm158, %v8305, 0
  %v8405 = vsel %vm158, %v8310, 0
  %8407 = vmatpush.msra.mxu0 %v8094
  %8408 = vmatpush.msra.mxu0 %v8093
  %8409 = vmatpush.msra.mxu0 %v8092
  %8410 = vmatpush.msra.mxu0 %v8091
  %8411 = vmatpush.msra.mxu0 %v8090
  %8412 = vmatpush.msra.mxu0 %v8089
  %8413 = vmatpush.msra.mxu0 %v8088
  %8414 = vmatpush.msra.mxu0 %v8087
  %8415 = vmatpush.msra.mxu0 %v8086
  %8416 = vmatpush.msra.mxu0 %v8085
  %8417 = vmatpush.msra.mxu0 %v8084
  %8418 = vmatpush.msra.mxu0 %v8083
  %8419 = vmatpush.msra.mxu0 %v8082
  %8420 = vmatpush.msra.mxu0 %v8081
  %8421 = vmatpush.msra.mxu0 %v8080
  %8422 = vmatpush.msra.mxu0 %v8079
  %8423 = vmatmul.f32.gmra.mxu0 %v8151
  %v8424 = vpop.f32.mrf.mxu0
  %v8425 = vadd.f32 0.0, %v8424
  %8426 = vmatmul.f32.gmra.mxu0 %v8156
  %v8427 = vpop.f32.mrf.mxu0
  %v8428 = vadd.f32 0.0, %v8427
  %8429 = vmatmul.f32.gmra.mxu0 %v8161
  %v8430 = vpop.f32.mrf.mxu0
  %v8431 = vadd.f32 0.0, %v8430
  %8432 = vmatmul.f32.gmra.mxu0 %v8166
  %v8433 = vpop.f32.mrf.mxu0
  %v8434 = vadd.f32 0.0, %v8433
  %8435 = vmatmul.f32.gmra.mxu0 %v8171
  %v8436 = vpop.f32.mrf.mxu0
  %v8437 = vadd.f32 0.0, %v8436
  %8438 = vmatmul.f32.gmra.mxu0 %v8176
  %v8439 = vpop.f32.mrf.mxu0
  %v8440 = vadd.f32 0.0, %v8439
  %8441 = vmatmul.f32.gmra.mxu0 %v8181
  %v8442 = vpop.f32.mrf.mxu0
  %v8443 = vadd.f32 0.0, %v8442
  %8444 = vmatmul.f32.gmra.mxu0 %v8186
  %v8445 = vpop.f32.mrf.mxu0
  %v8446 = vadd.f32 0.0, %v8445
  %8447 = vmatmul.f32.gmra.mxu0 %v8191
  %v8448 = vpop.f32.mrf.mxu0
  %v8449 = vadd.f32 0.0, %v8448
  %8450 = vmatmul.f32.gmra.mxu0 %v8196
  %v8451 = vpop.f32.mrf.mxu0
  %v8452 = vadd.f32 0.0, %v8451
  %8453 = vmatmul.f32.gmra.mxu0 %v8201
  %v8454 = vpop.f32.mrf.mxu0
  %v8455 = vadd.f32 0.0, %v8454
  %8456 = vmatmul.f32.gmra.mxu0 %v8206
  %v8457 = vpop.f32.mrf.mxu0
  %v8458 = vadd.f32 0.0, %v8457
  %8459 = vmatmul.f32.gmra.mxu0 %v8211
  %v8460 = vpop.f32.mrf.mxu0
  %v8461 = vadd.f32 0.0, %v8460
  %8462 = vmatmul.f32.gmra.mxu0 %v8216
  %v8463 = vpop.f32.mrf.mxu0
  %v8464 = vadd.f32 0.0, %v8463
  %8465 = vmatmul.f32.gmra.mxu0 %v8221
  %v8466 = vpop.f32.mrf.mxu0
  %v8467 = vadd.f32 0.0, %v8466
  %8468 = vmatmul.f32.gmra.mxu0 %v8226
  %v8469 = vpop.f32.mrf.mxu0
  %v8470 = vadd.f32 0.0, %v8469
  %8471 = vmatmul.f32.gmra.mxu0 %v8231
  %v8472 = vpop.f32.mrf.mxu0
  %v8473 = vadd.f32 0.0, %v8472
  %8474 = vmatmul.f32.gmra.mxu0 %v8236
  %v8475 = vpop.f32.mrf.mxu0
  %v8476 = vadd.f32 0.0, %v8475
  %8477 = vmatmul.f32.gmra.mxu0 %v8241
  %v8478 = vpop.f32.mrf.mxu0
  %v8479 = vadd.f32 0.0, %v8478
  %8480 = vmatmul.f32.gmra.mxu0 %v8246
  %v8481 = vpop.f32.mrf.mxu0
  %v8482 = vadd.f32 0.0, %v8481
  %8483 = vmatmul.f32.gmra.mxu0 %v8251
  %v8484 = vpop.f32.mrf.mxu0
  %v8485 = vadd.f32 0.0, %v8484
  %8486 = vmatmul.f32.gmra.mxu0 %v8256
  %v8487 = vpop.f32.mrf.mxu0
  %v8488 = vadd.f32 0.0, %v8487
  %8489 = vmatmul.f32.gmra.mxu0 %v8261
  %v8490 = vpop.f32.mrf.mxu0
  %v8491 = vadd.f32 0.0, %v8490
  %8492 = vmatmul.f32.gmra.mxu0 %v8266
  %v8493 = vpop.f32.mrf.mxu0
  %v8494 = vadd.f32 0.0, %v8493
  %8495 = vmatmul.f32.gmra.mxu0 %v8271
  %v8496 = vpop.f32.mrf.mxu0
  %v8497 = vadd.f32 0.0, %v8496
  %8498 = vmatmul.f32.gmra.mxu0 %v8276
  %v8499 = vpop.f32.mrf.mxu0
  %v8500 = vadd.f32 0.0, %v8499
  %8501 = vmatmul.f32.gmra.mxu0 %v8281
  %v8502 = vpop.f32.mrf.mxu0
  %v8503 = vadd.f32 0.0, %v8502
  %8504 = vmatmul.f32.gmra.mxu0 %v8286
  %v8505 = vpop.f32.mrf.mxu0
  %v8506 = vadd.f32 0.0, %v8505
  %8507 = vmatmul.f32.gmra.mxu0 %v8291
  %v8508 = vpop.f32.mrf.mxu0
  %v8509 = vadd.f32 0.0, %v8508
  %8510 = vmatmul.f32.gmra.mxu0 %v8296
  %v8511 = vpop.f32.mrf.mxu0
  %v8512 = vadd.f32 0.0, %v8511
  %8513 = vmatmul.f32.gmra.mxu0 %v8301
  %v8514 = vpop.f32.mrf.mxu0
  %v8515 = vadd.f32 0.0, %v8514
  %8516 = vmatmul.f32.gmra.mxu0 %v8306
  %v8517 = vpop.f32.mrf.mxu0
  %v8518 = vadd.f32 0.0, %v8517
  %8519 = vdwg.mxu0
  %8520 = vmatpush.msra.mxu0 %v8110
  %8521 = vmatpush.msra.mxu0 %v8109
  %8522 = vmatpush.msra.mxu0 %v8108
  %8523 = vmatpush.msra.mxu0 %v8107
  %8524 = vmatpush.msra.mxu0 %v8106
  %8525 = vmatpush.msra.mxu0 %v8105
  %8526 = vmatpush.msra.mxu0 %v8104
  %8527 = vmatpush.msra.mxu0 %v8103
  %8528 = vmatpush.msra.mxu0 %v8102
  %8529 = vmatpush.msra.mxu0 %v8101
  %8530 = vmatpush.msra.mxu0 %v8100
  %8531 = vmatpush.msra.mxu0 %v8099
  %8532 = vmatpush.msra.mxu0 %v8098
  %8533 = vmatpush.msra.mxu0 %v8097
  %8534 = vmatpush.msra.mxu0 %v8096
  %8535 = vmatpush.msra.mxu0 %v8095
  %8536 = vmatmul.f32.gmra.mxu0 %v8152
  %v8537 = vpop.f32.mrf.mxu0
  %v8538 = vadd.f32 %v8425, %v8537
  %8539 = vmatmul.f32.gmra.mxu0 %v8157
  %v8540 = vpop.f32.mrf.mxu0
  %v8541 = vadd.f32 %v8428, %v8540
  %8542 = vmatmul.f32.gmra.mxu0 %v8162
  %v8543 = vpop.f32.mrf.mxu0
  %v8544 = vadd.f32 %v8431, %v8543
  %8545 = vmatmul.f32.gmra.mxu0 %v8167
  %v8546 = vpop.f32.mrf.mxu0
  %v8547 = vadd.f32 %v8434, %v8546
  %8548 = vmatmul.f32.gmra.mxu0 %v8172
  %v8549 = vpop.f32.mrf.mxu0
  %v8550 = vadd.f32 %v8437, %v8549
  %8551 = vmatmul.f32.gmra.mxu0 %v8177
  %v8552 = vpop.f32.mrf.mxu0
  %v8553 = vadd.f32 %v8440, %v8552
  %8554 = vmatmul.f32.gmra.mxu0 %v8182
  %v8555 = vpop.f32.mrf.mxu0
  %v8556 = vadd.f32 %v8443, %v8555
  %8557 = vmatmul.f32.gmra.mxu0 %v8187
  %v8558 = vpop.f32.mrf.mxu0
  %v8559 = vadd.f32 %v8446, %v8558
  %8560 = vmatmul.f32.gmra.mxu0 %v8192
  %v8561 = vpop.f32.mrf.mxu0
  %v8562 = vadd.f32 %v8449, %v8561
  %8563 = vmatmul.f32.gmra.mxu0 %v8197
  %v8564 = vpop.f32.mrf.mxu0
  %v8565 = vadd.f32 %v8452, %v8564
  %8566 = vmatmul.f32.gmra.mxu0 %v8202
  %v8567 = vpop.f32.mrf.mxu0
  %v8568 = vadd.f32 %v8455, %v8567
  %8569 = vmatmul.f32.gmra.mxu0 %v8207
  %v8570 = vpop.f32.mrf.mxu0
  %v8571 = vadd.f32 %v8458, %v8570
  %8572 = vmatmul.f32.gmra.mxu0 %v8212
  %v8573 = vpop.f32.mrf.mxu0
  %v8574 = vadd.f32 %v8461, %v8573
  %8575 = vmatmul.f32.gmra.mxu0 %v8217
  %v8576 = vpop.f32.mrf.mxu0
  %v8577 = vadd.f32 %v8464, %v8576
  %8578 = vmatmul.f32.gmra.mxu0 %v8222
  %v8579 = vpop.f32.mrf.mxu0
  %v8580 = vadd.f32 %v8467, %v8579
  %8581 = vmatmul.f32.gmra.mxu0 %v8227
  %v8582 = vpop.f32.mrf.mxu0
  %v8583 = vadd.f32 %v8470, %v8582
  %8584 = vmatmul.f32.gmra.mxu0 %v8232
  %v8585 = vpop.f32.mrf.mxu0
  %v8586 = vadd.f32 %v8473, %v8585
  %8587 = vmatmul.f32.gmra.mxu0 %v8237
  %v8588 = vpop.f32.mrf.mxu0
  %v8589 = vadd.f32 %v8476, %v8588
  %8590 = vmatmul.f32.gmra.mxu0 %v8242
  %v8591 = vpop.f32.mrf.mxu0
  %v8592 = vadd.f32 %v8479, %v8591
  %8593 = vmatmul.f32.gmra.mxu0 %v8247
  %v8594 = vpop.f32.mrf.mxu0
  %v8595 = vadd.f32 %v8482, %v8594
  %8596 = vmatmul.f32.gmra.mxu0 %v8252
  %v8597 = vpop.f32.mrf.mxu0
  %v8598 = vadd.f32 %v8485, %v8597
  %8599 = vmatmul.f32.gmra.mxu0 %v8257
  %v8600 = vpop.f32.mrf.mxu0
  %v8601 = vadd.f32 %v8488, %v8600
  %8602 = vmatmul.f32.gmra.mxu0 %v8262
  %v8603 = vpop.f32.mrf.mxu0
  %v8604 = vadd.f32 %v8491, %v8603
  %8605 = vmatmul.f32.gmra.mxu0 %v8267
  %v8606 = vpop.f32.mrf.mxu0
  %v8607 = vadd.f32 %v8494, %v8606
  %8608 = vmatmul.f32.gmra.mxu0 %v8272
  %v8609 = vpop.f32.mrf.mxu0
  %v8610 = vadd.f32 %v8497, %v8609
  %8611 = vmatmul.f32.gmra.mxu0 %v8277
  %v8612 = vpop.f32.mrf.mxu0
  %v8613 = vadd.f32 %v8500, %v8612
  %8614 = vmatmul.f32.gmra.mxu0 %v8282
  %v8615 = vpop.f32.mrf.mxu0
  %v8616 = vadd.f32 %v8503, %v8615
  %8617 = vmatmul.f32.gmra.mxu0 %v8287
  %v8618 = vpop.f32.mrf.mxu0
  %v8619 = vadd.f32 %v8506, %v8618
  %8620 = vmatmul.f32.gmra.mxu0 %v8292
  %v8621 = vpop.f32.mrf.mxu0
  %v8622 = vadd.f32 %v8509, %v8621
  %8623 = vmatmul.f32.gmra.mxu0 %v8297
  %v8624 = vpop.f32.mrf.mxu0
  %v8625 = vadd.f32 %v8512, %v8624
  %8626 = vmatmul.f32.gmra.mxu0 %v8302
  %v8627 = vpop.f32.mrf.mxu0
  %v8628 = vadd.f32 %v8515, %v8627
  %8629 = vmatmul.f32.gmra.mxu0 %v8307
  %v8630 = vpop.f32.mrf.mxu0
  %v8631 = vadd.f32 %v8518, %v8630
  %8632 = vdwg.mxu0
  %8633 = vmatpush.msra.mxu0 %v8126
  %8634 = vmatpush.msra.mxu0 %v8125
  %8635 = vmatpush.msra.mxu0 %v8124
  %8636 = vmatpush.msra.mxu0 %v8123
  %8637 = vmatpush.msra.mxu0 %v8122
  %8638 = vmatpush.msra.mxu0 %v8121
  %8639 = vmatpush.msra.mxu0 %v8120
  %8640 = vmatpush.msra.mxu0 %v8119
  %8641 = vmatpush.msra.mxu0 %v8118
  %8642 = vmatpush.msra.mxu0 %v8117
  %8643 = vmatpush.msra.mxu0 %v8116
  %8644 = vmatpush.msra.mxu0 %v8115
  %8645 = vmatpush.msra.mxu0 %v8114
  %8646 = vmatpush.msra.mxu0 %v8113
  %8647 = vmatpush.msra.mxu0 %v8112
  %8648 = vmatpush.msra.mxu0 %v8111
  %8649 = vmatmul.f32.gmra.mxu0 %v8153
  %v8650 = vpop.f32.mrf.mxu0
  %v8651 = vadd.f32 %v8538, %v8650
  %8652 = vmatmul.f32.gmra.mxu0 %v8158
  %v8653 = vpop.f32.mrf.mxu0
  %v8654 = vadd.f32 %v8541, %v8653
  %8655 = vmatmul.f32.gmra.mxu0 %v8163
  %v8656 = vpop.f32.mrf.mxu0
  %v8657 = vadd.f32 %v8544, %v8656
  %8658 = vmatmul.f32.gmra.mxu0 %v8168
  %v8659 = vpop.f32.mrf.mxu0
  %v8660 = vadd.f32 %v8547, %v8659
  %8661 = vmatmul.f32.gmra.mxu0 %v8173
  %v8662 = vpop.f32.mrf.mxu0
  %v8663 = vadd.f32 %v8550, %v8662
  %8664 = vmatmul.f32.gmra.mxu0 %v8178
  %v8665 = vpop.f32.mrf.mxu0
  %v8666 = vadd.f32 %v8553, %v8665
  %8667 = vmatmul.f32.gmra.mxu0 %v8183
  %v8668 = vpop.f32.mrf.mxu0
  %v8669 = vadd.f32 %v8556, %v8668
  %8670 = vmatmul.f32.gmra.mxu0 %v8188
  %v8671 = vpop.f32.mrf.mxu0
  %v8672 = vadd.f32 %v8559, %v8671
  %8673 = vmatmul.f32.gmra.mxu0 %v8193
  %v8674 = vpop.f32.mrf.mxu0
  %v8675 = vadd.f32 %v8562, %v8674
  %8676 = vmatmul.f32.gmra.mxu0 %v8198
  %v8677 = vpop.f32.mrf.mxu0
  %v8678 = vadd.f32 %v8565, %v8677
  %8679 = vmatmul.f32.gmra.mxu0 %v8203
  %v8680 = vpop.f32.mrf.mxu0
  %v8681 = vadd.f32 %v8568, %v8680
  %8682 = vmatmul.f32.gmra.mxu0 %v8208
  %v8683 = vpop.f32.mrf.mxu0
  %v8684 = vadd.f32 %v8571, %v8683
  %8685 = vmatmul.f32.gmra.mxu0 %v8213
  %v8686 = vpop.f32.mrf.mxu0
  %v8687 = vadd.f32 %v8574, %v8686
  %8688 = vmatmul.f32.gmra.mxu0 %v8218
  %v8689 = vpop.f32.mrf.mxu0
  %v8690 = vadd.f32 %v8577, %v8689
  %8691 = vmatmul.f32.gmra.mxu0 %v8223
  %v8692 = vpop.f32.mrf.mxu0
  %v8693 = vadd.f32 %v8580, %v8692
  %8694 = vmatmul.f32.gmra.mxu0 %v8228
  %v8695 = vpop.f32.mrf.mxu0
  %v8696 = vadd.f32 %v8583, %v8695
  %8697 = vmatmul.f32.gmra.mxu0 %v8233
  %v8698 = vpop.f32.mrf.mxu0
  %v8699 = vadd.f32 %v8586, %v8698
  %8700 = vmatmul.f32.gmra.mxu0 %v8238
  %v8701 = vpop.f32.mrf.mxu0
  %v8702 = vadd.f32 %v8589, %v8701
  %8703 = vmatmul.f32.gmra.mxu0 %v8243
  %v8704 = vpop.f32.mrf.mxu0
  %v8705 = vadd.f32 %v8592, %v8704
  %8706 = vmatmul.f32.gmra.mxu0 %v8248
  %v8707 = vpop.f32.mrf.mxu0
  %v8708 = vadd.f32 %v8595, %v8707
  %8709 = vmatmul.f32.gmra.mxu0 %v8253
  %v8710 = vpop.f32.mrf.mxu0
  %v8711 = vadd.f32 %v8598, %v8710
  %8712 = vmatmul.f32.gmra.mxu0 %v8258
  %v8713 = vpop.f32.mrf.mxu0
  %v8714 = vadd.f32 %v8601, %v8713
  %8715 = vmatmul.f32.gmra.mxu0 %v8263
  %v8716 = vpop.f32.mrf.mxu0
  %v8717 = vadd.f32 %v8604, %v8716
  %8718 = vmatmul.f32.gmra.mxu0 %v8268
  %v8719 = vpop.f32.mrf.mxu0
  %v8720 = vadd.f32 %v8607, %v8719
  %8721 = vmatmul.f32.gmra.mxu0 %v8273
  %v8722 = vpop.f32.mrf.mxu0
  %v8723 = vadd.f32 %v8610, %v8722
  %8724 = vmatmul.f32.gmra.mxu0 %v8278
  %v8725 = vpop.f32.mrf.mxu0
  %v8726 = vadd.f32 %v8613, %v8725
  %8727 = vmatmul.f32.gmra.mxu0 %v8283
  %v8728 = vpop.f32.mrf.mxu0
  %v8729 = vadd.f32 %v8616, %v8728
  %8730 = vmatmul.f32.gmra.mxu0 %v8288
  %v8731 = vpop.f32.mrf.mxu0
  %v8732 = vadd.f32 %v8619, %v8731
  %8733 = vmatmul.f32.gmra.mxu0 %v8293
  %v8734 = vpop.f32.mrf.mxu0
  %v8735 = vadd.f32 %v8622, %v8734
  %8736 = vmatmul.f32.gmra.mxu0 %v8298
  %v8737 = vpop.f32.mrf.mxu0
  %v8738 = vadd.f32 %v8625, %v8737
  %8739 = vmatmul.f32.gmra.mxu0 %v8303
  %v8740 = vpop.f32.mrf.mxu0
  %v8741 = vadd.f32 %v8628, %v8740
  %8742 = vmatmul.f32.gmra.mxu0 %v8308
  %v8743 = vpop.f32.mrf.mxu0
  %v8744 = vadd.f32 %v8631, %v8743
  %8745 = vdwg.mxu0
  %8746 = vmatpush.msra.mxu0 %v8142
  %8747 = vmatpush.msra.mxu0 %v8141
  %8748 = vmatpush.msra.mxu0 %v8140
  %8749 = vmatpush.msra.mxu0 %v8139
  %8750 = vmatpush.msra.mxu0 %v8138
  %8751 = vmatpush.msra.mxu0 %v8137
  %8752 = vmatpush.msra.mxu0 %v8136
  %8753 = vmatpush.msra.mxu0 %v8135
  %8754 = vmatpush.msra.mxu0 %v8134
  %8755 = vmatpush.msra.mxu0 %v8133
  %8756 = vmatpush.msra.mxu0 %v8132
  %8757 = vmatpush.msra.mxu0 %v8131
  %8758 = vmatpush.msra.mxu0 %v8130
  %8759 = vmatpush.msra.mxu0 %v8129
  %8760 = vmatpush.msra.mxu0 %v8128
  %8761 = vmatpush.msra.mxu0 %v8127
  %8762 = vmatmul.f32.gmra.mxu0 %v8154
  %v8763 = vpop.f32.mrf.mxu0
  %v8764 = vadd.f32 %v8651, %v8763
  %8765 = vmatmul.f32.gmra.mxu0 %v8159
  %v8766 = vpop.f32.mrf.mxu0
  %v8767 = vadd.f32 %v8654, %v8766
  %8768 = vmatmul.f32.gmra.mxu0 %v8164
  %v8769 = vpop.f32.mrf.mxu0
  %v8770 = vadd.f32 %v8657, %v8769
  %8771 = vmatmul.f32.gmra.mxu0 %v8169
  %v8772 = vpop.f32.mrf.mxu0
  %v8773 = vadd.f32 %v8660, %v8772
  %8774 = vmatmul.f32.gmra.mxu0 %v8174
  %v8775 = vpop.f32.mrf.mxu0
  %v8776 = vadd.f32 %v8663, %v8775
  %8777 = vmatmul.f32.gmra.mxu0 %v8179
  %v8778 = vpop.f32.mrf.mxu0
  %v8779 = vadd.f32 %v8666, %v8778
  %8780 = vmatmul.f32.gmra.mxu0 %v8184
  %v8781 = vpop.f32.mrf.mxu0
  %v8782 = vadd.f32 %v8669, %v8781
  %8783 = vmatmul.f32.gmra.mxu0 %v8189
  %v8784 = vpop.f32.mrf.mxu0
  %v8785 = vadd.f32 %v8672, %v8784
  %8786 = vmatmul.f32.gmra.mxu0 %v8194
  %v8787 = vpop.f32.mrf.mxu0
  %v8788 = vadd.f32 %v8675, %v8787
  %8789 = vmatmul.f32.gmra.mxu0 %v8199
  %v8790 = vpop.f32.mrf.mxu0
  %v8791 = vadd.f32 %v8678, %v8790
  %8792 = vmatmul.f32.gmra.mxu0 %v8204
  %v8793 = vpop.f32.mrf.mxu0
  %v8794 = vadd.f32 %v8681, %v8793
  %8795 = vmatmul.f32.gmra.mxu0 %v8209
  %v8796 = vpop.f32.mrf.mxu0
  %v8797 = vadd.f32 %v8684, %v8796
  %8798 = vmatmul.f32.gmra.mxu0 %v8214
  %v8799 = vpop.f32.mrf.mxu0
  %v8800 = vadd.f32 %v8687, %v8799
  %8801 = vmatmul.f32.gmra.mxu0 %v8219
  %v8802 = vpop.f32.mrf.mxu0
  %v8803 = vadd.f32 %v8690, %v8802
  %8804 = vmatmul.f32.gmra.mxu0 %v8224
  %v8805 = vpop.f32.mrf.mxu0
  %v8806 = vadd.f32 %v8693, %v8805
  %8807 = vmatmul.f32.gmra.mxu0 %v8229
  %v8808 = vpop.f32.mrf.mxu0
  %v8809 = vadd.f32 %v8696, %v8808
  %8810 = vmatmul.f32.gmra.mxu0 %v8234
  %v8811 = vpop.f32.mrf.mxu0
  %v8812 = vadd.f32 %v8699, %v8811
  %8813 = vmatmul.f32.gmra.mxu0 %v8239
  %v8814 = vpop.f32.mrf.mxu0
  %v8815 = vadd.f32 %v8702, %v8814
  %8816 = vmatmul.f32.gmra.mxu0 %v8244
  %v8817 = vpop.f32.mrf.mxu0
  %v8818 = vadd.f32 %v8705, %v8817
  %8819 = vmatmul.f32.gmra.mxu0 %v8249
  %v8820 = vpop.f32.mrf.mxu0
  %v8821 = vadd.f32 %v8708, %v8820
  %8822 = vmatmul.f32.gmra.mxu0 %v8254
  %v8823 = vpop.f32.mrf.mxu0
  %v8824 = vadd.f32 %v8711, %v8823
  %8825 = vmatmul.f32.gmra.mxu0 %v8259
  %v8826 = vpop.f32.mrf.mxu0
  %v8827 = vadd.f32 %v8714, %v8826
  %8828 = vmatmul.f32.gmra.mxu0 %v8264
  %v8829 = vpop.f32.mrf.mxu0
  %v8830 = vadd.f32 %v8717, %v8829
  %8831 = vmatmul.f32.gmra.mxu0 %v8269
  %v8832 = vpop.f32.mrf.mxu0
  %v8833 = vadd.f32 %v8720, %v8832
  %8834 = vmatmul.f32.gmra.mxu0 %v8274
  %v8835 = vpop.f32.mrf.mxu0
  %v8836 = vadd.f32 %v8723, %v8835
  %8837 = vmatmul.f32.gmra.mxu0 %v8279
  %v8838 = vpop.f32.mrf.mxu0
  %v8839 = vadd.f32 %v8726, %v8838
  %8840 = vmatmul.f32.gmra.mxu0 %v8284
  %v8841 = vpop.f32.mrf.mxu0
  %v8842 = vadd.f32 %v8729, %v8841
  %8843 = vmatmul.f32.gmra.mxu0 %v8289
  %v8844 = vpop.f32.mrf.mxu0
  %v8845 = vadd.f32 %v8732, %v8844
  %8846 = vmatmul.f32.gmra.mxu0 %v8294
  %v8847 = vpop.f32.mrf.mxu0
  %v8848 = vadd.f32 %v8735, %v8847
  %8849 = vmatmul.f32.gmra.mxu0 %v8299
  %v8850 = vpop.f32.mrf.mxu0
  %v8851 = vadd.f32 %v8738, %v8850
  %8852 = vmatmul.f32.gmra.mxu0 %v8304
  %v8853 = vpop.f32.mrf.mxu0
  %v8854 = vadd.f32 %v8741, %v8853
  %8855 = vmatmul.f32.gmra.mxu0 %v8309
  %v8856 = vpop.f32.mrf.mxu0
  %v8857 = vadd.f32 %v8744, %v8856
  %8858 = vdwg.mxu0
  %8859 = vmatpush.msra.mxu0 0.0
  %8860 = vmatpush.msra.mxu0 0.0
  %8861 = vmatpush.msra.mxu0 0.0
  %8862 = vmatpush.msra.mxu0 0.0
  %8863 = vmatpush.msra.mxu0 0.0
  %8864 = vmatpush.msra.mxu0 0.0
  %8865 = vmatpush.msra.mxu0 0.0
  %8866 = vmatpush.msra.mxu0 0.0
  %8867 = vmatpush.msra.mxu0 %v8150
  %8868 = vmatpush.msra.mxu0 %v8149
  %8869 = vmatpush.msra.mxu0 %v8148
  %8870 = vmatpush.msra.mxu0 %v8147
  %8871 = vmatpush.msra.mxu0 %v8146
  %8872 = vmatpush.msra.mxu0 %v8145
  %8873 = vmatpush.msra.mxu0 %v8144
  %8874 = vmatpush.msra.mxu0 %v8143
  %8875 = vmatmul.f32.gmra.mxu0 %v8312
  %v8876 = vpop.f32.mrf.mxu0
  %v8877 = vadd.f32 %v8764, %v8876
  %8878 = vmatmul.f32.gmra.mxu0 %v8315
  %v8879 = vpop.f32.mrf.mxu0
  %v8880 = vadd.f32 %v8767, %v8879
  %8881 = vmatmul.f32.gmra.mxu0 %v8318
  %v8882 = vpop.f32.mrf.mxu0
  %v8883 = vadd.f32 %v8770, %v8882
  %8884 = vmatmul.f32.gmra.mxu0 %v8321
  %v8885 = vpop.f32.mrf.mxu0
  %v8886 = vadd.f32 %v8773, %v8885
  %8887 = vmatmul.f32.gmra.mxu0 %v8324
  %v8888 = vpop.f32.mrf.mxu0
  %v8889 = vadd.f32 %v8776, %v8888
  %8890 = vmatmul.f32.gmra.mxu0 %v8327
  %v8891 = vpop.f32.mrf.mxu0
  %v8892 = vadd.f32 %v8779, %v8891
  %8893 = vmatmul.f32.gmra.mxu0 %v8330
  %v8894 = vpop.f32.mrf.mxu0
  %v8895 = vadd.f32 %v8782, %v8894
  %8896 = vmatmul.f32.gmra.mxu0 %v8333
  %v8897 = vpop.f32.mrf.mxu0
  %v8898 = vadd.f32 %v8785, %v8897
  %8899 = vmatmul.f32.gmra.mxu0 %v8336
  %v8900 = vpop.f32.mrf.mxu0
  %v8901 = vadd.f32 %v8788, %v8900
  %8902 = vmatmul.f32.gmra.mxu0 %v8339
  %v8903 = vpop.f32.mrf.mxu0
  %v8904 = vadd.f32 %v8791, %v8903
  %8905 = vmatmul.f32.gmra.mxu0 %v8342
  %v8906 = vpop.f32.mrf.mxu0
  %v8907 = vadd.f32 %v8794, %v8906
  %8908 = vmatmul.f32.gmra.mxu0 %v8345
  %v8909 = vpop.f32.mrf.mxu0
  %v8910 = vadd.f32 %v8797, %v8909
  %8911 = vmatmul.f32.gmra.mxu0 %v8348
  %v8912 = vpop.f32.mrf.mxu0
  %v8913 = vadd.f32 %v8800, %v8912
  %8914 = vmatmul.f32.gmra.mxu0 %v8351
  %v8915 = vpop.f32.mrf.mxu0
  %v8916 = vadd.f32 %v8803, %v8915
  %8917 = vmatmul.f32.gmra.mxu0 %v8354
  %v8918 = vpop.f32.mrf.mxu0
  %v8919 = vadd.f32 %v8806, %v8918
  %8920 = vmatmul.f32.gmra.mxu0 %v8357
  %v8921 = vpop.f32.mrf.mxu0
  %v8922 = vadd.f32 %v8809, %v8921
  %8923 = vmatmul.f32.gmra.mxu0 %v8360
  %v8924 = vpop.f32.mrf.mxu0
  %v8925 = vadd.f32 %v8812, %v8924
  %8926 = vmatmul.f32.gmra.mxu0 %v8363
  %v8927 = vpop.f32.mrf.mxu0
  %v8928 = vadd.f32 %v8815, %v8927
  %8929 = vmatmul.f32.gmra.mxu0 %v8366
  %v8930 = vpop.f32.mrf.mxu0
  %v8931 = vadd.f32 %v8818, %v8930
  %8932 = vmatmul.f32.gmra.mxu0 %v8369
  %v8933 = vpop.f32.mrf.mxu0
  %v8934 = vadd.f32 %v8821, %v8933
  %8935 = vmatmul.f32.gmra.mxu0 %v8372
  %v8936 = vpop.f32.mrf.mxu0
  %v8937 = vadd.f32 %v8824, %v8936
  %8938 = vmatmul.f32.gmra.mxu0 %v8375
  %v8939 = vpop.f32.mrf.mxu0
  %v8940 = vadd.f32 %v8827, %v8939
  %8941 = vmatmul.f32.gmra.mxu0 %v8378
  %v8942 = vpop.f32.mrf.mxu0
  %v8943 = vadd.f32 %v8830, %v8942
  %8944 = vmatmul.f32.gmra.mxu0 %v8381
  %v8945 = vpop.f32.mrf.mxu0
  %v8946 = vadd.f32 %v8833, %v8945
  %8947 = vmatmul.f32.gmra.mxu0 %v8384
  %v8948 = vpop.f32.mrf.mxu0
  %v8949 = vadd.f32 %v8836, %v8948
  %8950 = vmatmul.f32.gmra.mxu0 %v8387
  %v8951 = vpop.f32.mrf.mxu0
  %v8952 = vadd.f32 %v8839, %v8951
  %8953 = vmatmul.f32.gmra.mxu0 %v8390
  %v8954 = vpop.f32.mrf.mxu0
  %v8955 = vadd.f32 %v8842, %v8954
  %8956 = vmatmul.f32.gmra.mxu0 %v8393
  %v8957 = vpop.f32.mrf.mxu0
  %v8958 = vadd.f32 %v8845, %v8957
  %8959 = vmatmul.f32.gmra.mxu0 %v8396
  %v8960 = vpop.f32.mrf.mxu0
  %v8961 = vadd.f32 %v8848, %v8960
  %8962 = vmatmul.f32.gmra.mxu0 %v8399
  %v8963 = vpop.f32.mrf.mxu0
  %v8964 = vadd.f32 %v8851, %v8963
  %8965 = vmatmul.f32.gmra.mxu0 %v8402
  %v8966 = vpop.f32.mrf.mxu0
  %v8967 = vadd.f32 %v8854, %v8966
  %8968 = vmatmul.f32.gmra.mxu0 %v8405
  %v8969 = vpop.f32.mrf.mxu0
  %v8970 = vadd.f32 %v8857, %v8969
  %8971 = vdwg.mxu0
  %v8972 = vmax.f32 %v8877, %v8925
  %v8973 = vmax.f32 %v8880, %v8928
  %v8974 = vmax.f32 %v8883, %v8931
  %v8975 = vmax.f32 %v8886, %v8934
  %v8976 = vmax.f32 %v8889, %v8937
  %v8977 = vmax.f32 %v8892, %v8940
  %v8978 = vmax.f32 %v8895, %v8943
  %v8979 = vmax.f32 %v8898, %v8946
  %v8980 = vmax.f32 %v8901, %v8949
  %v8981 = vmax.f32 %v8904, %v8952
  %v8982 = vmax.f32 %v8907, %v8955
  %v8983 = vmax.f32 %v8910, %v8958
  %v8984 = vmax.f32 %v8913, %v8961
  %v8985 = vmax.f32 %v8916, %v8964
  %v8986 = vmax.f32 %v8919, %v8967
  %v8987 = vmax.f32 %v8922, %v8970
  %v8988 = vmax.f32 %v8972, %v8980
  %v8989 = vmax.f32 %v8973, %v8981
  %v8990 = vmax.f32 %v8974, %v8982
  %v8991 = vmax.f32 %v8975, %v8983
  %v8992 = vmax.f32 %v8976, %v8984
  %v8993 = vmax.f32 %v8977, %v8985
  %v8994 = vmax.f32 %v8978, %v8986
  %v8995 = vmax.f32 %v8979, %v8987
  %v8996 = vld [vmem:[%s4] sm:$0xff]
  %v8997 = vld [vmem:[%s4 + $0x8] sm:$0xff]
  %v8998 = vld [vmem:[%s4 + $0x10] sm:$0xff]
  %v8999 = vld [vmem:[%s4 + $0x18] sm:$0xff]
  %v9000 = vld [vmem:[%s4 + $0x20] sm:$0xff]
  %v9001 = vld [vmem:[%s4 + $0x28] sm:$0xff]
  %v9002 = vld [vmem:[%s4 + $0x30] sm:$0xff]
  %v9003 = vld [vmem:[%s4 + $0x38] sm:$0xff]
  %v9004 = vadd.f32 %v8988, %v8996
  %v9005 = vadd.f32 %v8989, %v8997
  %v9006 = vadd.f32 %v8990, %v8998
  %v9007 = vadd.f32 %v8991, %v8999
  %v9008 = vadd.f32 %v8992, %v9000
  %v9009 = vadd.f32 %v8993, %v9001
  %v9010 = vadd.f32 %v8994, %v9002
  %v9011 = vadd.f32 %v8995, %v9003
  %v9012 = vmax.f32 %v9004, 0.0
  %v9013 = vmax.f32 %v9005, 0.0
  %v9014 = vmax.f32 %v9006, 0.0
  %v9015 = vmax.f32 %v9007, 0.0
  %v9016 = vmax.f32 %v9008, 0.0
  %v9017 = vmax.f32 %v9009, 0.0
  %v9018 = vmax.f32 %v9010, 0.0
  %v9019 = vmax.f32 %v9011, 0.0
  %9020 = vst [vmem:[#allocation3] sm:$0xff] %v9012
  %9021 = vst [vmem:[#allocation3 + $0x8] sm:$0xff] %v9013
  %9022 = vst [vmem:[#allocation3 + $0x10] sm:$0xff] %v9014
  %9023 = vst [vmem:[#allocation3 + $0x18] sm:$0xff] %v9015
  %9024 = vst [vmem:[#allocation3 + $0x20] sm:$0xff] %v9016
  %9025 = vst [vmem:[#allocation3 + $0x28] sm:$0xff] %v9017
  %9026 = vst [vmem:[#allocation3 + $0x30] sm:$0xff] %v9018
  %9027 = vst [vmem:[#allocation3 + $0x38] sm:$0xff] %v9019
  %v9028 = vld [vmem:[#allocation2 + $0xc0] sm:$0xff]
  %v9029 = vld [vmem:[#allocation2 + $0xc8] sm:$0xff]
  %v9030 = vld [vmem:[#allocation2 + $0xd0] sm:$0xff]
  %v9031 = vld [vmem:[#allocation2 + $0xd8] sm:$0xff]
  %v9032 = vld [vmem:[#allocation2 + $0xe0] sm:$0xff]
  %v9033 = vld [vmem:[#allocation2 + $0xe8] sm:$0xff]
  %v9034 = vld [vmem:[#allocation2 + $0xf0] sm:$0xff]
  %v9035 = vld [vmem:[#allocation2 + $0xf8] sm:$0xff]
  %v9036 = vld [vmem:[#allocation2 + $0x100] sm:$0xff]
  %v9037 = vld [vmem:[#allocation2 + $0x108] sm:$0xff]
  %v9038 = vld [vmem:[#allocation2 + $0x110] sm:$0xff]
  %v9039 = vld [vmem:[#allocation2 + $0x118] sm:$0xff]
  %v9040 = vld [vmem:[#allocation2 + $0x120] sm:$0xff]
  %v9041 = vld [vmem:[#allocation2 + $0x128] sm:$0xff]
  %v9042 = vld [vmem:[#allocation2 + $0x130] sm:$0xff]
  %v9043 = vld [vmem:[#allocation2 + $0x138] sm:$0xff]
  %v9044 = vld [vmem:[#allocation2 + $0x140] sm:$0xff]
  %v9045 = vld [vmem:[#allocation2 + $0x148] sm:$0xff]
  %v9046 = vld [vmem:[#allocation2 + $0x150] sm:$0xff]
  %v9047 = vld [vmem:[#allocation2 + $0x158] sm:$0xff]
  %v9048 = vld [vmem:[#allocation2 + $0x160] sm:$0xff]
  %v9049 = vld [vmem:[#allocation2 + $0x168] sm:$0xff]
  %v9050 = vld [vmem:[#allocation2 + $0x170] sm:$0xff]
  %v9051 = vld [vmem:[#allocation2 + $0x178] sm:$0xff]
  %v9052 = vld [vmem:[#allocation2 + $0x180] sm:$0xff]
  %v9053 = vld [vmem:[#allocation2 + $0x188] sm:$0xff]
  %v9054 = vld [vmem:[#allocation2 + $0x190] sm:$0xff]
  %v9055 = vld [vmem:[#allocation2 + $0x198] sm:$0xff]
  %v9056 = vld [vmem:[#allocation2 + $0x1a0] sm:$0xff]
  %v9057 = vld [vmem:[#allocation2 + $0x1a8] sm:$0xff]
  %v9058 = vld [vmem:[#allocation2 + $0x1b0] sm:$0xff]
  %v9059 = vld [vmem:[#allocation2 + $0x1b8] sm:$0xff]
  %v9060 = vld [vmem:[#allocation2 + $0x1c0] sm:$0xff]
  %v9061 = vld [vmem:[#allocation2 + $0x1c8] sm:$0xff]
  %v9062 = vld [vmem:[#allocation2 + $0x1d0] sm:$0xff]
  %v9063 = vld [vmem:[#allocation2 + $0x1d8] sm:$0xff]
  %v9064 = vld [vmem:[#allocation2 + $0x1e0] sm:$0xff]
  %v9065 = vld [vmem:[#allocation2 + $0x1e8] sm:$0xff]
  %v9066 = vld [vmem:[#allocation2 + $0x1f0] sm:$0xff]
  %v9067 = vld [vmem:[#allocation2 + $0x1f8] sm:$0xff]
  %v9068 = vld [vmem:[#allocation2 + $0x200] sm:$0xff]
  %v9069 = vld [vmem:[#allocation2 + $0x208] sm:$0xff]
  %v9070 = vld [vmem:[#allocation2 + $0x210] sm:$0xff]
  %v9071 = vld [vmem:[#allocation2 + $0x218] sm:$0xff]
  %v9072 = vld [vmem:[#allocation2 + $0x220] sm:$0xff]
  %v9073 = vld [vmem:[#allocation2 + $0x228] sm:$0xff]
  %v9074 = vld [vmem:[#allocation2 + $0x230] sm:$0xff]
  %v9075 = vld [vmem:[#allocation2 + $0x238] sm:$0xff]
  %v9076 = vld [vmem:[#allocation2 + $0x240] sm:$0xff]
  %v9077 = vld [vmem:[#allocation2 + $0x248] sm:$0xff]
  %v9078 = vld [vmem:[#allocation2 + $0x250] sm:$0xff]
  %v9079 = vld [vmem:[#allocation2 + $0x258] sm:$0xff]
  %v9080 = vld [vmem:[#allocation2 + $0x260] sm:$0xff]
  %v9081 = vld [vmem:[#allocation2 + $0x268] sm:$0xff]
  %v9082 = vld [vmem:[#allocation2 + $0x270] sm:$0xff]
  %v9083 = vld [vmem:[#allocation2 + $0x278] sm:$0xff]
  %v9084 = vld [vmem:[#allocation2 + $0x280] sm:$0xff]
  %v9085 = vld [vmem:[#allocation2 + $0x288] sm:$0xff]
  %v9086 = vld [vmem:[#allocation2 + $0x290] sm:$0xff]
  %v9087 = vld [vmem:[#allocation2 + $0x298] sm:$0xff]
  %v9088 = vld [vmem:[#allocation2 + $0x2a0] sm:$0xff]
  %v9089 = vld [vmem:[#allocation2 + $0x2a8] sm:$0xff]
  %v9090 = vld [vmem:[#allocation2 + $0x2b0] sm:$0xff]
  %v9091 = vld [vmem:[#allocation2 + $0x2b8] sm:$0xff]
  %v9092 = vld [vmem:[#allocation2 + $0x2c0] sm:$0xff]
  %v9093 = vld [vmem:[#allocation2 + $0x2c8] sm:$0xff]
  %v9094 = vld [vmem:[#allocation2 + $0x2d0] sm:$0xff]
  %v9095 = vld [vmem:[#allocation2 + $0x2d8] sm:$0xff]
  %v9096 = vld [vmem:[#allocation2 + $0x2e0] sm:$0xff]
  %v9097 = vld [vmem:[#allocation2 + $0x2e8] sm:$0xff]
  %v9098 = vld [vmem:[#allocation2 + $0x2f0] sm:$0xff]
  %v9099 = vld [vmem:[#allocation2 + $0x2f8] sm:$0xff]
  %v9100 = vld [vmem:[%s3] sm:$0xff]
  %v9101 = vld [vmem:[%s3 + $0x8] sm:$0xff]
  %v9102 = vld [vmem:[%s3 + $0x10] sm:$0xff]
  %v9103 = vld [vmem:[%s3 + $0x18] sm:$0xff]
  %v9104 = vld [vmem:[%s3 + $0x20] sm:$0xff]
  %v9105 = vld [vmem:[%s3 + $0x28] sm:$0xff]
  %v9106 = vld [vmem:[%s3 + $0x30] sm:$0xff]
  %v9107 = vld [vmem:[%s3 + $0x38] sm:$0xff]
  %v9108 = vld [vmem:[%s3 + $0x40] sm:$0xff]
  %v9109 = vld [vmem:[%s3 + $0x48] sm:$0xff]
  %v9110 = vld [vmem:[%s3 + $0x50] sm:$0xff]
  %v9111 = vld [vmem:[%s3 + $0x58] sm:$0xff]
  %v9112 = vld [vmem:[%s3 + $0x60] sm:$0xff]
  %v9113 = vld [vmem:[%s3 + $0x68] sm:$0xff]
  %v9114 = vld [vmem:[%s3 + $0x70] sm:$0xff]
  %v9115 = vld [vmem:[%s3 + $0x78] sm:$0xff]
  %v9116 = vld [vmem:[%s3 + $0x80] sm:$0xff]
  %v9117 = vld [vmem:[%s3 + $0x88] sm:$0xff]
  %v9118 = vld [vmem:[%s3 + $0x90] sm:$0xff]
  %v9119 = vld [vmem:[%s3 + $0x98] sm:$0xff]
  %v9120 = vld [vmem:[%s3 + $0xa0] sm:$0xff]
  %v9121 = vld [vmem:[%s3 + $0xa8] sm:$0xff]
  %v9122 = vld [vmem:[%s3 + $0xb0] sm:$0xff]
  %v9123 = vld [vmem:[%s3 + $0xb8] sm:$0xff]
  %v9124 = vld [vmem:[%s3 + $0xc0] sm:$0xff]
  %v9125 = vld [vmem:[%s3 + $0xc8] sm:$0xff]
  %v9126 = vld [vmem:[%s3 + $0xd0] sm:$0xff]
  %v9127 = vld [vmem:[%s3 + $0xd8] sm:$0xff]
  %v9128 = vld [vmem:[%s3 + $0xe0] sm:$0xff]
  %v9129 = vld [vmem:[%s3 + $0xe8] sm:$0xff]
  %v9130 = vld [vmem:[%s3 + $0xf0] sm:$0xff]
  %v9131 = vld [vmem:[%s3 + $0xf8] sm:$0xff]
  %v9132 = vld [vmem:[%s3 + $0x100] sm:$0xff]
  %v9133 = vld [vmem:[%s3 + $0x108] sm:$0xff]
  %v9134 = vld [vmem:[%s3 + $0x110] sm:$0xff]
  %v9135 = vld [vmem:[%s3 + $0x118] sm:$0xff]
  %v9136 = vld [vmem:[%s3 + $0x120] sm:$0xff]
  %v9137 = vld [vmem:[%s3 + $0x128] sm:$0xff]
  %v9138 = vld [vmem:[%s3 + $0x130] sm:$0xff]
  %v9139 = vld [vmem:[%s3 + $0x138] sm:$0xff]
  %v9140 = vld [vmem:[%s3 + $0x140] sm:$0xff]
  %v9141 = vld [vmem:[%s3 + $0x148] sm:$0xff]
  %v9142 = vld [vmem:[%s3 + $0x150] sm:$0xff]
  %v9143 = vld [vmem:[%s3 + $0x158] sm:$0xff]
  %v9144 = vld [vmem:[%s3 + $0x160] sm:$0xff]
  %v9145 = vld [vmem:[%s3 + $0x168] sm:$0xff]
  %v9146 = vld [vmem:[%s3 + $0x170] sm:$0xff]
  %v9147 = vld [vmem:[%s3 + $0x178] sm:$0xff]
  %v9148 = vld [vmem:[%s3 + $0x180] sm:$0xff]
  %v9149 = vld [vmem:[%s3 + $0x188] sm:$0xff]
  %v9150 = vld [vmem:[%s3 + $0x190] sm:$0xff]
  %v9151 = vld [vmem:[%s3 + $0x198] sm:$0xff]
  %v9152 = vld [vmem:[%s3 + $0x1a0] sm:$0xff]
  %v9153 = vld [vmem:[%s3 + $0x1a8] sm:$0xff]
  %v9154 = vld [vmem:[%s3 + $0x1b0] sm:$0xff]
  %v9155 = vld [vmem:[%s3 + $0x1b8] sm:$0xff]
  %v9156 = vld [vmem:[%s3 + $0x1c0] sm:$0xff]
  %v9157 = vld [vmem:[%s3 + $0x1c8] sm:$0xff]
  %v9158 = vld [vmem:[%s3 + $0x1d0] sm:$0xff]
  %v9159 = vld [vmem:[%s3 + $0x1d8] sm:$0xff]
  %v9160 = vld [vmem:[%s3 + $0x1e0] sm:$0xff]
  %v9161 = vld [vmem:[%s3 + $0x1e8] sm:$0xff]
  %v9162 = vld [vmem:[%s3 + $0x1f0] sm:$0xff]
  %v9163 = vld [vmem:[%s3 + $0x1f8] sm:$0xff]
  %v9164 = vld [vmem:[%s3 + $0x200] sm:$0xff]
  %v9165 = vld [vmem:[%s3 + $0x208] sm:$0xff]
  %v9166 = vld [vmem:[%s3 + $0x210] sm:$0xff]
  %v9167 = vld [vmem:[%s3 + $0x218] sm:$0xff]
  %v9168 = vld [vmem:[%s3 + $0x220] sm:$0xff]
  %v9169 = vld [vmem:[%s3 + $0x228] sm:$0xff]
  %v9170 = vld [vmem:[%s3 + $0x230] sm:$0xff]
  %v9171 = vld [vmem:[%s3 + $0x238] sm:$0xff]
  %v9172 = vld [vmem:[%s3 + $0x240] sm:$0xff]
  %v9173 = vld [vmem:[%s3 + $0x248] sm:$0xff]
  %v9174 = vld [vmem:[%s3 + $0x250] sm:$0xff]
  %v9175 = vld [vmem:[%s3 + $0x258] sm:$0xff]
  %v9176 = vld [vmem:[%s3 + $0x260] sm:$0xff]
  %v9177 = vld [vmem:[%s3 + $0x268] sm:$0xff]
  %v9178 = vld [vmem:[%s3 + $0x270] sm:$0xff]
  %v9179 = vld [vmem:[%s3 + $0x278] sm:$0xff]
  %v9180 = vld [vmem:[%s3 + $0x280] sm:$0xff]
  %v9181 = vld [vmem:[%s3 + $0x288] sm:$0xff]
  %v9182 = vld [vmem:[%s3 + $0x290] sm:$0xff]
  %v9183 = vld [vmem:[%s3 + $0x298] sm:$0xff]
  %v9184 = vld [vmem:[%s3 + $0x2a0] sm:$0xff]
  %v9185 = vld [vmem:[%s3 + $0x2a8] sm:$0xff]
  %v9186 = vld [vmem:[%s3 + $0x2b0] sm:$0xff]
  %v9187 = vld [vmem:[%s3 + $0x2b8] sm:$0xff]
  %v9188 = vld [vmem:[%s3 + $0x2c0] sm:$0xff]
  %v9189 = vld [vmem:[%s3 + $0x2c8] sm:$0xff]
  %v9190 = vld [vmem:[%s3 + $0x2d0] sm:$0xff]
  %v9191 = vld [vmem:[%s3 + $0x2d8] sm:$0xff]
  %v9192 = vld [vmem:[%s3 + $0x2e0] sm:$0xff]
  %v9193 = vld [vmem:[%s3 + $0x2e8] sm:$0xff]
  %v9194 = vld [vmem:[%s3 + $0x2f0] sm:$0xff]
  %v9195 = vld [vmem:[%s3 + $0x2f8] sm:$0xff]
  %v9196 = vld [vmem:[%s3 + $0x300] sm:$0xff]
  %v9197 = vld [vmem:[%s3 + $0x308] sm:$0xff]
  %v9198 = vld [vmem:[%s3 + $0x310] sm:$0xff]
  %v9199 = vld [vmem:[%s3 + $0x318] sm:$0xff]
  %v9200 = vld [vmem:[%s3 + $0x320] sm:$0xff]
  %v9201 = vld [vmem:[%s3 + $0x328] sm:$0xff]
  %v9202 = vld [vmem:[%s3 + $0x330] sm:$0xff]
  %v9203 = vld [vmem:[%s3 + $0x338] sm:$0xff]
  %v9204 = vld [vmem:[%s3 + $0x340] sm:$0xff]
  %v9205 = vld [vmem:[%s3 + $0x348] sm:$0xff]
  %v9206 = vld [vmem:[%s3 + $0x350] sm:$0xff]
  %v9207 = vld [vmem:[%s3 + $0x358] sm:$0xff]
  %v9208 = vld [vmem:[%s3 + $0x360] sm:$0xff]
  %v9209 = vld [vmem:[%s3 + $0x368] sm:$0xff]
  %v9210 = vld [vmem:[%s3 + $0x370] sm:$0xff]
  %v9211 = vld [vmem:[%s3 + $0x378] sm:$0xff]
  %v9212 = vld [vmem:[%s3 + $0x380] sm:$0xff]
  %v9213 = vld [vmem:[%s3 + $0x388] sm:$0xff]
  %v9214 = vld [vmem:[%s3 + $0x390] sm:$0xff]
  %v9215 = vld [vmem:[%s3 + $0x398] sm:$0xff]
  %v9216 = vld [vmem:[%s3 + $0x3a0] sm:$0xff]
  %v9217 = vld [vmem:[%s3 + $0x3a8] sm:$0xff]
  %v9218 = vld [vmem:[%s3 + $0x3b0] sm:$0xff]
  %v9219 = vld [vmem:[%s3 + $0x3b8] sm:$0xff]
  %v9220 = vld [vmem:[%s3 + $0x3c0] sm:$0xff]
  %v9221 = vld [vmem:[%s3 + $0x3c8] sm:$0xff]
  %v9222 = vld [vmem:[%s3 + $0x3d0] sm:$0xff]
  %v9223 = vld [vmem:[%s3 + $0x3d8] sm:$0xff]
  %v9224 = vld [vmem:[%s3 + $0x3e0] sm:$0xff]
  %v9225 = vld [vmem:[%s3 + $0x3e8] sm:$0xff]
  %v9226 = vld [vmem:[%s3 + $0x3f0] sm:$0xff]
  %v9227 = vld [vmem:[%s3 + $0x3f8] sm:$0xff]
  %v9228 = vld [vmem:[%s3 + $0x400] sm:$0xff]
  %v9229 = vld [vmem:[%s3 + $0x408] sm:$0xff]
  %v9230 = vld [vmem:[%s3 + $0x410] sm:$0xff]
  %v9231 = vld [vmem:[%s3 + $0x418] sm:$0xff]
  %v9232 = vld [vmem:[%s3 + $0x420] sm:$0xff]
  %v9233 = vld [vmem:[%s3 + $0x428] sm:$0xff]
  %v9234 = vld [vmem:[%s3 + $0x430] sm:$0xff]
  %v9235 = vld [vmem:[%s3 + $0x438] sm:$0xff]
  %v9236 = vld [vmem:[%s3 + $0x440] sm:$0xff]
  %v9237 = vld [vmem:[%s3 + $0x448] sm:$0xff]
  %v9238 = vld [vmem:[%s3 + $0x450] sm:$0xff]
  %v9239 = vld [vmem:[%s3 + $0x458] sm:$0xff]
  %v9240 = vld [vmem:[%s3 + $0x460] sm:$0xff]
  %v9241 = vld [vmem:[%s3 + $0x468] sm:$0xff]
  %v9242 = vld [vmem:[%s3 + $0x470] sm:$0xff]
  %v9243 = vld [vmem:[%s3 + $0x478] sm:$0xff]
  %v9244 = vld [vmem:[%s3 + $0x480] sm:$0xff]
  %v9245 = vld [vmem:[%s3 + $0x488] sm:$0xff]
  %v9246 = vld [vmem:[%s3 + $0x490] sm:$0xff]
  %v9247 = vld [vmem:[%s3 + $0x498] sm:$0xff]
  %v9248 = vld [vmem:[%s3 + $0x4a0] sm:$0xff]
  %v9249 = vld [vmem:[%s3 + $0x4a8] sm:$0xff]
  %v9250 = vld [vmem:[%s3 + $0x4b0] sm:$0xff]
  %v9251 = vld [vmem:[%s3 + $0x4b8] sm:$0xff]
  %v9252 = vld [vmem:[%s3 + $0x4c0] sm:$0xff]
  %v9253 = vld [vmem:[%s3 + $0x4c8] sm:$0xff]
  %v9254 = vld [vmem:[%s3 + $0x4d0] sm:$0xff]
  %v9255 = vld [vmem:[%s3 + $0x4d8] sm:$0xff]
  %v9256 = vld [vmem:[%s3 + $0x4e0] sm:$0xff]
  %v9257 = vld [vmem:[%s3 + $0x4e8] sm:$0xff]
  %v9258 = vld [vmem:[%s3 + $0x4f0] sm:$0xff]
  %v9259 = vld [vmem:[%s3 + $0x4f8] sm:$0xff]
  %v9261 = vsel %vm158, %v9104, 0
  %v9264 = vsel %vm158, %v9109, 0
  %v9267 = vsel %vm158, %v9114, 0
  %v9270 = vsel %vm158, %v9119, 0
  %v9273 = vsel %vm158, %v9124, 0
  %v9276 = vsel %vm158, %v9129, 0
  %v9279 = vsel %vm158, %v9134, 0
  %v9282 = vsel %vm158, %v9139, 0
  %v9285 = vsel %vm158, %v9144, 0
  %v9288 = vsel %vm158, %v9149, 0
  %v9291 = vsel %vm158, %v9154, 0
  %v9294 = vsel %vm158, %v9159, 0
  %v9297 = vsel %vm158, %v9164, 0
  %v9300 = vsel %vm158, %v9169, 0
  %v9303 = vsel %vm158, %v9174, 0
  %v9306 = vsel %vm158, %v9179, 0
  %v9309 = vsel %vm158, %v9184, 0
  %v9312 = vsel %vm158, %v9189, 0
  %v9315 = vsel %vm158, %v9194, 0
  %v9318 = vsel %vm158, %v9199, 0
  %v9321 = vsel %vm158, %v9204, 0
  %v9324 = vsel %vm158, %v9209, 0
  %v9327 = vsel %vm158, %v9214, 0
  %v9330 = vsel %vm158, %v9219, 0
  %v9333 = vsel %vm158, %v9224, 0
  %v9336 = vsel %vm158, %v9229, 0
  %v9339 = vsel %vm158, %v9234, 0
  %v9342 = vsel %vm158, %v9239, 0
  %v9345 = vsel %vm158, %v9244, 0
  %v9348 = vsel %vm158, %v9249, 0
  %v9351 = vsel %vm158, %v9254, 0
  %v9354 = vsel %vm158, %v9259, 0
  %9356 = vmatpush.msra.mxu0 %v9043
  %9357 = vmatpush.msra.mxu0 %v9042
  %9358 = vmatpush.msra.mxu0 %v9041
  %9359 = vmatpush.msra.mxu0 %v9040
  %9360 = vmatpush.msra.mxu0 %v9039
  %9361 = vmatpush.msra.mxu0 %v9038
  %9362 = vmatpush.msra.mxu0 %v9037
  %9363 = vmatpush.msra.mxu0 %v9036
  %9364 = vmatpush.msra.mxu0 %v9035
  %9365 = vmatpush.msra.mxu0 %v9034
  %9366 = vmatpush.msra.mxu0 %v9033
  %9367 = vmatpush.msra.mxu0 %v9032
  %9368 = vmatpush.msra.mxu0 %v9031
  %9369 = vmatpush.msra.mxu0 %v9030
  %9370 = vmatpush.msra.mxu0 %v9029
  %9371 = vmatpush.msra.mxu0 %v9028
  %9372 = vmatmul.f32.gmra.mxu0 %v9100
  %v9373 = vpop.f32.mrf.mxu0
  %v9374 = vadd.f32 0.0, %v9373
  %9375 = vmatmul.f32.gmra.mxu0 %v9105
  %v9376 = vpop.f32.mrf.mxu0
  %v9377 = vadd.f32 0.0, %v9376
  %9378 = vmatmul.f32.gmra.mxu0 %v9110
  %v9379 = vpop.f32.mrf.mxu0
  %v9380 = vadd.f32 0.0, %v9379
  %9381 = vmatmul.f32.gmra.mxu0 %v9115
  %v9382 = vpop.f32.mrf.mxu0
  %v9383 = vadd.f32 0.0, %v9382
  %9384 = vmatmul.f32.gmra.mxu0 %v9120
  %v9385 = vpop.f32.mrf.mxu0
  %v9386 = vadd.f32 0.0, %v9385
  %9387 = vmatmul.f32.gmra.mxu0 %v9125
  %v9388 = vpop.f32.mrf.mxu0
  %v9389 = vadd.f32 0.0, %v9388
  %9390 = vmatmul.f32.gmra.mxu0 %v9130
  %v9391 = vpop.f32.mrf.mxu0
  %v9392 = vadd.f32 0.0, %v9391
  %9393 = vmatmul.f32.gmra.mxu0 %v9135
  %v9394 = vpop.f32.mrf.mxu0
  %v9395 = vadd.f32 0.0, %v9394
  %9396 = vmatmul.f32.gmra.mxu0 %v9140
  %v9397 = vpop.f32.mrf.mxu0
  %v9398 = vadd.f32 0.0, %v9397
  %9399 = vmatmul.f32.gmra.mxu0 %v9145
  %v9400 = vpop.f32.mrf.mxu0
  %v9401 = vadd.f32 0.0, %v9400
  %9402 = vmatmul.f32.gmra.mxu0 %v9150
  %v9403 = vpop.f32.mrf.mxu0
  %v9404 = vadd.f32 0.0, %v9403
  %9405 = vmatmul.f32.gmra.mxu0 %v9155
  %v9406 = vpop.f32.mrf.mxu0
  %v9407 = vadd.f32 0.0, %v9406
  %9408 = vmatmul.f32.gmra.mxu0 %v9160
  %v9409 = vpop.f32.mrf.mxu0
  %v9410 = vadd.f32 0.0, %v9409
  %9411 = vmatmul.f32.gmra.mxu0 %v9165
  %v9412 = vpop.f32.mrf.mxu0
  %v9413 = vadd.f32 0.0, %v9412
  %9414 = vmatmul.f32.gmra.mxu0 %v9170
  %v9415 = vpop.f32.mrf.mxu0
  %v9416 = vadd.f32 0.0, %v9415
  %9417 = vmatmul.f32.gmra.mxu0 %v9175
  %v9418 = vpop.f32.mrf.mxu0
  %v9419 = vadd.f32 0.0, %v9418
  %9420 = vmatmul.f32.gmra.mxu0 %v9180
  %v9421 = vpop.f32.mrf.mxu0
  %v9422 = vadd.f32 0.0, %v9421
  %9423 = vmatmul.f32.gmra.mxu0 %v9185
  %v9424 = vpop.f32.mrf.mxu0
  %v9425 = vadd.f32 0.0, %v9424
  %9426 = vmatmul.f32.gmra.mxu0 %v9190
  %v9427 = vpop.f32.mrf.mxu0
  %v9428 = vadd.f32 0.0, %v9427
  %9429 = vmatmul.f32.gmra.mxu0 %v9195
  %v9430 = vpop.f32.mrf.mxu0
  %v9431 = vadd.f32 0.0, %v9430
  %9432 = vmatmul.f32.gmra.mxu0 %v9200
  %v9433 = vpop.f32.mrf.mxu0
  %v9434 = vadd.f32 0.0, %v9433
  %9435 = vmatmul.f32.gmra.mxu0 %v9205
  %v9436 = vpop.f32.mrf.mxu0
  %v9437 = vadd.f32 0.0, %v9436
  %9438 = vmatmul.f32.gmra.mxu0 %v9210
  %v9439 = vpop.f32.mrf.mxu0
  %v9440 = vadd.f32 0.0, %v9439
  %9441 = vmatmul.f32.gmra.mxu0 %v9215
  %v9442 = vpop.f32.mrf.mxu0
  %v9443 = vadd.f32 0.0, %v9442
  %9444 = vmatmul.f32.gmra.mxu0 %v9220
  %v9445 = vpop.f32.mrf.mxu0
  %v9446 = vadd.f32 0.0, %v9445
  %9447 = vmatmul.f32.gmra.mxu0 %v9225
  %v9448 = vpop.f32.mrf.mxu0
  %v9449 = vadd.f32 0.0, %v9448
  %9450 = vmatmul.f32.gmra.mxu0 %v9230
  %v9451 = vpop.f32.mrf.mxu0
  %v9452 = vadd.f32 0.0, %v9451
  %9453 = vmatmul.f32.gmra.mxu0 %v9235
  %v9454 = vpop.f32.mrf.mxu0
  %v9455 = vadd.f32 0.0, %v9454
  %9456 = vmatmul.f32.gmra.mxu0 %v9240
  %v9457 = vpop.f32.mrf.mxu0
  %v9458 = vadd.f32 0.0, %v9457
  %9459 = vmatmul.f32.gmra.mxu0 %v9245
  %v9460 = vpop.f32.mrf.mxu0
  %v9461 = vadd.f32 0.0, %v9460
  %9462 = vmatmul.f32.gmra.mxu0 %v9250
  %v9463 = vpop.f32.mrf.mxu0
  %v9464 = vadd.f32 0.0, %v9463
  %9465 = vmatmul.f32.gmra.mxu0 %v9255
  %v9466 = vpop.f32.mrf.mxu0
  %v9467 = vadd.f32 0.0, %v9466
  %9468 = vdwg.mxu0
  %9469 = vmatpush.msra.mxu0 %v9059
  %9470 = vmatpush.msra.mxu0 %v9058
  %9471 = vmatpush.msra.mxu0 %v9057
  %9472 = vmatpush.msra.mxu0 %v9056
  %9473 = vmatpush.msra.mxu0 %v9055
  %9474 = vmatpush.msra.mxu0 %v9054
  %9475 = vmatpush.msra.mxu0 %v9053
  %9476 = vmatpush.msra.mxu0 %v9052
  %9477 = vmatpush.msra.mxu0 %v9051
  %9478 = vmatpush.msra.mxu0 %v9050
  %9479 = vmatpush.msra.mxu0 %v9049
  %9480 = vmatpush.msra.mxu0 %v9048
  %9481 = vmatpush.msra.mxu0 %v9047
  %9482 = vmatpush.msra.mxu0 %v9046
  %9483 = vmatpush.msra.mxu0 %v9045
  %9484 = vmatpush.msra.mxu0 %v9044
  %9485 = vmatmul.f32.gmra.mxu0 %v9101
  %v9486 = vpop.f32.mrf.mxu0
  %v9487 = vadd.f32 %v9374, %v9486
  %9488 = vmatmul.f32.gmra.mxu0 %v9106
  %v9489 = vpop.f32.mrf.mxu0
  %v9490 = vadd.f32 %v9377, %v9489
  %9491 = vmatmul.f32.gmra.mxu0 %v9111
  %v9492 = vpop.f32.mrf.mxu0
  %v9493 = vadd.f32 %v9380, %v9492
  %9494 = vmatmul.f32.gmra.mxu0 %v9116
  %v9495 = vpop.f32.mrf.mxu0
  %v9496 = vadd.f32 %v9383, %v9495
  %9497 = vmatmul.f32.gmra.mxu0 %v9121
  %v9498 = vpop.f32.mrf.mxu0
  %v9499 = vadd.f32 %v9386, %v9498
  %9500 = vmatmul.f32.gmra.mxu0 %v9126
  %v9501 = vpop.f32.mrf.mxu0
  %v9502 = vadd.f32 %v9389, %v9501
  %9503 = vmatmul.f32.gmra.mxu0 %v9131
  %v9504 = vpop.f32.mrf.mxu0
  %v9505 = vadd.f32 %v9392, %v9504
  %9506 = vmatmul.f32.gmra.mxu0 %v9136
  %v9507 = vpop.f32.mrf.mxu0
  %v9508 = vadd.f32 %v9395, %v9507
  %9509 = vmatmul.f32.gmra.mxu0 %v9141
  %v9510 = vpop.f32.mrf.mxu0
  %v9511 = vadd.f32 %v9398, %v9510
  %9512 = vmatmul.f32.gmra.mxu0 %v9146
  %v9513 = vpop.f32.mrf.mxu0
  %v9514 = vadd.f32 %v9401, %v9513
  %9515 = vmatmul.f32.gmra.mxu0 %v9151
  %v9516 = vpop.f32.mrf.mxu0
  %v9517 = vadd.f32 %v9404, %v9516
  %9518 = vmatmul.f32.gmra.mxu0 %v9156
  %v9519 = vpop.f32.mrf.mxu0
  %v9520 = vadd.f32 %v9407, %v9519
  %9521 = vmatmul.f32.gmra.mxu0 %v9161
  %v9522 = vpop.f32.mrf.mxu0
  %v9523 = vadd.f32 %v9410, %v9522
  %9524 = vmatmul.f32.gmra.mxu0 %v9166
  %v9525 = vpop.f32.mrf.mxu0
  %v9526 = vadd.f32 %v9413, %v9525
  %9527 = vmatmul.f32.gmra.mxu0 %v9171
  %v9528 = vpop.f32.mrf.mxu0
  %v9529 = vadd.f32 %v9416, %v9528
  %9530 = vmatmul.f32.gmra.mxu0 %v9176
  %v9531 = vpop.f32.mrf.mxu0
  %v9532 = vadd.f32 %v9419, %v9531
  %9533 = vmatmul.f32.gmra.mxu0 %v9181
  %v9534 = vpop.f32.mrf.mxu0
  %v9535 = vadd.f32 %v9422, %v9534
  %9536 = vmatmul.f32.gmra.mxu0 %v9186
  %v9537 = vpop.f32.mrf.mxu0
  %v9538 = vadd.f32 %v9425, %v9537
  %9539 = vmatmul.f32.gmra.mxu0 %v9191
  %v9540 = vpop.f32.mrf.mxu0
  %v9541 = vadd.f32 %v9428, %v9540
  %9542 = vmatmul.f32.gmra.mxu0 %v9196
  %v9543 = vpop.f32.mrf.mxu0
  %v9544 = vadd.f32 %v9431, %v9543
  %9545 = vmatmul.f32.gmra.mxu0 %v9201
  %v9546 = vpop.f32.mrf.mxu0
  %v9547 = vadd.f32 %v9434, %v9546
  %9548 = vmatmul.f32.gmra.mxu0 %v9206
  %v9549 = vpop.f32.mrf.mxu0
  %v9550 = vadd.f32 %v9437, %v9549
  %9551 = vmatmul.f32.gmra.mxu0 %v9211
  %v9552 = vpop.f32.mrf.mxu0
  %v9553 = vadd.f32 %v9440, %v9552
  %9554 = vmatmul.f32.gmra.mxu0 %v9216
  %v9555 = vpop.f32.mrf.mxu0
  %v9556 = vadd.f32 %v9443, %v9555
  %9557 = vmatmul.f32.gmra.mxu0 %v9221
  %v9558 = vpop.f32.mrf.mxu0
  %v9559 = vadd.f32 %v9446, %v9558
  %9560 = vmatmul.f32.gmra.mxu0 %v9226
  %v9561 = vpop.f32.mrf.mxu0
  %v9562 = vadd.f32 %v9449, %v9561
  %9563 = vmatmul.f32.gmra.mxu0 %v9231
  %v9564 = vpop.f32.mrf.mxu0
  %v9565 = vadd.f32 %v9452, %v9564
  %9566 = vmatmul.f32.gmra.mxu0 %v9236
  %v9567 = vpop.f32.mrf.mxu0
  %v9568 = vadd.f32 %v9455, %v9567
  %9569 = vmatmul.f32.gmra.mxu0 %v9241
  %v9570 = vpop.f32.mrf.mxu0
  %v9571 = vadd.f32 %v9458, %v9570
  %9572 = vmatmul.f32.gmra.mxu0 %v9246
  %v9573 = vpop.f32.mrf.mxu0
  %v9574 = vadd.f32 %v9461, %v9573
  %9575 = vmatmul.f32.gmra.mxu0 %v9251
  %v9576 = vpop.f32.mrf.mxu0
  %v9577 = vadd.f32 %v9464, %v9576
  %9578 = vmatmul.f32.gmra.mxu0 %v9256
  %v9579 = vpop.f32.mrf.mxu0
  %v9580 = vadd.f32 %v9467, %v9579
  %9581 = vdwg.mxu0
  %9582 = vmatpush.msra.mxu0 %v9075
  %9583 = vmatpush.msra.mxu0 %v9074
  %9584 = vmatpush.msra.mxu0 %v9073
  %9585 = vmatpush.msra.mxu0 %v9072
  %9586 = vmatpush.msra.mxu0 %v9071
  %9587 = vmatpush.msra.mxu0 %v9070
  %9588 = vmatpush.msra.mxu0 %v9069
  %9589 = vmatpush.msra.mxu0 %v9068
  %9590 = vmatpush.msra.mxu0 %v9067
  %9591 = vmatpush.msra.mxu0 %v9066
  %9592 = vmatpush.msra.mxu0 %v9065
  %9593 = vmatpush.msra.mxu0 %v9064
  %9594 = vmatpush.msra.mxu0 %v9063
  %9595 = vmatpush.msra.mxu0 %v9062
  %9596 = vmatpush.msra.mxu0 %v9061
  %9597 = vmatpush.msra.mxu0 %v9060
  %9598 = vmatmul.f32.gmra.mxu0 %v9102
  %v9599 = vpop.f32.mrf.mxu0
  %v9600 = vadd.f32 %v9487, %v9599
  %9601 = vmatmul.f32.gmra.mxu0 %v9107
  %v9602 = vpop.f32.mrf.mxu0
  %v9603 = vadd.f32 %v9490, %v9602
  %9604 = vmatmul.f32.gmra.mxu0 %v9112
  %v9605 = vpop.f32.mrf.mxu0
  %v9606 = vadd.f32 %v9493, %v9605
  %9607 = vmatmul.f32.gmra.mxu0 %v9117
  %v9608 = vpop.f32.mrf.mxu0
  %v9609 = vadd.f32 %v9496, %v9608
  %9610 = vmatmul.f32.gmra.mxu0 %v9122
  %v9611 = vpop.f32.mrf.mxu0
  %v9612 = vadd.f32 %v9499, %v9611
  %9613 = vmatmul.f32.gmra.mxu0 %v9127
  %v9614 = vpop.f32.mrf.mxu0
  %v9615 = vadd.f32 %v9502, %v9614
  %9616 = vmatmul.f32.gmra.mxu0 %v9132
  %v9617 = vpop.f32.mrf.mxu0
  %v9618 = vadd.f32 %v9505, %v9617
  %9619 = vmatmul.f32.gmra.mxu0 %v9137
  %v9620 = vpop.f32.mrf.mxu0
  %v9621 = vadd.f32 %v9508, %v9620
  %9622 = vmatmul.f32.gmra.mxu0 %v9142
  %v9623 = vpop.f32.mrf.mxu0
  %v9624 = vadd.f32 %v9511, %v9623
  %9625 = vmatmul.f32.gmra.mxu0 %v9147
  %v9626 = vpop.f32.mrf.mxu0
  %v9627 = vadd.f32 %v9514, %v9626
  %9628 = vmatmul.f32.gmra.mxu0 %v9152
  %v9629 = vpop.f32.mrf.mxu0
  %v9630 = vadd.f32 %v9517, %v9629
  %9631 = vmatmul.f32.gmra.mxu0 %v9157
  %v9632 = vpop.f32.mrf.mxu0
  %v9633 = vadd.f32 %v9520, %v9632
  %9634 = vmatmul.f32.gmra.mxu0 %v9162
  %v9635 = vpop.f32.mrf.mxu0
  %v9636 = vadd.f32 %v9523, %v9635
  %9637 = vmatmul.f32.gmra.mxu0 %v9167
  %v9638 = vpop.f32.mrf.mxu0
  %v9639 = vadd.f32 %v9526, %v9638
  %9640 = vmatmul.f32.gmra.mxu0 %v9172
  %v9641 = vpop.f32.mrf.mxu0
  %v9642 = vadd.f32 %v9529, %v9641
  %9643 = vmatmul.f32.gmra.mxu0 %v9177
  %v9644 = vpop.f32.mrf.mxu0
  %v9645 = vadd.f32 %v9532, %v9644
  %9646 = vmatmul.f32.gmra.mxu0 %v9182
  %v9647 = vpop.f32.mrf.mxu0
  %v9648 = vadd.f32 %v9535, %v9647
  %9649 = vmatmul.f32.gmra.mxu0 %v9187
  %v9650 = vpop.f32.mrf.mxu0
  %v9651 = vadd.f32 %v9538, %v9650
  %9652 = vmatmul.f32.gmra.mxu0 %v9192
  %v9653 = vpop.f32.mrf.mxu0
  %v9654 = vadd.f32 %v9541, %v9653
  %9655 = vmatmul.f32.gmra.mxu0 %v9197
  %v9656 = vpop.f32.mrf.mxu0
  %v9657 = vadd.f32 %v9544, %v9656
  %9658 = vmatmul.f32.gmra.mxu0 %v9202
  %v9659 = vpop.f32.mrf.mxu0
  %v9660 = vadd.f32 %v9547, %v9659
  %9661 = vmatmul.f32.gmra.mxu0 %v9207
  %v9662 = vpop.f32.mrf.mxu0
  %v9663 = vadd.f32 %v9550, %v9662
  %9664 = vmatmul.f32.gmra.mxu0 %v9212
  %v9665 = vpop.f32.mrf.mxu0
  %v9666 = vadd.f32 %v9553, %v9665
  %9667 = vmatmul.f32.gmra.mxu0 %v9217
  %v9668 = vpop.f32.mrf.mxu0
  %v9669 = vadd.f32 %v9556, %v9668
  %9670 = vmatmul.f32.gmra.mxu0 %v9222
  %v9671 = vpop.f32.mrf.mxu0
  %v9672 = vadd.f32 %v9559, %v9671
  %9673 = vmatmul.f32.gmra.mxu0 %v9227
  %v9674 = vpop.f32.mrf.mxu0
  %v9675 = vadd.f32 %v9562, %v9674
  %9676 = vmatmul.f32.gmra.mxu0 %v9232
  %v9677 = vpop.f32.mrf.mxu0
  %v9678 = vadd.f32 %v9565, %v9677
  %9679 = vmatmul.f32.gmra.mxu0 %v9237
  %v9680 = vpop.f32.mrf.mxu0
  %v9681 = vadd.f32 %v9568, %v9680
  %9682 = vmatmul.f32.gmra.mxu0 %v9242
  %v9683 = vpop.f32.mrf.mxu0
  %v9684 = vadd.f32 %v9571, %v9683
  %9685 = vmatmul.f32.gmra.mxu0 %v9247
  %v9686 = vpop.f32.mrf.mxu0
  %v9687 = vadd.f32 %v9574, %v9686
  %9688 = vmatmul.f32.gmra.mxu0 %v9252
  %v9689 = vpop.f32.mrf.mxu0
  %v9690 = vadd.f32 %v9577, %v9689
  %9691 = vmatmul.f32.gmra.mxu0 %v9257
  %v9692 = vpop.f32.mrf.mxu0
  %v9693 = vadd.f32 %v9580, %v9692
  %9694 = vdwg.mxu0
  %9695 = vmatpush.msra.mxu0 %v9091
  %9696 = vmatpush.msra.mxu0 %v9090
  %9697 = vmatpush.msra.mxu0 %v9089
  %9698 = vmatpush.msra.mxu0 %v9088
  %9699 = vmatpush.msra.mxu0 %v9087
  %9700 = vmatpush.msra.mxu0 %v9086
  %9701 = vmatpush.msra.mxu0 %v9085
  %9702 = vmatpush.msra.mxu0 %v9084
  %9703 = vmatpush.msra.mxu0 %v9083
  %9704 = vmatpush.msra.mxu0 %v9082
  %9705 = vmatpush.msra.mxu0 %v9081
  %9706 = vmatpush.msra.mxu0 %v9080
  %9707 = vmatpush.msra.mxu0 %v9079
  %9708 = vmatpush.msra.mxu0 %v9078
  %9709 = vmatpush.msra.mxu0 %v9077
  %9710 = vmatpush.msra.mxu0 %v9076
  %9711 = vmatmul.f32.gmra.mxu0 %v9103
  %v9712 = vpop.f32.mrf.mxu0
  %v9713 = vadd.f32 %v9600, %v9712
  %9714 = vmatmul.f32.gmra.mxu0 %v9108
  %v9715 = vpop.f32.mrf.mxu0
  %v9716 = vadd.f32 %v9603, %v9715
  %9717 = vmatmul.f32.gmra.mxu0 %v9113
  %v9718 = vpop.f32.mrf.mxu0
  %v9719 = vadd.f32 %v9606, %v9718
  %9720 = vmatmul.f32.gmra.mxu0 %v9118
  %v9721 = vpop.f32.mrf.mxu0
  %v9722 = vadd.f32 %v9609, %v9721
  %9723 = vmatmul.f32.gmra.mxu0 %v9123
  %v9724 = vpop.f32.mrf.mxu0
  %v9725 = vadd.f32 %v9612, %v9724
  %9726 = vmatmul.f32.gmra.mxu0 %v9128
  %v9727 = vpop.f32.mrf.mxu0
  %v9728 = vadd.f32 %v9615, %v9727
  %9729 = vmatmul.f32.gmra.mxu0 %v9133
  %v9730 = vpop.f32.mrf.mxu0
  %v9731 = vadd.f32 %v9618, %v9730
  %9732 = vmatmul.f32.gmra.mxu0 %v9138
  %v9733 = vpop.f32.mrf.mxu0
  %v9734 = vadd.f32 %v9621, %v9733
  %9735 = vmatmul.f32.gmra.mxu0 %v9143
  %v9736 = vpop.f32.mrf.mxu0
  %v9737 = vadd.f32 %v9624, %v9736
  %9738 = vmatmul.f32.gmra.mxu0 %v9148
  %v9739 = vpop.f32.mrf.mxu0
  %v9740 = vadd.f32 %v9627, %v9739
  %9741 = vmatmul.f32.gmra.mxu0 %v9153
  %v9742 = vpop.f32.mrf.mxu0
  %v9743 = vadd.f32 %v9630, %v9742
  %9744 = vmatmul.f32.gmra.mxu0 %v9158
  %v9745 = vpop.f32.mrf.mxu0
  %v9746 = vadd.f32 %v9633, %v9745
  %9747 = vmatmul.f32.gmra.mxu0 %v9163
  %v9748 = vpop.f32.mrf.mxu0
  %v9749 = vadd.f32 %v9636, %v9748
  %9750 = vmatmul.f32.gmra.mxu0 %v9168
  %v9751 = vpop.f32.mrf.mxu0
  %v9752 = vadd.f32 %v9639, %v9751
  %9753 = vmatmul.f32.gmra.mxu0 %v9173
  %v9754 = vpop.f32.mrf.mxu0
  %v9755 = vadd.f32 %v9642, %v9754
  %9756 = vmatmul.f32.gmra.mxu0 %v9178
  %v9757 = vpop.f32.mrf.mxu0
  %v9758 = vadd.f32 %v9645, %v9757
  %9759 = vmatmul.f32.gmra.mxu0 %v9183
  %v9760 = vpop.f32.mrf.mxu0
  %v9761 = vadd.f32 %v9648, %v9760
  %9762 = vmatmul.f32.gmra.mxu0 %v9188
  %v9763 = vpop.f32.mrf.mxu0
  %v9764 = vadd.f32 %v9651, %v9763
  %9765 = vmatmul.f32.gmra.mxu0 %v9193
  %v9766 = vpop.f32.mrf.mxu0
  %v9767 = vadd.f32 %v9654, %v9766
  %9768 = vmatmul.f32.gmra.mxu0 %v9198
  %v9769 = vpop.f32.mrf.mxu0
  %v9770 = vadd.f32 %v9657, %v9769
  %9771 = vmatmul.f32.gmra.mxu0 %v9203
  %v9772 = vpop.f32.mrf.mxu0
  %v9773 = vadd.f32 %v9660, %v9772
  %9774 = vmatmul.f32.gmra.mxu0 %v9208
  %v9775 = vpop.f32.mrf.mxu0
  %v9776 = vadd.f32 %v9663, %v9775
  %9777 = vmatmul.f32.gmra.mxu0 %v9213
  %v9778 = vpop.f32.mrf.mxu0
  %v9779 = vadd.f32 %v9666, %v9778
  %9780 = vmatmul.f32.gmra.mxu0 %v9218
  %v9781 = vpop.f32.mrf.mxu0
  %v9782 = vadd.f32 %v9669, %v9781
  %9783 = vmatmul.f32.gmra.mxu0 %v9223
  %v9784 = vpop.f32.mrf.mxu0
  %v9785 = vadd.f32 %v9672, %v9784
  %9786 = vmatmul.f32.gmra.mxu0 %v9228
  %v9787 = vpop.f32.mrf.mxu0
  %v9788 = vadd.f32 %v9675, %v9787
  %9789 = vmatmul.f32.gmra.mxu0 %v9233
  %v9790 = vpop.f32.mrf.mxu0
  %v9791 = vadd.f32 %v9678, %v9790
  %9792 = vmatmul.f32.gmra.mxu0 %v9238
  %v9793 = vpop.f32.mrf.mxu0
  %v9794 = vadd.f32 %v9681, %v9793
  %9795 = vmatmul.f32.gmra.mxu0 %v9243
  %v9796 = vpop.f32.mrf.mxu0
  %v9797 = vadd.f32 %v9684, %v9796
  %9798 = vmatmul.f32.gmra.mxu0 %v9248
  %v9799 = vpop.f32.mrf.mxu0
  %v9800 = vadd.f32 %v9687, %v9799
  %9801 = vmatmul.f32.gmra.mxu0 %v9253
  %v9802 = vpop.f32.mrf.mxu0
  %v9803 = vadd.f32 %v9690, %v9802
  %9804 = vmatmul.f32.gmra.mxu0 %v9258
  %v9805 = vpop.f32.mrf.mxu0
  %v9806 = vadd.f32 %v9693, %v9805
  %9807 = vdwg.mxu0
  %9808 = vmatpush.msra.mxu0 0.0
  %9809 = vmatpush.msra.mxu0 0.0
  %9810 = vmatpush.msra.mxu0 0.0
  %9811 = vmatpush.msra.mxu0 0.0
  %9812 = vmatpush.msra.mxu0 0.0
  %9813 = vmatpush.msra.mxu0 0.0
  %9814 = vmatpush.msra.mxu0 0.0
  %9815 = vmatpush.msra.mxu0 0.0
  %9816 = vmatpush.msra.mxu0 %v9099
  %9817 = vmatpush.msra.mxu0 %v9098
  %9818 = vmatpush.msra.mxu0 %v9097
  %9819 = vmatpush.msra.mxu0 %v9096
  %9820 = vmatpush.msra.mxu0 %v9095
  %9821 = vmatpush.msra.mxu0 %v9094
  %9822 = vmatpush.msra.mxu0 %v9093
  %9823 = vmatpush.msra.mxu0 %v9092
  %9824 = vmatmul.f32.gmra.mxu0 %v9261
  %v9825 = vpop.f32.mrf.mxu0
  %v9826 = vadd.f32 %v9713, %v9825
  %9827 = vmatmul.f32.gmra.mxu0 %v9264
  %v9828 = vpop.f32.mrf.mxu0
  %v9829 = vadd.f32 %v9716, %v9828
  %9830 = vmatmul.f32.gmra.mxu0 %v9267
  %v9831 = vpop.f32.mrf.mxu0
  %v9832 = vadd.f32 %v9719, %v9831
  %9833 = vmatmul.f32.gmra.mxu0 %v9270
  %v9834 = vpop.f32.mrf.mxu0
  %v9835 = vadd.f32 %v9722, %v9834
  %9836 = vmatmul.f32.gmra.mxu0 %v9273
  %v9837 = vpop.f32.mrf.mxu0
  %v9838 = vadd.f32 %v9725, %v9837
  %9839 = vmatmul.f32.gmra.mxu0 %v9276
  %v9840 = vpop.f32.mrf.mxu0
  %v9841 = vadd.f32 %v9728, %v9840
  %9842 = vmatmul.f32.gmra.mxu0 %v9279
  %v9843 = vpop.f32.mrf.mxu0
  %v9844 = vadd.f32 %v9731, %v9843
  %9845 = vmatmul.f32.gmra.mxu0 %v9282
  %v9846 = vpop.f32.mrf.mxu0
  %v9847 = vadd.f32 %v9734, %v9846
  %9848 = vmatmul.f32.gmra.mxu0 %v9285
  %v9849 = vpop.f32.mrf.mxu0
  %v9850 = vadd.f32 %v9737, %v9849
  %9851 = vmatmul.f32.gmra.mxu0 %v9288
  %v9852 = vpop.f32.mrf.mxu0
  %v9853 = vadd.f32 %v9740, %v9852
  %9854 = vmatmul.f32.gmra.mxu0 %v9291
  %v9855 = vpop.f32.mrf.mxu0
  %v9856 = vadd.f32 %v9743, %v9855
  %9857 = vmatmul.f32.gmra.mxu0 %v9294
  %v9858 = vpop.f32.mrf.mxu0
  %v9859 = vadd.f32 %v9746, %v9858
  %9860 = vmatmul.f32.gmra.mxu0 %v9297
  %v9861 = vpop.f32.mrf.mxu0
  %v9862 = vadd.f32 %v9749, %v9861
  %9863 = vmatmul.f32.gmra.mxu0 %v9300
  %v9864 = vpop.f32.mrf.mxu0
  %v9865 = vadd.f32 %v9752, %v9864
  %9866 = vmatmul.f32.gmra.mxu0 %v9303
  %v9867 = vpop.f32.mrf.mxu0
  %v9868 = vadd.f32 %v9755, %v9867
  %9869 = vmatmul.f32.gmra.mxu0 %v9306
  %v9870 = vpop.f32.mrf.mxu0
  %v9871 = vadd.f32 %v9758, %v9870
  %9872 = vmatmul.f32.gmra.mxu0 %v9309
  %v9873 = vpop.f32.mrf.mxu0
  %v9874 = vadd.f32 %v9761, %v9873
  %9875 = vmatmul.f32.gmra.mxu0 %v9312
  %v9876 = vpop.f32.mrf.mxu0
  %v9877 = vadd.f32 %v9764, %v9876
  %9878 = vmatmul.f32.gmra.mxu0 %v9315
  %v9879 = vpop.f32.mrf.mxu0
  %v9880 = vadd.f32 %v9767, %v9879
  %9881 = vmatmul.f32.gmra.mxu0 %v9318
  %v9882 = vpop.f32.mrf.mxu0
  %v9883 = vadd.f32 %v9770, %v9882
  %9884 = vmatmul.f32.gmra.mxu0 %v9321
  %v9885 = vpop.f32.mrf.mxu0
  %v9886 = vadd.f32 %v9773, %v9885
  %9887 = vmatmul.f32.gmra.mxu0 %v9324
  %v9888 = vpop.f32.mrf.mxu0
  %v9889 = vadd.f32 %v9776, %v9888
  %9890 = vmatmul.f32.gmra.mxu0 %v9327
  %v9891 = vpop.f32.mrf.mxu0
  %v9892 = vadd.f32 %v9779, %v9891
  %9893 = vmatmul.f32.gmra.mxu0 %v9330
  %v9894 = vpop.f32.mrf.mxu0
  %v9895 = vadd.f32 %v9782, %v9894
  %9896 = vmatmul.f32.gmra.mxu0 %v9333
  %v9897 = vpop.f32.mrf.mxu0
  %v9898 = vadd.f32 %v9785, %v9897
  %9899 = vmatmul.f32.gmra.mxu0 %v9336
  %v9900 = vpop.f32.mrf.mxu0
  %v9901 = vadd.f32 %v9788, %v9900
  %9902 = vmatmul.f32.gmra.mxu0 %v9339
  %v9903 = vpop.f32.mrf.mxu0
  %v9904 = vadd.f32 %v9791, %v9903
  %9905 = vmatmul.f32.gmra.mxu0 %v9342
  %v9906 = vpop.f32.mrf.mxu0
  %v9907 = vadd.f32 %v9794, %v9906
  %9908 = vmatmul.f32.gmra.mxu0 %v9345
  %v9909 = vpop.f32.mrf.mxu0
  %v9910 = vadd.f32 %v9797, %v9909
  %9911 = vmatmul.f32.gmra.mxu0 %v9348
  %v9912 = vpop.f32.mrf.mxu0
  %v9913 = vadd.f32 %v9800, %v9912
  %9914 = vmatmul.f32.gmra.mxu0 %v9351
  %v9915 = vpop.f32.mrf.mxu0
  %v9916 = vadd.f32 %v9803, %v9915
  %9917 = vmatmul.f32.gmra.mxu0 %v9354
  %v9918 = vpop.f32.mrf.mxu0
  %v9919 = vadd.f32 %v9806, %v9918
  %9920 = vdwg.mxu0
  %v9921 = vmax.f32 %v9826, %v9874
  %v9922 = vmax.f32 %v9829, %v9877
  %v9923 = vmax.f32 %v9832, %v9880
  %v9924 = vmax.f32 %v9835, %v9883
  %v9925 = vmax.f32 %v9838, %v9886
  %v9926 = vmax.f32 %v9841, %v9889
  %v9927 = vmax.f32 %v9844, %v9892
  %v9928 = vmax.f32 %v9847, %v9895
  %v9929 = vmax.f32 %v9850, %v9898
  %v9930 = vmax.f32 %v9853, %v9901
  %v9931 = vmax.f32 %v9856, %v9904
  %v9932 = vmax.f32 %v9859, %v9907
  %v9933 = vmax.f32 %v9862, %v9910
  %v9934 = vmax.f32 %v9865, %v9913
  %v9935 = vmax.f32 %v9868, %v9916
  %v9936 = vmax.f32 %v9871, %v9919
  %v9937 = vmax.f32 %v9921, %v9929
  %v9938 = vmax.f32 %v9922, %v9930
  %v9939 = vmax.f32 %v9923, %v9931
  %v9940 = vmax.f32 %v9924, %v9932
  %v9941 = vmax.f32 %v9925, %v9933
  %v9942 = vmax.f32 %v9926, %v9934
  %v9943 = vmax.f32 %v9927, %v9935
  %v9944 = vmax.f32 %v9928, %v9936
  %v9945 = vld [vmem:[%s4] sm:$0xff]
  %v9946 = vld [vmem:[%s4 + $0x8] sm:$0xff]
  %v9947 = vld [vmem:[%s4 + $0x10] sm:$0xff]
  %v9948 = vld [vmem:[%s4 + $0x18] sm:$0xff]
  %v9949 = vld [vmem:[%s4 + $0x20] sm:$0xff]
  %v9950 = vld [vmem:[%s4 + $0x28] sm:$0xff]
  %v9951 = vld [vmem:[%s4 + $0x30] sm:$0xff]
  %v9952 = vld [vmem:[%s4 + $0x38] sm:$0xff]
  %v9953 = vadd.f32 %v9937, %v9945
  %v9954 = vadd.f32 %v9938, %v9946
  %v9955 = vadd.f32 %v9939, %v9947
  %v9956 = vadd.f32 %v9940, %v9948
  %v9957 = vadd.f32 %v9941, %v9949
  %v9958 = vadd.f32 %v9942, %v9950
  %v9959 = vadd.f32 %v9943, %v9951
  %v9960 = vadd.f32 %v9944, %v9952
  %v9961 = vmax.f32 %v9953, 0.0
  %v9962 = vmax.f32 %v9954, 0.0
  %v9963 = vmax.f32 %v9955, 0.0
  %v9964 = vmax.f32 %v9956, 0.0
  %v9965 = vmax.f32 %v9957, 0.0
  %v9966 = vmax.f32 %v9958, 0.0
  %v9967 = vmax.f32 %v9959, 0.0
  %v9968 = vmax.f32 %v9960, 0.0
  %9969 = vst [vmem:[#allocation3 + $0x40] sm:$0xff] %v9961
  %9970 = vst [vmem:[#allocation3 + $0x48] sm:$0xff] %v9962
  %9971 = vst [vmem:[#allocation3 + $0x50] sm:$0xff] %v9963
  %9972 = vst [vmem:[#allocation3 + $0x58] sm:$0xff] %v9964
  %9973 = vst [vmem:[#allocation3 + $0x60] sm:$0xff] %v9965
  %9974 = vst [vmem:[#allocation3 + $0x68] sm:$0xff] %v9966
  %9975 = vst [vmem:[#allocation3 + $0x70] sm:$0xff] %v9967
  %9976 = vst [vmem:[#allocation3 + $0x78] sm:$0xff] %v9968
  %v9977 = vld [vmem:[#allocation2 + $0x180] sm:$0xff]
  %v9978 = vld [vmem:[#allocation2 + $0x188] sm:$0xff]
  %v9979 = vld [vmem:[#allocation2 + $0x190] sm:$0xff]
  %v9980 = vld [vmem:[#allocation2 + $0x198] sm:$0xff]
  %v9981 = vld [vmem:[#allocation2 + $0x1a0] sm:$0xff]
  %v9982 = vld [vmem:[#allocation2 + $0x1a8] sm:$0xff]
  %v9983 = vld [vmem:[#allocation2 + $0x1b0] sm:$0xff]
  %v9984 = vld [vmem:[#allocation2 + $0x1b8] sm:$0xff]
  %v9985 = vld [vmem:[#allocation2 + $0x1c0] sm:$0xff]
  %v9986 = vld [vmem:[#allocation2 + $0x1c8] sm:$0xff]
  %v9987 = vld [vmem:[#allocation2 + $0x1d0] sm:$0xff]
  %v9988 = vld [vmem:[#allocation2 + $0x1d8] sm:$0xff]
  %v9989 = vld [vmem:[#allocation2 + $0x1e0] sm:$0xff]
  %v9990 = vld [vmem:[#allocation2 + $0x1e8] sm:$0xff]
  %v9991 = vld [vmem:[#allocation2 + $0x1f0] sm:$0xff]
  %v9992 = vld [vmem:[#allocation2 + $0x1f8] sm:$0xff]
  %v9993 = vld [vmem:[#allocation2 + $0x200] sm:$0xff]
  %v9994 = vld [vmem:[#allocation2 + $0x208] sm:$0xff]
  %v9995 = vld [vmem:[#allocation2 + $0x210] sm:$0xff]
  %v9996 = vld [vmem:[#allocation2 + $0x218] sm:$0xff]
  %v9997 = vld [vmem:[#allocation2 + $0x220] sm:$0xff]
  %v9998 = vld [vmem:[#allocation2 + $0x228] sm:$0xff]
  %v9999 = vld [vmem:[#allocation2 + $0x230] sm:$0xff]
  %v10000 = vld [vmem:[#allocation2 + $0x238] sm:$0xff]
  %v10001 = vld [vmem:[#allocation2 + $0x240] sm:$0xff]
  %v10002 = vld [vmem:[#allocation2 + $0x248] sm:$0xff]
  %v10003 = vld [vmem:[#allocation2 + $0x250] sm:$0xff]
  %v10004 = vld [vmem:[#allocation2 + $0x258] sm:$0xff]
  %v10005 = vld [vmem:[#allocation2 + $0x260] sm:$0xff]
  %v10006 = vld [vmem:[#allocation2 + $0x268] sm:$0xff]
  %v10007 = vld [vmem:[#allocation2 + $0x270] sm:$0xff]
  %v10008 = vld [vmem:[#allocation2 + $0x278] sm:$0xff]
  %v10009 = vld [vmem:[#allocation2 + $0x280] sm:$0xff]
  %v10010 = vld [vmem:[#allocation2 + $0x288] sm:$0xff]
  %v10011 = vld [vmem:[#allocation2 + $0x290] sm:$0xff]
  %v10012 = vld [vmem:[#allocation2 + $0x298] sm:$0xff]
  %v10013 = vld [vmem:[#allocation2 + $0x2a0] sm:$0xff]
  %v10014 = vld [vmem:[#allocation2 + $0x2a8] sm:$0xff]
  %v10015 = vld [vmem:[#allocation2 + $0x2b0] sm:$0xff]
  %v10016 = vld [vmem:[#allocation2 + $0x2b8] sm:$0xff]
  %v10017 = vld [vmem:[#allocation2 + $0x2c0] sm:$0xff]
  %v10018 = vld [vmem:[#allocation2 + $0x2c8] sm:$0xff]
  %v10019 = vld [vmem:[#allocation2 + $0x2d0] sm:$0xff]
  %v10020 = vld [vmem:[#allocation2 + $0x2d8] sm:$0xff]
  %v10021 = vld [vmem:[#allocation2 + $0x2e0] sm:$0xff]
  %v10022 = vld [vmem:[#allocation2 + $0x2e8] sm:$0xff]
  %v10023 = vld [vmem:[#allocation2 + $0x2f0] sm:$0xff]
  %v10024 = vld [vmem:[#allocation2 + $0x2f8] sm:$0xff]
  %v10025 = vld [vmem:[#allocation2 + $0x300] sm:$0xff]
  %v10026 = vld [vmem:[#allocation2 + $0x308] sm:$0xff]
  %v10027 = vld [vmem:[#allocation2 + $0x310] sm:$0xff]
  %v10028 = vld [vmem:[#allocation2 + $0x318] sm:$0xff]
  %v10029 = vld [vmem:[#allocation2 + $0x320] sm:$0xff]
  %v10030 = vld [vmem:[#allocation2 + $0x328] sm:$0xff]
  %v10031 = vld [vmem:[#allocation2 + $0x330] sm:$0xff]
  %v10032 = vld [vmem:[#allocation2 + $0x338] sm:$0xff]
  %v10033 = vld [vmem:[#allocation2 + $0x340] sm:$0xff]
  %v10034 = vld [vmem:[#allocation2 + $0x348] sm:$0xff]
  %v10035 = vld [vmem:[#allocation2 + $0x350] sm:$0xff]
  %v10036 = vld [vmem:[#allocation2 + $0x358] sm:$0xff]
  %v10037 = vld [vmem:[#allocation2 + $0x360] sm:$0xff]
  %v10038 = vld [vmem:[#allocation2 + $0x368] sm:$0xff]
  %v10039 = vld [vmem:[#allocation2 + $0x370] sm:$0xff]
  %v10040 = vld [vmem:[#allocation2 + $0x378] sm:$0xff]
  %v10041 = vld [vmem:[#allocation2 + $0x380] sm:$0xff]
  %v10042 = vld [vmem:[#allocation2 + $0x388] sm:$0xff]
  %v10043 = vld [vmem:[#allocation2 + $0x390] sm:$0xff]
  %v10044 = vld [vmem:[#allocation2 + $0x398] sm:$0xff]
  %v10045 = vld [vmem:[#allocation2 + $0x3a0] sm:$0xff]
  %v10046 = vld [vmem:[#allocation2 + $0x3a8] sm:$0xff]
  %v10047 = vld [vmem:[#allocation2 + $0x3b0] sm:$0xff]
  %v10048 = vld [vmem:[#allocation2 + $0x3b8] sm:$0xff]
  %v10049 = vld [vmem:[%s3] sm:$0xff]
  %v10050 = vld [vmem:[%s3 + $0x8] sm:$0xff]
  %v10051 = vld [vmem:[%s3 + $0x10] sm:$0xff]
  %v10052 = vld [vmem:[%s3 + $0x18] sm:$0xff]
  %v10053 = vld [vmem:[%s3 + $0x20] sm:$0xff]
  %v10054 = vld [vmem:[%s3 + $0x28] sm:$0xff]
  %v10055 = vld [vmem:[%s3 + $0x30] sm:$0xff]
  %v10056 = vld [vmem:[%s3 + $0x38] sm:$0xff]
  %v10057 = vld [vmem:[%s3 + $0x40] sm:$0xff]
  %v10058 = vld [vmem:[%s3 + $0x48] sm:$0xff]
  %v10059 = vld [vmem:[%s3 + $0x50] sm:$0xff]
  %v10060 = vld [vmem:[%s3 + $0x58] sm:$0xff]
  %v10061 = vld [vmem:[%s3 + $0x60] sm:$0xff]
  %v10062 = vld [vmem:[%s3 + $0x68] sm:$0xff]
  %v10063 = vld [vmem:[%s3 + $0x70] sm:$0xff]
  %v10064 = vld [vmem:[%s3 + $0x78] sm:$0xff]
  %v10065 = vld [vmem:[%s3 + $0x80] sm:$0xff]
  %v10066 = vld [vmem:[%s3 + $0x88] sm:$0xff]
  %v10067 = vld [vmem:[%s3 + $0x90] sm:$0xff]
  %v10068 = vld [vmem:[%s3 + $0x98] sm:$0xff]
  %v10069 = vld [vmem:[%s3 + $0xa0] sm:$0xff]
  %v10070 = vld [vmem:[%s3 + $0xa8] sm:$0xff]
  %v10071 = vld [vmem:[%s3 + $0xb0] sm:$0xff]
  %v10072 = vld [vmem:[%s3 + $0xb8] sm:$0xff]
  %v10073 = vld [vmem:[%s3 + $0xc0] sm:$0xff]
  %v10074 = vld [vmem:[%s3 + $0xc8] sm:$0xff]
  %v10075 = vld [vmem:[%s3 + $0xd0] sm:$0xff]
  %v10076 = vld [vmem:[%s3 + $0xd8] sm:$0xff]
  %v10077 = vld [vmem:[%s3 + $0xe0] sm:$0xff]
  %v10078 = vld [vmem:[%s3 + $0xe8] sm:$0xff]
  %v10079 = vld [vmem:[%s3 + $0xf0] sm:$0xff]
  %v10080 = vld [vmem:[%s3 + $0xf8] sm:$0xff]
  %v10081 = vld [vmem:[%s3 + $0x100] sm:$0xff]
  %v10082 = vld [vmem:[%s3 + $0x108] sm:$0xff]
  %v10083 = vld [vmem:[%s3 + $0x110] sm:$0xff]
  %v10084 = vld [vmem:[%s3 + $0x118] sm:$0xff]
  %v10085 = vld [vmem:[%s3 + $0x120] sm:$0xff]
  %v10086 = vld [vmem:[%s3 + $0x128] sm:$0xff]
  %v10087 = vld [vmem:[%s3 + $0x130] sm:$0xff]
  %v10088 = vld [vmem:[%s3 + $0x138] sm:$0xff]
  %v10089 = vld [vmem:[%s3 + $0x140] sm:$0xff]
  %v10090 = vld [vmem:[%s3 + $0x148] sm:$0xff]
  %v10091 = vld [vmem:[%s3 + $0x150] sm:$0xff]
  %v10092 = vld [vmem:[%s3 + $0x158] sm:$0xff]
  %v10093 = vld [vmem:[%s3 + $0x160] sm:$0xff]
  %v10094 = vld [vmem:[%s3 + $0x168] sm:$0xff]
  %v10095 = vld [vmem:[%s3 + $0x170] sm:$0xff]
  %v10096 = vld [vmem:[%s3 + $0x178] sm:$0xff]
  %v10097 = vld [vmem:[%s3 + $0x180] sm:$0xff]
  %v10098 = vld [vmem:[%s3 + $0x188] sm:$0xff]
  %v10099 = vld [vmem:[%s3 + $0x190] sm:$0xff]
  %v10100 = vld [vmem:[%s3 + $0x198] sm:$0xff]
  %v10101 = vld [vmem:[%s3 + $0x1a0] sm:$0xff]
  %v10102 = vld [vmem:[%s3 + $0x1a8] sm:$0xff]
  %v10103 = vld [vmem:[%s3 + $0x1b0] sm:$0xff]
  %v10104 = vld [vmem:[%s3 + $0x1b8] sm:$0xff]
  %v10105 = vld [vmem:[%s3 + $0x1c0] sm:$0xff]
  %v10106 = vld [vmem:[%s3 + $0x1c8] sm:$0xff]
  %v10107 = vld [vmem:[%s3 + $0x1d0] sm:$0xff]
  %v10108 = vld [vmem:[%s3 + $0x1d8] sm:$0xff]
  %v10109 = vld [vmem:[%s3 + $0x1e0] sm:$0xff]
  %v10110 = vld [vmem:[%s3 + $0x1e8] sm:$0xff]
  %v10111 = vld [vmem:[%s3 + $0x1f0] sm:$0xff]
  %v10112 = vld [vmem:[%s3 + $0x1f8] sm:$0xff]
  %v10113 = vld [vmem:[%s3 + $0x200] sm:$0xff]
  %v10114 = vld [vmem:[%s3 + $0x208] sm:$0xff]
  %v10115 = vld [vmem:[%s3 + $0x210] sm:$0xff]
  %v10116 = vld [vmem:[%s3 + $0x218] sm:$0xff]
  %v10117 = vld [vmem:[%s3 + $0x220] sm:$0xff]
  %v10118 = vld [vmem:[%s3 + $0x228] sm:$0xff]
  %v10119 = vld [vmem:[%s3 + $0x230] sm:$0xff]
  %v10120 = vld [vmem:[%s3 + $0x238] sm:$0xff]
  %v10121 = vld [vmem:[%s3 + $0x240] sm:$0xff]
  %v10122 = vld [vmem:[%s3 + $0x248] sm:$0xff]
  %v10123 = vld [vmem:[%s3 + $0x250] sm:$0xff]
  %v10124 = vld [vmem:[%s3 + $0x258] sm:$0xff]
  %v10125 = vld [vmem:[%s3 + $0x260] sm:$0xff]
  %v10126 = vld [vmem:[%s3 + $0x268] sm:$0xff]
  %v10127 = vld [vmem:[%s3 + $0x270] sm:$0xff]
  %v10128 = vld [vmem:[%s3 + $0x278] sm:$0xff]
  %v10129 = vld [vmem:[%s3 + $0x280] sm:$0xff]
  %v10130 = vld [vmem:[%s3 + $0x288] sm:$0xff]
  %v10131 = vld [vmem:[%s3 + $0x290] sm:$0xff]
  %v10132 = vld [vmem:[%s3 + $0x298] sm:$0xff]
  %v10133 = vld [vmem:[%s3 + $0x2a0] sm:$0xff]
  %v10134 = vld [vmem:[%s3 + $0x2a8] sm:$0xff]
  %v10135 = vld [vmem:[%s3 + $0x2b0] sm:$0xff]
  %v10136 = vld [vmem:[%s3 + $0x2b8] sm:$0xff]
  %v10137 = vld [vmem:[%s3 + $0x2c0] sm:$0xff]
  %v10138 = vld [vmem:[%s3 + $0x2c8] sm:$0xff]
  %v10139 = vld [vmem:[%s3 + $0x2d0] sm:$0xff]
  %v10140 = vld [vmem:[%s3 + $0x2d8] sm:$0xff]
  %v10141 = vld [vmem:[%s3 + $0x2e0] sm:$0xff]
  %v10142 = vld [vmem:[%s3 + $0x2e8] sm:$0xff]
  %v10143 = vld [vmem:[%s3 + $0x2f0] sm:$0xff]
  %v10144 = vld [vmem:[%s3 + $0x2f8] sm:$0xff]
  %v10145 = vld [vmem:[%s3 + $0x300] sm:$0xff]
  %v10146 = vld [vmem:[%s3 + $0x308] sm:$0xff]
  %v10147 = vld [vmem:[%s3 + $0x310] sm:$0xff]
  %v10148 = vld [vmem:[%s3 + $0x318] sm:$0xff]
  %v10149 = vld [vmem:[%s3 + $0x320] sm:$0xff]
  %v10150 = vld [vmem:[%s3 + $0x328] sm:$0xff]
  %v10151 = vld [vmem:[%s3 + $0x330] sm:$0xff]
  %v10152 = vld [vmem:[%s3 + $0x338] sm:$0xff]
  %v10153 = vld [vmem:[%s3 + $0x340] sm:$0xff]
  %v10154 = vld [vmem:[%s3 + $0x348] sm:$0xff]
  %v10155 = vld [vmem:[%s3 + $0x350] sm:$0xff]
  %v10156 = vld [vmem:[%s3 + $0x358] sm:$0xff]
  %v10157 = vld [vmem:[%s3 + $0x360] sm:$0xff]
  %v10158 = vld [vmem:[%s3 + $0x368] sm:$0xff]
  %v10159 = vld [vmem:[%s3 + $0x370] sm:$0xff]
  %v10160 = vld [vmem:[%s3 + $0x378] sm:$0xff]
  %v10161 = vld [vmem:[%s3 + $0x380] sm:$0xff]
  %v10162 = vld [vmem:[%s3 + $0x388] sm:$0xff]
  %v10163 = vld [vmem:[%s3 + $0x390] sm:$0xff]
  %v10164 = vld [vmem:[%s3 + $0x398] sm:$0xff]
  %v10165 = vld [vmem:[%s3 + $0x3a0] sm:$0xff]
  %v10166 = vld [vmem:[%s3 + $0x3a8] sm:$0xff]
  %v10167 = vld [vmem:[%s3 + $0x3b0] sm:$0xff]
  %v10168 = vld [vmem:[%s3 + $0x3b8] sm:$0xff]
  %v10169 = vld [vmem:[%s3 + $0x3c0] sm:$0xff]
  %v10170 = vld [vmem:[%s3 + $0x3c8] sm:$0xff]
  %v10171 = vld [vmem:[%s3 + $0x3d0] sm:$0xff]
  %v10172 = vld [vmem:[%s3 + $0x3d8] sm:$0xff]
  %v10173 = vld [vmem:[%s3 + $0x3e0] sm:$0xff]
  %v10174 = vld [vmem:[%s3 + $0x3e8] sm:$0xff]
  %v10175 = vld [vmem:[%s3 + $0x3f0] sm:$0xff]
  %v10176 = vld [vmem:[%s3 + $0x3f8] sm:$0xff]
  %v10177 = vld [vmem:[%s3 + $0x400] sm:$0xff]
  %v10178 = vld [vmem:[%s3 + $0x408] sm:$0xff]
  %v10179 = vld [vmem:[%s3 + $0x410] sm:$0xff]
  %v10180 = vld [vmem:[%s3 + $0x418] sm:$0xff]
  %v10181 = vld [vmem:[%s3 + $0x420] sm:$0xff]
  %v10182 = vld [vmem:[%s3 + $0x428] sm:$0xff]
  %v10183 = vld [vmem:[%s3 + $0x430] sm:$0xff]
  %v10184 = vld [vmem:[%s3 + $0x438] sm:$0xff]
  %v10185 = vld [vmem:[%s3 + $0x440] sm:$0xff]
  %v10186 = vld [vmem:[%s3 + $0x448] sm:$0xff]
  %v10187 = vld [vmem:[%s3 + $0x450] sm:$0xff]
  %v10188 = vld [vmem:[%s3 + $0x458] sm:$0xff]
  %v10189 = vld [vmem:[%s3 + $0x460] sm:$0xff]
  %v10190 = vld [vmem:[%s3 + $0x468] sm:$0xff]
  %v10191 = vld [vmem:[%s3 + $0x470] sm:$0xff]
  %v10192 = vld [vmem:[%s3 + $0x478] sm:$0xff]
  %v10193 = vld [vmem:[%s3 + $0x480] sm:$0xff]
  %v10194 = vld [vmem:[%s3 + $0x488] sm:$0xff]
  %v10195 = vld [vmem:[%s3 + $0x490] sm:$0xff]
  %v10196 = vld [vmem:[%s3 + $0x498] sm:$0xff]
  %v10197 = vld [vmem:[%s3 + $0x4a0] sm:$0xff]
  %v10198 = vld [vmem:[%s3 + $0x4a8] sm:$0xff]
  %v10199 = vld [vmem:[%s3 + $0x4b0] sm:$0xff]
  %v10200 = vld [vmem:[%s3 + $0x4b8] sm:$0xff]
  %v10201 = vld [vmem:[%s3 + $0x4c0] sm:$0xff]
  %v10202 = vld [vmem:[%s3 + $0x4c8] sm:$0xff]
  %v10203 = vld [vmem:[%s3 + $0x4d0] sm:$0xff]
  %v10204 = vld [vmem:[%s3 + $0x4d8] sm:$0xff]
  %v10205 = vld [vmem:[%s3 + $0x4e0] sm:$0xff]
  %v10206 = vld [vmem:[%s3 + $0x4e8] sm:$0xff]
  %v10207 = vld [vmem:[%s3 + $0x4f0] sm:$0xff]
  %v10208 = vld [vmem:[%s3 + $0x4f8] sm:$0xff]
  %v10210 = vsel %vm158, %v10053, 0
  %v10213 = vsel %vm158, %v10058, 0
  %v10216 = vsel %vm158, %v10063, 0
  %v10219 = vsel %vm158, %v10068, 0
  %v10222 = vsel %vm158, %v10073, 0
  %v10225 = vsel %vm158, %v10078, 0
  %v10228 = vsel %vm158, %v10083, 0
  %v10231 = vsel %vm158, %v10088, 0
  %v10234 = vsel %vm158, %v10093, 0
  %v10237 = vsel %vm158, %v10098, 0
  %v10240 = vsel %vm158, %v10103, 0
  %v10243 = vsel %vm158, %v10108, 0
  %v10246 = vsel %vm158, %v10113, 0
  %v10249 = vsel %vm158, %v10118, 0
  %v10252 = vsel %vm158, %v10123, 0
  %v10255 = vsel %vm158, %v10128, 0
  %v10258 = vsel %vm158, %v10133, 0
  %v10261 = vsel %vm158, %v10138, 0
  %v10264 = vsel %vm158, %v10143, 0
  %v10267 = vsel %vm158, %v10148, 0
  %v10270 = vsel %vm158, %v10153, 0
  %v10273 = vsel %vm158, %v10158, 0
  %v10276 = vsel %vm158, %v10163, 0
  %v10279 = vsel %vm158, %v10168, 0
  %v10282 = vsel %vm158, %v10173, 0
  %v10285 = vsel %vm158, %v10178, 0
  %v10288 = vsel %vm158, %v10183, 0
  %v10291 = vsel %vm158, %v10188, 0
  %v10294 = vsel %vm158, %v10193, 0
  %v10297 = vsel %vm158, %v10198, 0
  %v10300 = vsel %vm158, %v10203, 0
  %v10303 = vsel %vm158, %v10208, 0
  %10305 = vmatpush.msra.mxu0 %v9992
  %10306 = vmatpush.msra.mxu0 %v9991
  %10307 = vmatpush.msra.mxu0 %v9990
  %10308 = vmatpush.msra.mxu0 %v9989
  %10309 = vmatpush.msra.mxu0 %v9988
  %10310 = vmatpush.msra.mxu0 %v9987
  %10311 = vmatpush.msra.mxu0 %v9986
  %10312 = vmatpush.msra.mxu0 %v9985
  %10313 = vmatpush.msra.mxu0 %v9984
  %10314 = vmatpush.msra.mxu0 %v9983
  %10315 = vmatpush.msra.mxu0 %v9982
  %10316 = vmatpush.msra.mxu0 %v9981
  %10317 = vmatpush.msra.mxu0 %v9980
  %10318 = vmatpush.msra.mxu0 %v9979
  %10319 = vmatpush.msra.mxu0 %v9978
  %10320 = vmatpush.msra.mxu0 %v9977
  %10321 = vmatmul.f32.gmra.mxu0 %v10049
  %v10322 = vpop.f32.mrf.mxu0
  %v10323 = vadd.f32 0.0, %v10322
  %10324 = vmatmul.f32.gmra.mxu0 %v10054
  %v10325 = vpop.f32.mrf.mxu0
  %v10326 = vadd.f32 0.0, %v10325
  %10327 = vmatmul.f32.gmra.mxu0 %v10059
  %v10328 = vpop.f32.mrf.mxu0
  %v10329 = vadd.f32 0.0, %v10328
  %10330 = vmatmul.f32.gmra.mxu0 %v10064
  %v10331 = vpop.f32.mrf.mxu0
  %v10332 = vadd.f32 0.0, %v10331
  %10333 = vmatmul.f32.gmra.mxu0 %v10069
  %v10334 = vpop.f32.mrf.mxu0
  %v10335 = vadd.f32 0.0, %v10334
  %10336 = vmatmul.f32.gmra.mxu0 %v10074
  %v10337 = vpop.f32.mrf.mxu0
  %v10338 = vadd.f32 0.0, %v10337
  %10339 = vmatmul.f32.gmra.mxu0 %v10079
  %v10340 = vpop.f32.mrf.mxu0
  %v10341 = vadd.f32 0.0, %v10340
  %10342 = vmatmul.f32.gmra.mxu0 %v10084
  %v10343 = vpop.f32.mrf.mxu0
  %v10344 = vadd.f32 0.0, %v10343
  %10345 = vmatmul.f32.gmra.mxu0 %v10089
  %v10346 = vpop.f32.mrf.mxu0
  %v10347 = vadd.f32 0.0, %v10346
  %10348 = vmatmul.f32.gmra.mxu0 %v10094
  %v10349 = vpop.f32.mrf.mxu0
  %v10350 = vadd.f32 0.0, %v10349
  %10351 = vmatmul.f32.gmra.mxu0 %v10099
  %v10352 = vpop.f32.mrf.mxu0
  %v10353 = vadd.f32 0.0, %v10352
  %10354 = vmatmul.f32.gmra.mxu0 %v10104
  %v10355 = vpop.f32.mrf.mxu0
  %v10356 = vadd.f32 0.0, %v10355
  %10357 = vmatmul.f32.gmra.mxu0 %v10109
  %v10358 = vpop.f32.mrf.mxu0
  %v10359 = vadd.f32 0.0, %v10358
  %10360 = vmatmul.f32.gmra.mxu0 %v10114
  %v10361 = vpop.f32.mrf.mxu0
  %v10362 = vadd.f32 0.0, %v10361
  %10363 = vmatmul.f32.gmra.mxu0 %v10119
  %v10364 = vpop.f32.mrf.mxu0
  %v10365 = vadd.f32 0.0, %v10364
  %10366 = vmatmul.f32.gmra.mxu0 %v10124
  %v10367 = vpop.f32.mrf.mxu0
  %v10368 = vadd.f32 0.0, %v10367
  %10369 = vmatmul.f32.gmra.mxu0 %v10129
  %v10370 = vpop.f32.mrf.mxu0
  %v10371 = vadd.f32 0.0, %v10370
  %10372 = vmatmul.f32.gmra.mxu0 %v10134
  %v10373 = vpop.f32.mrf.mxu0
  %v10374 = vadd.f32 0.0, %v10373
  %10375 = vmatmul.f32.gmra.mxu0 %v10139
  %v10376 = vpop.f32.mrf.mxu0
  %v10377 = vadd.f32 0.0, %v10376
  %10378 = vmatmul.f32.gmra.mxu0 %v10144
  %v10379 = vpop.f32.mrf.mxu0
  %v10380 = vadd.f32 0.0, %v10379
  %10381 = vmatmul.f32.gmra.mxu0 %v10149
  %v10382 = vpop.f32.mrf.mxu0
  %v10383 = vadd.f32 0.0, %v10382
  %10384 = vmatmul.f32.gmra.mxu0 %v10154
  %v10385 = vpop.f32.mrf.mxu0
  %v10386 = vadd.f32 0.0, %v10385
  %10387 = vmatmul.f32.gmra.mxu0 %v10159
  %v10388 = vpop.f32.mrf.mxu0
  %v10389 = vadd.f32 0.0, %v10388
  %10390 = vmatmul.f32.gmra.mxu0 %v10164
  %v10391 = vpop.f32.mrf.mxu0
  %v10392 = vadd.f32 0.0, %v10391
  %10393 = vmatmul.f32.gmra.mxu0 %v10169
  %v10394 = vpop.f32.mrf.mxu0
  %v10395 = vadd.f32 0.0, %v10394
  %10396 = vmatmul.f32.gmra.mxu0 %v10174
  %v10397 = vpop.f32.mrf.mxu0
  %v10398 = vadd.f32 0.0, %v10397
  %10399 = vmatmul.f32.gmra.mxu0 %v10179
  %v10400 = vpop.f32.mrf.mxu0
  %v10401 = vadd.f32 0.0, %v10400
  %10402 = vmatmul.f32.gmra.mxu0 %v10184
  %v10403 = vpop.f32.mrf.mxu0
  %v10404 = vadd.f32 0.0, %v10403
  %10405 = vmatmul.f32.gmra.mxu0 %v10189
  %v10406 = vpop.f32.mrf.mxu0
  %v10407 = vadd.f32 0.0, %v10406
  %10408 = vmatmul.f32.gmra.mxu0 %v10194
  %v10409 = vpop.f32.mrf.mxu0
  %v10410 = vadd.f32 0.0, %v10409
  %10411 = vmatmul.f32.gmra.mxu0 %v10199
  %v10412 = vpop.f32.mrf.mxu0
  %v10413 = vadd.f32 0.0, %v10412
  %10414 = vmatmul.f32.gmra.mxu0 %v10204
  %v10415 = vpop.f32.mrf.mxu0
  %v10416 = vadd.f32 0.0, %v10415
  %10417 = vdwg.mxu0
  %10418 = vmatpush.msra.mxu0 %v10008
  %10419 = vmatpush.msra.mxu0 %v10007
  %10420 = vmatpush.msra.mxu0 %v10006
  %10421 = vmatpush.msra.mxu0 %v10005
  %10422 = vmatpush.msra.mxu0 %v10004
  %10423 = vmatpush.msra.mxu0 %v10003
  %10424 = vmatpush.msra.mxu0 %v10002
  %10425 = vmatpush.msra.mxu0 %v10001
  %10426 = vmatpush.msra.mxu0 %v10000
  %10427 = vmatpush.msra.mxu0 %v9999
  %10428 = vmatpush.msra.mxu0 %v9998
  %10429 = vmatpush.msra.mxu0 %v9997
  %10430 = vmatpush.msra.mxu0 %v9996
  %10431 = vmatpush.msra.mxu0 %v9995
  %10432 = vmatpush.msra.mxu0 %v9994
  %10433 = vmatpush.msra.mxu0 %v9993
  %10434 = vmatmul.f32.gmra.mxu0 %v10050
  %v10435 = vpop.f32.mrf.mxu0
  %v10436 = vadd.f32 %v10323, %v10435
  %10437 = vmatmul.f32.gmra.mxu0 %v10055
  %v10438 = vpop.f32.mrf.mxu0
  %v10439 = vadd.f32 %v10326, %v10438
  %10440 = vmatmul.f32.gmra.mxu0 %v10060
  %v10441 = vpop.f32.mrf.mxu0
  %v10442 = vadd.f32 %v10329, %v10441
  %10443 = vmatmul.f32.gmra.mxu0 %v10065
  %v10444 = vpop.f32.mrf.mxu0
  %v10445 = vadd.f32 %v10332, %v10444
  %10446 = vmatmul.f32.gmra.mxu0 %v10070
  %v10447 = vpop.f32.mrf.mxu0
  %v10448 = vadd.f32 %v10335, %v10447
  %10449 = vmatmul.f32.gmra.mxu0 %v10075
  %v10450 = vpop.f32.mrf.mxu0
  %v10451 = vadd.f32 %v10338, %v10450
  %10452 = vmatmul.f32.gmra.mxu0 %v10080
  %v10453 = vpop.f32.mrf.mxu0
  %v10454 = vadd.f32 %v10341, %v10453
  %10455 = vmatmul.f32.gmra.mxu0 %v10085
  %v10456 = vpop.f32.mrf.mxu0
  %v10457 = vadd.f32 %v10344, %v10456
  %10458 = vmatmul.f32.gmra.mxu0 %v10090
  %v10459 = vpop.f32.mrf.mxu0
  %v10460 = vadd.f32 %v10347, %v10459
  %10461 = vmatmul.f32.gmra.mxu0 %v10095
  %v10462 = vpop.f32.mrf.mxu0
  %v10463 = vadd.f32 %v10350, %v10462
  %10464 = vmatmul.f32.gmra.mxu0 %v10100
  %v10465 = vpop.f32.mrf.mxu0
  %v10466 = vadd.f32 %v10353, %v10465
  %10467 = vmatmul.f32.gmra.mxu0 %v10105
  %v10468 = vpop.f32.mrf.mxu0
  %v10469 = vadd.f32 %v10356, %v10468
  %10470 = vmatmul.f32.gmra.mxu0 %v10110
  %v10471 = vpop.f32.mrf.mxu0
  %v10472 = vadd.f32 %v10359, %v10471
  %10473 = vmatmul.f32.gmra.mxu0 %v10115
  %v10474 = vpop.f32.mrf.mxu0
  %v10475 = vadd.f32 %v10362, %v10474
  %10476 = vmatmul.f32.gmra.mxu0 %v10120
  %v10477 = vpop.f32.mrf.mxu0
  %v10478 = vadd.f32 %v10365, %v10477
  %10479 = vmatmul.f32.gmra.mxu0 %v10125
  %v10480 = vpop.f32.mrf.mxu0
  %v10481 = vadd.f32 %v10368, %v10480
  %10482 = vmatmul.f32.gmra.mxu0 %v10130
  %v10483 = vpop.f32.mrf.mxu0
  %v10484 = vadd.f32 %v10371, %v10483
  %10485 = vmatmul.f32.gmra.mxu0 %v10135
  %v10486 = vpop.f32.mrf.mxu0
  %v10487 = vadd.f32 %v10374, %v10486
  %10488 = vmatmul.f32.gmra.mxu0 %v10140
  %v10489 = vpop.f32.mrf.mxu0
  %v10490 = vadd.f32 %v10377, %v10489
  %10491 = vmatmul.f32.gmra.mxu0 %v10145
  %v10492 = vpop.f32.mrf.mxu0
  %v10493 = vadd.f32 %v10380, %v10492
  %10494 = vmatmul.f32.gmra.mxu0 %v10150
  %v10495 = vpop.f32.mrf.mxu0
  %v10496 = vadd.f32 %v10383, %v10495
  %10497 = vmatmul.f32.gmra.mxu0 %v10155
  %v10498 = vpop.f32.mrf.mxu0
  %v10499 = vadd.f32 %v10386, %v10498
  %10500 = vmatmul.f32.gmra.mxu0 %v10160
  %v10501 = vpop.f32.mrf.mxu0
  %v10502 = vadd.f32 %v10389, %v10501
  %10503 = vmatmul.f32.gmra.mxu0 %v10165
  %v10504 = vpop.f32.mrf.mxu0
  %v10505 = vadd.f32 %v10392, %v10504
  %10506 = vmatmul.f32.gmra.mxu0 %v10170
  %v10507 = vpop.f32.mrf.mxu0
  %v10508 = vadd.f32 %v10395, %v10507
  %10509 = vmatmul.f32.gmra.mxu0 %v10175
  %v10510 = vpop.f32.mrf.mxu0
  %v10511 = vadd.f32 %v10398, %v10510
  %10512 = vmatmul.f32.gmra.mxu0 %v10180
  %v10513 = vpop.f32.mrf.mxu0
  %v10514 = vadd.f32 %v10401, %v10513
  %10515 = vmatmul.f32.gmra.mxu0 %v10185
  %v10516 = vpop.f32.mrf.mxu0
  %v10517 = vadd.f32 %v10404, %v10516
  %10518 = vmatmul.f32.gmra.mxu0 %v10190
  %v10519 = vpop.f32.mrf.mxu0
  %v10520 = vadd.f32 %v10407, %v10519
  %10521 = vmatmul.f32.gmra.mxu0 %v10195
  %v10522 = vpop.f32.mrf.mxu0
  %v10523 = vadd.f32 %v10410, %v10522
  %10524 = vmatmul.f32.gmra.mxu0 %v10200
  %v10525 = vpop.f32.mrf.mxu0
  %v10526 = vadd.f32 %v10413, %v10525
  %10527 = vmatmul.f32.gmra.mxu0 %v10205
  %v10528 = vpop.f32.mrf.mxu0
  %v10529 = vadd.f32 %v10416, %v10528
  %10530 = vdwg.mxu0
  %10531 = vmatpush.msra.mxu0 %v10024
  %10532 = vmatpush.msra.mxu0 %v10023
  %10533 = vmatpush.msra.mxu0 %v10022
  %10534 = vmatpush.msra.mxu0 %v10021
  %10535 = vmatpush.msra.mxu0 %v10020
  %10536 = vmatpush.msra.mxu0 %v10019
  %10537 = vmatpush.msra.mxu0 %v10018
  %10538 = vmatpush.msra.mxu0 %v10017
  %10539 = vmatpush.msra.mxu0 %v10016
  %10540 = vmatpush.msra.mxu0 %v10015
  %10541 = vmatpush.msra.mxu0 %v10014
  %10542 = vmatpush.msra.mxu0 %v10013
  %10543 = vmatpush.msra.mxu0 %v10012
  %10544 = vmatpush.msra.mxu0 %v10011
  %10545 = vmatpush.msra.mxu0 %v10010
  %10546 = vmatpush.msra.mxu0 %v10009
  %10547 = vmatmul.f32.gmra.mxu0 %v10051
  %v10548 = vpop.f32.mrf.mxu0
  %v10549 = vadd.f32 %v10436, %v10548
  %10550 = vmatmul.f32.gmra.mxu0 %v10056
  %v10551 = vpop.f32.mrf.mxu0
  %v10552 = vadd.f32 %v10439, %v10551
  %10553 = vmatmul.f32.gmra.mxu0 %v10061
  %v10554 = vpop.f32.mrf.mxu0
  %v10555 = vadd.f32 %v10442, %v10554
  %10556 = vmatmul.f32.gmra.mxu0 %v10066
  %v10557 = vpop.f32.mrf.mxu0
  %v10558 = vadd.f32 %v10445, %v10557
  %10559 = vmatmul.f32.gmra.mxu0 %v10071
  %v10560 = vpop.f32.mrf.mxu0
  %v10561 = vadd.f32 %v10448, %v10560
  %10562 = vmatmul.f32.gmra.mxu0 %v10076
  %v10563 = vpop.f32.mrf.mxu0
  %v10564 = vadd.f32 %v10451, %v10563
  %10565 = vmatmul.f32.gmra.mxu0 %v10081
  %v10566 = vpop.f32.mrf.mxu0
  %v10567 = vadd.f32 %v10454, %v10566
  %10568 = vmatmul.f32.gmra.mxu0 %v10086
  %v10569 = vpop.f32.mrf.mxu0
  %v10570 = vadd.f32 %v10457, %v10569
  %10571 = vmatmul.f32.gmra.mxu0 %v10091
  %v10572 = vpop.f32.mrf.mxu0
  %v10573 = vadd.f32 %v10460, %v10572
  %10574 = vmatmul.f32.gmra.mxu0 %v10096
  %v10575 = vpop.f32.mrf.mxu0
  %v10576 = vadd.f32 %v10463, %v10575
  %10577 = vmatmul.f32.gmra.mxu0 %v10101
  %v10578 = vpop.f32.mrf.mxu0
  %v10579 = vadd.f32 %v10466, %v10578
  %10580 = vmatmul.f32.gmra.mxu0 %v10106
  %v10581 = vpop.f32.mrf.mxu0
  %v10582 = vadd.f32 %v10469, %v10581
  %10583 = vmatmul.f32.gmra.mxu0 %v10111
  %v10584 = vpop.f32.mrf.mxu0
  %v10585 = vadd.f32 %v10472, %v10584
  %10586 = vmatmul.f32.gmra.mxu0 %v10116
  %v10587 = vpop.f32.mrf.mxu0
  %v10588 = vadd.f32 %v10475, %v10587
  %10589 = vmatmul.f32.gmra.mxu0 %v10121
  %v10590 = vpop.f32.mrf.mxu0
  %v10591 = vadd.f32 %v10478, %v10590
  %10592 = vmatmul.f32.gmra.mxu0 %v10126
  %v10593 = vpop.f32.mrf.mxu0
  %v10594 = vadd.f32 %v10481, %v10593
  %10595 = vmatmul.f32.gmra.mxu0 %v10131
  %v10596 = vpop.f32.mrf.mxu0
  %v10597 = vadd.f32 %v10484, %v10596
  %10598 = vmatmul.f32.gmra.mxu0 %v10136
  %v10599 = vpop.f32.mrf.mxu0
  %v10600 = vadd.f32 %v10487, %v10599
  %10601 = vmatmul.f32.gmra.mxu0 %v10141
  %v10602 = vpop.f32.mrf.mxu0
  %v10603 = vadd.f32 %v10490, %v10602
  %10604 = vmatmul.f32.gmra.mxu0 %v10146
  %v10605 = vpop.f32.mrf.mxu0
  %v10606 = vadd.f32 %v10493, %v10605
  %10607 = vmatmul.f32.gmra.mxu0 %v10151
  %v10608 = vpop.f32.mrf.mxu0
  %v10609 = vadd.f32 %v10496, %v10608
  %10610 = vmatmul.f32.gmra.mxu0 %v10156
  %v10611 = vpop.f32.mrf.mxu0
  %v10612 = vadd.f32 %v10499, %v10611
  %10613 = vmatmul.f32.gmra.mxu0 %v10161
  %v10614 = vpop.f32.mrf.mxu0
  %v10615 = vadd.f32 %v10502, %v10614
  %10616 = vmatmul.f32.gmra.mxu0 %v10166
  %v10617 = vpop.f32.mrf.mxu0
  %v10618 = vadd.f32 %v10505, %v10617
  %10619 = vmatmul.f32.gmra.mxu0 %v10171
  %v10620 = vpop.f32.mrf.mxu0
  %v10621 = vadd.f32 %v10508, %v10620
  %10622 = vmatmul.f32.gmra.mxu0 %v10176
  %v10623 = vpop.f32.mrf.mxu0
  %v10624 = vadd.f32 %v10511, %v10623
  %10625 = vmatmul.f32.gmra.mxu0 %v10181
  %v10626 = vpop.f32.mrf.mxu0
  %v10627 = vadd.f32 %v10514, %v10626
  %10628 = vmatmul.f32.gmra.mxu0 %v10186
  %v10629 = vpop.f32.mrf.mxu0
  %v10630 = vadd.f32 %v10517, %v10629
  %10631 = vmatmul.f32.gmra.mxu0 %v10191
  %v10632 = vpop.f32.mrf.mxu0
  %v10633 = vadd.f32 %v10520, %v10632
  %10634 = vmatmul.f32.gmra.mxu0 %v10196
  %v10635 = vpop.f32.mrf.mxu0
  %v10636 = vadd.f32 %v10523, %v10635
  %10637 = vmatmul.f32.gmra.mxu0 %v10201
  %v10638 = vpop.f32.mrf.mxu0
  %v10639 = vadd.f32 %v10526, %v10638
  %10640 = vmatmul.f32.gmra.mxu0 %v10206
  %v10641 = vpop.f32.mrf.mxu0
  %v10642 = vadd.f32 %v10529, %v10641
  %10643 = vdwg.mxu0
  %10644 = vmatpush.msra.mxu0 %v10040
  %10645 = vmatpush.msra.mxu0 %v10039
  %10646 = vmatpush.msra.mxu0 %v10038
  %10647 = vmatpush.msra.mxu0 %v10037
  %10648 = vmatpush.msra.mxu0 %v10036
  %10649 = vmatpush.msra.mxu0 %v10035
  %10650 = vmatpush.msra.mxu0 %v10034
  %10651 = vmatpush.msra.mxu0 %v10033
  %10652 = vmatpush.msra.mxu0 %v10032
  %10653 = vmatpush.msra.mxu0 %v10031
  %10654 = vmatpush.msra.mxu0 %v10030
  %10655 = vmatpush.msra.mxu0 %v10029
  %10656 = vmatpush.msra.mxu0 %v10028
  %10657 = vmatpush.msra.mxu0 %v10027
  %10658 = vmatpush.msra.mxu0 %v10026
  %10659 = vmatpush.msra.mxu0 %v10025
  %10660 = vmatmul.f32.gmra.mxu0 %v10052
  %v10661 = vpop.f32.mrf.mxu0
  %v10662 = vadd.f32 %v10549, %v10661
  %10663 = vmatmul.f32.gmra.mxu0 %v10057
  %v10664 = vpop.f32.mrf.mxu0
  %v10665 = vadd.f32 %v10552, %v10664
  %10666 = vmatmul.f32.gmra.mxu0 %v10062
  %v10667 = vpop.f32.mrf.mxu0
  %v10668 = vadd.f32 %v10555, %v10667
  %10669 = vmatmul.f32.gmra.mxu0 %v10067
  %v10670 = vpop.f32.mrf.mxu0
  %v10671 = vadd.f32 %v10558, %v10670
  %10672 = vmatmul.f32.gmra.mxu0 %v10072
  %v10673 = vpop.f32.mrf.mxu0
  %v10674 = vadd.f32 %v10561, %v10673
  %10675 = vmatmul.f32.gmra.mxu0 %v10077
  %v10676 = vpop.f32.mrf.mxu0
  %v10677 = vadd.f32 %v10564, %v10676
  %10678 = vmatmul.f32.gmra.mxu0 %v10082
  %v10679 = vpop.f32.mrf.mxu0
  %v10680 = vadd.f32 %v10567, %v10679
  %10681 = vmatmul.f32.gmra.mxu0 %v10087
  %v10682 = vpop.f32.mrf.mxu0
  %v10683 = vadd.f32 %v10570, %v10682
  %10684 = vmatmul.f32.gmra.mxu0 %v10092
  %v10685 = vpop.f32.mrf.mxu0
  %v10686 = vadd.f32 %v10573, %v10685
  %10687 = vmatmul.f32.gmra.mxu0 %v10097
  %v10688 = vpop.f32.mrf.mxu0
  %v10689 = vadd.f32 %v10576, %v10688
  %10690 = vmatmul.f32.gmra.mxu0 %v10102
  %v10691 = vpop.f32.mrf.mxu0
  %v10692 = vadd.f32 %v10579, %v10691
  %10693 = vmatmul.f32.gmra.mxu0 %v10107
  %v10694 = vpop.f32.mrf.mxu0
  %v10695 = vadd.f32 %v10582, %v10694
  %10696 = vmatmul.f32.gmra.mxu0 %v10112
  %v10697 = vpop.f32.mrf.mxu0
  %v10698 = vadd.f32 %v10585, %v10697
  %10699 = vmatmul.f32.gmra.mxu0 %v10117
  %v10700 = vpop.f32.mrf.mxu0
  %v10701 = vadd.f32 %v10588, %v10700
  %10702 = vmatmul.f32.gmra.mxu0 %v10122
  %v10703 = vpop.f32.mrf.mxu0
  %v10704 = vadd.f32 %v10591, %v10703
  %10705 = vmatmul.f32.gmra.mxu0 %v10127
  %v10706 = vpop.f32.mrf.mxu0
  %v10707 = vadd.f32 %v10594, %v10706
  %10708 = vmatmul.f32.gmra.mxu0 %v10132
  %v10709 = vpop.f32.mrf.mxu0
  %v10710 = vadd.f32 %v10597, %v10709
  %10711 = vmatmul.f32.gmra.mxu0 %v10137
  %v10712 = vpop.f32.mrf.mxu0
  %v10713 = vadd.f32 %v10600, %v10712
  %10714 = vmatmul.f32.gmra.mxu0 %v10142
  %v10715 = vpop.f32.mrf.mxu0
  %v10716 = vadd.f32 %v10603, %v10715
  %10717 = vmatmul.f32.gmra.mxu0 %v10147
  %v10718 = vpop.f32.mrf.mxu0
  %v10719 = vadd.f32 %v10606, %v10718
  %10720 = vmatmul.f32.gmra.mxu0 %v10152
  %v10721 = vpop.f32.mrf.mxu0
  %v10722 = vadd.f32 %v10609, %v10721
  %10723 = vmatmul.f32.gmra.mxu0 %v10157
  %v10724 = vpop.f32.mrf.mxu0
  %v10725 = vadd.f32 %v10612, %v10724
  %10726 = vmatmul.f32.gmra.mxu0 %v10162
  %v10727 = vpop.f32.mrf.mxu0
  %v10728 = vadd.f32 %v10615, %v10727
  %10729 = vmatmul.f32.gmra.mxu0 %v10167
  %v10730 = vpop.f32.mrf.mxu0
  %v10731 = vadd.f32 %v10618, %v10730
  %10732 = vmatmul.f32.gmra.mxu0 %v10172
  %v10733 = vpop.f32.mrf.mxu0
  %v10734 = vadd.f32 %v10621, %v10733
  %10735 = vmatmul.f32.gmra.mxu0 %v10177
  %v10736 = vpop.f32.mrf.mxu0
  %v10737 = vadd.f32 %v10624, %v10736
  %10738 = vmatmul.f32.gmra.mxu0 %v10182
  %v10739 = vpop.f32.mrf.mxu0
  %v10740 = vadd.f32 %v10627, %v10739
  %10741 = vmatmul.f32.gmra.mxu0 %v10187
  %v10742 = vpop.f32.mrf.mxu0
  %v10743 = vadd.f32 %v10630, %v10742
  %10744 = vmatmul.f32.gmra.mxu0 %v10192
  %v10745 = vpop.f32.mrf.mxu0
  %v10746 = vadd.f32 %v10633, %v10745
  %10747 = vmatmul.f32.gmra.mxu0 %v10197
  %v10748 = vpop.f32.mrf.mxu0
  %v10749 = vadd.f32 %v10636, %v10748
  %10750 = vmatmul.f32.gmra.mxu0 %v10202
  %v10751 = vpop.f32.mrf.mxu0
  %v10752 = vadd.f32 %v10639, %v10751
  %10753 = vmatmul.f32.gmra.mxu0 %v10207
  %v10754 = vpop.f32.mrf.mxu0
  %v10755 = vadd.f32 %v10642, %v10754
  %10756 = vdwg.mxu0
  %10757 = vmatpush.msra.mxu0 0.0
  %10758 = vmatpush.msra.mxu0 0.0
  %10759 = vmatpush.msra.mxu0 0.0
  %10760 = vmatpush.msra.mxu0 0.0
  %10761 = vmatpush.msra.mxu0 0.0
  %10762 = vmatpush.msra.mxu0 0.0
  %10763 = vmatpush.msra.mxu0 0.0
  %10764 = vmatpush.msra.mxu0 0.0
  %10765 = vmatpush.msra.mxu0 %v10048
  %10766 = vmatpush.msra.mxu0 %v10047
  %10767 = vmatpush.msra.mxu0 %v10046
  %10768 = vmatpush.msra.mxu0 %v10045
  %10769 = vmatpush.msra.mxu0 %v10044
  %10770 = vmatpush.msra.mxu0 %v10043
  %10771 = vmatpush.msra.mxu0 %v10042
  %10772 = vmatpush.msra.mxu0 %v10041
  %10773 = vmatmul.f32.gmra.mxu0 %v10210
  %v10774 = vpop.f32.mrf.mxu0
  %v10775 = vadd.f32 %v10662, %v10774
  %10776 = vmatmul.f32.gmra.mxu0 %v10213
  %v10777 = vpop.f32.mrf.mxu0
  %v10778 = vadd.f32 %v10665, %v10777
  %10779 = vmatmul.f32.gmra.mxu0 %v10216
  %v10780 = vpop.f32.mrf.mxu0
  %v10781 = vadd.f32 %v10668, %v10780
  %10782 = vmatmul.f32.gmra.mxu0 %v10219
  %v10783 = vpop.f32.mrf.mxu0
  %v10784 = vadd.f32 %v10671, %v10783
  %10785 = vmatmul.f32.gmra.mxu0 %v10222
  %v10786 = vpop.f32.mrf.mxu0
  %v10787 = vadd.f32 %v10674, %v10786
  %10788 = vmatmul.f32.gmra.mxu0 %v10225
  %v10789 = vpop.f32.mrf.mxu0
  %v10790 = vadd.f32 %v10677, %v10789
  %10791 = vmatmul.f32.gmra.mxu0 %v10228
  %v10792 = vpop.f32.mrf.mxu0
  %v10793 = vadd.f32 %v10680, %v10792
  %10794 = vmatmul.f32.gmra.mxu0 %v10231
  %v10795 = vpop.f32.mrf.mxu0
  %v10796 = vadd.f32 %v10683, %v10795
  %10797 = vmatmul.f32.gmra.mxu0 %v10234
  %v10798 = vpop.f32.mrf.mxu0
  %v10799 = vadd.f32 %v10686, %v10798
  %10800 = vmatmul.f32.gmra.mxu0 %v10237
  %v10801 = vpop.f32.mrf.mxu0
  %v10802 = vadd.f32 %v10689, %v10801
  %10803 = vmatmul.f32.gmra.mxu0 %v10240
  %v10804 = vpop.f32.mrf.mxu0
  %v10805 = vadd.f32 %v10692, %v10804
  %10806 = vmatmul.f32.gmra.mxu0 %v10243
  %v10807 = vpop.f32.mrf.mxu0
  %v10808 = vadd.f32 %v10695, %v10807
  %10809 = vmatmul.f32.gmra.mxu0 %v10246
  %v10810 = vpop.f32.mrf.mxu0
  %v10811 = vadd.f32 %v10698, %v10810
  %10812 = vmatmul.f32.gmra.mxu0 %v10249
  %v10813 = vpop.f32.mrf.mxu0
  %v10814 = vadd.f32 %v10701, %v10813
  %10815 = vmatmul.f32.gmra.mxu0 %v10252
  %v10816 = vpop.f32.mrf.mxu0
  %v10817 = vadd.f32 %v10704, %v10816
  %10818 = vmatmul.f32.gmra.mxu0 %v10255
  %v10819 = vpop.f32.mrf.mxu0
  %v10820 = vadd.f32 %v10707, %v10819
  %10821 = vmatmul.f32.gmra.mxu0 %v10258
  %v10822 = vpop.f32.mrf.mxu0
  %v10823 = vadd.f32 %v10710, %v10822
  %10824 = vmatmul.f32.gmra.mxu0 %v10261
  %v10825 = vpop.f32.mrf.mxu0
  %v10826 = vadd.f32 %v10713, %v10825
  %10827 = vmatmul.f32.gmra.mxu0 %v10264
  %v10828 = vpop.f32.mrf.mxu0
  %v10829 = vadd.f32 %v10716, %v10828
  %10830 = vmatmul.f32.gmra.mxu0 %v10267
  %v10831 = vpop.f32.mrf.mxu0
  %v10832 = vadd.f32 %v10719, %v10831
  %10833 = vmatmul.f32.gmra.mxu0 %v10270
  %v10834 = vpop.f32.mrf.mxu0
  %v10835 = vadd.f32 %v10722, %v10834
  %10836 = vmatmul.f32.gmra.mxu0 %v10273
  %v10837 = vpop.f32.mrf.mxu0
  %v10838 = vadd.f32 %v10725, %v10837
  %10839 = vmatmul.f32.gmra.mxu0 %v10276
  %v10840 = vpop.f32.mrf.mxu0
  %v10841 = vadd.f32 %v10728, %v10840
  %10842 = vmatmul.f32.gmra.mxu0 %v10279
  %v10843 = vpop.f32.mrf.mxu0
  %v10844 = vadd.f32 %v10731, %v10843
  %10845 = vmatmul.f32.gmra.mxu0 %v10282
  %v10846 = vpop.f32.mrf.mxu0
  %v10847 = vadd.f32 %v10734, %v10846
  %10848 = vmatmul.f32.gmra.mxu0 %v10285
  %v10849 = vpop.f32.mrf.mxu0
  %v10850 = vadd.f32 %v10737, %v10849
  %10851 = vmatmul.f32.gmra.mxu0 %v10288
  %v10852 = vpop.f32.mrf.mxu0
  %v10853 = vadd.f32 %v10740, %v10852
  %10854 = vmatmul.f32.gmra.mxu0 %v10291
  %v10855 = vpop.f32.mrf.mxu0
  %v10856 = vadd.f32 %v10743, %v10855
  %10857 = vmatmul.f32.gmra.mxu0 %v10294
  %v10858 = vpop.f32.mrf.mxu0
  %v10859 = vadd.f32 %v10746, %v10858
  %10860 = vmatmul.f32.gmra.mxu0 %v10297
  %v10861 = vpop.f32.mrf.mxu0
  %v10862 = vadd.f32 %v10749, %v10861
  %10863 = vmatmul.f32.gmra.mxu0 %v10300
  %v10864 = vpop.f32.mrf.mxu0
  %v10865 = vadd.f32 %v10752, %v10864
  %10866 = vmatmul.f32.gmra.mxu0 %v10303
  %v10867 = vpop.f32.mrf.mxu0
  %v10868 = vadd.f32 %v10755, %v10867
  %10869 = vdwg.mxu0
  %v10870 = vmax.f32 %v10775, %v10823
  %v10871 = vmax.f32 %v10778, %v10826
  %v10872 = vmax.f32 %v10781, %v10829
  %v10873 = vmax.f32 %v10784, %v10832
  %v10874 = vmax.f32 %v10787, %v10835
  %v10875 = vmax.f32 %v10790, %v10838
  %v10876 = vmax.f32 %v10793, %v10841
  %v10877 = vmax.f32 %v10796, %v10844
  %v10878 = vmax.f32 %v10799, %v10847
  %v10879 = vmax.f32 %v10802, %v10850
  %v10880 = vmax.f32 %v10805, %v10853
  %v10881 = vmax.f32 %v10808, %v10856
  %v10882 = vmax.f32 %v10811, %v10859
  %v10883 = vmax.f32 %v10814, %v10862
  %v10884 = vmax.f32 %v10817, %v10865
  %v10885 = vmax.f32 %v10820, %v10868
  %v10886 = vmax.f32 %v10870, %v10878
  %v10887 = vmax.f32 %v10871, %v10879
  %v10888 = vmax.f32 %v10872, %v10880
  %v10889 = vmax.f32 %v10873, %v10881
  %v10890 = vmax.f32 %v10874, %v10882
  %v10891 = vmax.f32 %v10875, %v10883
  %v10892 = vmax.f32 %v10876, %v10884
  %v10893 = vmax.f32 %v10877, %v10885
  %v10894 = vld [vmem:[%s4] sm:$0xff]
  %v10895 = vld [vmem:[%s4 + $0x8] sm:$0xff]
  %v10896 = vld [vmem:[%s4 + $0x10] sm:$0xff]
  %v10897 = vld [vmem:[%s4 + $0x18] sm:$0xff]
  %v10898 = vld [vmem:[%s4 + $0x20] sm:$0xff]
  %v10899 = vld [vmem:[%s4 + $0x28] sm:$0xff]
  %v10900 = vld [vmem:[%s4 + $0x30] sm:$0xff]
  %v10901 = vld [vmem:[%s4 + $0x38] sm:$0xff]
  %v10902 = vadd.f32 %v10886, %v10894
  %v10903 = vadd.f32 %v10887, %v10895
  %v10904 = vadd.f32 %v10888, %v10896
  %v10905 = vadd.f32 %v10889, %v10897
  %v10906 = vadd.f32 %v10890, %v10898
  %v10907 = vadd.f32 %v10891, %v10899
  %v10908 = vadd.f32 %v10892, %v10900
  %v10909 = vadd.f32 %v10893, %v10901
  %v10910 = vmax.f32 %v10902, 0.0
  %v10911 = vmax.f32 %v10903, 0.0
  %v10912 = vmax.f32 %v10904, 0.0
  %v10913 = vmax.f32 %v10905, 0.0
  %v10914 = vmax.f32 %v10906, 0.0
  %v10915 = vmax.f32 %v10907, 0.0
  %v10916 = vmax.f32 %v10908, 0.0
  %v10917 = vmax.f32 %v10909, 0.0
  %10918 = vst [vmem:[#allocation3 + $0x80] sm:$0xff] %v10910
  %10919 = vst [vmem:[#allocation3 + $0x88] sm:$0xff] %v10911
  %10920 = vst [vmem:[#allocation3 + $0x90] sm:$0xff] %v10912
  %10921 = vst [vmem:[#allocation3 + $0x98] sm:$0xff] %v10913
  %10922 = vst [vmem:[#allocation3 + $0xa0] sm:$0xff] %v10914
  %10923 = vst [vmem:[#allocation3 + $0xa8] sm:$0xff] %v10915
  %10924 = vst [vmem:[#allocation3 + $0xb0] sm:$0xff] %v10916
  %10925 = vst [vmem:[#allocation3 + $0xb8] sm:$0xff] %v10917
  %v10926 = vld [vmem:[#allocation2 + $0x240] sm:$0xff]
  %v10927 = vld [vmem:[#allocation2 + $0x248] sm:$0xff]
  %v10928 = vld [vmem:[#allocation2 + $0x250] sm:$0xff]
  %v10929 = vld [vmem:[#allocation2 + $0x258] sm:$0xff]
  %v10930 = vld [vmem:[#allocation2 + $0x260] sm:$0xff]
  %v10931 = vld [vmem:[#allocation2 + $0x268] sm:$0xff]
  %v10932 = vld [vmem:[#allocation2 + $0x270] sm:$0xff]
  %v10933 = vld [vmem:[#allocation2 + $0x278] sm:$0xff]
  %v10934 = vld [vmem:[#allocation2 + $0x280] sm:$0xff]
  %v10935 = vld [vmem:[#allocation2 + $0x288] sm:$0xff]
  %v10936 = vld [vmem:[#allocation2 + $0x290] sm:$0xff]
  %v10937 = vld [vmem:[#allocation2 + $0x298] sm:$0xff]
  %v10938 = vld [vmem:[#allocation2 + $0x2a0] sm:$0xff]
  %v10939 = vld [vmem:[#allocation2 + $0x2a8] sm:$0xff]
  %v10940 = vld [vmem:[#allocation2 + $0x2b0] sm:$0xff]
  %v10941 = vld [vmem:[#allocation2 + $0x2b8] sm:$0xff]
  %v10942 = vld [vmem:[#allocation2 + $0x2c0] sm:$0xff]
  %v10943 = vld [vmem:[#allocation2 + $0x2c8] sm:$0xff]
  %v10944 = vld [vmem:[#allocation2 + $0x2d0] sm:$0xff]
  %v10945 = vld [vmem:[#allocation2 + $0x2d8] sm:$0xff]
  %v10946 = vld [vmem:[#allocation2 + $0x2e0] sm:$0xff]
  %v10947 = vld [vmem:[#allocation2 + $0x2e8] sm:$0xff]
  %v10948 = vld [vmem:[#allocation2 + $0x2f0] sm:$0xff]
  %v10949 = vld [vmem:[#allocation2 + $0x2f8] sm:$0xff]
  %v10950 = vld [vmem:[#allocation2 + $0x300] sm:$0xff]
  %v10951 = vld [vmem:[#allocation2 + $0x308] sm:$0xff]
  %v10952 = vld [vmem:[#allocation2 + $0x310] sm:$0xff]
  %v10953 = vld [vmem:[#allocation2 + $0x318] sm:$0xff]
  %v10954 = vld [vmem:[#allocation2 + $0x320] sm:$0xff]
  %v10955 = vld [vmem:[#allocation2 + $0x328] sm:$0xff]
  %v10956 = vld [vmem:[#allocation2 + $0x330] sm:$0xff]
  %v10957 = vld [vmem:[#allocation2 + $0x338] sm:$0xff]
  %v10958 = vld [vmem:[#allocation2 + $0x340] sm:$0xff]
  %v10959 = vld [vmem:[#allocation2 + $0x348] sm:$0xff]
  %v10960 = vld [vmem:[#allocation2 + $0x350] sm:$0xff]
  %v10961 = vld [vmem:[#allocation2 + $0x358] sm:$0xff]
  %v10962 = vld [vmem:[#allocation2 + $0x360] sm:$0xff]
  %v10963 = vld [vmem:[#allocation2 + $0x368] sm:$0xff]
  %v10964 = vld [vmem:[#allocation2 + $0x370] sm:$0xff]
  %v10965 = vld [vmem:[#allocation2 + $0x378] sm:$0xff]
  %v10966 = vld [vmem:[#allocation2 + $0x380] sm:$0xff]
  %v10967 = vld [vmem:[#allocation2 + $0x388] sm:$0xff]
  %v10968 = vld [vmem:[#allocation2 + $0x390] sm:$0xff]
  %v10969 = vld [vmem:[#allocation2 + $0x398] sm:$0xff]
  %v10970 = vld [vmem:[#allocation2 + $0x3a0] sm:$0xff]
  %v10971 = vld [vmem:[#allocation2 + $0x3a8] sm:$0xff]
  %v10972 = vld [vmem:[#allocation2 + $0x3b0] sm:$0xff]
  %v10973 = vld [vmem:[#allocation2 + $0x3b8] sm:$0xff]
  %v10974 = vld [vmem:[#allocation2 + $0x3c0] sm:$0xff]
  %v10975 = vld [vmem:[#allocation2 + $0x3c8] sm:$0xff]
  %v10976 = vld [vmem:[#allocation2 + $0x3d0] sm:$0xff]
  %v10977 = vld [vmem:[#allocation2 + $0x3d8] sm:$0xff]
  %v10978 = vld [vmem:[#allocation2 + $0x3e0] sm:$0xff]
  %v10979 = vld [vmem:[#allocation2 + $0x3e8] sm:$0xff]
  %v10980 = vld [vmem:[#allocation2 + $0x3f0] sm:$0xff]
  %v10981 = vld [vmem:[#allocation2 + $0x3f8] sm:$0xff]
  %v10982 = vld [vmem:[#allocation2 + $0x400] sm:$0xff]
  %v10983 = vld [vmem:[#allocation2 + $0x408] sm:$0xff]
  %v10984 = vld [vmem:[#allocation2 + $0x410] sm:$0xff]
  %v10985 = vld [vmem:[#allocation2 + $0x418] sm:$0xff]
  %v10986 = vld [vmem:[#allocation2 + $0x420] sm:$0xff]
  %v10987 = vld [vmem:[#allocation2 + $0x428] sm:$0xff]
  %v10988 = vld [vmem:[#allocation2 + $0x430] sm:$0xff]
  %v10989 = vld [vmem:[#allocation2 + $0x438] sm:$0xff]
  %v10990 = vld [vmem:[#allocation2 + $0x440] sm:$0xff]
  %v10991 = vld [vmem:[#allocation2 + $0x448] sm:$0xff]
  %v10992 = vld [vmem:[#allocation2 + $0x450] sm:$0xff]
  %v10993 = vld [vmem:[#allocation2 + $0x458] sm:$0xff]
  %v10994 = vld [vmem:[#allocation2 + $0x460] sm:$0xff]
  %v10995 = vld [vmem:[#allocation2 + $0x468] sm:$0xff]
  %v10996 = vld [vmem:[#allocation2 + $0x470] sm:$0xff]
  %v10997 = vld [vmem:[#allocation2 + $0x478] sm:$0xff]
  %v10998 = vld [vmem:[%s3] sm:$0xff]
  %v10999 = vld [vmem:[%s3 + $0x8] sm:$0xff]
  %v11000 = vld [vmem:[%s3 + $0x10] sm:$0xff]
  %v11001 = vld [vmem:[%s3 + $0x18] sm:$0xff]
  %v11002 = vld [vmem:[%s3 + $0x20] sm:$0xff]
  %v11003 = vld [vmem:[%s3 + $0x28] sm:$0xff]
  %v11004 = vld [vmem:[%s3 + $0x30] sm:$0xff]
  %v11005 = vld [vmem:[%s3 + $0x38] sm:$0xff]
  %v11006 = vld [vmem:[%s3 + $0x40] sm:$0xff]
  %v11007 = vld [vmem:[%s3 + $0x48] sm:$0xff]
  %v11008 = vld [vmem:[%s3 + $0x50] sm:$0xff]
  %v11009 = vld [vmem:[%s3 + $0x58] sm:$0xff]
  %v11010 = vld [vmem:[%s3 + $0x60] sm:$0xff]
  %v11011 = vld [vmem:[%s3 + $0x68] sm:$0xff]
  %v11012 = vld [vmem:[%s3 + $0x70] sm:$0xff]
  %v11013 = vld [vmem:[%s3 + $0x78] sm:$0xff]
  %v11014 = vld [vmem:[%s3 + $0x80] sm:$0xff]
  %v11015 = vld [vmem:[%s3 + $0x88] sm:$0xff]
  %v11016 = vld [vmem:[%s3 + $0x90] sm:$0xff]
  %v11017 = vld [vmem:[%s3 + $0x98] sm:$0xff]
  %v11018 = vld [vmem:[%s3 + $0xa0] sm:$0xff]
  %v11019 = vld [vmem:[%s3 + $0xa8] sm:$0xff]
  %v11020 = vld [vmem:[%s3 + $0xb0] sm:$0xff]
  %v11021 = vld [vmem:[%s3 + $0xb8] sm:$0xff]
  %v11022 = vld [vmem:[%s3 + $0xc0] sm:$0xff]
  %v11023 = vld [vmem:[%s3 + $0xc8] sm:$0xff]
  %v11024 = vld [vmem:[%s3 + $0xd0] sm:$0xff]
  %v11025 = vld [vmem:[%s3 + $0xd8] sm:$0xff]
  %v11026 = vld [vmem:[%s3 + $0xe0] sm:$0xff]
  %v11027 = vld [vmem:[%s3 + $0xe8] sm:$0xff]
  %v11028 = vld [vmem:[%s3 + $0xf0] sm:$0xff]
  %v11029 = vld [vmem:[%s3 + $0xf8] sm:$0xff]
  %v11030 = vld [vmem:[%s3 + $0x100] sm:$0xff]
  %v11031 = vld [vmem:[%s3 + $0x108] sm:$0xff]
  %v11032 = vld [vmem:[%s3 + $0x110] sm:$0xff]
  %v11033 = vld [vmem:[%s3 + $0x118] sm:$0xff]
  %v11034 = vld [vmem:[%s3 + $0x120] sm:$0xff]
  %v11035 = vld [vmem:[%s3 + $0x128] sm:$0xff]
  %v11036 = vld [vmem:[%s3 + $0x130] sm:$0xff]
  %v11037 = vld [vmem:[%s3 + $0x138] sm:$0xff]
  %v11038 = vld [vmem:[%s3 + $0x140] sm:$0xff]
  %v11039 = vld [vmem:[%s3 + $0x148] sm:$0xff]
  %v11040 = vld [vmem:[%s3 + $0x150] sm:$0xff]
  %v11041 = vld [vmem:[%s3 + $0x158] sm:$0xff]
  %v11042 = vld [vmem:[%s3 + $0x160] sm:$0xff]
  %v11043 = vld [vmem:[%s3 + $0x168] sm:$0xff]
  %v11044 = vld [vmem:[%s3 + $0x170] sm:$0xff]
  %v11045 = vld [vmem:[%s3 + $0x178] sm:$0xff]
  %v11046 = vld [vmem:[%s3 + $0x180] sm:$0xff]
  %v11047 = vld [vmem:[%s3 + $0x188] sm:$0xff]
  %v11048 = vld [vmem:[%s3 + $0x190] sm:$0xff]
  %v11049 = vld [vmem:[%s3 + $0x198] sm:$0xff]
  %v11050 = vld [vmem:[%s3 + $0x1a0] sm:$0xff]
  %v11051 = vld [vmem:[%s3 + $0x1a8] sm:$0xff]
  %v11052 = vld [vmem:[%s3 + $0x1b0] sm:$0xff]
  %v11053 = vld [vmem:[%s3 + $0x1b8] sm:$0xff]
  %v11054 = vld [vmem:[%s3 + $0x1c0] sm:$0xff]
  %v11055 = vld [vmem:[%s3 + $0x1c8] sm:$0xff]
  %v11056 = vld [vmem:[%s3 + $0x1d0] sm:$0xff]
  %v11057 = vld [vmem:[%s3 + $0x1d8] sm:$0xff]
  %v11058 = vld [vmem:[%s3 + $0x1e0] sm:$0xff]
  %v11059 = vld [vmem:[%s3 + $0x1e8] sm:$0xff]
  %v11060 = vld [vmem:[%s3 + $0x1f0] sm:$0xff]
  %v11061 = vld [vmem:[%s3 + $0x1f8] sm:$0xff]
  %v11062 = vld [vmem:[%s3 + $0x200] sm:$0xff]
  %v11063 = vld [vmem:[%s3 + $0x208] sm:$0xff]
  %v11064 = vld [vmem:[%s3 + $0x210] sm:$0xff]
  %v11065 = vld [vmem:[%s3 + $0x218] sm:$0xff]
  %v11066 = vld [vmem:[%s3 + $0x220] sm:$0xff]
  %v11067 = vld [vmem:[%s3 + $0x228] sm:$0xff]
  %v11068 = vld [vmem:[%s3 + $0x230] sm:$0xff]
  %v11069 = vld [vmem:[%s3 + $0x238] sm:$0xff]
  %v11070 = vld [vmem:[%s3 + $0x240] sm:$0xff]
  %v11071 = vld [vmem:[%s3 + $0x248] sm:$0xff]
  %v11072 = vld [vmem:[%s3 + $0x250] sm:$0xff]
  %v11073 = vld [vmem:[%s3 + $0x258] sm:$0xff]
  %v11074 = vld [vmem:[%s3 + $0x260] sm:$0xff]
  %v11075 = vld [vmem:[%s3 + $0x268] sm:$0xff]
  %v11076 = vld [vmem:[%s3 + $0x270] sm:$0xff]
  %v11077 = vld [vmem:[%s3 + $0x278] sm:$0xff]
  %v11078 = vld [vmem:[%s3 + $0x280] sm:$0xff]
  %v11079 = vld [vmem:[%s3 + $0x288] sm:$0xff]
  %v11080 = vld [vmem:[%s3 + $0x290] sm:$0xff]
  %v11081 = vld [vmem:[%s3 + $0x298] sm:$0xff]
  %v11082 = vld [vmem:[%s3 + $0x2a0] sm:$0xff]
  %v11083 = vld [vmem:[%s3 + $0x2a8] sm:$0xff]
  %v11084 = vld [vmem:[%s3 + $0x2b0] sm:$0xff]
  %v11085 = vld [vmem:[%s3 + $0x2b8] sm:$0xff]
  %v11086 = vld [vmem:[%s3 + $0x2c0] sm:$0xff]
  %v11087 = vld [vmem:[%s3 + $0x2c8] sm:$0xff]
  %v11088 = vld [vmem:[%s3 + $0x2d0] sm:$0xff]
  %v11089 = vld [vmem:[%s3 + $0x2d8] sm:$0xff]
  %v11090 = vld [vmem:[%s3 + $0x2e0] sm:$0xff]
  %v11091 = vld [vmem:[%s3 + $0x2e8] sm:$0xff]
  %v11092 = vld [vmem:[%s3 + $0x2f0] sm:$0xff]
  %v11093 = vld [vmem:[%s3 + $0x2f8] sm:$0xff]
  %v11094 = vld [vmem:[%s3 + $0x300] sm:$0xff]
  %v11095 = vld [vmem:[%s3 + $0x308] sm:$0xff]
  %v11096 = vld [vmem:[%s3 + $0x310] sm:$0xff]
  %v11097 = vld [vmem:[%s3 + $0x318] sm:$0xff]
  %v11098 = vld [vmem:[%s3 + $0x320] sm:$0xff]
  %v11099 = vld [vmem:[%s3 + $0x328] sm:$0xff]
  %v11100 = vld [vmem:[%s3 + $0x330] sm:$0xff]
  %v11101 = vld [vmem:[%s3 + $0x338] sm:$0xff]
  %v11102 = vld [vmem:[%s3 + $0x340] sm:$0xff]
  %v11103 = vld [vmem:[%s3 + $0x348] sm:$0xff]
  %v11104 = vld [vmem:[%s3 + $0x350] sm:$0xff]
  %v11105 = vld [vmem:[%s3 + $0x358] sm:$0xff]
  %v11106 = vld [vmem:[%s3 + $0x360] sm:$0xff]
  %v11107 = vld [vmem:[%s3 + $0x368] sm:$0xff]
  %v11108 = vld [vmem:[%s3 + $0x370] sm:$0xff]
  %v11109 = vld [vmem:[%s3 + $0x378] sm:$0xff]
  %v11110 = vld [vmem:[%s3 + $0x380] sm:$0xff]
  %v11111 = vld [vmem:[%s3 + $0x388] sm:$0xff]
  %v11112 = vld [vmem:[%s3 + $0x390] sm:$0xff]
  %v11113 = vld [vmem:[%s3 + $0x398] sm:$0xff]
  %v11114 = vld [vmem:[%s3 + $0x3a0] sm:$0xff]
  %v11115 = vld [vmem:[%s3 + $0x3a8] sm:$0xff]
  %v11116 = vld [vmem:[%s3 + $0x3b0] sm:$0xff]
  %v11117 = vld [vmem:[%s3 + $0x3b8] sm:$0xff]
  %v11118 = vld [vmem:[%s3 + $0x3c0] sm:$0xff]
  %v11119 = vld [vmem:[%s3 + $0x3c8] sm:$0xff]
  %v11120 = vld [vmem:[%s3 + $0x3d0] sm:$0xff]
  %v11121 = vld [vmem:[%s3 + $0x3d8] sm:$0xff]
  %v11122 = vld [vmem:[%s3 + $0x3e0] sm:$0xff]
  %v11123 = vld [vmem:[%s3 + $0x3e8] sm:$0xff]
  %v11124 = vld [vmem:[%s3 + $0x3f0] sm:$0xff]
  %v11125 = vld [vmem:[%s3 + $0x3f8] sm:$0xff]
  %v11126 = vld [vmem:[%s3 + $0x400] sm:$0xff]
  %v11127 = vld [vmem:[%s3 + $0x408] sm:$0xff]
  %v11128 = vld [vmem:[%s3 + $0x410] sm:$0xff]
  %v11129 = vld [vmem:[%s3 + $0x418] sm:$0xff]
  %v11130 = vld [vmem:[%s3 + $0x420] sm:$0xff]
  %v11131 = vld [vmem:[%s3 + $0x428] sm:$0xff]
  %v11132 = vld [vmem:[%s3 + $0x430] sm:$0xff]
  %v11133 = vld [vmem:[%s3 + $0x438] sm:$0xff]
  %v11134 = vld [vmem:[%s3 + $0x440] sm:$0xff]
  %v11135 = vld [vmem:[%s3 + $0x448] sm:$0xff]
  %v11136 = vld [vmem:[%s3 + $0x450] sm:$0xff]
  %v11137 = vld [vmem:[%s3 + $0x458] sm:$0xff]
  %v11138 = vld [vmem:[%s3 + $0x460] sm:$0xff]
  %v11139 = vld [vmem:[%s3 + $0x468] sm:$0xff]
  %v11140 = vld [vmem:[%s3 + $0x470] sm:$0xff]
  %v11141 = vld [vmem:[%s3 + $0x478] sm:$0xff]
  %v11142 = vld [vmem:[%s3 + $0x480] sm:$0xff]
  %v11143 = vld [vmem:[%s3 + $0x488] sm:$0xff]
  %v11144 = vld [vmem:[%s3 + $0x490] sm:$0xff]
  %v11145 = vld [vmem:[%s3 + $0x498] sm:$0xff]
  %v11146 = vld [vmem:[%s3 + $0x4a0] sm:$0xff]
  %v11147 = vld [vmem:[%s3 + $0x4a8] sm:$0xff]
  %v11148 = vld [vmem:[%s3 + $0x4b0] sm:$0xff]
  %v11149 = vld [vmem:[%s3 + $0x4b8] sm:$0xff]
  %v11150 = vld [vmem:[%s3 + $0x4c0] sm:$0xff]
  %v11151 = vld [vmem:[%s3 + $0x4c8] sm:$0xff]
  %v11152 = vld [vmem:[%s3 + $0x4d0] sm:$0xff]
  %v11153 = vld [vmem:[%s3 + $0x4d8] sm:$0xff]
  %v11154 = vld [vmem:[%s3 + $0x4e0] sm:$0xff]
  %v11155 = vld [vmem:[%s3 + $0x4e8] sm:$0xff]
  %v11156 = vld [vmem:[%s3 + $0x4f0] sm:$0xff]
  %v11157 = vld [vmem:[%s3 + $0x4f8] sm:$0xff]
  %v11159 = vsel %vm158, %v11002, 0
  %v11162 = vsel %vm158, %v11007, 0
  %v11165 = vsel %vm158, %v11012, 0
  %v11168 = vsel %vm158, %v11017, 0
  %v11171 = vsel %vm158, %v11022, 0
  %v11174 = vsel %vm158, %v11027, 0
  %v11177 = vsel %vm158, %v11032, 0
  %v11180 = vsel %vm158, %v11037, 0
  %v11183 = vsel %vm158, %v11042, 0
  %v11186 = vsel %vm158, %v11047, 0
  %v11189 = vsel %vm158, %v11052, 0
  %v11192 = vsel %vm158, %v11057, 0
  %v11195 = vsel %vm158, %v11062, 0
  %v11198 = vsel %vm158, %v11067, 0
  %v11201 = vsel %vm158, %v11072, 0
  %v11204 = vsel %vm158, %v11077, 0
  %v11207 = vsel %vm158, %v11082, 0
  %v11210 = vsel %vm158, %v11087, 0
  %v11213 = vsel %vm158, %v11092, 0
  %v11216 = vsel %vm158, %v11097, 0
  %v11219 = vsel %vm158, %v11102, 0
  %v11222 = vsel %vm158, %v11107, 0
  %v11225 = vsel %vm158, %v11112, 0
  %v11228 = vsel %vm158, %v11117, 0
  %v11231 = vsel %vm158, %v11122, 0
  %v11234 = vsel %vm158, %v11127, 0
  %v11237 = vsel %vm158, %v11132, 0
  %v11240 = vsel %vm158, %v11137, 0
  %v11243 = vsel %vm158, %v11142, 0
  %v11246 = vsel %vm158, %v11147, 0
  %v11249 = vsel %vm158, %v11152, 0
  %v11252 = vsel %vm158, %v11157, 0
  %11254 = vmatpush.msra.mxu0 %v10941
  %11255 = vmatpush.msra.mxu0 %v10940
  %11256 = vmatpush.msra.mxu0 %v10939
  %11257 = vmatpush.msra.mxu0 %v10938
  %11258 = vmatpush.msra.mxu0 %v10937
  %11259 = vmatpush.msra.mxu0 %v10936
  %11260 = vmatpush.msra.mxu0 %v10935
  %11261 = vmatpush.msra.mxu0 %v10934
  %11262 = vmatpush.msra.mxu0 %v10933
  %11263 = vmatpush.msra.mxu0 %v10932
  %11264 = vmatpush.msra.mxu0 %v10931
  %11265 = vmatpush.msra.mxu0 %v10930
  %11266 = vmatpush.msra.mxu0 %v10929
  %11267 = vmatpush.msra.mxu0 %v10928
  %11268 = vmatpush.msra.mxu0 %v10927
  %11269 = vmatpush.msra.mxu0 %v10926
  %11270 = vmatmul.f32.gmra.mxu0 %v10998
  %v11271 = vpop.f32.mrf.mxu0
  %v11272 = vadd.f32 0.0, %v11271
  %11273 = vmatmul.f32.gmra.mxu0 %v11003
  %v11274 = vpop.f32.mrf.mxu0
  %v11275 = vadd.f32 0.0, %v11274
  %11276 = vmatmul.f32.gmra.mxu0 %v11008
  %v11277 = vpop.f32.mrf.mxu0
  %v11278 = vadd.f32 0.0, %v11277
  %11279 = vmatmul.f32.gmra.mxu0 %v11013
  %v11280 = vpop.f32.mrf.mxu0
  %v11281 = vadd.f32 0.0, %v11280
  %11282 = vmatmul.f32.gmra.mxu0 %v11018
  %v11283 = vpop.f32.mrf.mxu0
  %v11284 = vadd.f32 0.0, %v11283
  %11285 = vmatmul.f32.gmra.mxu0 %v11023
  %v11286 = vpop.f32.mrf.mxu0
  %v11287 = vadd.f32 0.0, %v11286
  %11288 = vmatmul.f32.gmra.mxu0 %v11028
  %v11289 = vpop.f32.mrf.mxu0
  %v11290 = vadd.f32 0.0, %v11289
  %11291 = vmatmul.f32.gmra.mxu0 %v11033
  %v11292 = vpop.f32.mrf.mxu0
  %v11293 = vadd.f32 0.0, %v11292
  %11294 = vmatmul.f32.gmra.mxu0 %v11038
  %v11295 = vpop.f32.mrf.mxu0
  %v11296 = vadd.f32 0.0, %v11295
  %11297 = vmatmul.f32.gmra.mxu0 %v11043
  %v11298 = vpop.f32.mrf.mxu0
  %v11299 = vadd.f32 0.0, %v11298
  %11300 = vmatmul.f32.gmra.mxu0 %v11048
  %v11301 = vpop.f32.mrf.mxu0
  %v11302 = vadd.f32 0.0, %v11301
  %11303 = vmatmul.f32.gmra.mxu0 %v11053
  %v11304 = vpop.f32.mrf.mxu0
  %v11305 = vadd.f32 0.0, %v11304
  %11306 = vmatmul.f32.gmra.mxu0 %v11058
  %v11307 = vpop.f32.mrf.mxu0
  %v11308 = vadd.f32 0.0, %v11307
  %11309 = vmatmul.f32.gmra.mxu0 %v11063
  %v11310 = vpop.f32.mrf.mxu0
  %v11311 = vadd.f32 0.0, %v11310
  %11312 = vmatmul.f32.gmra.mxu0 %v11068
  %v11313 = vpop.f32.mrf.mxu0
  %v11314 = vadd.f32 0.0, %v11313
  %11315 = vmatmul.f32.gmra.mxu0 %v11073
  %v11316 = vpop.f32.mrf.mxu0
  %v11317 = vadd.f32 0.0, %v11316
  %11318 = vmatmul.f32.gmra.mxu0 %v11078
  %v11319 = vpop.f32.mrf.mxu0
  %v11320 = vadd.f32 0.0, %v11319
  %11321 = vmatmul.f32.gmra.mxu0 %v11083
  %v11322 = vpop.f32.mrf.mxu0
  %v11323 = vadd.f32 0.0, %v11322
  %11324 = vmatmul.f32.gmra.mxu0 %v11088
  %v11325 = vpop.f32.mrf.mxu0
  %v11326 = vadd.f32 0.0, %v11325
  %11327 = vmatmul.f32.gmra.mxu0 %v11093
  %v11328 = vpop.f32.mrf.mxu0
  %v11329 = vadd.f32 0.0, %v11328
  %11330 = vmatmul.f32.gmra.mxu0 %v11098
  %v11331 = vpop.f32.mrf.mxu0
  %v11332 = vadd.f32 0.0, %v11331
  %11333 = vmatmul.f32.gmra.mxu0 %v11103
  %v11334 = vpop.f32.mrf.mxu0
  %v11335 = vadd.f32 0.0, %v11334
  %11336 = vmatmul.f32.gmra.mxu0 %v11108
  %v11337 = vpop.f32.mrf.mxu0
  %v11338 = vadd.f32 0.0, %v11337
  %11339 = vmatmul.f32.gmra.mxu0 %v11113
  %v11340 = vpop.f32.mrf.mxu0
  %v11341 = vadd.f32 0.0, %v11340
  %11342 = vmatmul.f32.gmra.mxu0 %v11118
  %v11343 = vpop.f32.mrf.mxu0
  %v11344 = vadd.f32 0.0, %v11343
  %11345 = vmatmul.f32.gmra.mxu0 %v11123
  %v11346 = vpop.f32.mrf.mxu0
  %v11347 = vadd.f32 0.0, %v11346
  %11348 = vmatmul.f32.gmra.mxu0 %v11128
  %v11349 = vpop.f32.mrf.mxu0
  %v11350 = vadd.f32 0.0, %v11349
  %11351 = vmatmul.f32.gmra.mxu0 %v11133
  %v11352 = vpop.f32.mrf.mxu0
  %v11353 = vadd.f32 0.0, %v11352
  %11354 = vmatmul.f32.gmra.mxu0 %v11138
  %v11355 = vpop.f32.mrf.mxu0
  %v11356 = vadd.f32 0.0, %v11355
  %11357 = vmatmul.f32.gmra.mxu0 %v11143
  %v11358 = vpop.f32.mrf.mxu0
  %v11359 = vadd.f32 0.0, %v11358
  %11360 = vmatmul.f32.gmra.mxu0 %v11148
  %v11361 = vpop.f32.mrf.mxu0
  %v11362 = vadd.f32 0.0, %v11361
  %11363 = vmatmul.f32.gmra.mxu0 %v11153
  %v11364 = vpop.f32.mrf.mxu0
  %v11365 = vadd.f32 0.0, %v11364
  %11366 = vdwg.mxu0
  %11367 = vmatpush.msra.mxu0 %v10957
  %11368 = vmatpush.msra.mxu0 %v10956
  %11369 = vmatpush.msra.mxu0 %v10955
  %11370 = vmatpush.msra.mxu0 %v10954
  %11371 = vmatpush.msra.mxu0 %v10953
  %11372 = vmatpush.msra.mxu0 %v10952
  %11373 = vmatpush.msra.mxu0 %v10951
  %11374 = vmatpush.msra.mxu0 %v10950
  %11375 = vmatpush.msra.mxu0 %v10949
  %11376 = vmatpush.msra.mxu0 %v10948
  %11377 = vmatpush.msra.mxu0 %v10947
  %11378 = vmatpush.msra.mxu0 %v10946
  %11379 = vmatpush.msra.mxu0 %v10945
  %11380 = vmatpush.msra.mxu0 %v10944
  %11381 = vmatpush.msra.mxu0 %v10943
  %11382 = vmatpush.msra.mxu0 %v10942
  %11383 = vmatmul.f32.gmra.mxu0 %v10999
  %v11384 = vpop.f32.mrf.mxu0
  %v11385 = vadd.f32 %v11272, %v11384
  %11386 = vmatmul.f32.gmra.mxu0 %v11004
  %v11387 = vpop.f32.mrf.mxu0
  %v11388 = vadd.f32 %v11275, %v11387
  %11389 = vmatmul.f32.gmra.mxu0 %v11009
  %v11390 = vpop.f32.mrf.mxu0
  %v11391 = vadd.f32 %v11278, %v11390
  %11392 = vmatmul.f32.gmra.mxu0 %v11014
  %v11393 = vpop.f32.mrf.mxu0
  %v11394 = vadd.f32 %v11281, %v11393
  %11395 = vmatmul.f32.gmra.mxu0 %v11019
  %v11396 = vpop.f32.mrf.mxu0
  %v11397 = vadd.f32 %v11284, %v11396
  %11398 = vmatmul.f32.gmra.mxu0 %v11024
  %v11399 = vpop.f32.mrf.mxu0
  %v11400 = vadd.f32 %v11287, %v11399
  %11401 = vmatmul.f32.gmra.mxu0 %v11029
  %v11402 = vpop.f32.mrf.mxu0
  %v11403 = vadd.f32 %v11290, %v11402
  %11404 = vmatmul.f32.gmra.mxu0 %v11034
  %v11405 = vpop.f32.mrf.mxu0
  %v11406 = vadd.f32 %v11293, %v11405
  %11407 = vmatmul.f32.gmra.mxu0 %v11039
  %v11408 = vpop.f32.mrf.mxu0
  %v11409 = vadd.f32 %v11296, %v11408
  %11410 = vmatmul.f32.gmra.mxu0 %v11044
  %v11411 = vpop.f32.mrf.mxu0
  %v11412 = vadd.f32 %v11299, %v11411
  %11413 = vmatmul.f32.gmra.mxu0 %v11049
  %v11414 = vpop.f32.mrf.mxu0
  %v11415 = vadd.f32 %v11302, %v11414
  %11416 = vmatmul.f32.gmra.mxu0 %v11054
  %v11417 = vpop.f32.mrf.mxu0
  %v11418 = vadd.f32 %v11305, %v11417
  %11419 = vmatmul.f32.gmra.mxu0 %v11059
  %v11420 = vpop.f32.mrf.mxu0
  %v11421 = vadd.f32 %v11308, %v11420
  %11422 = vmatmul.f32.gmra.mxu0 %v11064
  %v11423 = vpop.f32.mrf.mxu0
  %v11424 = vadd.f32 %v11311, %v11423
  %11425 = vmatmul.f32.gmra.mxu0 %v11069
  %v11426 = vpop.f32.mrf.mxu0
  %v11427 = vadd.f32 %v11314, %v11426
  %11428 = vmatmul.f32.gmra.mxu0 %v11074
  %v11429 = vpop.f32.mrf.mxu0
  %v11430 = vadd.f32 %v11317, %v11429
  %11431 = vmatmul.f32.gmra.mxu0 %v11079
  %v11432 = vpop.f32.mrf.mxu0
  %v11433 = vadd.f32 %v11320, %v11432
  %11434 = vmatmul.f32.gmra.mxu0 %v11084
  %v11435 = vpop.f32.mrf.mxu0
  %v11436 = vadd.f32 %v11323, %v11435
  %11437 = vmatmul.f32.gmra.mxu0 %v11089
  %v11438 = vpop.f32.mrf.mxu0
  %v11439 = vadd.f32 %v11326, %v11438
  %11440 = vmatmul.f32.gmra.mxu0 %v11094
  %v11441 = vpop.f32.mrf.mxu0
  %v11442 = vadd.f32 %v11329, %v11441
  %11443 = vmatmul.f32.gmra.mxu0 %v11099
  %v11444 = vpop.f32.mrf.mxu0
  %v11445 = vadd.f32 %v11332, %v11444
  %11446 = vmatmul.f32.gmra.mxu0 %v11104
  %v11447 = vpop.f32.mrf.mxu0
  %v11448 = vadd.f32 %v11335, %v11447
  %11449 = vmatmul.f32.gmra.mxu0 %v11109
  %v11450 = vpop.f32.mrf.mxu0
  %v11451 = vadd.f32 %v11338, %v11450
  %11452 = vmatmul.f32.gmra.mxu0 %v11114
  %v11453 = vpop.f32.mrf.mxu0
  %v11454 = vadd.f32 %v11341, %v11453
  %11455 = vmatmul.f32.gmra.mxu0 %v11119
  %v11456 = vpop.f32.mrf.mxu0
  %v11457 = vadd.f32 %v11344, %v11456
  %11458 = vmatmul.f32.gmra.mxu0 %v11124
  %v11459 = vpop.f32.mrf.mxu0
  %v11460 = vadd.f32 %v11347, %v11459
  %11461 = vmatmul.f32.gmra.mxu0 %v11129
  %v11462 = vpop.f32.mrf.mxu0
  %v11463 = vadd.f32 %v11350, %v11462
  %11464 = vmatmul.f32.gmra.mxu0 %v11134
  %v11465 = vpop.f32.mrf.mxu0
  %v11466 = vadd.f32 %v11353, %v11465
  %11467 = vmatmul.f32.gmra.mxu0 %v11139
  %v11468 = vpop.f32.mrf.mxu0
  %v11469 = vadd.f32 %v11356, %v11468
  %11470 = vmatmul.f32.gmra.mxu0 %v11144
  %v11471 = vpop.f32.mrf.mxu0
  %v11472 = vadd.f32 %v11359, %v11471
  %11473 = vmatmul.f32.gmra.mxu0 %v11149
  %v11474 = vpop.f32.mrf.mxu0
  %v11475 = vadd.f32 %v11362, %v11474
  %11476 = vmatmul.f32.gmra.mxu0 %v11154
  %v11477 = vpop.f32.mrf.mxu0
  %v11478 = vadd.f32 %v11365, %v11477
  %11479 = vdwg.mxu0
  %11480 = vmatpush.msra.mxu0 %v10973
  %11481 = vmatpush.msra.mxu0 %v10972
  %11482 = vmatpush.msra.mxu0 %v10971
  %11483 = vmatpush.msra.mxu0 %v10970
  %11484 = vmatpush.msra.mxu0 %v10969
  %11485 = vmatpush.msra.mxu0 %v10968
  %11486 = vmatpush.msra.mxu0 %v10967
  %11487 = vmatpush.msra.mxu0 %v10966
  %11488 = vmatpush.msra.mxu0 %v10965
  %11489 = vmatpush.msra.mxu0 %v10964
  %11490 = vmatpush.msra.mxu0 %v10963
  %11491 = vmatpush.msra.mxu0 %v10962
  %11492 = vmatpush.msra.mxu0 %v10961
  %11493 = vmatpush.msra.mxu0 %v10960
  %11494 = vmatpush.msra.mxu0 %v10959
  %11495 = vmatpush.msra.mxu0 %v10958
  %11496 = vmatmul.f32.gmra.mxu0 %v11000
  %v11497 = vpop.f32.mrf.mxu0
  %v11498 = vadd.f32 %v11385, %v11497
  %11499 = vmatmul.f32.gmra.mxu0 %v11005
  %v11500 = vpop.f32.mrf.mxu0
  %v11501 = vadd.f32 %v11388, %v11500
  %11502 = vmatmul.f32.gmra.mxu0 %v11010
  %v11503 = vpop.f32.mrf.mxu0
  %v11504 = vadd.f32 %v11391, %v11503
  %11505 = vmatmul.f32.gmra.mxu0 %v11015
  %v11506 = vpop.f32.mrf.mxu0
  %v11507 = vadd.f32 %v11394, %v11506
  %11508 = vmatmul.f32.gmra.mxu0 %v11020
  %v11509 = vpop.f32.mrf.mxu0
  %v11510 = vadd.f32 %v11397, %v11509
  %11511 = vmatmul.f32.gmra.mxu0 %v11025
  %v11512 = vpop.f32.mrf.mxu0
  %v11513 = vadd.f32 %v11400, %v11512
  %11514 = vmatmul.f32.gmra.mxu0 %v11030
  %v11515 = vpop.f32.mrf.mxu0
  %v11516 = vadd.f32 %v11403, %v11515
  %11517 = vmatmul.f32.gmra.mxu0 %v11035
  %v11518 = vpop.f32.mrf.mxu0
  %v11519 = vadd.f32 %v11406, %v11518
  %11520 = vmatmul.f32.gmra.mxu0 %v11040
  %v11521 = vpop.f32.mrf.mxu0
  %v11522 = vadd.f32 %v11409, %v11521
  %11523 = vmatmul.f32.gmra.mxu0 %v11045
  %v11524 = vpop.f32.mrf.mxu0
  %v11525 = vadd.f32 %v11412, %v11524
  %11526 = vmatmul.f32.gmra.mxu0 %v11050
  %v11527 = vpop.f32.mrf.mxu0
  %v11528 = vadd.f32 %v11415, %v11527
  %11529 = vmatmul.f32.gmra.mxu0 %v11055
  %v11530 = vpop.f32.mrf.mxu0
  %v11531 = vadd.f32 %v11418, %v11530
  %11532 = vmatmul.f32.gmra.mxu0 %v11060
  %v11533 = vpop.f32.mrf.mxu0
  %v11534 = vadd.f32 %v11421, %v11533
  %11535 = vmatmul.f32.gmra.mxu0 %v11065
  %v11536 = vpop.f32.mrf.mxu0
  %v11537 = vadd.f32 %v11424, %v11536
  %11538 = vmatmul.f32.gmra.mxu0 %v11070
  %v11539 = vpop.f32.mrf.mxu0
  %v11540 = vadd.f32 %v11427, %v11539
  %11541 = vmatmul.f32.gmra.mxu0 %v11075
  %v11542 = vpop.f32.mrf.mxu0
  %v11543 = vadd.f32 %v11430, %v11542
  %11544 = vmatmul.f32.gmra.mxu0 %v11080
  %v11545 = vpop.f32.mrf.mxu0
  %v11546 = vadd.f32 %v11433, %v11545
  %11547 = vmatmul.f32.gmra.mxu0 %v11085
  %v11548 = vpop.f32.mrf.mxu0
  %v11549 = vadd.f32 %v11436, %v11548
  %11550 = vmatmul.f32.gmra.mxu0 %v11090
  %v11551 = vpop.f32.mrf.mxu0
  %v11552 = vadd.f32 %v11439, %v11551
  %11553 = vmatmul.f32.gmra.mxu0 %v11095
  %v11554 = vpop.f32.mrf.mxu0
  %v11555 = vadd.f32 %v11442, %v11554
  %11556 = vmatmul.f32.gmra.mxu0 %v11100
  %v11557 = vpop.f32.mrf.mxu0
  %v11558 = vadd.f32 %v11445, %v11557
  %11559 = vmatmul.f32.gmra.mxu0 %v11105
  %v11560 = vpop.f32.mrf.mxu0
  %v11561 = vadd.f32 %v11448, %v11560
  %11562 = vmatmul.f32.gmra.mxu0 %v11110
  %v11563 = vpop.f32.mrf.mxu0
  %v11564 = vadd.f32 %v11451, %v11563
  %11565 = vmatmul.f32.gmra.mxu0 %v11115
  %v11566 = vpop.f32.mrf.mxu0
  %v11567 = vadd.f32 %v11454, %v11566
  %11568 = vmatmul.f32.gmra.mxu0 %v11120
  %v11569 = vpop.f32.mrf.mxu0
  %v11570 = vadd.f32 %v11457, %v11569
  %11571 = vmatmul.f32.gmra.mxu0 %v11125
  %v11572 = vpop.f32.mrf.mxu0
  %v11573 = vadd.f32 %v11460, %v11572
  %11574 = vmatmul.f32.gmra.mxu0 %v11130
  %v11575 = vpop.f32.mrf.mxu0
  %v11576 = vadd.f32 %v11463, %v11575
  %11577 = vmatmul.f32.gmra.mxu0 %v11135
  %v11578 = vpop.f32.mrf.mxu0
  %v11579 = vadd.f32 %v11466, %v11578
  %11580 = vmatmul.f32.gmra.mxu0 %v11140
  %v11581 = vpop.f32.mrf.mxu0
  %v11582 = vadd.f32 %v11469, %v11581
  %11583 = vmatmul.f32.gmra.mxu0 %v11145
  %v11584 = vpop.f32.mrf.mxu0
  %v11585 = vadd.f32 %v11472, %v11584
  %11586 = vmatmul.f32.gmra.mxu0 %v11150
  %v11587 = vpop.f32.mrf.mxu0
  %v11588 = vadd.f32 %v11475, %v11587
  %11589 = vmatmul.f32.gmra.mxu0 %v11155
  %v11590 = vpop.f32.mrf.mxu0
  %v11591 = vadd.f32 %v11478, %v11590
  %11592 = vdwg.mxu0
  %11593 = vmatpush.msra.mxu0 %v10989
  %11594 = vmatpush.msra.mxu0 %v10988
  %11595 = vmatpush.msra.mxu0 %v10987
  %11596 = vmatpush.msra.mxu0 %v10986
  %11597 = vmatpush.msra.mxu0 %v10985
  %11598 = vmatpush.msra.mxu0 %v10984
  %11599 = vmatpush.msra.mxu0 %v10983
  %11600 = vmatpush.msra.mxu0 %v10982
  %11601 = vmatpush.msra.mxu0 %v10981
  %11602 = vmatpush.msra.mxu0 %v10980
  %11603 = vmatpush.msra.mxu0 %v10979
  %11604 = vmatpush.msra.mxu0 %v10978
  %11605 = vmatpush.msra.mxu0 %v10977
  %11606 = vmatpush.msra.mxu0 %v10976
  %11607 = vmatpush.msra.mxu0 %v10975
  %11608 = vmatpush.msra.mxu0 %v10974
  %11609 = vmatmul.f32.gmra.mxu0 %v11001
  %v11610 = vpop.f32.mrf.mxu0
  %v11611 = vadd.f32 %v11498, %v11610
  %11612 = vmatmul.f32.gmra.mxu0 %v11006
  %v11613 = vpop.f32.mrf.mxu0
  %v11614 = vadd.f32 %v11501, %v11613
  %11615 = vmatmul.f32.gmra.mxu0 %v11011
  %v11616 = vpop.f32.mrf.mxu0
  %v11617 = vadd.f32 %v11504, %v11616
  %11618 = vmatmul.f32.gmra.mxu0 %v11016
  %v11619 = vpop.f32.mrf.mxu0
  %v11620 = vadd.f32 %v11507, %v11619
  %11621 = vmatmul.f32.gmra.mxu0 %v11021
  %v11622 = vpop.f32.mrf.mxu0
  %v11623 = vadd.f32 %v11510, %v11622
  %11624 = vmatmul.f32.gmra.mxu0 %v11026
  %v11625 = vpop.f32.mrf.mxu0
  %v11626 = vadd.f32 %v11513, %v11625
  %11627 = vmatmul.f32.gmra.mxu0 %v11031
  %v11628 = vpop.f32.mrf.mxu0
  %v11629 = vadd.f32 %v11516, %v11628
  %11630 = vmatmul.f32.gmra.mxu0 %v11036
  %v11631 = vpop.f32.mrf.mxu0
  %v11632 = vadd.f32 %v11519, %v11631
  %11633 = vmatmul.f32.gmra.mxu0 %v11041
  %v11634 = vpop.f32.mrf.mxu0
  %v11635 = vadd.f32 %v11522, %v11634
  %11636 = vmatmul.f32.gmra.mxu0 %v11046
  %v11637 = vpop.f32.mrf.mxu0
  %v11638 = vadd.f32 %v11525, %v11637
  %11639 = vmatmul.f32.gmra.mxu0 %v11051
  %v11640 = vpop.f32.mrf.mxu0
  %v11641 = vadd.f32 %v11528, %v11640
  %11642 = vmatmul.f32.gmra.mxu0 %v11056
  %v11643 = vpop.f32.mrf.mxu0
  %v11644 = vadd.f32 %v11531, %v11643
  %11645 = vmatmul.f32.gmra.mxu0 %v11061
  %v11646 = vpop.f32.mrf.mxu0
  %v11647 = vadd.f32 %v11534, %v11646
  %11648 = vmatmul.f32.gmra.mxu0 %v11066
  %v11649 = vpop.f32.mrf.mxu0
  %v11650 = vadd.f32 %v11537, %v11649
  %11651 = vmatmul.f32.gmra.mxu0 %v11071
  %v11652 = vpop.f32.mrf.mxu0
  %v11653 = vadd.f32 %v11540, %v11652
  %11654 = vmatmul.f32.gmra.mxu0 %v11076
  %v11655 = vpop.f32.mrf.mxu0
  %v11656 = vadd.f32 %v11543, %v11655
  %11657 = vmatmul.f32.gmra.mxu0 %v11081
  %v11658 = vpop.f32.mrf.mxu0
  %v11659 = vadd.f32 %v11546, %v11658
  %11660 = vmatmul.f32.gmra.mxu0 %v11086
  %v11661 = vpop.f32.mrf.mxu0
  %v11662 = vadd.f32 %v11549, %v11661
  %11663 = vmatmul.f32.gmra.mxu0 %v11091
  %v11664 = vpop.f32.mrf.mxu0
  %v11665 = vadd.f32 %v11552, %v11664
  %11666 = vmatmul.f32.gmra.mxu0 %v11096
  %v11667 = vpop.f32.mrf.mxu0
  %v11668 = vadd.f32 %v11555, %v11667
  %11669 = vmatmul.f32.gmra.mxu0 %v11101
  %v11670 = vpop.f32.mrf.mxu0
  %v11671 = vadd.f32 %v11558, %v11670
  %11672 = vmatmul.f32.gmra.mxu0 %v11106
  %v11673 = vpop.f32.mrf.mxu0
  %v11674 = vadd.f32 %v11561, %v11673
  %11675 = vmatmul.f32.gmra.mxu0 %v11111
  %v11676 = vpop.f32.mrf.mxu0
  %v11677 = vadd.f32 %v11564, %v11676
  %11678 = vmatmul.f32.gmra.mxu0 %v11116
  %v11679 = vpop.f32.mrf.mxu0
  %v11680 = vadd.f32 %v11567, %v11679
  %11681 = vmatmul.f32.gmra.mxu0 %v11121
  %v11682 = vpop.f32.mrf.mxu0
  %v11683 = vadd.f32 %v11570, %v11682
  %11684 = vmatmul.f32.gmra.mxu0 %v11126
  %v11685 = vpop.f32.mrf.mxu0
  %v11686 = vadd.f32 %v11573, %v11685
  %11687 = vmatmul.f32.gmra.mxu0 %v11131
  %v11688 = vpop.f32.mrf.mxu0
  %v11689 = vadd.f32 %v11576, %v11688
  %11690 = vmatmul.f32.gmra.mxu0 %v11136
  %v11691 = vpop.f32.mrf.mxu0
  %v11692 = vadd.f32 %v11579, %v11691
  %11693 = vmatmul.f32.gmra.mxu0 %v11141
  %v11694 = vpop.f32.mrf.mxu0
  %v11695 = vadd.f32 %v11582, %v11694
  %11696 = vmatmul.f32.gmra.mxu0 %v11146
  %v11697 = vpop.f32.mrf.mxu0
  %v11698 = vadd.f32 %v11585, %v11697
  %11699 = vmatmul.f32.gmra.mxu0 %v11151
  %v11700 = vpop.f32.mrf.mxu0
  %v11701 = vadd.f32 %v11588, %v11700
  %11702 = vmatmul.f32.gmra.mxu0 %v11156
  %v11703 = vpop.f32.mrf.mxu0
  %v11704 = vadd.f32 %v11591, %v11703
  %11705 = vdwg.mxu0
  %11706 = vmatpush.msra.mxu0 0.0
  %11707 = vmatpush.msra.mxu0 0.0
  %11708 = vmatpush.msra.mxu0 0.0
  %11709 = vmatpush.msra.mxu0 0.0
  %11710 = vmatpush.msra.mxu0 0.0
  %11711 = vmatpush.msra.mxu0 0.0
  %11712 = vmatpush.msra.mxu0 0.0
  %11713 = vmatpush.msra.mxu0 0.0
  %11714 = vmatpush.msra.mxu0 %v10997
  %11715 = vmatpush.msra.mxu0 %v10996
  %11716 = vmatpush.msra.mxu0 %v10995
  %11717 = vmatpush.msra.mxu0 %v10994
  %11718 = vmatpush.msra.mxu0 %v10993
  %11719 = vmatpush.msra.mxu0 %v10992
  %11720 = vmatpush.msra.mxu0 %v10991
  %11721 = vmatpush.msra.mxu0 %v10990
  %11722 = vmatmul.f32.gmra.mxu0 %v11159
  %v11723 = vpop.f32.mrf.mxu0
  %v11724 = vadd.f32 %v11611, %v11723
  %11725 = vmatmul.f32.gmra.mxu0 %v11162
  %v11726 = vpop.f32.mrf.mxu0
  %v11727 = vadd.f32 %v11614, %v11726
  %11728 = vmatmul.f32.gmra.mxu0 %v11165
  %v11729 = vpop.f32.mrf.mxu0
  %v11730 = vadd.f32 %v11617, %v11729
  %11731 = vmatmul.f32.gmra.mxu0 %v11168
  %v11732 = vpop.f32.mrf.mxu0
  %v11733 = vadd.f32 %v11620, %v11732
  %11734 = vmatmul.f32.gmra.mxu0 %v11171
  %v11735 = vpop.f32.mrf.mxu0
  %v11736 = vadd.f32 %v11623, %v11735
  %11737 = vmatmul.f32.gmra.mxu0 %v11174
  %v11738 = vpop.f32.mrf.mxu0
  %v11739 = vadd.f32 %v11626, %v11738
  %11740 = vmatmul.f32.gmra.mxu0 %v11177
  %v11741 = vpop.f32.mrf.mxu0
  %v11742 = vadd.f32 %v11629, %v11741
  %11743 = vmatmul.f32.gmra.mxu0 %v11180
  %v11744 = vpop.f32.mrf.mxu0
  %v11745 = vadd.f32 %v11632, %v11744
  %11746 = vmatmul.f32.gmra.mxu0 %v11183
  %v11747 = vpop.f32.mrf.mxu0
  %v11748 = vadd.f32 %v11635, %v11747
  %11749 = vmatmul.f32.gmra.mxu0 %v11186
  %v11750 = vpop.f32.mrf.mxu0
  %v11751 = vadd.f32 %v11638, %v11750
  %11752 = vmatmul.f32.gmra.mxu0 %v11189
  %v11753 = vpop.f32.mrf.mxu0
  %v11754 = vadd.f32 %v11641, %v11753
  %11755 = vmatmul.f32.gmra.mxu0 %v11192
  %v11756 = vpop.f32.mrf.mxu0
  %v11757 = vadd.f32 %v11644, %v11756
  %11758 = vmatmul.f32.gmra.mxu0 %v11195
  %v11759 = vpop.f32.mrf.mxu0
  %v11760 = vadd.f32 %v11647, %v11759
  %11761 = vmatmul.f32.gmra.mxu0 %v11198
  %v11762 = vpop.f32.mrf.mxu0
  %v11763 = vadd.f32 %v11650, %v11762
  %11764 = vmatmul.f32.gmra.mxu0 %v11201
  %v11765 = vpop.f32.mrf.mxu0
  %v11766 = vadd.f32 %v11653, %v11765
  %11767 = vmatmul.f32.gmra.mxu0 %v11204
  %v11768 = vpop.f32.mrf.mxu0
  %v11769 = vadd.f32 %v11656, %v11768
  %11770 = vmatmul.f32.gmra.mxu0 %v11207
  %v11771 = vpop.f32.mrf.mxu0
  %v11772 = vadd.f32 %v11659, %v11771
  %11773 = vmatmul.f32.gmra.mxu0 %v11210
  %v11774 = vpop.f32.mrf.mxu0
  %v11775 = vadd.f32 %v11662, %v11774
  %11776 = vmatmul.f32.gmra.mxu0 %v11213
  %v11777 = vpop.f32.mrf.mxu0
  %v11778 = vadd.f32 %v11665, %v11777
  %11779 = vmatmul.f32.gmra.mxu0 %v11216
  %v11780 = vpop.f32.mrf.mxu0
  %v11781 = vadd.f32 %v11668, %v11780
  %11782 = vmatmul.f32.gmra.mxu0 %v11219
  %v11783 = vpop.f32.mrf.mxu0
  %v11784 = vadd.f32 %v11671, %v11783
  %11785 = vmatmul.f32.gmra.mxu0 %v11222
  %v11786 = vpop.f32.mrf.mxu0
  %v11787 = vadd.f32 %v11674, %v11786
  %11788 = vmatmul.f32.gmra.mxu0 %v11225
  %v11789 = vpop.f32.mrf.mxu0
  %v11790 = vadd.f32 %v11677, %v11789
  %11791 = vmatmul.f32.gmra.mxu0 %v11228
  %v11792 = vpop.f32.mrf.mxu0
  %v11793 = vadd.f32 %v11680, %v11792
  %11794 = vmatmul.f32.gmra.mxu0 %v11231
  %v11795 = vpop.f32.mrf.mxu0
  %v11796 = vadd.f32 %v11683, %v11795
  %11797 = vmatmul.f32.gmra.mxu0 %v11234
  %v11798 = vpop.f32.mrf.mxu0
  %v11799 = vadd.f32 %v11686, %v11798
  %11800 = vmatmul.f32.gmra.mxu0 %v11237
  %v11801 = vpop.f32.mrf.mxu0
  %v11802 = vadd.f32 %v11689, %v11801
  %11803 = vmatmul.f32.gmra.mxu0 %v11240
  %v11804 = vpop.f32.mrf.mxu0
  %v11805 = vadd.f32 %v11692, %v11804
  %11806 = vmatmul.f32.gmra.mxu0 %v11243
  %v11807 = vpop.f32.mrf.mxu0
  %v11808 = vadd.f32 %v11695, %v11807
  %11809 = vmatmul.f32.gmra.mxu0 %v11246
  %v11810 = vpop.f32.mrf.mxu0
  %v11811 = vadd.f32 %v11698, %v11810
  %11812 = vmatmul.f32.gmra.mxu0 %v11249
  %v11813 = vpop.f32.mrf.mxu0
  %v11814 = vadd.f32 %v11701, %v11813
  %11815 = vmatmul.f32.gmra.mxu0 %v11252
  %v11816 = vpop.f32.mrf.mxu0
  %v11817 = vadd.f32 %v11704, %v11816
  %11818 = vdwg.mxu0
  %v11819 = vmax.f32 %v11724, %v11772
  %v11820 = vmax.f32 %v11727, %v11775
  %v11821 = vmax.f32 %v11730, %v11778
  %v11822 = vmax.f32 %v11733, %v11781
  %v11823 = vmax.f32 %v11736, %v11784
  %v11824 = vmax.f32 %v11739, %v11787
  %v11825 = vmax.f32 %v11742, %v11790
  %v11826 = vmax.f32 %v11745, %v11793
  %v11827 = vmax.f32 %v11748, %v11796
  %v11828 = vmax.f32 %v11751, %v11799
  %v11829 = vmax.f32 %v11754, %v11802
  %v11830 = vmax.f32 %v11757, %v11805
  %v11831 = vmax.f32 %v11760, %v11808
  %v11832 = vmax.f32 %v11763, %v11811
  %v11833 = vmax.f32 %v11766, %v11814
  %v11834 = vmax.f32 %v11769, %v11817
  %v11835 = vmax.f32 %v11819, %v11827
  %v11836 = vmax.f32 %v11820, %v11828
  %v11837 = vmax.f32 %v11821, %v11829
  %v11838 = vmax.f32 %v11822, %v11830
  %v11839 = vmax.f32 %v11823, %v11831
  %v11840 = vmax.f32 %v11824, %v11832
  %v11841 = vmax.f32 %v11825, %v11833
  %v11842 = vmax.f32 %v11826, %v11834
  %v11843 = vld [vmem:[%s4] sm:$0xff]
  %v11844 = vld [vmem:[%s4 + $0x8] sm:$0xff]
  %v11845 = vld [vmem:[%s4 + $0x10] sm:$0xff]
  %v11846 = vld [vmem:[%s4 + $0x18] sm:$0xff]
  %v11847 = vld [vmem:[%s4 + $0x20] sm:$0xff]
  %v11848 = vld [vmem:[%s4 + $0x28] sm:$0xff]
  %v11849 = vld [vmem:[%s4 + $0x30] sm:$0xff]
  %v11850 = vld [vmem:[%s4 + $0x38] sm:$0xff]
  %v11851 = vadd.f32 %v11835, %v11843
  %v11852 = vadd.f32 %v11836, %v11844
  %v11853 = vadd.f32 %v11837, %v11845
  %v11854 = vadd.f32 %v11838, %v11846
  %v11855 = vadd.f32 %v11839, %v11847
  %v11856 = vadd.f32 %v11840, %v11848
  %v11857 = vadd.f32 %v11841, %v11849
  %v11858 = vadd.f32 %v11842, %v11850
  %v11859 = vmax.f32 %v11851, 0.0
  %v11860 = vmax.f32 %v11852, 0.0
  %v11861 = vmax.f32 %v11853, 0.0
  %v11862 = vmax.f32 %v11854, 0.0
  %v11863 = vmax.f32 %v11855, 0.0
  %v11864 = vmax.f32 %v11856, 0.0
  %v11865 = vmax.f32 %v11857, 0.0
  %v11866 = vmax.f32 %v11858, 0.0
  %11867 = vst [vmem:[#allocation3 + $0xc0] sm:$0xff] %v11859
  %11868 = vst [vmem:[#allocation3 + $0xc8] sm:$0xff] %v11860
  %11869 = vst [vmem:[#allocation3 + $0xd0] sm:$0xff] %v11861
  %11870 = vst [vmem:[#allocation3 + $0xd8] sm:$0xff] %v11862
  %11871 = vst [vmem:[#allocation3 + $0xe0] sm:$0xff] %v11863
  %11872 = vst [vmem:[#allocation3 + $0xe8] sm:$0xff] %v11864
  %11873 = vst [vmem:[#allocation3 + $0xf0] sm:$0xff] %v11865
  %11874 = vst [vmem:[#allocation3 + $0xf8] sm:$0xff] %v11866
  %v11875 = vld [vmem:[#allocation3] sm:$0xff]
  %v11876 = vld [vmem:[#allocation3 + $0x8] sm:$0xff]
  %v11877 = vld [vmem:[#allocation3 + $0x10] sm:$0xff]
  %v11878 = vld [vmem:[#allocation3 + $0x18] sm:$0xff]
  %v11879 = vld [vmem:[#allocation3 + $0x20] sm:$0xff]
  %v11880 = vld [vmem:[#allocation3 + $0x28] sm:$0xff]
  %v11881 = vld [vmem:[#allocation3 + $0x30] sm:$0xff]
  %v11882 = vld [vmem:[#allocation3 + $0x38] sm:$0xff]
  %v11883 = vld [vmem:[#allocation3 + $0x40] sm:$0xff]
  %v11884 = vld [vmem:[#allocation3 + $0x48] sm:$0xff]
  %v11885 = vld [vmem:[#allocation3 + $0x50] sm:$0xff]
  %v11886 = vld [vmem:[#allocation3 + $0x58] sm:$0xff]
  %v11887 = vld [vmem:[#allocation3 + $0x60] sm:$0xff]
  %v11888 = vld [vmem:[#allocation3 + $0x68] sm:$0xff]
  %v11889 = vld [vmem:[#allocation3 + $0x70] sm:$0xff]
  %v11890 = vld [vmem:[#allocation3 + $0x78] sm:$0xff]
  %v11891 = vld [vmem:[#allocation3 + $0x80] sm:$0xff]
  %v11892 = vld [vmem:[#allocation3 + $0x88] sm:$0xff]
  %v11893 = vld [vmem:[#allocation3 + $0x90] sm:$0xff]
  %v11894 = vld [vmem:[#allocation3 + $0x98] sm:$0xff]
  %v11895 = vld [vmem:[#allocation3 + $0xa0] sm:$0xff]
  %v11896 = vld [vmem:[#allocation3 + $0xa8] sm:$0xff]
  %v11897 = vld [vmem:[#allocation3 + $0xb0] sm:$0xff]
  %v11898 = vld [vmem:[#allocation3 + $0xb8] sm:$0xff]
  %v11899 = vld [vmem:[#allocation3 + $0xc0] sm:$0xff]
  %v11900 = vld [vmem:[#allocation3 + $0xc8] sm:$0xff]
  %v11901 = vld [vmem:[#allocation3 + $0xd0] sm:$0xff]
  %v11902 = vld [vmem:[#allocation3 + $0xd8] sm:$0xff]
  %v11903 = vld [vmem:[#allocation3 + $0xe0] sm:$0xff]
  %v11904 = vld [vmem:[#allocation3 + $0xe8] sm:$0xff]
  %v11905 = vld [vmem:[#allocation3 + $0xf0] sm:$0xff]
  %v11906 = vld [vmem:[#allocation3 + $0xf8] sm:$0xff]
  %v11907 = vld [vmem:[%s5] sm:$0xff]
  %v11908 = vld [vmem:[%s5 + $0x8] sm:$0xff]
  %v11909 = vld [vmem:[%s5 + $0x10] sm:$0xff]
  %v11910 = vld [vmem:[%s5 + $0x18] sm:$0xff]
  %v11911 = vld [vmem:[%s5 + $0x20] sm:$0xff]
  %v11912 = vld [vmem:[%s5 + $0x28] sm:$0xff]
  %v11913 = vld [vmem:[%s5 + $0x30] sm:$0xff]
  %v11914 = vld [vmem:[%s5 + $0x38] sm:$0xff]
  %v11915 = vld [vmem:[%s5 + $0x40] sm:$0xff]
  %v11916 = vld [vmem:[%s5 + $0x48] sm:$0xff]
  %v11917 = vld [vmem:[%s5 + $0x50] sm:$0xff]
  %v11918 = vld [vmem:[%s5 + $0x58] sm:$0xff]
  %v11919 = vld [vmem:[%s5 + $0x60] sm:$0xff]
  %v11920 = vld [vmem:[%s5 + $0x68] sm:$0xff]
  %v11921 = vld [vmem:[%s5 + $0x70] sm:$0xff]
  %v11922 = vld [vmem:[%s5 + $0x78] sm:$0xff]
  %v11923 = vld [vmem:[%s5 + $0x80] sm:$0xff]
  %v11924 = vld [vmem:[%s5 + $0x88] sm:$0xff]
  %v11925 = vld [vmem:[%s5 + $0x90] sm:$0xff]
  %v11926 = vld [vmem:[%s5 + $0x98] sm:$0xff]
  %v11927 = vld [vmem:[%s5 + $0xa0] sm:$0xff]
  %v11928 = vld [vmem:[%s5 + $0xa8] sm:$0xff]
  %v11929 = vld [vmem:[%s5 + $0xb0] sm:$0xff]
  %v11930 = vld [vmem:[%s5 + $0xb8] sm:$0xff]
  %v11931 = vld [vmem:[%s5 + $0xc0] sm:$0xff]
  %v11932 = vld [vmem:[%s5 + $0xc8] sm:$0xff]
  %v11933 = vld [vmem:[%s5 + $0xd0] sm:$0xff]
  %v11934 = vld [vmem:[%s5 + $0xd8] sm:$0xff]
  %v11935 = vld [vmem:[%s5 + $0xe0] sm:$0xff]
  %v11936 = vld [vmem:[%s5 + $0xe8] sm:$0xff]
  %v11937 = vld [vmem:[%s5 + $0xf0] sm:$0xff]
  %v11938 = vld [vmem:[%s5 + $0xf8] sm:$0xff]
  %v11939 = vld [vmem:[%s6] sm:$0xff]
  %v11940 = vld [vmem:[%s6 + $0x8] sm:$0xff]
  %v11941 = vld [vmem:[%s6 + $0x10] sm:$0xff]
  %v11942 = vld [vmem:[%s6 + $0x18] sm:$0xff]
  %v11943 = vld [vmem:[%s6 + $0x20] sm:$0xff]
  %v11944 = vld [vmem:[%s6 + $0x28] sm:$0xff]
  %v11945 = vld [vmem:[%s6 + $0x30] sm:$0xff]
  %v11946 = vld [vmem:[%s6 + $0x38] sm:$0xff]
  %v11947 = vld [vmem:[%s6 + $0x40] sm:$0xff]
  %v11948 = vld [vmem:[%s6 + $0x48] sm:$0xff]
  %v11949 = vld [vmem:[%s6 + $0x50] sm:$0xff]
  %v11950 = vld [vmem:[%s6 + $0x58] sm:$0xff]
  %v11951 = vld [vmem:[%s6 + $0x60] sm:$0xff]
  %v11952 = vld [vmem:[%s6 + $0x68] sm:$0xff]
  %v11953 = vld [vmem:[%s6 + $0x70] sm:$0xff]
  %v11954 = vld [vmem:[%s6 + $0x78] sm:$0xff]
  %11955 = vmatpush.msra.mxu0 %v11890
  %11956 = vmatpush.msra.mxu0 %v11889
  %11957 = vmatpush.msra.mxu0 %v11888
  %11958 = vmatpush.msra.mxu0 %v11887
  %11959 = vmatpush.msra.mxu0 %v11886
  %11960 = vmatpush.msra.mxu0 %v11885
  %11961 = vmatpush.msra.mxu0 %v11884
  %11962 = vmatpush.msra.mxu0 %v11883
  %11963 = vmatpush.msra.mxu0 %v11882
  %11964 = vmatpush.msra.mxu0 %v11881
  %11965 = vmatpush.msra.mxu0 %v11880
  %11966 = vmatpush.msra.mxu0 %v11879
  %11967 = vmatpush.msra.mxu0 %v11878
  %11968 = vmatpush.msra.mxu0 %v11877
  %11969 = vmatpush.msra.mxu0 %v11876
  %11970 = vmatpush.msra.mxu0 %v11875
  %11971 = vmatmul.f32.gmra.mxu0 %v11907
  %v11972 = vpop.f32.mrf.mxu0
  %v11973 = vadd.f32 %v11939, %v11972
  %11974 = vmatmul.f32.gmra.mxu0 %v11909
  %v11975 = vpop.f32.mrf.mxu0
  %v11976 = vadd.f32 %v11940, %v11975
  %11977 = vmatmul.f32.gmra.mxu0 %v11911
  %v11978 = vpop.f32.mrf.mxu0
  %v11979 = vadd.f32 %v11941, %v11978
  %11980 = vmatmul.f32.gmra.mxu0 %v11913
  %v11981 = vpop.f32.mrf.mxu0
  %v11982 = vadd.f32 %v11942, %v11981
  %11983 = vmatmul.f32.gmra.mxu0 %v11915
  %v11984 = vpop.f32.mrf.mxu0
  %v11985 = vadd.f32 %v11943, %v11984
  %11986 = vmatmul.f32.gmra.mxu0 %v11917
  %v11987 = vpop.f32.mrf.mxu0
  %v11988 = vadd.f32 %v11944, %v11987
  %11989 = vmatmul.f32.gmra.mxu0 %v11919
  %v11990 = vpop.f32.mrf.mxu0
  %v11991 = vadd.f32 %v11945, %v11990
  %11992 = vmatmul.f32.gmra.mxu0 %v11921
  %v11993 = vpop.f32.mrf.mxu0
  %v11994 = vadd.f32 %v11946, %v11993
  %11995 = vmatmul.f32.gmra.mxu0 %v11923
  %v11996 = vpop.f32.mrf.mxu0
  %v11997 = vadd.f32 %v11947, %v11996
  %11998 = vmatmul.f32.gmra.mxu0 %v11925
  %v11999 = vpop.f32.mrf.mxu0
  %v12000 = vadd.f32 %v11948, %v11999
  %12001 = vmatmul.f32.gmra.mxu0 %v11927
  %v12002 = vpop.f32.mrf.mxu0
  %v12003 = vadd.f32 %v11949, %v12002
  %12004 = vmatmul.f32.gmra.mxu0 %v11929
  %v12005 = vpop.f32.mrf.mxu0
  %v12006 = vadd.f32 %v11950, %v12005
  %12007 = vmatmul.f32.gmra.mxu0 %v11931
  %v12008 = vpop.f32.mrf.mxu0
  %v12009 = vadd.f32 %v11951, %v12008
  %12010 = vmatmul.f32.gmra.mxu0 %v11933
  %v12011 = vpop.f32.mrf.mxu0
  %v12012 = vadd.f32 %v11952, %v12011
  %12013 = vmatmul.f32.gmra.mxu0 %v11935
  %v12014 = vpop.f32.mrf.mxu0
  %v12015 = vadd.f32 %v11953, %v12014
  %12016 = vmatmul.f32.gmra.mxu0 %v11937
  %v12017 = vpop.f32.mrf.mxu0
  %v12018 = vadd.f32 %v11954, %v12017
  %12019 = vdwg.mxu0
  %12020 = vmatpush.msra.mxu0 %v11906
  %12021 = vmatpush.msra.mxu0 %v11905
  %12022 = vmatpush.msra.mxu0 %v11904
  %12023 = vmatpush.msra.mxu0 %v11903
  %12024 = vmatpush.msra.mxu0 %v11902
  %12025 = vmatpush.msra.mxu0 %v11901
  %12026 = vmatpush.msra.mxu0 %v11900
  %12027 = vmatpush.msra.mxu0 %v11899
  %12028 = vmatpush.msra.mxu0 %v11898
  %12029 = vmatpush.msra.mxu0 %v11897
  %12030 = vmatpush.msra.mxu0 %v11896
  %12031 = vmatpush.msra.mxu0 %v11895
  %12032 = vmatpush.msra.mxu0 %v11894
  %12033 = vmatpush.msra.mxu0 %v11893
  %12034 = vmatpush.msra.mxu0 %v11892
  %12035 = vmatpush.msra.mxu0 %v11891
  %12036 = vmatmul.f32.gmra.mxu0 %v11908
  %v12037 = vpop.f32.mrf.mxu0
  %v12038 = vadd.f32 %v11973, %v12037
  %12039 = vmatmul.f32.gmra.mxu0 %v11910
  %v12040 = vpop.f32.mrf.mxu0
  %v12041 = vadd.f32 %v11976, %v12040
  %12042 = vmatmul.f32.gmra.mxu0 %v11912
  %v12043 = vpop.f32.mrf.mxu0
  %v12044 = vadd.f32 %v11979, %v12043
  %12045 = vmatmul.f32.gmra.mxu0 %v11914
  %v12046 = vpop.f32.mrf.mxu0
  %v12047 = vadd.f32 %v11982, %v12046
  %12048 = vmatmul.f32.gmra.mxu0 %v11916
  %v12049 = vpop.f32.mrf.mxu0
  %v12050 = vadd.f32 %v11985, %v12049
  %12051 = vmatmul.f32.gmra.mxu0 %v11918
  %v12052 = vpop.f32.mrf.mxu0
  %v12053 = vadd.f32 %v11988, %v12052
  %12054 = vmatmul.f32.gmra.mxu0 %v11920
  %v12055 = vpop.f32.mrf.mxu0
  %v12056 = vadd.f32 %v11991, %v12055
  %12057 = vmatmul.f32.gmra.mxu0 %v11922
  %v12058 = vpop.f32.mrf.mxu0
  %v12059 = vadd.f32 %v11994, %v12058
  %12060 = vmatmul.f32.gmra.mxu0 %v11924
  %v12061 = vpop.f32.mrf.mxu0
  %v12062 = vadd.f32 %v11997, %v12061
  %12063 = vmatmul.f32.gmra.mxu0 %v11926
  %v12064 = vpop.f32.mrf.mxu0
  %v12065 = vadd.f32 %v12000, %v12064
  %12066 = vmatmul.f32.gmra.mxu0 %v11928
  %v12067 = vpop.f32.mrf.mxu0
  %v12068 = vadd.f32 %v12003, %v12067
  %12069 = vmatmul.f32.gmra.mxu0 %v11930
  %v12070 = vpop.f32.mrf.mxu0
  %v12071 = vadd.f32 %v12006, %v12070
  %12072 = vmatmul.f32.gmra.mxu0 %v11932
  %v12073 = vpop.f32.mrf.mxu0
  %v12074 = vadd.f32 %v12009, %v12073
  %12075 = vmatmul.f32.gmra.mxu0 %v11934
  %v12076 = vpop.f32.mrf.mxu0
  %v12077 = vadd.f32 %v12012, %v12076
  %12078 = vmatmul.f32.gmra.mxu0 %v11936
  %v12079 = vpop.f32.mrf.mxu0
  %v12080 = vadd.f32 %v12015, %v12079
  %12081 = vmatmul.f32.gmra.mxu0 %v11938
  %v12082 = vpop.f32.mrf.mxu0
  %v12083 = vadd.f32 %v12018, %v12082
  %12084 = vdwg.mxu0
  %v12085 = vmax.f32 %v12038, 0.0
  %v12086 = vmax.f32 %v12041, 0.0
  %v12087 = vmax.f32 %v12044, 0.0
  %v12088 = vmax.f32 %v12047, 0.0
  %v12089 = vmax.f32 %v12050, 0.0
  %v12090 = vmax.f32 %v12053, 0.0
  %v12091 = vmax.f32 %v12056, 0.0
  %v12092 = vmax.f32 %v12059, 0.0
  %v12093 = vmax.f32 %v12062, 0.0
  %v12094 = vmax.f32 %v12065, 0.0
  %v12095 = vmax.f32 %v12068, 0.0
  %v12096 = vmax.f32 %v12071, 0.0
  %v12097 = vmax.f32 %v12074, 0.0
  %v12098 = vmax.f32 %v12077, 0.0
  %v12099 = vmax.f32 %v12080, 0.0
  %v12100 = vmax.f32 %v12083, 0.0
  %v12101 = vld [vmem:[%s7] sm:$0xff]
  %v12102 = vld [vmem:[%s7 + $0x8] sm:$0xff]
  %v12103 = vld [vmem:[%s7 + $0x10] sm:$0xff]
  %v12104 = vld [vmem:[%s7 + $0x18] sm:$0xff]
  %v12105 = vld [vmem:[%s7 + $0x20] sm:$0xff]
  %v12106 = vld [vmem:[%s7 + $0x28] sm:$0xff]
  %v12107 = vld [vmem:[%s7 + $0x30] sm:$0xff]
  %v12108 = vld [vmem:[%s7 + $0x38] sm:$0xff]
  %v12109 = vld [vmem:[%s7 + $0x40] sm:$0xff]
  %v12110 = vld [vmem:[%s7 + $0x48] sm:$0xff]
  %v12111 = vld [vmem:[%s7 + $0x50] sm:$0xff]
  %v12112 = vld [vmem:[%s7 + $0x58] sm:$0xff]
  %v12113 = vld [vmem:[%s7 + $0x60] sm:$0xff]
  %v12114 = vld [vmem:[%s7 + $0x68] sm:$0xff]
  %v12115 = vld [vmem:[%s7 + $0x70] sm:$0xff]
  %v12116 = vld [vmem:[%s7 + $0x78] sm:$0xff]
  %v12117 = vld [vmem:[%s8] sm:$0xff]
  %v12118 = vld [vmem:[%s8 + $0x8] sm:$0xff]
  %v12119 = vld [vmem:[%s8 + $0x10] sm:$0xff]
  %v12120 = vld [vmem:[%s8 + $0x18] sm:$0xff]
  %v12121 = vld [vmem:[%s8 + $0x20] sm:$0xff]
  %v12122 = vld [vmem:[%s8 + $0x28] sm:$0xff]
  %v12123 = vld [vmem:[%s8 + $0x30] sm:$0xff]
  %v12124 = vld [vmem:[%s8 + $0x38] sm:$0xff]
  %v12125 = vld [vmem:[%s8 + $0x40] sm:$0xff]
  %v12126 = vld [vmem:[%s8 + $0x48] sm:$0xff]
  %v12127 = vld [vmem:[%s8 + $0x50] sm:$0xff]
  %v12128 = vld [vmem:[%s8 + $0x58] sm:$0xff]
  %v12129 = vld [vmem:[%s8 + $0x60] sm:$0xff]
  %v12130 = vld [vmem:[%s8 + $0x68] sm:$0xff]
  %v12131 = vld [vmem:[%s8 + $0x70] sm:$0xff]
  %v12132 = vld [vmem:[%s8 + $0x78] sm:$0xff]
  %12133 = vmatpush.msra.mxu0 %v12100
  %12134 = vmatpush.msra.mxu0 %v12099
  %12135 = vmatpush.msra.mxu0 %v12098
  %12136 = vmatpush.msra.mxu0 %v12097
  %12137 = vmatpush.msra.mxu0 %v12096
  %12138 = vmatpush.msra.mxu0 %v12095
  %12139 = vmatpush.msra.mxu0 %v12094
  %12140 = vmatpush.msra.mxu0 %v12093
  %12141 = vmatpush.msra.mxu0 %v12092
  %12142 = vmatpush.msra.mxu0 %v12091
  %12143 = vmatpush.msra.mxu0 %v12090
  %12144 = vmatpush.msra.mxu0 %v12089
  %12145 = vmatpush.msra.mxu0 %v12088
  %12146 = vmatpush.msra.mxu0 %v12087
  %12147 = vmatpush.msra.mxu0 %v12086
  %12148 = vmatpush.msra.mxu0 %v12085
  %12149 = vmatmul.f32.gmra.mxu0 %v12101
  %v12150 = vpop.f32.mrf.mxu0
  %v12151 = vadd.f32 %v12117, %v12150
  %12152 = vmatmul.f32.gmra.mxu0 %v12102
  %v12153 = vpop.f32.mrf.mxu0
  %v12154 = vadd.f32 %v12118, %v12153
  %12155 = vmatmul.f32.gmra.mxu0 %v12103
  %v12156 = vpop.f32.mrf.mxu0
  %v12157 = vadd.f32 %v12119, %v12156
  %12158 = vmatmul.f32.gmra.mxu0 %v12104
  %v12159 = vpop.f32.mrf.mxu0
  %v12160 = vadd.f32 %v12120, %v12159
  %12161 = vmatmul.f32.gmra.mxu0 %v12105
  %v12162 = vpop.f32.mrf.mxu0
  %v12163 = vadd.f32 %v12121, %v12162
  %12164 = vmatmul.f32.gmra.mxu0 %v12106
  %v12165 = vpop.f32.mrf.mxu0
  %v12166 = vadd.f32 %v12122, %v12165
  %12167 = vmatmul.f32.gmra.mxu0 %v12107
  %v12168 = vpop.f32.mrf.mxu0
  %v12169 = vadd.f32 %v12123, %v12168
  %12170 = vmatmul.f32.gmra.mxu0 %v12108
  %v12171 = vpop.f32.mrf.mxu0
  %v12172 = vadd.f32 %v12124, %v12171
  %12173 = vmatmul.f32.gmra.mxu0 %v12109
  %v12174 = vpop.f32.mrf.mxu0
  %v12175 = vadd.f32 %v12125, %v12174
  %12176 = vmatmul.f32.gmra.mxu0 %v12110
  %v12177 = vpop.f32.mrf.mxu0
  %v12178 = vadd.f32 %v12126, %v12177
  %12179 = vmatmul.f32.gmra.mxu0 %v12111
  %v12180 = vpop.f32.mrf.mxu0
  %v12181 = vadd.f32 %v12127, %v12180
  %12182 = vmatmul.f32.gmra.mxu0 %v12112
  %v12183 = vpop.f32.mrf.mxu0
  %v12184 = vadd.f32 %v12128, %v12183
  %12185 = vmatmul.f32.gmra.mxu0 %v12113
  %v12186 = vpop.f32.mrf.mxu0
  %v12187 = vadd.f32 %v12129, %v12186
  %12188 = vmatmul.f32.gmra.mxu0 %v12114
  %v12189 = vpop.f32.mrf.mxu0
  %v12190 = vadd.f32 %v12130, %v12189
  %12191 = vmatmul.f32.gmra.mxu0 %v12115
  %v12192 = vpop.f32.mrf.mxu0
  %v12193 = vadd.f32 %v12131, %v12192
  %12194 = vmatmul.f32.gmra.mxu0 %v12116
  %v12195 = vpop.f32.mrf.mxu0
  %v12196 = vadd.f32 %v12132, %v12195
  %12197 = vdwg.mxu0
  %v12198 = vmax.f32 %v12151, 0.0
  %v12199 = vmax.f32 %v12154, 0.0
  %v12200 = vmax.f32 %v12157, 0.0
  %v12201 = vmax.f32 %v12160, 0.0
  %v12202 = vmax.f32 %v12163, 0.0
  %v12203 = vmax.f32 %v12166, 0.0
  %v12204 = vmax.f32 %v12169, 0.0
  %v12205 = vmax.f32 %v12172, 0.0
  %v12206 = vmax.f32 %v12175, 0.0
  %v12207 = vmax.f32 %v12178, 0.0
  %v12208 = vmax.f32 %v12181, 0.0
  %v12209 = vmax.f32 %v12184, 0.0
  %v12210 = vmax.f32 %v12187, 0.0
  %v12211 = vmax.f32 %v12190, 0.0
  %v12212 = vmax.f32 %v12193, 0.0
  %v12213 = vmax.f32 %v12196, 0.0
  %v12214 = vld [vmem:[%s9] sm:$0xff]
  %v12215 = vld [vmem:[%s9 + $0x8] sm:$0xff]
  %v12216 = vld [vmem:[%s10] sm:$0xff]
  %v12217 = vld [vmem:[%s10 + $0x8] sm:$0xff]
  %12218 = vmatpush.msra.mxu0 %v12213
  %12219 = vmatpush.msra.mxu0 %v12212
  %12220 = vmatpush.msra.mxu0 %v12211
  %12221 = vmatpush.msra.mxu0 %v12210
  %12222 = vmatpush.msra.mxu0 %v12209
  %12223 = vmatpush.msra.mxu0 %v12208
  %12224 = vmatpush.msra.mxu0 %v12207
  %12225 = vmatpush.msra.mxu0 %v12206
  %12226 = vmatpush.msra.mxu0 %v12205
  %12227 = vmatpush.msra.mxu0 %v12204
  %12228 = vmatpush.msra.mxu0 %v12203
  %12229 = vmatpush.msra.mxu0 %v12202
  %12230 = vmatpush.msra.mxu0 %v12201
  %12231 = vmatpush.msra.mxu0 %v12200
  %12232 = vmatpush.msra.mxu0 %v12199
  %12233 = vmatpush.msra.mxu0 %v12198
  %12234 = vmatmul.f32.gmra.mxu0 %v12214
  %v12235 = vpop.f32.mrf.mxu0
  %v12236 = vadd.f32 %v12216, %v12235
  %12237 = vmatmul.f32.gmra.mxu0 %v12215
  %v12238 = vpop.f32.mrf.mxu0
  %v12239 = vadd.f32 %v12217, %v12238
  %12240 = vdwg.mxu0
  %12241 = vst [vmem:[%s11] sm:$0xff] %v12236
  %12242 = vst [vmem:[%s11 + $0x8] sm:$0xff] %v12239
  // Predicated region
  $region46: #{net_forward.1} parent=0 // pred_check
    _
  $region47: #{net_forward.1} parent=0 // pred_check_branch
    %12244 = sbr.rel (0) target = $region49
  $region48: #{net_forward.1} parent=0 // pred_region
    _
  $region49: #{net_forward.1} parent=0 // pred_fallthru
    _
  // Predicated region
  $region50: #{net_forward.1} parent=0 // pred_check
    _
  $region51: #{net_forward.1} parent=0 // pred_check_branch
    %12246 = sbr.rel (0) target = $region53
  $region52: #{net_forward.1} parent=0 // pred_region
    _
  $region53: #{net_forward.1} parent=0 // pred_fallthru
    _

</llo_original>
